<compile_context>
chip_gen: v7x
topology: tpu7x:2x2x1
jax: 0.10.0
libtpu: 0.0.40
codegen_flags: <defaults>
</compile_context>

<pallas_src>
import functools

import jax
import jax.numpy as jnp
from jax import lax
from jax.experimental import pallas as pl
from jax.experimental.pallas import tpu as pltpu

LEAKY_SLOPE = 0.2
BN_EPS = 1e-5


def _conv_taps(ap, stride, hout, wout):
    """Build the 9 conv taps, each (hout*wout*B, Cin), from a padded value.

    ap has layout (hin+2, win+2, B, Cin): spatial dims are untiled, so every
    slice / reshape below only touches untiled leading dims (layout-friendly).
    """
    _, _, b, cin = ap.shape
    taps = []
    if stride == 1:
        for dy in range(3):
            for dx in range(3):
                taps.append(
                    ap[dy:dy + hout, dx:dx + wout].reshape(hout * wout * b, cin))
    else:  # stride 2, k=3, pad=1: split into 4 even/odd row/col phases first.
        hh, wh = hout + 1, wout + 1
        ar = ap.reshape(hh, 2, 2 * wh, b, cin)
        ph = []
        for a in range(2):
            row = ar[:, a]                               # (hh, 2*wh, B, Cin)
            r2 = row.reshape(hh, wh, 2, b, cin)
            ph.append([r2[:, :, 0], r2[:, :, 1]])        # (hh, wh, B, Cin)
        for dy in range(3):
            for dx in range(3):
                q = ph[dy % 2][dx % 2]
                taps.append(
                    q[dy // 2:dy // 2 + hout,
                      dx // 2:dx // 2 + wout].reshape(hout * wout * b, cin))
    return taps


def _encoder_kernel(*refs, geom):
    """Fused 5-layer encoder for one block of B batch elements.

    refs = [slab, w_0..w_{L-1}, scale_0.., shift_0.., out, act_0..act_{L-2}]
      slab:   (h1, w1, B, 9*Cin)     layer-1 im2col slab, bf16
      w_0:    (9*Cin, Cout0)         bf16
      w_l:    (9, Cin_l, Cout_l)     bf16 (l >= 1)
      scale/shift_l: (1, Cout_l)     folded conv-bias / eval-BN affine, f32
      out:    (hL, wL, B, C_last)    f32
      act_l:  (h_l+2, w_l+2, B, C_l) padded inter-layer activations, bf16
    """
    nl = len(geom)
    x_ref = refs[0]
    w_refs = refs[1:1 + nl]
    sc_refs = refs[1 + nl:1 + 2 * nl]
    sh_refs = refs[1 + 2 * nl:1 + 3 * nl]
    o_ref = refs[1 + 3 * nl]
    act_refs = refs[2 + 3 * nl:]

    B = x_ref.shape[2]

    def epilogue(acc, li):
        y = acc * sc_refs[li][...] + sh_refs[li][...]   # folded bias / BN affine
        return jnp.where(y > 0.0, y, LEAKY_SLOPE * y)   # LeakyReLU(0.2)

    def store_padded(ref, y, hout, wout, cout):
        # All stores below hit untiled-dim slices with full (B, C) extent:
        # dense, tile-aligned, no masked vst.msk.  Ring re-zeroed every step
        # (cheap; keeps the kernel correct under megacore grid partitioning).
        y4 = y.astype(jnp.bfloat16).reshape(hout, wout, B, cout)
        zrow = jnp.zeros((1, wout + 2, B, cout), jnp.bfloat16)
        zcol = jnp.zeros((hout, 1, B, cout), jnp.bfloat16)
        ref[0:1, :, :, :] = zrow
        ref[hout + 1:hout + 2, :, :, :] = zrow
        ref[1:hout + 1, 0:1, :, :] = zcol
        ref[1:hout + 1, wout + 1:wout + 2, :, :] = zcol
        ref[1:hout + 1, 1:wout + 1, :, :] = y4

    # ---- layer 1: XLA-packed im2col slab -> one MXU dot (K = 9*Cin) ----
    cin, cout, _, _, _, hout, wout = geom[0]
    slab = x_ref[...].reshape(hout * wout * B, 9 * cin)
    acc = jnp.dot(slab, w_refs[0][...], preferred_element_type=jnp.float32)
    y = epilogue(acc, 0)
    store_padded(act_refs[0], y, hout, wout, cout)

    # ---- layers 2..L: 9 accumulating dots (no lane-shuffling concat) ----
    for li in range(1, nl):
        cin, cout, stride, hin, win, hout, wout = geom[li]
        ap = act_refs[li - 1][...]                      # (hin+2, win+2, B, Cin) bf16
        taps = _conv_taps(ap, stride, hout, wout)
        acc = None
        for t, tap in enumerate(taps):
            d = jnp.dot(tap, w_refs[li][t], preferred_element_type=jnp.float32)
            acc = d if acc is None else acc + d
        y = epilogue(acc, li)
        if li + 1 < nl:
            store_padded(act_refs[li], y, hout, wout, cout)
        else:
            # Lane-dense (C_last = 64) output, no in-kernel transpose.
            o_ref[...] = y.reshape(hout, wout, B, cout)


def _layer_geometry(params, H, W, C):
    geom = []
    h, w, cin = H, W, C
    for p in params:
        s = int(p["stride"])
        cout = int(p["w"].shape[-1])
        assert s in (1, 2)
        if s == 2:
            # Documented precondition: spatial dims even at every stride-2 conv.
            assert h % 2 == 0 and w % 2 == 0
        hout, wout = h // s, w // s
        geom.append((cin, cout, s, h, w, hout, wout))
        h, w, cin = hout, wout, cout
    return tuple(geom)


def encoder_forward(x_nchw, params, batch_block=64):
    """Pallas encoder. x_nchw: (N, C, H, W) -> (N, 64 * H/8 * W/8).

    batch_block: batch elements processed per grid step (folded into the
    matmul M dimension).  64 fills the v6e MXU (B*p_last >= 256); >=32 is
    enough on v5e.  On v7x keep N/batch_block >= 2 so both TensorCores get a
    block; total VMEM at B=64 / 16x16 inputs is ~9 MiB, well under budget.
    """
    N, C, H, W = x_nchw.shape
    geom = _layer_geometry(params, H, W, C)
    nl = len(geom)

    if N >= batch_block:
        B = batch_block
        assert B % 8 == 0, "batch_block must be a multiple of 8"
    else:
        B = N
    n_pad = (-N) % B
    Np = N + n_pad

    # Layer-1 im2col slab built by XLA over the tiny input: (h1, w1, N, 9*C),
    # bf16 (lane = 9*C instead of C=4 -> far better DMA rows / VMEM tiling).
    s1, h1, w1 = geom[0][2], geom[0][5], geom[0][6]
    x = jnp.transpose(x_nchw, (2, 3, 0, 1)).astype(jnp.float32)    # (H, W, N, C)
    if n_pad:
        x = jnp.pad(x, ((0, 0), (0, 0), (0, n_pad), (0, 0)))
    xp = jnp.pad(x, ((1, 1), (1, 1), (0, 0), (0, 0)))
    taps = [xp[dy:dy + s1 * h1:s1, dx:dx + s1 * w1:s1]
            for dy in range(3) for dx in range(3)]                 # (h1, w1, Np, C)
    slab = jnp.concatenate(taps, axis=-1).astype(jnp.bfloat16)     # (h1, w1, Np, 9C)

    # Weights: layer 1 as (9*Cin, Cout) for the fused slab dot; layers 2..L
    # as (9, Cin, Cout) for the 9 accumulating dots.  bf16 operands.
    w_args = [params[0]["w"].reshape(9 * C, geom[0][1]).astype(jnp.bfloat16)]
    for li in range(1, nl):
        cin, cout = geom[li][0], geom[li][1]
        w_args.append(params[li]["w"].reshape(9, cin, cout).astype(jnp.bfloat16))
    sc_args = [p["scale"].reshape(1, -1).astype(jnp.float32) for p in params]
    sh_args = [p["shift"].reshape(1, -1).astype(jnp.float32) for p in params]

    in_specs = [pl.BlockSpec((h1, w1, B, 9 * C), lambda nb: (0, 0, nb, 0))]
    in_specs.append(pl.BlockSpec(w_args[0].shape, lambda nb: (0, 0)))
    for li in range(1, nl):
        in_specs.append(pl.BlockSpec(w_args[li].shape, lambda nb: (0, 0, 0)))
    for a in (*sc_args, *sh_args):
        in_specs.append(pl.BlockSpec(a.shape, lambda nb: (0, 0)))

    cL, hL, wL = geom[-1][1], geom[-1][5], geom[-1][6]
    # bf16 inter-layer activation scratch, padded ring included.
    scratch = [pltpu.VMEM((g[5] + 2, g[6] + 2, B, g[1]), jnp.bfloat16)
               for g in geom[:-1]]

    out = pl.pallas_call(
        functools.partial(_encoder_kernel, geom=geom),
        out_shape=jax.ShapeDtypeStruct((hL, wL, Np, cL), jnp.float32),
        grid_spec=pltpu.PrefetchScalarGridSpec(
            num_scalar_prefetch=0,
            grid=(Np // B,),
            in_specs=in_specs,
            out_specs=pl.BlockSpec((hL, wL, B, cL), lambda nb: (0, 0, nb, 0)),
            scratch_shapes=scratch,
        ),
        compiler_params=pltpu.CompilerParams(dimension_semantics=("parallel",)),
    )(slab, *w_args, *sc_args, *sh_args)

    out = out[:, :, :N, :]                       # drop batch padding
    out = jnp.transpose(out, (2, 3, 0, 1))       # (N, C_last, hL, wL) = NCHW
    return out.reshape(N, cL * hL * wL)          # torch.flatten(start_dim=1)


def init_encoder_params(key, in_c):
    """Deterministic synthetic parameters matching Encoder.__init__ shapes."""
    # (cin, cout, stride, has_batchnorm) for each Conv2d in the Sequential.
    specs = [
        (in_c, 32, 2, False),
        (32, 32, 1, True),
        (32, 64, 2, False),
        (64, 64, 1, True),
        (64, 64, 2, False),
    ]
    params = []
    for cin, cout, stride, has_bn in specs:
        key, kw, kb = jax.random.split(key, 3)
        w = 0.1 * jax.random.normal(kw, (3, 3, cin, cout), jnp.float32)
        b = 0.05 * jax.random.normal(kb, (cout,), jnp.float32)
        if has_bn:
            gamma = jnp.ones((cout,), jnp.float32)
            beta = jnp.zeros((cout,), jnp.float32)
            run_mean = jnp.zeros((cout,), jnp.float32)
            run_var = jnp.ones((cout,), jnp.float32)
            scale = gamma / jnp.sqrt(run_var + BN_EPS)
            shift = scale * (b - run_mean) + beta
        else:
            scale = jnp.ones((cout,), jnp.float32)
            shift = b
        params.append({"w": w, "scale": scale, "shift": shift, "stride": stride})
    return params


def encoder_reference(x_nchw, params):
    """Pure-JAX reference with matched precision (bf16 operands, f32 accum)."""
    x = jnp.transpose(x_nchw, (0, 2, 3, 1)).astype(jnp.float32)
    for p in params:
        y = lax.conv_general_dilated(
            x.astype(jnp.bfloat16), p["w"].astype(jnp.bfloat16),
            window_strides=(p["stride"], p["stride"]),
            padding=((1, 1), (1, 1)),
            dimension_numbers=("NHWC", "HWIO", "NHWC"),
            preferred_element_type=jnp.float32)
        y = y * p["scale"] + p["shift"]
        x = jnp.where(y > 0, y, LEAKY_SLOPE * y)
    x_nchw_out = jnp.transpose(x, (0, 3, 1, 2))
    return x_nchw_out.reshape(x_nchw_out.shape[0], -1)


if __name__ == "__main__":
    key = jax.random.PRNGKey(0)
    k_x, k_p = jax.random.split(key)

    N, C, H, W = 2, 4, 16, 16
    x = jax.random.normal(k_x, (N, C, H, W), jnp.float32)
    params = init_encoder_params(k_p, C)

    out = jax.block_until_ready(encoder_forward(x, params))
    assert out.shape == (N, 64 * (H // 8) * (W // 8)), out.shape

    ref = jax.block_until_ready(encoder_reference(x, params))
    max_err = float(jnp.max(jnp.abs(out - ref)))
    assert jnp.allclose(out, ref, rtol=2e-2, atol=2e-2), max_err

    print("KERNEL_OK")
</pallas_src>

<mosaic_0001>
module attributes {stable_mosaic.version = 11 : i64} {
  func.func @_encoder_kernel(%arg0: i32, %arg1: memref<8x8x2x36xbf16, #tpu.memory_space<vmem>>, %arg2: memref<36x32xbf16, #tpu.memory_space<vmem>>, %arg3: memref<9x32x32xbf16, #tpu.memory_space<vmem>>, %arg4: memref<9x32x64xbf16, #tpu.memory_space<vmem>>, %arg5: memref<9x64x64xbf16, #tpu.memory_space<vmem>>, %arg6: memref<9x64x64xbf16, #tpu.memory_space<vmem>>, %arg7: memref<1x32xf32, #tpu.memory_space<vmem>>, %arg8: memref<1x32xf32, #tpu.memory_space<vmem>>, %arg9: memref<1x64xf32, #tpu.memory_space<vmem>>, %arg10: memref<1x64xf32, #tpu.memory_space<vmem>>, %arg11: memref<1x64xf32, #tpu.memory_space<vmem>>, %arg12: memref<1x32xf32, #tpu.memory_space<vmem>>, %arg13: memref<1x32xf32, #tpu.memory_space<vmem>>, %arg14: memref<1x64xf32, #tpu.memory_space<vmem>>, %arg15: memref<1x64xf32, #tpu.memory_space<vmem>>, %arg16: memref<1x64xf32, #tpu.memory_space<vmem>>, %arg17: memref<2x2x2x64xf32, #tpu.memory_space<vmem>>, %arg18: memref<10x10x2x32xbf16, #tpu.memory_space<vmem>>, %arg19: memref<10x10x2x32xbf16, #tpu.memory_space<vmem>>, %arg20: memref<6x6x2x64xbf16, #tpu.memory_space<vmem>>, %arg21: memref<6x6x2x64xbf16, #tpu.memory_space<vmem>>) attributes {dimension_semantics = [#tpu.dimension_semantics<parallel>], iteration_bounds = array<i64: 1>, scalar_prefetch = 0 : i64, scratch_operands = 4 : i64, tpu.core_type = #tpu.core_type<tc>, window_params = [{transform_indices = @transform_0, window_bounds = array<i64: 8, 8, 2, 36>}, {pipeline_mode = #tpu.pipeline_mode<synchronous>, transform_indices = @transform_1, window_bounds = array<i64: 36, 32>}, {pipeline_mode = #tpu.pipeline_mode<synchronous>, transform_indices = @transform_2, window_bounds = array<i64: 9, 32, 32>}, {pipeline_mode = #tpu.pipeline_mode<synchronous>, transform_indices = @transform_3, window_bounds = array<i64: 9, 32, 64>}, {pipeline_mode = #tpu.pipeline_mode<synchronous>, transform_indices = @transform_4, window_bounds = array<i64: 9, 64, 64>}, {pipeline_mode = #tpu.pipeline_mode<synchronous>, transform_indices = @transform_5, window_bounds = array<i64: 9, 64, 64>}, {pipeline_mode = #tpu.pipeline_mode<synchronous>, transform_indices = @transform_6, window_bounds = array<i64: 1, 32>}, {pipeline_mode = #tpu.pipeline_mode<synchronous>, transform_indices = @transform_7, window_bounds = array<i64: 1, 32>}, {pipeline_mode = #tpu.pipeline_mode<synchronous>, transform_indices = @transform_8, window_bounds = array<i64: 1, 64>}, {pipeline_mode = #tpu.pipeline_mode<synchronous>, transform_indices = @transform_9, window_bounds = array<i64: 1, 64>}, {pipeline_mode = #tpu.pipeline_mode<synchronous>, transform_indices = @transform_10, window_bounds = array<i64: 1, 64>}, {pipeline_mode = #tpu.pipeline_mode<synchronous>, transform_indices = @transform_11, window_bounds = array<i64: 1, 32>}, {pipeline_mode = #tpu.pipeline_mode<synchronous>, transform_indices = @transform_12, window_bounds = array<i64: 1, 32>}, {pipeline_mode = #tpu.pipeline_mode<synchronous>, transform_indices = @transform_13, window_bounds = array<i64: 1, 64>}, {pipeline_mode = #tpu.pipeline_mode<synchronous>, transform_indices = @transform_14, window_bounds = array<i64: 1, 64>}, {pipeline_mode = #tpu.pipeline_mode<synchronous>, transform_indices = @transform_15, window_bounds = array<i64: 1, 64>}, {transform_indices = @transform_16, window_bounds = array<i64: 2, 2, 2, 64>}]} {
    %c0 = arith.constant 0 : index
    %c0_0 = arith.constant 0 : index
    %c0_1 = arith.constant 0 : index
    %c0_2 = arith.constant 0 : index
    %0 = vector.load %arg1[%c0, %c0_0, %c0_1, %c0_2] : memref<8x8x2x36xbf16, #tpu.memory_space<vmem>>, vector<8x8x2x36xbf16>
    %1 = vector.shape_cast %0 : vector<8x8x2x36xbf16> to vector<128x36xbf16>
    %c0_3 = arith.constant 0 : index
    %c0_4 = arith.constant 0 : index
    %2 = vector.load %arg2[%c0_3, %c0_4] : memref<36x32xbf16, #tpu.memory_space<vmem>>, vector<36x32xbf16>
    %cst = arith.constant dense<0.000000e+00> : vector<128x32xf32>
    %3 = tpu.matmul %1, %2, %cst {dimension_numbers = #tpu.dot_dimension_numbers<[1], [0], [0], [1], [0, 0, 1, 1], [], []>} : vector<128x36xbf16>, vector<36x32xbf16>, vector<128x32xf32> -> vector<128x32xf32>
    %c0_5 = arith.constant 0 : index
    %c0_6 = arith.constant 0 : index
    %4 = vector.load %arg7[%c0_5, %c0_6] : memref<1x32xf32, #tpu.memory_space<vmem>>, vector<1x32xf32>
    %5 = vector.broadcast %4 : vector<1x32xf32> to vector<128x32xf32>
    %6 = arith.mulf %3, %5 : vector<128x32xf32>
    %c0_7 = arith.constant 0 : index
    %c0_8 = arith.constant 0 : index
    %7 = vector.load %arg12[%c0_7, %c0_8] : memref<1x32xf32, #tpu.memory_space<vmem>>, vector<1x32xf32>
    %8 = vector.broadcast %7 : vector<1x32xf32> to vector<128x32xf32>
    %9 = arith.addf %6, %8 : vector<128x32xf32>
    %cst_9 = arith.constant 0.000000e+00 : f32
    %10 = vector.broadcast %cst_9 : f32 to vector<128x32xf32>
    %11 = arith.cmpf ogt, %9, %10 : vector<128x32xf32>
    %cst_10 = arith.constant 2.000000e-01 : f32
    %12 = vector.broadcast %cst_10 : f32 to vector<128x32xf32>
    %13 = arith.mulf %12, %9 : vector<128x32xf32>
    %14 = arith.select %11, %9, %13 : vector<128x32xi1>, vector<128x32xf32>
    %15 = arith.truncf %14 : vector<128x32xf32> to vector<128x32xbf16>
    %16 = vector.shape_cast %15 : vector<128x32xbf16> to vector<8x8x2x32xbf16>
    %cst_11 = arith.constant 0.000000e+00 : bf16
    %17 = vector.broadcast %cst_11 : bf16 to vector<1x10x2x32xbf16>
    %cst_12 = arith.constant 0.000000e+00 : bf16
    %18 = vector.broadcast %cst_12 : bf16 to vector<8x1x2x32xbf16>
    %c0_13 = arith.constant 0 : index
    %c0_14 = arith.constant 0 : index
    %c0_15 = arith.constant 0 : index
    %c0_16 = arith.constant 0 : index
    %19 = vector.load %arg18[%c0_13, %c0_14, %c0_15, %c0_16] : memref<10x10x2x32xbf16, #tpu.memory_space<vmem>>, vector<1x10x2x32xbf16>
    tpu.vector_store %arg18[%c0_13, %c0_14, %c0_15, %c0_16], %17 {strides = array<i32>} : memref<10x10x2x32xbf16, #tpu.memory_space<vmem>>, vector<1x10x2x32xbf16>,
    %c9 = arith.constant 9 : index
    %c0_17 = arith.constant 0 : index
    %c0_18 = arith.constant 0 : index
    %c0_19 = arith.constant 0 : index
    %20 = vector.load %arg18[%c9, %c0_17, %c0_18, %c0_19] : memref<10x10x2x32xbf16, #tpu.memory_space<vmem>>, vector<1x10x2x32xbf16>
    tpu.vector_store %arg18[%c9, %c0_17, %c0_18, %c0_19], %17 {strides = array<i32>} : memref<10x10x2x32xbf16, #tpu.memory_space<vmem>>, vector<1x10x2x32xbf16>,
    %c1 = arith.constant 1 : index
    %c0_20 = arith.constant 0 : index
    %c0_21 = arith.constant 0 : index
    %c0_22 = arith.constant 0 : index
    %21 = vector.load %arg18[%c1, %c0_20, %c0_21, %c0_22] : memref<10x10x2x32xbf16, #tpu.memory_space<vmem>>, vector<8x1x2x32xbf16>
    tpu.vector_store %arg18[%c1, %c0_20, %c0_21, %c0_22], %18 {strides = array<i32>} : memref<10x10x2x32xbf16, #tpu.memory_space<vmem>>, vector<8x1x2x32xbf16>,
    %c1_23 = arith.constant 1 : index
    %c9_24 = arith.constant 9 : index
    %c0_25 = arith.constant 0 : index
    %c0_26 = arith.constant 0 : index
    %22 = vector.load %arg18[%c1_23, %c9_24, %c0_25, %c0_26] : memref<10x10x2x32xbf16, #tpu.memory_space<vmem>>, vector<8x1x2x32xbf16>
    tpu.vector_store %arg18[%c1_23, %c9_24, %c0_25, %c0_26], %18 {strides = array<i32>} : memref<10x10x2x32xbf16, #tpu.memory_space<vmem>>, vector<8x1x2x32xbf16>,
    %c1_27 = arith.constant 1 : index
    %c1_28 = arith.constant 1 : index
    %c0_29 = arith.constant 0 : index
    %c0_30 = arith.constant 0 : index
    %23 = vector.load %arg18[%c1_27, %c1_28, %c0_29, %c0_30] : memref<10x10x2x32xbf16, #tpu.memory_space<vmem>>, vector<8x8x2x32xbf16>
    tpu.vector_store %arg18[%c1_27, %c1_28, %c0_29, %c0_30], %16 {strides = array<i32>} : memref<10x10x2x32xbf16, #tpu.memory_space<vmem>>, vector<8x8x2x32xbf16>,
    %c0_31 = arith.constant 0 : index
    %c0_32 = arith.constant 0 : index
    %c0_33 = arith.constant 0 : index
    %c0_34 = arith.constant 0 : index
    %24 = vector.load %arg18[%c0_31, %c0_32, %c0_33, %c0_34] : memref<10x10x2x32xbf16, #tpu.memory_space<vmem>>, vector<10x10x2x32xbf16>
    %25 = vector.extract_strided_slice %24 {offsets = [0, 0, 0, 0], sizes = [8, 8, 2, 32], strides = [1, 1, 1, 1]} : vector<10x10x2x32xbf16> to vector<8x8x2x32xbf16>
    %26 = vector.shape_cast %25 : vector<8x8x2x32xbf16> to vector<128x32xbf16>
    %27 = vector.extract_strided_slice %24 {offsets = [0, 1, 0, 0], sizes = [8, 8, 2, 32], strides = [1, 1, 1, 1]} : vector<10x10x2x32xbf16> to vector<8x8x2x32xbf16>
    %28 = vector.shape_cast %27 : vector<8x8x2x32xbf16> to vector<128x32xbf16>
    %29 = vector.extract_strided_slice %24 {offsets = [0, 2, 0, 0], sizes = [8, 8, 2, 32], strides = [1, 1, 1, 1]} : vector<10x10x2x32xbf16> to vector<8x8x2x32xbf16>
    %30 = vector.shape_cast %29 : vector<8x8x2x32xbf16> to vector<128x32xbf16>
    %31 = vector.extract_strided_slice %24 {offsets = [1, 0, 0, 0], sizes = [8, 8, 2, 32], strides = [1, 1, 1, 1]} : vector<10x10x2x32xbf16> to vector<8x8x2x32xbf16>
    %32 = vector.shape_cast %31 : vector<8x8x2x32xbf16> to vector<128x32xbf16>
    %33 = vector.extract_strided_slice %24 {offsets = [1, 1, 0, 0], sizes = [8, 8, 2, 32], strides = [1, 1, 1, 1]} : vector<10x10x2x32xbf16> to vector<8x8x2x32xbf16>
    %34 = vector.shape_cast %33 : vector<8x8x2x32xbf16> to vector<128x32xbf16>
    %35 = vector.extract_strided_slice %24 {offsets = [1, 2, 0, 0], sizes = [8, 8, 2, 32], strides = [1, 1, 1, 1]} : vector<10x10x2x32xbf16> to vector<8x8x2x32xbf16>
    %36 = vector.shape_cast %35 : vector<8x8x2x32xbf16> to vector<128x32xbf16>
    %37 = vector.extract_strided_slice %24 {offsets = [2, 0, 0, 0], sizes = [8, 8, 2, 32], strides = [1, 1, 1, 1]} : vector<10x10x2x32xbf16> to vector<8x8x2x32xbf16>
    %38 = vector.shape_cast %37 : vector<8x8x2x32xbf16> to vector<128x32xbf16>
    %39 = vector.extract_strided_slice %24 {offsets = [2, 1, 0, 0], sizes = [8, 8, 2, 32], strides = [1, 1, 1, 1]} : vector<10x10x2x32xbf16> to vector<8x8x2x32xbf16>
    %40 = vector.shape_cast %39 : vector<8x8x2x32xbf16> to vector<128x32xbf16>
    %41 = vector.extract_strided_slice %24 {offsets = [2, 2, 0, 0], sizes = [8, 8, 2, 32], strides = [1, 1, 1, 1]} : vector<10x10x2x32xbf16> to vector<8x8x2x32xbf16>
    %42 = vector.shape_cast %41 : vector<8x8x2x32xbf16> to vector<128x32xbf16>
    %c0_35 = arith.constant 0 : index
    %c0_36 = arith.constant 0 : index
    %c0_37 = arith.constant 0 : index
    %43 = vector.load %arg3[%c0_35, %c0_36, %c0_37] : memref<9x32x32xbf16, #tpu.memory_space<vmem>>, vector<1x32x32xbf16>
    %44 = vector.shape_cast %43 : vector<1x32x32xbf16> to vector<32x32xbf16>
    %cst_38 = arith.constant dense<0.000000e+00> : vector<128x32xf32>
    %45 = tpu.matmul %26, %44, %cst_38 {dimension_numbers = #tpu.dot_dimension_numbers<[1], [0], [0], [1], [0, 0, 1, 1], [], []>} : vector<128x32xbf16>, vector<32x32xbf16>, vector<128x32xf32> -> vector<128x32xf32>
    %c1_39 = arith.constant 1 : index
    %c0_40 = arith.constant 0 : index
    %c0_41 = arith.constant 0 : index
    %46 = vector.load %arg3[%c1_39, %c0_40, %c0_41] : memref<9x32x32xbf16, #tpu.memory_space<vmem>>, vector<1x32x32xbf16>
    %47 = vector.shape_cast %46 : vector<1x32x32xbf16> to vector<32x32xbf16>
    %cst_42 = arith.constant dense<0.000000e+00> : vector<128x32xf32>
    %48 = tpu.matmul %28, %47, %cst_42 {dimension_numbers = #tpu.dot_dimension_numbers<[1], [0], [0], [1], [0, 0, 1, 1], [], []>} : vector<128x32xbf16>, vector<32x32xbf16>, vector<128x32xf32> -> vector<128x32xf32>
    %49 = arith.addf %45, %48 : vector<128x32xf32>
    %c2 = arith.constant 2 : index
    %c0_43 = arith.constant 0 : index
    %c0_44 = arith.constant 0 : index
    %50 = vector.load %arg3[%c2, %c0_43, %c0_44] : memref<9x32x32xbf16, #tpu.memory_space<vmem>>, vector<1x32x32xbf16>
    %51 = vector.shape_cast %50 : vector<1x32x32xbf16> to vector<32x32xbf16>
    %cst_45 = arith.constant dense<0.000000e+00> : vector<128x32xf32>
    %52 = tpu.matmul %30, %51, %cst_45 {dimension_numbers = #tpu.dot_dimension_numbers<[1], [0], [0], [1], [0, 0, 1, 1], [], []>} : vector<128x32xbf16>, vector<32x32xbf16>, vector<128x32xf32> -> vector<128x32xf32>
    %53 = arith.addf %49, %52 : vector<128x32xf32>
    %c3 = arith.constant 3 : index
    %c0_46 = arith.constant 0 : index
    %c0_47 = arith.constant 0 : index
    %54 = vector.load %arg3[%c3, %c0_46, %c0_47] : memref<9x32x32xbf16, #tpu.memory_space<vmem>>, vector<1x32x32xbf16>
    %55 = vector.shape_cast %54 : vector<1x32x32xbf16> to vector<32x32xbf16>
    %cst_48 = arith.constant dense<0.000000e+00> : vector<128x32xf32>
    %56 = tpu.matmul %32, %55, %cst_48 {dimension_numbers = #tpu.dot_dimension_numbers<[1], [0], [0], [1], [0, 0, 1, 1], [], []>} : vector<128x32xbf16>, vector<32x32xbf16>, vector<128x32xf32> -> vector<128x32xf32>
    %57 = arith.addf %53, %56 : vector<128x32xf32>
    %c4 = arith.constant 4 : index
    %c0_49 = arith.constant 0 : index
    %c0_50 = arith.constant 0 : index
    %58 = vector.load %arg3[%c4, %c0_49, %c0_50] : memref<9x32x32xbf16, #tpu.memory_space<vmem>>, vector<1x32x32xbf16>
    %59 = vector.shape_cast %58 : vector<1x32x32xbf16> to vector<32x32xbf16>
    %cst_51 = arith.constant dense<0.000000e+00> : vector<128x32xf32>
    %60 = tpu.matmul %34, %59, %cst_51 {dimension_numbers = #tpu.dot_dimension_numbers<[1], [0], [0], [1], [0, 0, 1, 1], [], []>} : vector<128x32xbf16>, vector<32x32xbf16>, vector<128x32xf32> -> vector<128x32xf32>
    %61 = arith.addf %57, %60 : vector<128x32xf32>
    %c5 = arith.constant 5 : index
    %c0_52 = arith.constant 0 : index
    %c0_53 = arith.constant 0 : index
    %62 = vector.load %arg3[%c5, %c0_52, %c0_53] : memref<9x32x32xbf16, #tpu.memory_space<vmem>>, vector<1x32x32xbf16>
    %63 = vector.shape_cast %62 : vector<1x32x32xbf16> to vector<32x32xbf16>
    %cst_54 = arith.constant dense<0.000000e+00> : vector<128x32xf32>
    %64 = tpu.matmul %36, %63, %cst_54 {dimension_numbers = #tpu.dot_dimension_numbers<[1], [0], [0], [1], [0, 0, 1, 1], [], []>} : vector<128x32xbf16>, vector<32x32xbf16>, vector<128x32xf32> -> vector<128x32xf32>
    %65 = arith.addf %61, %64 : vector<128x32xf32>
    %c6 = arith.constant 6 : index
    %c0_55 = arith.constant 0 : index
    %c0_56 = arith.constant 0 : index
    %66 = vector.load %arg3[%c6, %c0_55, %c0_56] : memref<9x32x32xbf16, #tpu.memory_space<vmem>>, vector<1x32x32xbf16>
    %67 = vector.shape_cast %66 : vector<1x32x32xbf16> to vector<32x32xbf16>
    %cst_57 = arith.constant dense<0.000000e+00> : vector<128x32xf32>
    %68 = tpu.matmul %38, %67, %cst_57 {dimension_numbers = #tpu.dot_dimension_numbers<[1], [0], [0], [1], [0, 0, 1, 1], [], []>} : vector<128x32xbf16>, vector<32x32xbf16>, vector<128x32xf32> -> vector<128x32xf32>
    %69 = arith.addf %65, %68 : vector<128x32xf32>
    %c7 = arith.constant 7 : index
    %c0_58 = arith.constant 0 : index
    %c0_59 = arith.constant 0 : index
    %70 = vector.load %arg3[%c7, %c0_58, %c0_59] : memref<9x32x32xbf16, #tpu.memory_space<vmem>>, vector<1x32x32xbf16>
    %71 = vector.shape_cast %70 : vector<1x32x32xbf16> to vector<32x32xbf16>
    %cst_60 = arith.constant dense<0.000000e+00> : vector<128x32xf32>
    %72 = tpu.matmul %40, %71, %cst_60 {dimension_numbers = #tpu.dot_dimension_numbers<[1], [0], [0], [1], [0, 0, 1, 1], [], []>} : vector<128x32xbf16>, vector<32x32xbf16>, vector<128x32xf32> -> vector<128x32xf32>
    %73 = arith.addf %69, %72 : vector<128x32xf32>
    %c8 = arith.constant 8 : index
    %c0_61 = arith.constant 0 : index
    %c0_62 = arith.constant 0 : index
    %74 = vector.load %arg3[%c8, %c0_61, %c0_62] : memref<9x32x32xbf16, #tpu.memory_space<vmem>>, vector<1x32x32xbf16>
    %75 = vector.shape_cast %74 : vector<1x32x32xbf16> to vector<32x32xbf16>
    %cst_63 = arith.constant dense<0.000000e+00> : vector<128x32xf32>
    %76 = tpu.matmul %42, %75, %cst_63 {dimension_numbers = #tpu.dot_dimension_numbers<[1], [0], [0], [1], [0, 0, 1, 1], [], []>} : vector<128x32xbf16>, vector<32x32xbf16>, vector<128x32xf32> -> vector<128x32xf32>
    %77 = arith.addf %73, %76 : vector<128x32xf32>
    %c0_64 = arith.constant 0 : index
    %c0_65 = arith.constant 0 : index
    %78 = vector.load %arg8[%c0_64, %c0_65] : memref<1x32xf32, #tpu.memory_space<vmem>>, vector<1x32xf32>
    %79 = vector.broadcast %78 : vector<1x32xf32> to vector<128x32xf32>
    %80 = arith.mulf %77, %79 : vector<128x32xf32>
    %c0_66 = arith.constant 0 : index
    %c0_67 = arith.constant 0 : index
    %81 = vector.load %arg13[%c0_66, %c0_67] : memref<1x32xf32, #tpu.memory_space<vmem>>, vector<1x32xf32>
    %82 = vector.broadcast %81 : vector<1x32xf32> to vector<128x32xf32>
    %83 = arith.addf %80, %82 : vector<128x32xf32>
    %cst_68 = arith.constant 0.000000e+00 : f32
    %84 = vector.broadcast %cst_68 : f32 to vector<128x32xf32>
    %85 = arith.cmpf ogt, %83, %84 : vector<128x32xf32>
    %cst_69 = arith.constant 2.000000e-01 : f32
    %86 = vector.broadcast %cst_69 : f32 to vector<128x32xf32>
    %87 = arith.mulf %86, %83 : vector<128x32xf32>
    %88 = arith.select %85, %83, %87 : vector<128x32xi1>, vector<128x32xf32>
    %89 = arith.truncf %88 : vector<128x32xf32> to vector<128x32xbf16>
    %90 = vector.shape_cast %89 : vector<128x32xbf16> to vector<8x8x2x32xbf16>
    %cst_70 = arith.constant 0.000000e+00 : bf16
    %91 = vector.broadcast %cst_70 : bf16 to vector<1x10x2x32xbf16>
    %cst_71 = arith.constant 0.000000e+00 : bf16
    %92 = vector.broadcast %cst_71 : bf16 to vector<8x1x2x32xbf16>
    %c0_72 = arith.constant 0 : index
    %c0_73 = arith.constant 0 : index
    %c0_74 = arith.constant 0 : index
    %c0_75 = arith.constant 0 : index
    %93 = vector.load %arg19[%c0_72, %c0_73, %c0_74, %c0_75] : memref<10x10x2x32xbf16, #tpu.memory_space<vmem>>, vector<1x10x2x32xbf16>
    tpu.vector_store %arg19[%c0_72, %c0_73, %c0_74, %c0_75], %91 {strides = array<i32>} : memref<10x10x2x32xbf16, #tpu.memory_space<vmem>>, vector<1x10x2x32xbf16>,
    %c9_76 = arith.constant 9 : index
    %c0_77 = arith.constant 0 : index
    %c0_78 = arith.constant 0 : index
    %c0_79 = arith.constant 0 : index
    %94 = vector.load %arg19[%c9_76, %c0_77, %c0_78, %c0_79] : memref<10x10x2x32xbf16, #tpu.memory_space<vmem>>, vector<1x10x2x32xbf16>
    tpu.vector_store %arg19[%c9_76, %c0_77, %c0_78, %c0_79], %91 {strides = array<i32>} : memref<10x10x2x32xbf16, #tpu.memory_space<vmem>>, vector<1x10x2x32xbf16>,
    %c1_80 = arith.constant 1 : index
    %c0_81 = arith.constant 0 : index
    %c0_82 = arith.constant 0 : index
    %c0_83 = arith.constant 0 : index
    %95 = vector.load %arg19[%c1_80, %c0_81, %c0_82, %c0_83] : memref<10x10x2x32xbf16, #tpu.memory_space<vmem>>, vector<8x1x2x32xbf16>
    tpu.vector_store %arg19[%c1_80, %c0_81, %c0_82, %c0_83], %92 {strides = array<i32>} : memref<10x10x2x32xbf16, #tpu.memory_space<vmem>>, vector<8x1x2x32xbf16>,
    %c1_84 = arith.constant 1 : index
    %c9_85 = arith.constant 9 : index
    %c0_86 = arith.constant 0 : index
    %c0_87 = arith.constant 0 : index
    %96 = vector.load %arg19[%c1_84, %c9_85, %c0_86, %c0_87] : memref<10x10x2x32xbf16, #tpu.memory_space<vmem>>, vector<8x1x2x32xbf16>
    tpu.vector_store %arg19[%c1_84, %c9_85, %c0_86, %c0_87], %92 {strides = array<i32>} : memref<10x10x2x32xbf16, #tpu.memory_space<vmem>>, vector<8x1x2x32xbf16>,
    %c1_88 = arith.constant 1 : index
    %c1_89 = arith.constant 1 : index
    %c0_90 = arith.constant 0 : index
    %c0_91 = arith.constant 0 : index
    %97 = vector.load %arg19[%c1_88, %c1_89, %c0_90, %c0_91] : memref<10x10x2x32xbf16, #tpu.memory_space<vmem>>, vector<8x8x2x32xbf16>
    tpu.vector_store %arg19[%c1_88, %c1_89, %c0_90, %c0_91], %90 {strides = array<i32>} : memref<10x10x2x32xbf16, #tpu.memory_space<vmem>>, vector<8x8x2x32xbf16>,
    %c0_92 = arith.constant 0 : index
    %c0_93 = arith.constant 0 : index
    %c0_94 = arith.constant 0 : index
    %c0_95 = arith.constant 0 : index
    %98 = vector.load %arg19[%c0_92, %c0_93, %c0_94, %c0_95] : memref<10x10x2x32xbf16, #tpu.memory_space<vmem>>, vector<10x10x2x32xbf16>
    %99 = vector.shape_cast %98 : vector<10x10x2x32xbf16> to vector<5x2x10x2x32xbf16>
    %100 = vector.extract_strided_slice %99 {offsets = [0, 0, 0, 0, 0], sizes = [5, 1, 10, 2, 32], strides = [1, 1, 1, 1, 1]} : vector<5x2x10x2x32xbf16> to vector<5x1x10x2x32xbf16>
    %101 = vector.shape_cast %100 : vector<5x1x10x2x32xbf16> to vector<5x10x2x32xbf16>
    %102 = vector.shape_cast %101 : vector<5x10x2x32xbf16> to vector<5x5x2x2x32xbf16>
    %103 = vector.extract_strided_slice %102 {offsets = [0, 0, 0, 0, 0], sizes = [5, 5, 1, 2, 32], strides = [1, 1, 1, 1, 1]} : vector<5x5x2x2x32xbf16> to vector<5x5x1x2x32xbf16>
    %104 = vector.shape_cast %103 : vector<5x5x1x2x32xbf16> to vector<5x5x2x32xbf16>
    %105 = vector.extract_strided_slice %102 {offsets = [0, 0, 1, 0, 0], sizes = [5, 5, 1, 2, 32], strides = [1, 1, 1, 1, 1]} : vector<5x5x2x2x32xbf16> to vector<5x5x1x2x32xbf16>
    %106 = vector.shape_cast %105 : vector<5x5x1x2x32xbf16> to vector<5x5x2x32xbf16>
    %107 = vector.extract_strided_slice %99 {offsets = [0, 1, 0, 0, 0], sizes = [5, 1, 10, 2, 32], strides = [1, 1, 1, 1, 1]} : vector<5x2x10x2x32xbf16> to vector<5x1x10x2x32xbf16>
    %108 = vector.shape_cast %107 : vector<5x1x10x2x32xbf16> to vector<5x10x2x32xbf16>
    %109 = vector.shape_cast %108 : vector<5x10x2x32xbf16> to vector<5x5x2x2x32xbf16>
    %110 = vector.extract_strided_slice %109 {offsets = [0, 0, 0, 0, 0], sizes = [5, 5, 1, 2, 32], strides = [1, 1, 1, 1, 1]} : vector<5x5x2x2x32xbf16> to vector<5x5x1x2x32xbf16>
    %111 = vector.shape_cast %110 : vector<5x5x1x2x32xbf16> to vector<5x5x2x32xbf16>
    %112 = vector.extract_strided_slice %109 {offsets = [0, 0, 1, 0, 0], sizes = [5, 5, 1, 2, 32], strides = [1, 1, 1, 1, 1]} : vector<5x5x2x2x32xbf16> to vector<5x5x1x2x32xbf16>
    %113 = vector.shape_cast %112 : vector<5x5x1x2x32xbf16> to vector<5x5x2x32xbf16>
    %114 = vector.extract_strided_slice %104 {offsets = [0, 0, 0, 0], sizes = [4, 4, 2, 32], strides = [1, 1, 1, 1]} : vector<5x5x2x32xbf16> to vector<4x4x2x32xbf16>
    %115 = vector.shape_cast %114 : vector<4x4x2x32xbf16> to vector<32x32xbf16>
    %116 = vector.extract_strided_slice %106 {offsets = [0, 0, 0, 0], sizes = [4, 4, 2, 32], strides = [1, 1, 1, 1]} : vector<5x5x2x32xbf16> to vector<4x4x2x32xbf16>
    %117 = vector.shape_cast %116 : vector<4x4x2x32xbf16> to vector<32x32xbf16>
    %118 = vector.extract_strided_slice %104 {offsets = [0, 1, 0, 0], sizes = [4, 4, 2, 32], strides = [1, 1, 1, 1]} : vector<5x5x2x32xbf16> to vector<4x4x2x32xbf16>
    %119 = vector.shape_cast %118 : vector<4x4x2x32xbf16> to vector<32x32xbf16>
    %120 = vector.extract_strided_slice %111 {offsets = [0, 0, 0, 0], sizes = [4, 4, 2, 32], strides = [1, 1, 1, 1]} : vector<5x5x2x32xbf16> to vector<4x4x2x32xbf16>
    %121 = vector.shape_cast %120 : vector<4x4x2x32xbf16> to vector<32x32xbf16>
    %122 = vector.extract_strided_slice %113 {offsets = [0, 0, 0, 0], sizes = [4, 4, 2, 32], strides = [1, 1, 1, 1]} : vector<5x5x2x32xbf16> to vector<4x4x2x32xbf16>
    %123 = vector.shape_cast %122 : vector<4x4x2x32xbf16> to vector<32x32xbf16>
    %124 = vector.extract_strided_slice %111 {offsets = [0, 1, 0, 0], sizes = [4, 4, 2, 32], strides = [1, 1, 1, 1]} : vector<5x5x2x32xbf16> to vector<4x4x2x32xbf16>
    %125 = vector.shape_cast %124 : vector<4x4x2x32xbf16> to vector<32x32xbf16>
    %126 = vector.extract_strided_slice %104 {offsets = [1, 0, 0, 0], sizes = [4, 4, 2, 32], strides = [1, 1, 1, 1]} : vector<5x5x2x32xbf16> to vector<4x4x2x32xbf16>
    %127 = vector.shape_cast %126 : vector<4x4x2x32xbf16> to vector<32x32xbf16>
    %128 = vector.extract_strided_slice %106 {offsets = [1, 0, 0, 0], sizes = [4, 4, 2, 32], strides = [1, 1, 1, 1]} : vector<5x5x2x32xbf16> to vector<4x4x2x32xbf16>
    %129 = vector.shape_cast %128 : vector<4x4x2x32xbf16> to vector<32x32xbf16>
    %130 = vector.extract_strided_slice %104 {offsets = [1, 1, 0, 0], sizes = [4, 4, 2, 32], strides = [1, 1, 1, 1]} : vector<5x5x2x32xbf16> to vector<4x4x2x32xbf16>
    %131 = vector.shape_cast %130 : vector<4x4x2x32xbf16> to vector<32x32xbf16>
    %c0_96 = arith.constant 0 : index
    %c0_97 = arith.constant 0 : index
    %c0_98 = arith.constant 0 : index
    %132 = vector.load %arg4[%c0_96, %c0_97, %c0_98] : memref<9x32x64xbf16, #tpu.memory_space<vmem>>, vector<1x32x64xbf16>
    %133 = vector.shape_cast %132 : vector<1x32x64xbf16> to vector<32x64xbf16>
    %cst_99 = arith.constant dense<0.000000e+00> : vector<32x64xf32>
    %134 = tpu.matmul %115, %133, %cst_99 {dimension_numbers = #tpu.dot_dimension_numbers<[1], [0], [0], [1], [0, 0, 1, 1], [], []>} : vector<32x32xbf16>, vector<32x64xbf16>, vector<32x64xf32> -> vector<32x64xf32>
    %c1_100 = arith.constant 1 : index
    %c0_101 = arith.constant 0 : index
    %c0_102 = arith.constant 0 : index
    %135 = vector.load %arg4[%c1_100, %c0_101, %c0_102] : memref<9x32x64xbf16, #tpu.memory_space<vmem>>, vector<1x32x64xbf16>
    %136 = vector.shape_cast %135 : vector<1x32x64xbf16> to vector<32x64xbf16>
    %cst_103 = arith.constant dense<0.000000e+00> : vector<32x64xf32>
    %137 = tpu.matmul %117, %136, %cst_103 {dimension_numbers = #tpu.dot_dimension_numbers<[1], [0], [0], [1], [0, 0, 1, 1], [], []>} : vector<32x32xbf16>, vector<32x64xbf16>, vector<32x64xf32> -> vector<32x64xf32>
    %138 = arith.addf %134, %137 : vector<32x64xf32>
    %c2_104 = arith.constant 2 : index
    %c0_105 = arith.constant 0 : index
    %c0_106 = arith.constant 0 : index
    %139 = vector.load %arg4[%c2_104, %c0_105, %c0_106] : memref<9x32x64xbf16, #tpu.memory_space<vmem>>, vector<1x32x64xbf16>
    %140 = vector.shape_cast %139 : vector<1x32x64xbf16> to vector<32x64xbf16>
    %cst_107 = arith.constant dense<0.000000e+00> : vector<32x64xf32>
    %141 = tpu.matmul %119, %140, %cst_107 {dimension_numbers = #tpu.dot_dimension_numbers<[1], [0], [0], [1], [0, 0, 1, 1], [], []>} : vector<32x32xbf16>, vector<32x64xbf16>, vector<32x64xf32> -> vector<32x64xf32>
    %142 = arith.addf %138, %141 : vector<32x64xf32>
    %c3_108 = arith.constant 3 : index
    %c0_109 = arith.constant 0 : index
    %c0_110 = arith.constant 0 : index
    %143 = vector.load %arg4[%c3_108, %c0_109, %c0_110] : memref<9x32x64xbf16, #tpu.memory_space<vmem>>, vector<1x32x64xbf16>
    %144 = vector.shape_cast %143 : vector<1x32x64xbf16> to vector<32x64xbf16>
    %cst_111 = arith.constant dense<0.000000e+00> : vector<32x64xf32>
    %145 = tpu.matmul %121, %144, %cst_111 {dimension_numbers = #tpu.dot_dimension_numbers<[1], [0], [0], [1], [0, 0, 1, 1], [], []>} : vector<32x32xbf16>, vector<32x64xbf16>, vector<32x64xf32> -> vector<32x64xf32>
    %146 = arith.addf %142, %145 : vector<32x64xf32>
    %c4_112 = arith.constant 4 : index
    %c0_113 = arith.constant 0 : index
    %c0_114 = arith.constant 0 : index
    %147 = vector.load %arg4[%c4_112, %c0_113, %c0_114] : memref<9x32x64xbf16, #tpu.memory_space<vmem>>, vector<1x32x64xbf16>
    %148 = vector.shape_cast %147 : vector<1x32x64xbf16> to vector<32x64xbf16>
    %cst_115 = arith.constant dense<0.000000e+00> : vector<32x64xf32>
    %149 = tpu.matmul %123, %148, %cst_115 {dimension_numbers = #tpu.dot_dimension_numbers<[1], [0], [0], [1], [0, 0, 1, 1], [], []>} : vector<32x32xbf16>, vector<32x64xbf16>, vector<32x64xf32> -> vector<32x64xf32>
    %150 = arith.addf %146, %149 : vector<32x64xf32>
    %c5_116 = arith.constant 5 : index
    %c0_117 = arith.constant 0 : index
    %c0_118 = arith.constant 0 : index
    %151 = vector.load %arg4[%c5_116, %c0_117, %c0_118] : memref<9x32x64xbf16, #tpu.memory_space<vmem>>, vector<1x32x64xbf16>
    %152 = vector.shape_cast %151 : vector<1x32x64xbf16> to vector<32x64xbf16>
    %cst_119 = arith.constant dense<0.000000e+00> : vector<32x64xf32>
    %153 = tpu.matmul %125, %152, %cst_119 {dimension_numbers = #tpu.dot_dimension_numbers<[1], [0], [0], [1], [0, 0, 1, 1], [], []>} : vector<32x32xbf16>, vector<32x64xbf16>, vector<32x64xf32> -> vector<32x64xf32>
    %154 = arith.addf %150, %153 : vector<32x64xf32>
    %c6_120 = arith.constant 6 : index
    %c0_121 = arith.constant 0 : index
    %c0_122 = arith.constant 0 : index
    %155 = vector.load %arg4[%c6_120, %c0_121, %c0_122] : memref<9x32x64xbf16, #tpu.memory_space<vmem>>, vector<1x32x64xbf16>
    %156 = vector.shape_cast %155 : vector<1x32x64xbf16> to vector<32x64xbf16>
    %cst_123 = arith.constant dense<0.000000e+00> : vector<32x64xf32>
    %157 = tpu.matmul %127, %156, %cst_123 {dimension_numbers = #tpu.dot_dimension_numbers<[1], [0], [0], [1], [0, 0, 1, 1], [], []>} : vector<32x32xbf16>, vector<32x64xbf16>, vector<32x64xf32> -> vector<32x64xf32>
    %158 = arith.addf %154, %157 : vector<32x64xf32>
    %c7_124 = arith.constant 7 : index
    %c0_125 = arith.constant 0 : index
    %c0_126 = arith.constant 0 : index
    %159 = vector.load %arg4[%c7_124, %c0_125, %c0_126] : memref<9x32x64xbf16, #tpu.memory_space<vmem>>, vector<1x32x64xbf16>
    %160 = vector.shape_cast %159 : vector<1x32x64xbf16> to vector<32x64xbf16>
    %cst_127 = arith.constant dense<0.000000e+00> : vector<32x64xf32>
    %161 = tpu.matmul %129, %160, %cst_127 {dimension_numbers = #tpu.dot_dimension_numbers<[1], [0], [0], [1], [0, 0, 1, 1], [], []>} : vector<32x32xbf16>, vector<32x64xbf16>, vector<32x64xf32> -> vector<32x64xf32>
    %162 = arith.addf %158, %161 : vector<32x64xf32>
    %c8_128 = arith.constant 8 : index
    %c0_129 = arith.constant 0 : index
    %c0_130 = arith.constant 0 : index
    %163 = vector.load %arg4[%c8_128, %c0_129, %c0_130] : memref<9x32x64xbf16, #tpu.memory_space<vmem>>, vector<1x32x64xbf16>
    %164 = vector.shape_cast %163 : vector<1x32x64xbf16> to vector<32x64xbf16>
    %cst_131 = arith.constant dense<0.000000e+00> : vector<32x64xf32>
    %165 = tpu.matmul %131, %164, %cst_131 {dimension_numbers = #tpu.dot_dimension_numbers<[1], [0], [0], [1], [0, 0, 1, 1], [], []>} : vector<32x32xbf16>, vector<32x64xbf16>, vector<32x64xf32> -> vector<32x64xf32>
    %166 = arith.addf %162, %165 : vector<32x64xf32>
    %c0_132 = arith.constant 0 : index
    %c0_133 = arith.constant 0 : index
    %167 = vector.load %arg9[%c0_132, %c0_133] : memref<1x64xf32, #tpu.memory_space<vmem>>, vector<1x64xf32>
    %168 = vector.broadcast %167 : vector<1x64xf32> to vector<32x64xf32>
    %169 = arith.mulf %166, %168 : vector<32x64xf32>
    %c0_134 = arith.constant 0 : index
    %c0_135 = arith.constant 0 : index
    %170 = vector.load %arg14[%c0_134, %c0_135] : memref<1x64xf32, #tpu.memory_space<vmem>>, vector<1x64xf32>
    %171 = vector.broadcast %170 : vector<1x64xf32> to vector<32x64xf32>
    %172 = arith.addf %169, %171 : vector<32x64xf32>
    %cst_136 = arith.constant 0.000000e+00 : f32
    %173 = vector.broadcast %cst_136 : f32 to vector<32x64xf32>
    %174 = arith.cmpf ogt, %172, %173 : vector<32x64xf32>
    %cst_137 = arith.constant 2.000000e-01 : f32
    %175 = vector.broadcast %cst_137 : f32 to vector<32x64xf32>
    %176 = arith.mulf %175, %172 : vector<32x64xf32>
    %177 = arith.select %174, %172, %176 : vector<32x64xi1>, vector<32x64xf32>
    %178 = arith.truncf %177 : vector<32x64xf32> to vector<32x64xbf16>
    %179 = vector.shape_cast %178 : vector<32x64xbf16> to vector<4x4x2x64xbf16>
    %cst_138 = arith.constant 0.000000e+00 : bf16
    %180 = vector.broadcast %cst_138 : bf16 to vector<1x6x2x64xbf16>
    %cst_139 = arith.constant 0.000000e+00 : bf16
    %181 = vector.broadcast %cst_139 : bf16 to vector<4x1x2x64xbf16>
    %c0_140 = arith.constant 0 : index
    %c0_141 = arith.constant 0 : index
    %c0_142 = arith.constant 0 : index
    %c0_143 = arith.constant 0 : index
    %182 = vector.load %arg20[%c0_140, %c0_141, %c0_142, %c0_143] : memref<6x6x2x64xbf16, #tpu.memory_space<vmem>>, vector<1x6x2x64xbf16>
    tpu.vector_store %arg20[%c0_140, %c0_141, %c0_142, %c0_143], %180 {strides = array<i32>} : memref<6x6x2x64xbf16, #tpu.memory_space<vmem>>, vector<1x6x2x64xbf16>,
    %c5_144 = arith.constant 5 : index
    %c0_145 = arith.constant 0 : index
    %c0_146 = arith.constant 0 : index
    %c0_147 = arith.constant 0 : index
    %183 = vector.load %arg20[%c5_144, %c0_145, %c0_146, %c0_147] : memref<6x6x2x64xbf16, #tpu.memory_space<vmem>>, vector<1x6x2x64xbf16>
    tpu.vector_store %arg20[%c5_144, %c0_145, %c0_146, %c0_147], %180 {strides = array<i32>} : memref<6x6x2x64xbf16, #tpu.memory_space<vmem>>, vector<1x6x2x64xbf16>,
    %c1_148 = arith.constant 1 : index
    %c0_149 = arith.constant 0 : index
    %c0_150 = arith.constant 0 : index
    %c0_151 = arith.constant 0 : index
    %184 = vector.load %arg20[%c1_148, %c0_149, %c0_150, %c0_151] : memref<6x6x2x64xbf16, #tpu.memory_space<vmem>>, vector<4x1x2x64xbf16>
    tpu.vector_store %arg20[%c1_148, %c0_149, %c0_150, %c0_151], %181 {strides = array<i32>} : memref<6x6x2x64xbf16, #tpu.memory_space<vmem>>, vector<4x1x2x64xbf16>,
    %c1_152 = arith.constant 1 : index
    %c5_153 = arith.constant 5 : index
    %c0_154 = arith.constant 0 : index
    %c0_155 = arith.constant 0 : index
    %185 = vector.load %arg20[%c1_152, %c5_153, %c0_154, %c0_155] : memref<6x6x2x64xbf16, #tpu.memory_space<vmem>>, vector<4x1x2x64xbf16>
    tpu.vector_store %arg20[%c1_152, %c5_153, %c0_154, %c0_155], %181 {strides = array<i32>} : memref<6x6x2x64xbf16, #tpu.memory_space<vmem>>, vector<4x1x2x64xbf16>,
    %c1_156 = arith.constant 1 : index
    %c1_157 = arith.constant 1 : index
    %c0_158 = arith.constant 0 : index
    %c0_159 = arith.constant 0 : index
    %186 = vector.load %arg20[%c1_156, %c1_157, %c0_158, %c0_159] : memref<6x6x2x64xbf16, #tpu.memory_space<vmem>>, vector<4x4x2x64xbf16>
    tpu.vector_store %arg20[%c1_156, %c1_157, %c0_158, %c0_159], %179 {strides = array<i32>} : memref<6x6x2x64xbf16, #tpu.memory_space<vmem>>, vector<4x4x2x64xbf16>,
    %c0_160 = arith.constant 0 : index
    %c0_161 = arith.constant 0 : index
    %c0_162 = arith.constant 0 : index
    %c0_163 = arith.constant 0 : index
    %187 = vector.load %arg20[%c0_160, %c0_161, %c0_162, %c0_163] : memref<6x6x2x64xbf16, #tpu.memory_space<vmem>>, vector<6x6x2x64xbf16>
    %188 = vector.extract_strided_slice %187 {offsets = [0, 0, 0, 0], sizes = [4, 4, 2, 64], strides = [1, 1, 1, 1]} : vector<6x6x2x64xbf16> to vector<4x4x2x64xbf16>
    %189 = vector.shape_cast %188 : vector<4x4x2x64xbf16> to vector<32x64xbf16>
    %190 = vector.extract_strided_slice %187 {offsets = [0, 1, 0, 0], sizes = [4, 4, 2, 64], strides = [1, 1, 1, 1]} : vector<6x6x2x64xbf16> to vector<4x4x2x64xbf16>
    %191 = vector.shape_cast %190 : vector<4x4x2x64xbf16> to vector<32x64xbf16>
    %192 = vector.extract_strided_slice %187 {offsets = [0, 2, 0, 0], sizes = [4, 4, 2, 64], strides = [1, 1, 1, 1]} : vector<6x6x2x64xbf16> to vector<4x4x2x64xbf16>
    %193 = vector.shape_cast %192 : vector<4x4x2x64xbf16> to vector<32x64xbf16>
    %194 = vector.extract_strided_slice %187 {offsets = [1, 0, 0, 0], sizes = [4, 4, 2, 64], strides = [1, 1, 1, 1]} : vector<6x6x2x64xbf16> to vector<4x4x2x64xbf16>
    %195 = vector.shape_cast %194 : vector<4x4x2x64xbf16> to vector<32x64xbf16>
    %196 = vector.extract_strided_slice %187 {offsets = [1, 1, 0, 0], sizes = [4, 4, 2, 64], strides = [1, 1, 1, 1]} : vector<6x6x2x64xbf16> to vector<4x4x2x64xbf16>
    %197 = vector.shape_cast %196 : vector<4x4x2x64xbf16> to vector<32x64xbf16>
    %198 = vector.extract_strided_slice %187 {offsets = [1, 2, 0, 0], sizes = [4, 4, 2, 64], strides = [1, 1, 1, 1]} : vector<6x6x2x64xbf16> to vector<4x4x2x64xbf16>
    %199 = vector.shape_cast %198 : vector<4x4x2x64xbf16> to vector<32x64xbf16>
    %200 = vector.extract_strided_slice %187 {offsets = [2, 0, 0, 0], sizes = [4, 4, 2, 64], strides = [1, 1, 1, 1]} : vector<6x6x2x64xbf16> to vector<4x4x2x64xbf16>
    %201 = vector.shape_cast %200 : vector<4x4x2x64xbf16> to vector<32x64xbf16>
    %202 = vector.extract_strided_slice %187 {offsets = [2, 1, 0, 0], sizes = [4, 4, 2, 64], strides = [1, 1, 1, 1]} : vector<6x6x2x64xbf16> to vector<4x4x2x64xbf16>
    %203 = vector.shape_cast %202 : vector<4x4x2x64xbf16> to vector<32x64xbf16>
    %204 = vector.extract_strided_slice %187 {offsets = [2, 2, 0, 0], sizes = [4, 4, 2, 64], strides = [1, 1, 1, 1]} : vector<6x6x2x64xbf16> to vector<4x4x2x64xbf16>
    %205 = vector.shape_cast %204 : vector<4x4x2x64xbf16> to vector<32x64xbf16>
    %c0_164 = arith.constant 0 : index
    %c0_165 = arith.constant 0 : index
    %c0_166 = arith.constant 0 : index
    %206 = vector.load %arg5[%c0_164, %c0_165, %c0_166] : memref<9x64x64xbf16, #tpu.memory_space<vmem>>, vector<1x64x64xbf16>
    %207 = vector.shape_cast %206 : vector<1x64x64xbf16> to vector<64x64xbf16>
    %cst_167 = arith.constant dense<0.000000e+00> : vector<32x64xf32>
    %208 = tpu.matmul %189, %207, %cst_167 {dimension_numbers = #tpu.dot_dimension_numbers<[1], [0], [0], [1], [0, 0, 1, 1], [], []>} : vector<32x64xbf16>, vector<64x64xbf16>, vector<32x64xf32> -> vector<32x64xf32>
    %c1_168 = arith.constant 1 : index
    %c0_169 = arith.constant 0 : index
    %c0_170 = arith.constant 0 : index
    %209 = vector.load %arg5[%c1_168, %c0_169, %c0_170] : memref<9x64x64xbf16, #tpu.memory_space<vmem>>, vector<1x64x64xbf16>
    %210 = vector.shape_cast %209 : vector<1x64x64xbf16> to vector<64x64xbf16>
    %cst_171 = arith.constant dense<0.000000e+00> : vector<32x64xf32>
    %211 = tpu.matmul %191, %210, %cst_171 {dimension_numbers = #tpu.dot_dimension_numbers<[1], [0], [0], [1], [0, 0, 1, 1], [], []>} : vector<32x64xbf16>, vector<64x64xbf16>, vector<32x64xf32> -> vector<32x64xf32>
    %212 = arith.addf %208, %211 : vector<32x64xf32>
    %c2_172 = arith.constant 2 : index
    %c0_173 = arith.constant 0 : index
    %c0_174 = arith.constant 0 : index
    %213 = vector.load %arg5[%c2_172, %c0_173, %c0_174] : memref<9x64x64xbf16, #tpu.memory_space<vmem>>, vector<1x64x64xbf16>
    %214 = vector.shape_cast %213 : vector<1x64x64xbf16> to vector<64x64xbf16>
    %cst_175 = arith.constant dense<0.000000e+00> : vector<32x64xf32>
    %215 = tpu.matmul %193, %214, %cst_175 {dimension_numbers = #tpu.dot_dimension_numbers<[1], [0], [0], [1], [0, 0, 1, 1], [], []>} : vector<32x64xbf16>, vector<64x64xbf16>, vector<32x64xf32> -> vector<32x64xf32>
    %216 = arith.addf %212, %215 : vector<32x64xf32>
    %c3_176 = arith.constant 3 : index
    %c0_177 = arith.constant 0 : index
    %c0_178 = arith.constant 0 : index
    %217 = vector.load %arg5[%c3_176, %c0_177, %c0_178] : memref<9x64x64xbf16, #tpu.memory_space<vmem>>, vector<1x64x64xbf16>
    %218 = vector.shape_cast %217 : vector<1x64x64xbf16> to vector<64x64xbf16>
    %cst_179 = arith.constant dense<0.000000e+00> : vector<32x64xf32>
    %219 = tpu.matmul %195, %218, %cst_179 {dimension_numbers = #tpu.dot_dimension_numbers<[1], [0], [0], [1], [0, 0, 1, 1], [], []>} : vector<32x64xbf16>, vector<64x64xbf16>, vector<32x64xf32> -> vector<32x64xf32>
    %220 = arith.addf %216, %219 : vector<32x64xf32>
    %c4_180 = arith.constant 4 : index
    %c0_181 = arith.constant 0 : index
    %c0_182 = arith.constant 0 : index
    %221 = vector.load %arg5[%c4_180, %c0_181, %c0_182] : memref<9x64x64xbf16, #tpu.memory_space<vmem>>, vector<1x64x64xbf16>
    %222 = vector.shape_cast %221 : vector<1x64x64xbf16> to vector<64x64xbf16>
    %cst_183 = arith.constant dense<0.000000e+00> : vector<32x64xf32>
    %223 = tpu.matmul %197, %222, %cst_183 {dimension_numbers = #tpu.dot_dimension_numbers<[1], [0], [0], [1], [0, 0, 1, 1], [], []>} : vector<32x64xbf16>, vector<64x64xbf16>, vector<32x64xf32> -> vector<32x64xf32>
    %224 = arith.addf %220, %223 : vector<32x64xf32>
    %c5_184 = arith.constant 5 : index
    %c0_185 = arith.constant 0 : index
    %c0_186 = arith.constant 0 : index
    %225 = vector.load %arg5[%c5_184, %c0_185, %c0_186] : memref<9x64x64xbf16, #tpu.memory_space<vmem>>, vector<1x64x64xbf16>
    %226 = vector.shape_cast %225 : vector<1x64x64xbf16> to vector<64x64xbf16>
    %cst_187 = arith.constant dense<0.000000e+00> : vector<32x64xf32>
    %227 = tpu.matmul %199, %226, %cst_187 {dimension_numbers = #tpu.dot_dimension_numbers<[1], [0], [0], [1], [0, 0, 1, 1], [], []>} : vector<32x64xbf16>, vector<64x64xbf16>, vector<32x64xf32> -> vector<32x64xf32>
    %228 = arith.addf %224, %227 : vector<32x64xf32>
    %c6_188 = arith.constant 6 : index
    %c0_189 = arith.constant 0 : index
    %c0_190 = arith.constant 0 : index
    %229 = vector.load %arg5[%c6_188, %c0_189, %c0_190] : memref<9x64x64xbf16, #tpu.memory_space<vmem>>, vector<1x64x64xbf16>
    %230 = vector.shape_cast %229 : vector<1x64x64xbf16> to vector<64x64xbf16>
    %cst_191 = arith.constant dense<0.000000e+00> : vector<32x64xf32>
    %231 = tpu.matmul %201, %230, %cst_191 {dimension_numbers = #tpu.dot_dimension_numbers<[1], [0], [0], [1], [0, 0, 1, 1], [], []>} : vector<32x64xbf16>, vector<64x64xbf16>, vector<32x64xf32> -> vector<32x64xf32>
    %232 = arith.addf %228, %231 : vector<32x64xf32>
    %c7_192 = arith.constant 7 : index
    %c0_193 = arith.constant 0 : index
    %c0_194 = arith.constant 0 : index
    %233 = vector.load %arg5[%c7_192, %c0_193, %c0_194] : memref<9x64x64xbf16, #tpu.memory_space<vmem>>, vector<1x64x64xbf16>
    %234 = vector.shape_cast %233 : vector<1x64x64xbf16> to vector<64x64xbf16>
    %cst_195 = arith.constant dense<0.000000e+00> : vector<32x64xf32>
    %235 = tpu.matmul %203, %234, %cst_195 {dimension_numbers = #tpu.dot_dimension_numbers<[1], [0], [0], [1], [0, 0, 1, 1], [], []>} : vector<32x64xbf16>, vector<64x64xbf16>, vector<32x64xf32> -> vector<32x64xf32>
    %236 = arith.addf %232, %235 : vector<32x64xf32>
    %c8_196 = arith.constant 8 : index
    %c0_197 = arith.constant 0 : index
    %c0_198 = arith.constant 0 : index
    %237 = vector.load %arg5[%c8_196, %c0_197, %c0_198] : memref<9x64x64xbf16, #tpu.memory_space<vmem>>, vector<1x64x64xbf16>
    %238 = vector.shape_cast %237 : vector<1x64x64xbf16> to vector<64x64xbf16>
    %cst_199 = arith.constant dense<0.000000e+00> : vector<32x64xf32>
    %239 = tpu.matmul %205, %238, %cst_199 {dimension_numbers = #tpu.dot_dimension_numbers<[1], [0], [0], [1], [0, 0, 1, 1], [], []>} : vector<32x64xbf16>, vector<64x64xbf16>, vector<32x64xf32> -> vector<32x64xf32>
    %240 = arith.addf %236, %239 : vector<32x64xf32>
    %c0_200 = arith.constant 0 : index
    %c0_201 = arith.constant 0 : index
    %241 = vector.load %arg10[%c0_200, %c0_201] : memref<1x64xf32, #tpu.memory_space<vmem>>, vector<1x64xf32>
    %242 = vector.broadcast %241 : vector<1x64xf32> to vector<32x64xf32>
    %243 = arith.mulf %240, %242 : vector<32x64xf32>
    %c0_202 = arith.constant 0 : index
    %c0_203 = arith.constant 0 : index
    %244 = vector.load %arg15[%c0_202, %c0_203] : memref<1x64xf32, #tpu.memory_space<vmem>>, vector<1x64xf32>
    %245 = vector.broadcast %244 : vector<1x64xf32> to vector<32x64xf32>
    %246 = arith.addf %243, %245 : vector<32x64xf32>
    %cst_204 = arith.constant 0.000000e+00 : f32
    %247 = vector.broadcast %cst_204 : f32 to vector<32x64xf32>
    %248 = arith.cmpf ogt, %246, %247 : vector<32x64xf32>
    %cst_205 = arith.constant 2.000000e-01 : f32
    %249 = vector.broadcast %cst_205 : f32 to vector<32x64xf32>
    %250 = arith.mulf %249, %246 : vector<32x64xf32>
    %251 = arith.select %248, %246, %250 : vector<32x64xi1>, vector<32x64xf32>
    %252 = arith.truncf %251 : vector<32x64xf32> to vector<32x64xbf16>
    %253 = vector.shape_cast %252 : vector<32x64xbf16> to vector<4x4x2x64xbf16>
    %cst_206 = arith.constant 0.000000e+00 : bf16
    %254 = vector.broadcast %cst_206 : bf16 to vector<1x6x2x64xbf16>
    %cst_207 = arith.constant 0.000000e+00 : bf16
    %255 = vector.broadcast %cst_207 : bf16 to vector<4x1x2x64xbf16>
    %c0_208 = arith.constant 0 : index
    %c0_209 = arith.constant 0 : index
    %c0_210 = arith.constant 0 : index
    %c0_211 = arith.constant 0 : index
    %256 = vector.load %arg21[%c0_208, %c0_209, %c0_210, %c0_211] : memref<6x6x2x64xbf16, #tpu.memory_space<vmem>>, vector<1x6x2x64xbf16>
    tpu.vector_store %arg21[%c0_208, %c0_209, %c0_210, %c0_211], %254 {strides = array<i32>} : memref<6x6x2x64xbf16, #tpu.memory_space<vmem>>, vector<1x6x2x64xbf16>,
    %c5_212 = arith.constant 5 : index
    %c0_213 = arith.constant 0 : index
    %c0_214 = arith.constant 0 : index
    %c0_215 = arith.constant 0 : index
    %257 = vector.load %arg21[%c5_212, %c0_213, %c0_214, %c0_215] : memref<6x6x2x64xbf16, #tpu.memory_space<vmem>>, vector<1x6x2x64xbf16>
    tpu.vector_store %arg21[%c5_212, %c0_213, %c0_214, %c0_215], %254 {strides = array<i32>} : memref<6x6x2x64xbf16, #tpu.memory_space<vmem>>, vector<1x6x2x64xbf16>,
    %c1_216 = arith.constant 1 : index
    %c0_217 = arith.constant 0 : index
    %c0_218 = arith.constant 0 : index
    %c0_219 = arith.constant 0 : index
    %258 = vector.load %arg21[%c1_216, %c0_217, %c0_218, %c0_219] : memref<6x6x2x64xbf16, #tpu.memory_space<vmem>>, vector<4x1x2x64xbf16>
    tpu.vector_store %arg21[%c1_216, %c0_217, %c0_218, %c0_219], %255 {strides = array<i32>} : memref<6x6x2x64xbf16, #tpu.memory_space<vmem>>, vector<4x1x2x64xbf16>,
    %c1_220 = arith.constant 1 : index
    %c5_221 = arith.constant 5 : index
    %c0_222 = arith.constant 0 : index
    %c0_223 = arith.constant 0 : index
    %259 = vector.load %arg21[%c1_220, %c5_221, %c0_222, %c0_223] : memref<6x6x2x64xbf16, #tpu.memory_space<vmem>>, vector<4x1x2x64xbf16>
    tpu.vector_store %arg21[%c1_220, %c5_221, %c0_222, %c0_223], %255 {strides = array<i32>} : memref<6x6x2x64xbf16, #tpu.memory_space<vmem>>, vector<4x1x2x64xbf16>,
    %c1_224 = arith.constant 1 : index
    %c1_225 = arith.constant 1 : index
    %c0_226 = arith.constant 0 : index
    %c0_227 = arith.constant 0 : index
    %260 = vector.load %arg21[%c1_224, %c1_225, %c0_226, %c0_227] : memref<6x6x2x64xbf16, #tpu.memory_space<vmem>>, vector<4x4x2x64xbf16>
    tpu.vector_store %arg21[%c1_224, %c1_225, %c0_226, %c0_227], %253 {strides = array<i32>} : memref<6x6x2x64xbf16, #tpu.memory_space<vmem>>, vector<4x4x2x64xbf16>,
    %c0_228 = arith.constant 0 : index
    %c0_229 = arith.constant 0 : index
    %c0_230 = arith.constant 0 : index
    %c0_231 = arith.constant 0 : index
    %261 = vector.load %arg21[%c0_228, %c0_229, %c0_230, %c0_231] : memref<6x6x2x64xbf16, #tpu.memory_space<vmem>>, vector<6x6x2x64xbf16>
    %262 = vector.shape_cast %261 : vector<6x6x2x64xbf16> to vector<3x2x6x2x64xbf16>
    %263 = vector.extract_strided_slice %262 {offsets = [0, 0, 0, 0, 0], sizes = [3, 1, 6, 2, 64], strides = [1, 1, 1, 1, 1]} : vector<3x2x6x2x64xbf16> to vector<3x1x6x2x64xbf16>
    %264 = vector.shape_cast %263 : vector<3x1x6x2x64xbf16> to vector<3x6x2x64xbf16>
    %265 = vector.shape_cast %264 : vector<3x6x2x64xbf16> to vector<3x3x2x2x64xbf16>
    %266 = vector.extract_strided_slice %265 {offsets = [0, 0, 0, 0, 0], sizes = [3, 3, 1, 2, 64], strides = [1, 1, 1, 1, 1]} : vector<3x3x2x2x64xbf16> to vector<3x3x1x2x64xbf16>
    %267 = vector.shape_cast %266 : vector<3x3x1x2x64xbf16> to vector<3x3x2x64xbf16>
    %268 = vector.extract_strided_slice %265 {offsets = [0, 0, 1, 0, 0], sizes = [3, 3, 1, 2, 64], strides = [1, 1, 1, 1, 1]} : vector<3x3x2x2x64xbf16> to vector<3x3x1x2x64xbf16>
    %269 = vector.shape_cast %268 : vector<3x3x1x2x64xbf16> to vector<3x3x2x64xbf16>
    %270 = vector.extract_strided_slice %262 {offsets = [0, 1, 0, 0, 0], sizes = [3, 1, 6, 2, 64], strides = [1, 1, 1, 1, 1]} : vector<3x2x6x2x64xbf16> to vector<3x1x6x2x64xbf16>
    %271 = vector.shape_cast %270 : vector<3x1x6x2x64xbf16> to vector<3x6x2x64xbf16>
    %272 = vector.shape_cast %271 : vector<3x6x2x64xbf16> to vector<3x3x2x2x64xbf16>
    %273 = vector.extract_strided_slice %272 {offsets = [0, 0, 0, 0, 0], sizes = [3, 3, 1, 2, 64], strides = [1, 1, 1, 1, 1]} : vector<3x3x2x2x64xbf16> to vector<3x3x1x2x64xbf16>
    %274 = vector.shape_cast %273 : vector<3x3x1x2x64xbf16> to vector<3x3x2x64xbf16>
    %275 = vector.extract_strided_slice %272 {offsets = [0, 0, 1, 0, 0], sizes = [3, 3, 1, 2, 64], strides = [1, 1, 1, 1, 1]} : vector<3x3x2x2x64xbf16> to vector<3x3x1x2x64xbf16>
    %276 = vector.shape_cast %275 : vector<3x3x1x2x64xbf16> to vector<3x3x2x64xbf16>
    %277 = vector.extract_strided_slice %267 {offsets = [0, 0, 0, 0], sizes = [2, 2, 2, 64], strides = [1, 1, 1, 1]} : vector<3x3x2x64xbf16> to vector<2x2x2x64xbf16>
    %278 = vector.shape_cast %277 : vector<2x2x2x64xbf16> to vector<8x64xbf16>
    %279 = vector.extract_strided_slice %269 {offsets = [0, 0, 0, 0], sizes = [2, 2, 2, 64], strides = [1, 1, 1, 1]} : vector<3x3x2x64xbf16> to vector<2x2x2x64xbf16>
    %280 = vector.shape_cast %279 : vector<2x2x2x64xbf16> to vector<8x64xbf16>
    %281 = vector.extract_strided_slice %267 {offsets = [0, 1, 0, 0], sizes = [2, 2, 2, 64], strides = [1, 1, 1, 1]} : vector<3x3x2x64xbf16> to vector<2x2x2x64xbf16>
    %282 = vector.shape_cast %281 : vector<2x2x2x64xbf16> to vector<8x64xbf16>
    %283 = vector.extract_strided_slice %274 {offsets = [0, 0, 0, 0], sizes = [2, 2, 2, 64], strides = [1, 1, 1, 1]} : vector<3x3x2x64xbf16> to vector<2x2x2x64xbf16>
    %284 = vector.shape_cast %283 : vector<2x2x2x64xbf16> to vector<8x64xbf16>
    %285 = vector.extract_strided_slice %276 {offsets = [0, 0, 0, 0], sizes = [2, 2, 2, 64], strides = [1, 1, 1, 1]} : vector<3x3x2x64xbf16> to vector<2x2x2x64xbf16>
    %286 = vector.shape_cast %285 : vector<2x2x2x64xbf16> to vector<8x64xbf16>
    %287 = vector.extract_strided_slice %274 {offsets = [0, 1, 0, 0], sizes = [2, 2, 2, 64], strides = [1, 1, 1, 1]} : vector<3x3x2x64xbf16> to vector<2x2x2x64xbf16>
    %288 = vector.shape_cast %287 : vector<2x2x2x64xbf16> to vector<8x64xbf16>
    %289 = vector.extract_strided_slice %267 {offsets = [1, 0, 0, 0], sizes = [2, 2, 2, 64], strides = [1, 1, 1, 1]} : vector<3x3x2x64xbf16> to vector<2x2x2x64xbf16>
    %290 = vector.shape_cast %289 : vector<2x2x2x64xbf16> to vector<8x64xbf16>
    %291 = vector.extract_strided_slice %269 {offsets = [1, 0, 0, 0], sizes = [2, 2, 2, 64], strides = [1, 1, 1, 1]} : vector<3x3x2x64xbf16> to vector<2x2x2x64xbf16>
    %292 = vector.shape_cast %291 : vector<2x2x2x64xbf16> to vector<8x64xbf16>
    %293 = vector.extract_strided_slice %267 {offsets = [1, 1, 0, 0], sizes = [2, 2, 2, 64], strides = [1, 1, 1, 1]} : vector<3x3x2x64xbf16> to vector<2x2x2x64xbf16>
    %294 = vector.shape_cast %293 : vector<2x2x2x64xbf16> to vector<8x64xbf16>
    %c0_232 = arith.constant 0 : index
    %c0_233 = arith.constant 0 : index
    %c0_234 = arith.constant 0 : index
    %295 = vector.load %arg6[%c0_232, %c0_233, %c0_234] : memref<9x64x64xbf16, #tpu.memory_space<vmem>>, vector<1x64x64xbf16>
    %296 = vector.shape_cast %295 : vector<1x64x64xbf16> to vector<64x64xbf16>
    %cst_235 = arith.constant dense<0.000000e+00> : vector<8x64xf32>
    %297 = tpu.matmul %278, %296, %cst_235 {dimension_numbers = #tpu.dot_dimension_numbers<[1], [0], [0], [1], [0, 0, 1, 1], [], []>} : vector<8x64xbf16>, vector<64x64xbf16>, vector<8x64xf32> -> vector<8x64xf32>
    %c1_236 = arith.constant 1 : index
    %c0_237 = arith.constant 0 : index
    %c0_238 = arith.constant 0 : index
    %298 = vector.load %arg6[%c1_236, %c0_237, %c0_238] : memref<9x64x64xbf16, #tpu.memory_space<vmem>>, vector<1x64x64xbf16>
    %299 = vector.shape_cast %298 : vector<1x64x64xbf16> to vector<64x64xbf16>
    %cst_239 = arith.constant dense<0.000000e+00> : vector<8x64xf32>
    %300 = tpu.matmul %280, %299, %cst_239 {dimension_numbers = #tpu.dot_dimension_numbers<[1], [0], [0], [1], [0, 0, 1, 1], [], []>} : vector<8x64xbf16>, vector<64x64xbf16>, vector<8x64xf32> -> vector<8x64xf32>
    %301 = arith.addf %297, %300 : vector<8x64xf32>
    %c2_240 = arith.constant 2 : index
    %c0_241 = arith.constant 0 : index
    %c0_242 = arith.constant 0 : index
    %302 = vector.load %arg6[%c2_240, %c0_241, %c0_242] : memref<9x64x64xbf16, #tpu.memory_space<vmem>>, vector<1x64x64xbf16>
    %303 = vector.shape_cast %302 : vector<1x64x64xbf16> to vector<64x64xbf16>
    %cst_243 = arith.constant dense<0.000000e+00> : vector<8x64xf32>
    %304 = tpu.matmul %282, %303, %cst_243 {dimension_numbers = #tpu.dot_dimension_numbers<[1], [0], [0], [1], [0, 0, 1, 1], [], []>} : vector<8x64xbf16>, vector<64x64xbf16>, vector<8x64xf32> -> vector<8x64xf32>
    %305 = arith.addf %301, %304 : vector<8x64xf32>
    %c3_244 = arith.constant 3 : index
    %c0_245 = arith.constant 0 : index
    %c0_246 = arith.constant 0 : index
    %306 = vector.load %arg6[%c3_244, %c0_245, %c0_246] : memref<9x64x64xbf16, #tpu.memory_space<vmem>>, vector<1x64x64xbf16>
    %307 = vector.shape_cast %306 : vector<1x64x64xbf16> to vector<64x64xbf16>
    %cst_247 = arith.constant dense<0.000000e+00> : vector<8x64xf32>
    %308 = tpu.matmul %284, %307, %cst_247 {dimension_numbers = #tpu.dot_dimension_numbers<[1], [0], [0], [1], [0, 0, 1, 1], [], []>} : vector<8x64xbf16>, vector<64x64xbf16>, vector<8x64xf32> -> vector<8x64xf32>
    %309 = arith.addf %305, %308 : vector<8x64xf32>
    %c4_248 = arith.constant 4 : index
    %c0_249 = arith.constant 0 : index
    %c0_250 = arith.constant 0 : index
    %310 = vector.load %arg6[%c4_248, %c0_249, %c0_250] : memref<9x64x64xbf16, #tpu.memory_space<vmem>>, vector<1x64x64xbf16>
    %311 = vector.shape_cast %310 : vector<1x64x64xbf16> to vector<64x64xbf16>
    %cst_251 = arith.constant dense<0.000000e+00> : vector<8x64xf32>
    %312 = tpu.matmul %286, %311, %cst_251 {dimension_numbers = #tpu.dot_dimension_numbers<[1], [0], [0], [1], [0, 0, 1, 1], [], []>} : vector<8x64xbf16>, vector<64x64xbf16>, vector<8x64xf32> -> vector<8x64xf32>
    %313 = arith.addf %309, %312 : vector<8x64xf32>
    %c5_252 = arith.constant 5 : index
    %c0_253 = arith.constant 0 : index
    %c0_254 = arith.constant 0 : index
    %314 = vector.load %arg6[%c5_252, %c0_253, %c0_254] : memref<9x64x64xbf16, #tpu.memory_space<vmem>>, vector<1x64x64xbf16>
    %315 = vector.shape_cast %314 : vector<1x64x64xbf16> to vector<64x64xbf16>
    %cst_255 = arith.constant dense<0.000000e+00> : vector<8x64xf32>
    %316 = tpu.matmul %288, %315, %cst_255 {dimension_numbers = #tpu.dot_dimension_numbers<[1], [0], [0], [1], [0, 0, 1, 1], [], []>} : vector<8x64xbf16>, vector<64x64xbf16>, vector<8x64xf32> -> vector<8x64xf32>
    %317 = arith.addf %313, %316 : vector<8x64xf32>
    %c6_256 = arith.constant 6 : index
    %c0_257 = arith.constant 0 : index
    %c0_258 = arith.constant 0 : index
    %318 = vector.load %arg6[%c6_256, %c0_257, %c0_258] : memref<9x64x64xbf16, #tpu.memory_space<vmem>>, vector<1x64x64xbf16>
    %319 = vector.shape_cast %318 : vector<1x64x64xbf16> to vector<64x64xbf16>
    %cst_259 = arith.constant dense<0.000000e+00> : vector<8x64xf32>
    %320 = tpu.matmul %290, %319, %cst_259 {dimension_numbers = #tpu.dot_dimension_numbers<[1], [0], [0], [1], [0, 0, 1, 1], [], []>} : vector<8x64xbf16>, vector<64x64xbf16>, vector<8x64xf32> -> vector<8x64xf32>
    %321 = arith.addf %317, %320 : vector<8x64xf32>
    %c7_260 = arith.constant 7 : index
    %c0_261 = arith.constant 0 : index
    %c0_262 = arith.constant 0 : index
    %322 = vector.load %arg6[%c7_260, %c0_261, %c0_262] : memref<9x64x64xbf16, #tpu.memory_space<vmem>>, vector<1x64x64xbf16>
    %323 = vector.shape_cast %322 : vector<1x64x64xbf16> to vector<64x64xbf16>
    %cst_263 = arith.constant dense<0.000000e+00> : vector<8x64xf32>
    %324 = tpu.matmul %292, %323, %cst_263 {dimension_numbers = #tpu.dot_dimension_numbers<[1], [0], [0], [1], [0, 0, 1, 1], [], []>} : vector<8x64xbf16>, vector<64x64xbf16>, vector<8x64xf32> -> vector<8x64xf32>
    %325 = arith.addf %321, %324 : vector<8x64xf32>
    %c8_264 = arith.constant 8 : index
    %c0_265 = arith.constant 0 : index
    %c0_266 = arith.constant 0 : index
    %326 = vector.load %arg6[%c8_264, %c0_265, %c0_266] : memref<9x64x64xbf16, #tpu.memory_space<vmem>>, vector<1x64x64xbf16>
    %327 = vector.shape_cast %326 : vector<1x64x64xbf16> to vector<64x64xbf16>
    %cst_267 = arith.constant dense<0.000000e+00> : vector<8x64xf32>
    %328 = tpu.matmul %294, %327, %cst_267 {dimension_numbers = #tpu.dot_dimension_numbers<[1], [0], [0], [1], [0, 0, 1, 1], [], []>} : vector<8x64xbf16>, vector<64x64xbf16>, vector<8x64xf32> -> vector<8x64xf32>
    %329 = arith.addf %325, %328 : vector<8x64xf32>
    %c0_268 = arith.constant 0 : index
    %c0_269 = arith.constant 0 : index
    %330 = vector.load %arg11[%c0_268, %c0_269] : memref<1x64xf32, #tpu.memory_space<vmem>>, vector<1x64xf32>
    %331 = vector.broadcast %330 : vector<1x64xf32> to vector<8x64xf32>
    %332 = arith.mulf %329, %331 : vector<8x64xf32>
    %c0_270 = arith.constant 0 : index
    %c0_271 = arith.constant 0 : index
    %333 = vector.load %arg16[%c0_270, %c0_271] : memref<1x64xf32, #tpu.memory_space<vmem>>, vector<1x64xf32>
    %334 = vector.broadcast %333 : vector<1x64xf32> to vector<8x64xf32>
    %335 = arith.addf %332, %334 : vector<8x64xf32>
    %cst_272 = arith.constant 0.000000e+00 : f32
    %336 = vector.broadcast %cst_272 : f32 to vector<8x64xf32>
    %337 = arith.cmpf ogt, %335, %336 : vector<8x64xf32>
    %cst_273 = arith.constant 2.000000e-01 : f32
    %338 = vector.broadcast %cst_273 : f32 to vector<8x64xf32>
    %339 = arith.mulf %338, %335 : vector<8x64xf32>
    %340 = arith.select %337, %335, %339 : vector<8x64xi1>, vector<8x64xf32>
    %341 = vector.shape_cast %340 : vector<8x64xf32> to vector<2x2x2x64xf32>
    %c0_274 = arith.constant 0 : index
    %c0_275 = arith.constant 0 : index
    %c0_276 = arith.constant 0 : index
    %c0_277 = arith.constant 0 : index
    %342 = vector.load %arg17[%c0_274, %c0_275, %c0_276, %c0_277] : memref<2x2x2x64xf32, #tpu.memory_space<vmem>>, vector<2x2x2x64xf32>
    tpu.vector_store %arg17[%c0_274, %c0_275, %c0_276, %c0_277], %341 {strides = array<i32>} : memref<2x2x2x64xf32, #tpu.memory_space<vmem>>, vector<2x2x2x64xf32>,
    return
  }
  func.func @transform_0(%arg0: i32) -> (i32, i32, i32, i32) {
    %c0_i32 = arith.constant 0 : i32
    %c0_i32_0 = arith.constant 0 : i32
    %c0_i32_1 = arith.constant 0 : i32
    %c0_i32_2 = arith.constant 0 : i32
    return %c0_i32, %c0_i32_0, %arg0, %c0_i32_1 : i32, i32, i32, i32
  }
  func.func @transform_1(%arg0: i32) -> (i32, i32) {
    %c0_i32 = arith.constant 0 : i32
    %c0_i32_0 = arith.constant 0 : i32
    %c0_i32_1 = arith.constant 0 : i32
    return %c0_i32, %c0_i32_0 : i32, i32
  }
  func.func @transform_2(%arg0: i32) -> (i32, i32, i32) {
    %c0_i32 = arith.constant 0 : i32
    %c0_i32_0 = arith.constant 0 : i32
    %c0_i32_1 = arith.constant 0 : i32
    %c0_i32_2 = arith.constant 0 : i32
    return %c0_i32, %c0_i32_0, %c0_i32_1 : i32, i32, i32
  }
  func.func @transform_3(%arg0: i32) -> (i32, i32, i32) {
    %c0_i32 = arith.constant 0 : i32
    %c0_i32_0 = arith.constant 0 : i32
    %c0_i32_1 = arith.constant 0 : i32
    %c0_i32_2 = arith.constant 0 : i32
    return %c0_i32, %c0_i32_0, %c0_i32_1 : i32, i32, i32
  }
  func.func @transform_4(%arg0: i32) -> (i32, i32, i32) {
    %c0_i32 = arith.constant 0 : i32
    %c0_i32_0 = arith.constant 0 : i32
    %c0_i32_1 = arith.constant 0 : i32
    %c0_i32_2 = arith.constant 0 : i32
    return %c0_i32, %c0_i32_0, %c0_i32_1 : i32, i32, i32
  }
  func.func @transform_5(%arg0: i32) -> (i32, i32, i32) {
    %c0_i32 = arith.constant 0 : i32
    %c0_i32_0 = arith.constant 0 : i32
    %c0_i32_1 = arith.constant 0 : i32
    %c0_i32_2 = arith.constant 0 : i32
    return %c0_i32, %c0_i32_0, %c0_i32_1 : i32, i32, i32
  }
  func.func @transform_6(%arg0: i32) -> (i32, i32) {
    %c0_i32 = arith.constant 0 : i32
    %c0_i32_0 = arith.constant 0 : i32
    %c0_i32_1 = arith.constant 0 : i32
    return %c0_i32, %c0_i32_0 : i32, i32
  }
  func.func @transform_7(%arg0: i32) -> (i32, i32) {
    %c0_i32 = arith.constant 0 : i32
    %c0_i32_0 = arith.constant 0 : i32
    %c0_i32_1 = arith.constant 0 : i32
    return %c0_i32, %c0_i32_0 : i32, i32
  }
  func.func @transform_8(%arg0: i32) -> (i32, i32) {
    %c0_i32 = arith.constant 0 : i32
    %c0_i32_0 = arith.constant 0 : i32
    %c0_i32_1 = arith.constant 0 : i32
    return %c0_i32, %c0_i32_0 : i32, i32
  }
  func.func @transform_9(%arg0: i32) -> (i32, i32) {
    %c0_i32 = arith.constant 0 : i32
    %c0_i32_0 = arith.constant 0 : i32
    %c0_i32_1 = arith.constant 0 : i32
    return %c0_i32, %c0_i32_0 : i32, i32
  }
  func.func @transform_10(%arg0: i32) -> (i32, i32) {
    %c0_i32 = arith.constant 0 : i32
    %c0_i32_0 = arith.constant 0 : i32
    %c0_i32_1 = arith.constant 0 : i32
    return %c0_i32, %c0_i32_0 : i32, i32
  }
  func.func @transform_11(%arg0: i32) -> (i32, i32) {
    %c0_i32 = arith.constant 0 : i32
    %c0_i32_0 = arith.constant 0 : i32
    %c0_i32_1 = arith.constant 0 : i32
    return %c0_i32, %c0_i32_0 : i32, i32
  }
  func.func @transform_12(%arg0: i32) -> (i32, i32) {
    %c0_i32 = arith.constant 0 : i32
    %c0_i32_0 = arith.constant 0 : i32
    %c0_i32_1 = arith.constant 0 : i32
    return %c0_i32, %c0_i32_0 : i32, i32
  }
  func.func @transform_13(%arg0: i32) -> (i32, i32) {
    %c0_i32 = arith.constant 0 : i32
    %c0_i32_0 = arith.constant 0 : i32
    %c0_i32_1 = arith.constant 0 : i32
    return %c0_i32, %c0_i32_0 : i32, i32
  }
  func.func @transform_14(%arg0: i32) -> (i32, i32) {
    %c0_i32 = arith.constant 0 : i32
    %c0_i32_0 = arith.constant 0 : i32
    %c0_i32_1 = arith.constant 0 : i32
    return %c0_i32, %c0_i32_0 : i32, i32
  }
  func.func @transform_15(%arg0: i32) -> (i32, i32) {
    %c0_i32 = arith.constant 0 : i32
    %c0_i32_0 = arith.constant 0 : i32
    %c0_i32_1 = arith.constant 0 : i32
    return %c0_i32, %c0_i32_0 : i32, i32
  }
  func.func @transform_16(%arg0: i32) -> (i32, i32, i32, i32) {
    %c0_i32 = arith.constant 0 : i32
    %c0_i32_0 = arith.constant 0 : i32
    %c0_i32_1 = arith.constant 0 : i32
    %c0_i32_2 = arith.constant 0 : i32
    return %c0_i32, %c0_i32_0, %arg0, %c0_i32_1 : i32, i32, i32, i32
  }
}

</mosaic_0001>

<llo_original>
// kernel: tpu_custom_call.1
$region0: #{tpu_custom_call.1}
  #allocation0 [shape = 'u32[]', space=smem, size = 0x4, offset = 0x4, fixed_abs, tag = 'smem constant byte address 0x4 - core index']
  #allocation1 [shape = 'u32[144,128]{1,0:T(1,128)}', space=vmem, size = 0x12000, scoped, tag = 'internal scratch']
  #allocation2 [shape = 'bf16[10,10,2,32]{3,2,1,0:T(2,128)(2,1)}', space=vmem, size = 0xc800, scoped, tag = 'scratch operand']
  #allocation3 [shape = 'bf16[10,10,2,32]{3,2,1,0:T(2,128)(2,1)}', space=vmem, size = 0xc800, scoped, tag = 'scratch operand']
  #allocation4 [shape = 'bf16[6,6,2,64]{3,2,1,0:T(2,128)(2,1)}', space=vmem, size = 0x4800, scoped, tag = 'scratch operand']
  #allocation5 [shape = 'bf16[6,6,2,64]{3,2,1,0:T(2,128)(2,1)}', space=vmem, size = 0x4800, scoped, tag = 'scratch operand']
  %s0 = inlined_call_operand.hbm [shape: bf16[8,8,2,36], index: 0, kind: input, shape index: {}]
  %s1 = inlined_call_operand.vmem [shape: bf16[36,32], index: 1, kind: input, shape index: {}]
  %s2 = inlined_call_operand.hbm [shape: bf16[9,32,32], index: 2, kind: input, shape index: {}]
  %s3 = inlined_call_operand.hbm [shape: bf16[9,32,64], index: 3, kind: input, shape index: {}]
  %s4 = inlined_call_operand.hbm [shape: bf16[9,64,64], index: 4, kind: input, shape index: {}]
  %s5 = inlined_call_operand.hbm [shape: bf16[9,64,64], index: 5, kind: input, shape index: {}]
  %s6 = inlined_call_operand.vmem [shape: f32[1,32], index: 6, kind: input, shape index: {}]
  %s7 = inlined_call_operand.vmem [shape: f32[1,32], index: 7, kind: input, shape index: {}]
  %s8 = inlined_call_operand.vmem [shape: f32[1,64], index: 8, kind: input, shape index: {}]
  %s9 = inlined_call_operand.vmem [shape: f32[1,64], index: 9, kind: input, shape index: {}]
  %s10 = inlined_call_operand.vmem [shape: f32[1,64], index: 10, kind: input, shape index: {}]
  %s11 = inlined_call_operand.vmem [shape: f32[1,32], index: 11, kind: input, shape index: {}]
  %s12 = inlined_call_operand.vmem [shape: f32[1,32], index: 12, kind: input, shape index: {}]
  %s13 = inlined_call_operand.vmem [shape: f32[1,64], index: 13, kind: input, shape index: {}]
  %s14 = inlined_call_operand.vmem [shape: f32[1,64], index: 14, kind: input, shape index: {}]
  %s15 = inlined_call_operand.vmem [shape: f32[1,64], index: 15, kind: input, shape index: {}]
  %s16 = inlined_call_operand.hbm [shape: f32[2,2,2,64], index: 16, kind: output, shape index: {}]
  %s17 = sld [smem:[#allocation0]]
  $region94: #{tpu_custom_call.1} parent=0
    _
  %s19 = ssub.s32 1, %s17
  %s20 = scalar_select 0, %s19, %s17
  $region1: #{tpu_custom_call.1} parent=0
    #allocation6 [shape = 'u8[32768]{0}', space=vmem, size = 0x8000, scoped, tag = 'input window, operand 0, single buffered']
    #allocation7 [shape = 's32[1]{0}', space=sflag, size = 0x4, scoped, tag = 'scoped memory for tpu_custom_call.1']
    #allocation8 [shape = 's32[1]{0}', space=sflag, size = 0x4, scoped, tag = 'scoped memory for tpu_custom_call.1']
    #allocation9 [shape = 'u8[73728]{0}', space=vmem, size = 0x12000, scoped, tag = 'input window, operand 2, single buffered']
    #allocation10 [shape = 's32[1]{0}', space=sflag, size = 0x4, scoped, tag = 'scoped memory for tpu_custom_call.1']
    #allocation11 [shape = 'u8[73728]{0}', space=vmem, size = 0x12000, scoped, tag = 'input window, operand 3, single buffered']
    #allocation12 [shape = 'u8[147456]{0}', space=vmem, size = 0x24000, scoped, tag = 'input window, operand 4, single buffered']
    #allocation13 [shape = 's32[1]{0}', space=sflag, size = 0x4, scoped, tag = 'scoped memory for tpu_custom_call.1']
    #allocation14 [shape = 'u8[147456]{0}', space=vmem, size = 0x24000, scoped, tag = 'input window, operand 5, single buffered']
    #allocation15 [shape = 'u8[4096]{0}', space=vmem, size = 0x1000, scoped, tag = 'output window, operand 0, single buffered']
    %21 = vsyncpa [#allocation7], 0
    %22 = vsyncpa [#allocation10], 0
    %23 = vsyncpa [#allocation13], 0
    %24 = vsyncpa [#allocation8], 0
    // Predicated region
    $region2: #{tpu_custom_call.1} parent=1 // pred_check
      _
    $region3: #{tpu_custom_call.1} parent=1 // pred_check_branch
      %26 = sbr.rel (0) target = $region5
    $region4: #{tpu_custom_call.1} parent=1 // pred_region
      %s28 = ssub.s32 1024, 1024
      %29 = vsyncadd [#allocation7], %s28
      %s30 = sshll.u32 [#allocation6], 4
      %s31 = int_to_ptr.vmem [resolvable:$true] %s30
      %36 = dma.hbm_to_vmem [thread:$0]  %s0, 1024, %s31, [#allocation7], 16, 16, 1
    $region5: #{tpu_custom_call.1} parent=1 // pred_fallthru
      _
    // Predicated region
    $region6: #{tpu_custom_call.1} parent=1 // pred_check
      _
    $region7: #{tpu_custom_call.1} parent=1 // pred_check_branch
      %38 = sbr.rel (0) target = $region9
    $region8: #{tpu_custom_call.1} parent=1 // pred_region
      _
    $region9: #{tpu_custom_call.1} parent=1 // pred_fallthru
      _
    // Predicated region
    $region10: #{tpu_custom_call.1} parent=1 // pred_check
      _
    $region11: #{tpu_custom_call.1} parent=1 // pred_check_branch
      %40 = sbr.rel (0) target = $region13
    $region12: #{tpu_custom_call.1} parent=1 // pred_region
      %s42 = ssub.s32 2304, 2304
      %43 = vsyncadd [#allocation10], %s42
      %s44 = sshll.u32 [#allocation9], 4
      %s45 = int_to_ptr.vmem [resolvable:$true] %s44
      %50 = dma.hbm_to_vmem [thread:$0]  %s2, 2304, %s45, [#allocation10], 64, 64, 4
    $region13: #{tpu_custom_call.1} parent=1 // pred_fallthru
      _
    // Predicated region
    $region14: #{tpu_custom_call.1} parent=1 // pred_check
      _
    $region15: #{tpu_custom_call.1} parent=1 // pred_check_branch
      %52 = sbr.rel (0) target = $region17
    $region16: #{tpu_custom_call.1} parent=1 // pred_region
      %s54 = ssub.s32 2304, 2304
      %55 = vsyncadd [#allocation10], %s54
      %s56 = sshll.u32 [#allocation11], 4
      %s57 = int_to_ptr.vmem [resolvable:$true] %s56
      %62 = dma.hbm_to_vmem [thread:$0]  %s3, 2304, %s57, [#allocation10], 64, 64, 4
    $region17: #{tpu_custom_call.1} parent=1 // pred_fallthru
      _
    // Predicated region
    $region18: #{tpu_custom_call.1} parent=1 // pred_check
      _
    $region19: #{tpu_custom_call.1} parent=1 // pred_check_branch
      %64 = sbr.rel (0) target = $region21
    $region20: #{tpu_custom_call.1} parent=1 // pred_region
      %s66 = ssub.s32 4608, 4608
      %67 = vsyncadd [#allocation13], %s66
      %s68 = sshll.u32 [#allocation12], 4
      %s69 = int_to_ptr.vmem [resolvable:$true] %s68
      %74 = dma.hbm_to_vmem [thread:$0]  %s4, 4608, %s69, [#allocation13], 64, 64, 4
    $region21: #{tpu_custom_call.1} parent=1 // pred_fallthru
      _
    // Predicated region
    $region22: #{tpu_custom_call.1} parent=1 // pred_check
      _
    $region23: #{tpu_custom_call.1} parent=1 // pred_check_branch
      %76 = sbr.rel (0) target = $region25
    $region24: #{tpu_custom_call.1} parent=1 // pred_region
      %s78 = ssub.s32 4608, 4608
      %79 = vsyncadd [#allocation13], %s78
      %s80 = sshll.u32 [#allocation14], 4
      %s81 = int_to_ptr.vmem [resolvable:$true] %s80
      %86 = dma.hbm_to_vmem [thread:$0]  %s5, 4608, %s81, [#allocation13], 64, 64, 4
    $region25: #{tpu_custom_call.1} parent=1 // pred_fallthru
      _
    // Predicated region
    $region26: #{tpu_custom_call.1} parent=1 // pred_check
      _
    $region27: #{tpu_custom_call.1} parent=1 // pred_check_branch
      %88 = sbr.rel (0) target = $region29
    $region28: #{tpu_custom_call.1} parent=1 // pred_region
      _
    $region29: #{tpu_custom_call.1} parent=1 // pred_fallthru
      _
    // Predicated region
    $region30: #{tpu_custom_call.1} parent=1 // pred_check
      _
    $region31: #{tpu_custom_call.1} parent=1 // pred_check_branch
      %90 = sbr.rel (0) target = $region33
    $region32: #{tpu_custom_call.1} parent=1 // pred_region
      _
    $region33: #{tpu_custom_call.1} parent=1 // pred_fallthru
      _
    // Predicated region
    $region34: #{tpu_custom_call.1} parent=1 // pred_check
      _
    $region35: #{tpu_custom_call.1} parent=1 // pred_check_branch
      %92 = sbr.rel (0) target = $region37
    $region36: #{tpu_custom_call.1} parent=1 // pred_region
      _
    $region37: #{tpu_custom_call.1} parent=1 // pred_fallthru
      _
    // Predicated region
    $region38: #{tpu_custom_call.1} parent=1 // pred_check
      _
    $region39: #{tpu_custom_call.1} parent=1 // pred_check_branch
      %94 = sbr.rel (0) target = $region41
    $region40: #{tpu_custom_call.1} parent=1 // pred_region
      _
    $region41: #{tpu_custom_call.1} parent=1 // pred_fallthru
      _
    // Predicated region
    $region42: #{tpu_custom_call.1} parent=1 // pred_check
      _
    $region43: #{tpu_custom_call.1} parent=1 // pred_check_branch
      %96 = sbr.rel (0) target = $region45
    $region44: #{tpu_custom_call.1} parent=1 // pred_region
      _
    $region45: #{tpu_custom_call.1} parent=1 // pred_fallthru
      _
    // Predicated region
    $region46: #{tpu_custom_call.1} parent=1 // pred_check
      _
    $region47: #{tpu_custom_call.1} parent=1 // pred_check_branch
      %98 = sbr.rel (0) target = $region49
    $region48: #{tpu_custom_call.1} parent=1 // pred_region
      _
    $region49: #{tpu_custom_call.1} parent=1 // pred_fallthru
      _
    // Predicated region
    $region50: #{tpu_custom_call.1} parent=1 // pred_check
      _
    $region51: #{tpu_custom_call.1} parent=1 // pred_check_branch
      %100 = sbr.rel (0) target = $region53
    $region52: #{tpu_custom_call.1} parent=1 // pred_region
      _
    $region53: #{tpu_custom_call.1} parent=1 // pred_fallthru
      _
    // Predicated region
    $region54: #{tpu_custom_call.1} parent=1 // pred_check
      _
    $region55: #{tpu_custom_call.1} parent=1 // pred_check_branch
      %102 = sbr.rel (0) target = $region57
    $region56: #{tpu_custom_call.1} parent=1 // pred_region
      _
    $region57: #{tpu_custom_call.1} parent=1 // pred_fallthru
      _
    // Predicated region
    $region58: #{tpu_custom_call.1} parent=1 // pred_check
      _
    $region59: #{tpu_custom_call.1} parent=1 // pred_check_branch
      %104 = sbr.rel (0) target = $region61
    $region60: #{tpu_custom_call.1} parent=1 // pred_region
      _
    $region61: #{tpu_custom_call.1} parent=1 // pred_fallthru
      _
    // Predicated region
    $region62: #{tpu_custom_call.1} parent=1 // pred_check
      _
    $region63: #{tpu_custom_call.1} parent=1 // pred_check_branch
      %106 = sbr.rel (0) target = $region65
    $region64: #{tpu_custom_call.1} parent=1 // pred_region
      _
    $region65: #{tpu_custom_call.1} parent=1 // pred_fallthru
      _
    // Predicated region
    $region66: #{tpu_custom_call.1} parent=1 // pred_check
      _
    $region67: #{tpu_custom_call.1} parent=1 // pred_check_branch
      %108 = sbr.rel (0) target = $region69
    $region68: #{tpu_custom_call.1} parent=1 // pred_region
      %109 = dma.done [#allocation7], 1024
    $region69: #{tpu_custom_call.1} parent=1 // pred_fallthru
      _
    // Predicated region
    $region70: #{tpu_custom_call.1} parent=1 // pred_check
      _
    $region71: #{tpu_custom_call.1} parent=1 // pred_check_branch
      %111 = sbr.rel (0) target = $region73
    $region72: #{tpu_custom_call.1} parent=1 // pred_region
      %112 = dma.done [#allocation10], 2304
    $region73: #{tpu_custom_call.1} parent=1 // pred_fallthru
      _
    // Predicated region
    $region74: #{tpu_custom_call.1} parent=1 // pred_check
      _
    $region75: #{tpu_custom_call.1} parent=1 // pred_check_branch
      %114 = sbr.rel (0) target = $region77
    $region76: #{tpu_custom_call.1} parent=1 // pred_region
      %115 = dma.done [#allocation10], 2304
    $region77: #{tpu_custom_call.1} parent=1 // pred_fallthru
      _
    // Predicated region
    $region78: #{tpu_custom_call.1} parent=1 // pred_check
      _
    $region79: #{tpu_custom_call.1} parent=1 // pred_check_branch
      %117 = sbr.rel (0) target = $region81
    $region80: #{tpu_custom_call.1} parent=1 // pred_region
      %118 = dma.done [#allocation13], 4608
    $region81: #{tpu_custom_call.1} parent=1 // pred_fallthru
      _
    // Predicated region
    $region82: #{tpu_custom_call.1} parent=1 // pred_check
      _
    $region83: #{tpu_custom_call.1} parent=1 // pred_check_branch
      %120 = sbr.rel (0) target = $region85
    $region84: #{tpu_custom_call.1} parent=1 // pred_region
      %121 = dma.done [#allocation13], 4608
    $region85: #{tpu_custom_call.1} parent=1 // pred_fallthru
      _
    %v123 = vld [vmem:[#allocation6] sm:$0x1]
    %v124 = vld [vmem:[#allocation6 + $0x1] sm:$0x1]
    %v125 = vld [vmem:[#allocation6 + $0x2] sm:$0x1]
    %v126 = vld [vmem:[#allocation6 + $0x3] sm:$0x1]
    %v127 = vld [vmem:[#allocation6 + $0x4] sm:$0x1]
    %v128 = vld [vmem:[#allocation6 + $0x5] sm:$0x1]
    %v129 = vld [vmem:[#allocation6 + $0x6] sm:$0x1]
    %v130 = vld [vmem:[#allocation6 + $0x7] sm:$0x1]
    %v131 = vld [vmem:[#allocation6 + $0x8] sm:$0x1]
    %v132 = vld [vmem:[#allocation6 + $0x9] sm:$0x1]
    %v133 = vld [vmem:[#allocation6 + $0xa] sm:$0x1]
    %v134 = vld [vmem:[#allocation6 + $0xb] sm:$0x1]
    %v135 = vld [vmem:[#allocation6 + $0xc] sm:$0x1]
    %v136 = vld [vmem:[#allocation6 + $0xd] sm:$0x1]
    %v137 = vld [vmem:[#allocation6 + $0xe] sm:$0x1]
    %v138 = vld [vmem:[#allocation6 + $0xf] sm:$0x1]
    %v139 = vld [vmem:[#allocation6 + $0x10] sm:$0x1]
    %v140 = vld [vmem:[#allocation6 + $0x11] sm:$0x1]
    %v141 = vld [vmem:[#allocation6 + $0x12] sm:$0x1]
    %v142 = vld [vmem:[#allocation6 + $0x13] sm:$0x1]
    %v143 = vld [vmem:[#allocation6 + $0x14] sm:$0x1]
    %v144 = vld [vmem:[#allocation6 + $0x15] sm:$0x1]
    %v145 = vld [vmem:[#allocation6 + $0x16] sm:$0x1]
    %v146 = vld [vmem:[#allocation6 + $0x17] sm:$0x1]
    %v147 = vld [vmem:[#allocation6 + $0x18] sm:$0x1]
    %v148 = vld [vmem:[#allocation6 + $0x19] sm:$0x1]
    %v149 = vld [vmem:[#allocation6 + $0x1a] sm:$0x1]
    %v150 = vld [vmem:[#allocation6 + $0x1b] sm:$0x1]
    %v151 = vld [vmem:[#allocation6 + $0x1c] sm:$0x1]
    %v152 = vld [vmem:[#allocation6 + $0x1d] sm:$0x1]
    %v153 = vld [vmem:[#allocation6 + $0x1e] sm:$0x1]
    %v154 = vld [vmem:[#allocation6 + $0x1f] sm:$0x1]
    %v155 = vld [vmem:[#allocation6 + $0x20] sm:$0x1]
    %v156 = vld [vmem:[#allocation6 + $0x21] sm:$0x1]
    %v157 = vld [vmem:[#allocation6 + $0x22] sm:$0x1]
    %v158 = vld [vmem:[#allocation6 + $0x23] sm:$0x1]
    %v159 = vld [vmem:[#allocation6 + $0x24] sm:$0x1]
    %v160 = vld [vmem:[#allocation6 + $0x25] sm:$0x1]
    %v161 = vld [vmem:[#allocation6 + $0x26] sm:$0x1]
    %v162 = vld [vmem:[#allocation6 + $0x27] sm:$0x1]
    %v163 = vld [vmem:[#allocation6 + $0x28] sm:$0x1]
    %v164 = vld [vmem:[#allocation6 + $0x29] sm:$0x1]
    %v165 = vld [vmem:[#allocation6 + $0x2a] sm:$0x1]
    %v166 = vld [vmem:[#allocation6 + $0x2b] sm:$0x1]
    %v167 = vld [vmem:[#allocation6 + $0x2c] sm:$0x1]
    %v168 = vld [vmem:[#allocation6 + $0x2d] sm:$0x1]
    %v169 = vld [vmem:[#allocation6 + $0x2e] sm:$0x1]
    %v170 = vld [vmem:[#allocation6 + $0x2f] sm:$0x1]
    %v171 = vld [vmem:[#allocation6 + $0x30] sm:$0x1]
    %v172 = vld [vmem:[#allocation6 + $0x31] sm:$0x1]
    %v173 = vld [vmem:[#allocation6 + $0x32] sm:$0x1]
    %v174 = vld [vmem:[#allocation6 + $0x33] sm:$0x1]
    %v175 = vld [vmem:[#allocation6 + $0x34] sm:$0x1]
    %v176 = vld [vmem:[#allocation6 + $0x35] sm:$0x1]
    %v177 = vld [vmem:[#allocation6 + $0x36] sm:$0x1]
    %v178 = vld [vmem:[#allocation6 + $0x37] sm:$0x1]
    %v179 = vld [vmem:[#allocation6 + $0x38] sm:$0x1]
    %v180 = vld [vmem:[#allocation6 + $0x39] sm:$0x1]
    %v181 = vld [vmem:[#allocation6 + $0x3a] sm:$0x1]
    %v182 = vld [vmem:[#allocation6 + $0x3b] sm:$0x1]
    %v183 = vld [vmem:[#allocation6 + $0x3c] sm:$0x1]
    %v184 = vld [vmem:[#allocation6 + $0x3d] sm:$0x1]
    %v185 = vld [vmem:[#allocation6 + $0x3e] sm:$0x1]
    %v186 = vld [vmem:[#allocation6 + $0x3f] sm:$0x1]
    %v187 = vld [vmem:[%s1] sm:$0xf]
    %v188 = vld [vmem:[%s1 + $0x4] sm:$0xf]
    %v189 = vld [vmem:[%s1 + $0x8] sm:$0xf]
    %v190 = vld [vmem:[%s1 + $0xc] sm:$0xf]
    %v191 = vld [vmem:[%s1 + $0x10] sm:$0x3]
    %v256 = vcombine.low %v123, %v124
    %v257 = vcombine.low %v125, %v126
    %v258 = vcombine.low %v127, %v128
    %v259 = vcombine.low %v129, %v130
    %v261 = vunpack.c.l.s4 1966171168
    %v262 = vunpack.c.0.s8 %v261
    %v263 = vlaneseq
    %v264 = vshrl.u32 %v263, 7
    %v265 = vsub.s32 %v262, %v264
    %v266 = vrot.slane %v256, %v265
    %v268 = vunpack.c.l.s4 1966171168
    %v269 = vunpack.c.0.s8 %v268
    %v270 = vlaneseq
    %v271 = vshrl.u32 %v270, 7
    %v272 = vsub.s32 %v269, %v271
    %v273 = vrot.slane %v257, %v272
    %v275 = vunpack.c.l.s4 1966171168
    %v276 = vunpack.c.0.s8 %v275
    %v277 = vlaneseq
    %v278 = vshrl.u32 %v277, 7
    %v279 = vsub.s32 %v276, %v278
    %v280 = vrot.slane %v258, %v279
    %v282 = vunpack.c.l.s4 1966171168
    %v283 = vunpack.c.0.s8 %v282
    %v284 = vlaneseq
    %v285 = vshrl.u32 %v284, 7
    %v286 = vsub.s32 %v283, %v285
    %v287 = vrot.slane %v259, %v286
    %v288 = vcombine.low %v266, %v273
    %v289 = vcombine.low %v280, %v287
    %v291 = vunpack.c.l.s4 1966171168
    %v292 = vunpack.c.0.s8 %v291
    %v293 = vlaneseq
    %v294 = vshrl.u32 %v293, 7
    %v295 = vsub.s32 %v292, %v294
    %v296 = vrot.slane %v288, %v295
    %v298 = vunpack.c.l.s4 1966171168
    %v299 = vunpack.c.0.s8 %v298
    %v300 = vlaneseq
    %v301 = vshrl.u32 %v300, 7
    %v302 = vsub.s32 %v299, %v301
    %v303 = vrot.slane %v289, %v302
    %v304 = vcombine.low %v296, %v303
    %v305 = vcombine.low %v131, %v132
    %v306 = vcombine.low %v133, %v134
    %v307 = vcombine.low %v135, %v136
    %v308 = vcombine.low %v137, %v138
    %v310 = vunpack.c.l.s4 1966171168
    %v311 = vunpack.c.0.s8 %v310
    %v312 = vlaneseq
    %v313 = vshrl.u32 %v312, 7
    %v314 = vsub.s32 %v311, %v313
    %v315 = vrot.slane %v305, %v314
    %v317 = vunpack.c.l.s4 1966171168
    %v318 = vunpack.c.0.s8 %v317
    %v319 = vlaneseq
    %v320 = vshrl.u32 %v319, 7
    %v321 = vsub.s32 %v318, %v320
    %v322 = vrot.slane %v306, %v321
    %v324 = vunpack.c.l.s4 1966171168
    %v325 = vunpack.c.0.s8 %v324
    %v326 = vlaneseq
    %v327 = vshrl.u32 %v326, 7
    %v328 = vsub.s32 %v325, %v327
    %v329 = vrot.slane %v307, %v328
    %v331 = vunpack.c.l.s4 1966171168
    %v332 = vunpack.c.0.s8 %v331
    %v333 = vlaneseq
    %v334 = vshrl.u32 %v333, 7
    %v335 = vsub.s32 %v332, %v334
    %v336 = vrot.slane %v308, %v335
    %v337 = vcombine.low %v315, %v322
    %v338 = vcombine.low %v329, %v336
    %v340 = vunpack.c.l.s4 1966171168
    %v341 = vunpack.c.0.s8 %v340
    %v342 = vlaneseq
    %v343 = vshrl.u32 %v342, 7
    %v344 = vsub.s32 %v341, %v343
    %v345 = vrot.slane %v337, %v344
    %v347 = vunpack.c.l.s4 1966171168
    %v348 = vunpack.c.0.s8 %v347
    %v349 = vlaneseq
    %v350 = vshrl.u32 %v349, 7
    %v351 = vsub.s32 %v348, %v350
    %v352 = vrot.slane %v338, %v351
    %v353 = vcombine.low %v345, %v352
    %v354 = vcombine.low %v139, %v140
    %v355 = vcombine.low %v141, %v142
    %v356 = vcombine.low %v143, %v144
    %v357 = vcombine.low %v145, %v146
    %v359 = vunpack.c.l.s4 1966171168
    %v360 = vunpack.c.0.s8 %v359
    %v361 = vlaneseq
    %v362 = vshrl.u32 %v361, 7
    %v363 = vsub.s32 %v360, %v362
    %v364 = vrot.slane %v354, %v363
    %v366 = vunpack.c.l.s4 1966171168
    %v367 = vunpack.c.0.s8 %v366
    %v368 = vlaneseq
    %v369 = vshrl.u32 %v368, 7
    %v370 = vsub.s32 %v367, %v369
    %v371 = vrot.slane %v355, %v370
    %v373 = vunpack.c.l.s4 1966171168
    %v374 = vunpack.c.0.s8 %v373
    %v375 = vlaneseq
    %v376 = vshrl.u32 %v375, 7
    %v377 = vsub.s32 %v374, %v376
    %v378 = vrot.slane %v356, %v377
    %v380 = vunpack.c.l.s4 1966171168
    %v381 = vunpack.c.0.s8 %v380
    %v382 = vlaneseq
    %v383 = vshrl.u32 %v382, 7
    %v384 = vsub.s32 %v381, %v383
    %v385 = vrot.slane %v357, %v384
    %v386 = vcombine.low %v364, %v371
    %v387 = vcombine.low %v378, %v385
    %v389 = vunpack.c.l.s4 1966171168
    %v390 = vunpack.c.0.s8 %v389
    %v391 = vlaneseq
    %v392 = vshrl.u32 %v391, 7
    %v393 = vsub.s32 %v390, %v392
    %v394 = vrot.slane %v386, %v393
    %v396 = vunpack.c.l.s4 1966171168
    %v397 = vunpack.c.0.s8 %v396
    %v398 = vlaneseq
    %v399 = vshrl.u32 %v398, 7
    %v400 = vsub.s32 %v397, %v399
    %v401 = vrot.slane %v387, %v400
    %v402 = vcombine.low %v394, %v401
    %v403 = vcombine.low %v147, %v148
    %v404 = vcombine.low %v149, %v150
    %v405 = vcombine.low %v151, %v152
    %v406 = vcombine.low %v153, %v154
    %v408 = vunpack.c.l.s4 1966171168
    %v409 = vunpack.c.0.s8 %v408
    %v410 = vlaneseq
    %v411 = vshrl.u32 %v410, 7
    %v412 = vsub.s32 %v409, %v411
    %v413 = vrot.slane %v403, %v412
    %v415 = vunpack.c.l.s4 1966171168
    %v416 = vunpack.c.0.s8 %v415
    %v417 = vlaneseq
    %v418 = vshrl.u32 %v417, 7
    %v419 = vsub.s32 %v416, %v418
    %v420 = vrot.slane %v404, %v419
    %v422 = vunpack.c.l.s4 1966171168
    %v423 = vunpack.c.0.s8 %v422
    %v424 = vlaneseq
    %v425 = vshrl.u32 %v424, 7
    %v426 = vsub.s32 %v423, %v425
    %v427 = vrot.slane %v405, %v426
    %v429 = vunpack.c.l.s4 1966171168
    %v430 = vunpack.c.0.s8 %v429
    %v431 = vlaneseq
    %v432 = vshrl.u32 %v431, 7
    %v433 = vsub.s32 %v430, %v432
    %v434 = vrot.slane %v406, %v433
    %v435 = vcombine.low %v413, %v420
    %v436 = vcombine.low %v427, %v434
    %v438 = vunpack.c.l.s4 1966171168
    %v439 = vunpack.c.0.s8 %v438
    %v440 = vlaneseq
    %v441 = vshrl.u32 %v440, 7
    %v442 = vsub.s32 %v439, %v441
    %v443 = vrot.slane %v435, %v442
    %v445 = vunpack.c.l.s4 1966171168
    %v446 = vunpack.c.0.s8 %v445
    %v447 = vlaneseq
    %v448 = vshrl.u32 %v447, 7
    %v449 = vsub.s32 %v446, %v448
    %v450 = vrot.slane %v436, %v449
    %v451 = vcombine.low %v443, %v450
    %v452 = vcombine.low %v155, %v156
    %v453 = vcombine.low %v157, %v158
    %v454 = vcombine.low %v159, %v160
    %v455 = vcombine.low %v161, %v162
    %v457 = vunpack.c.l.s4 1966171168
    %v458 = vunpack.c.0.s8 %v457
    %v459 = vlaneseq
    %v460 = vshrl.u32 %v459, 7
    %v461 = vsub.s32 %v458, %v460
    %v462 = vrot.slane %v452, %v461
    %v464 = vunpack.c.l.s4 1966171168
    %v465 = vunpack.c.0.s8 %v464
    %v466 = vlaneseq
    %v467 = vshrl.u32 %v466, 7
    %v468 = vsub.s32 %v465, %v467
    %v469 = vrot.slane %v453, %v468
    %v471 = vunpack.c.l.s4 1966171168
    %v472 = vunpack.c.0.s8 %v471
    %v473 = vlaneseq
    %v474 = vshrl.u32 %v473, 7
    %v475 = vsub.s32 %v472, %v474
    %v476 = vrot.slane %v454, %v475
    %v478 = vunpack.c.l.s4 1966171168
    %v479 = vunpack.c.0.s8 %v478
    %v480 = vlaneseq
    %v481 = vshrl.u32 %v480, 7
    %v482 = vsub.s32 %v479, %v481
    %v483 = vrot.slane %v455, %v482
    %v484 = vcombine.low %v462, %v469
    %v485 = vcombine.low %v476, %v483
    %v487 = vunpack.c.l.s4 1966171168
    %v488 = vunpack.c.0.s8 %v487
    %v489 = vlaneseq
    %v490 = vshrl.u32 %v489, 7
    %v491 = vsub.s32 %v488, %v490
    %v492 = vrot.slane %v484, %v491
    %v494 = vunpack.c.l.s4 1966171168
    %v495 = vunpack.c.0.s8 %v494
    %v496 = vlaneseq
    %v497 = vshrl.u32 %v496, 7
    %v498 = vsub.s32 %v495, %v497
    %v499 = vrot.slane %v485, %v498
    %v500 = vcombine.low %v492, %v499
    %v501 = vcombine.low %v163, %v164
    %v502 = vcombine.low %v165, %v166
    %v503 = vcombine.low %v167, %v168
    %v504 = vcombine.low %v169, %v170
    %v506 = vunpack.c.l.s4 1966171168
    %v507 = vunpack.c.0.s8 %v506
    %v508 = vlaneseq
    %v509 = vshrl.u32 %v508, 7
    %v510 = vsub.s32 %v507, %v509
    %v511 = vrot.slane %v501, %v510
    %v513 = vunpack.c.l.s4 1966171168
    %v514 = vunpack.c.0.s8 %v513
    %v515 = vlaneseq
    %v516 = vshrl.u32 %v515, 7
    %v517 = vsub.s32 %v514, %v516
    %v518 = vrot.slane %v502, %v517
    %v520 = vunpack.c.l.s4 1966171168
    %v521 = vunpack.c.0.s8 %v520
    %v522 = vlaneseq
    %v523 = vshrl.u32 %v522, 7
    %v524 = vsub.s32 %v521, %v523
    %v525 = vrot.slane %v503, %v524
    %v527 = vunpack.c.l.s4 1966171168
    %v528 = vunpack.c.0.s8 %v527
    %v529 = vlaneseq
    %v530 = vshrl.u32 %v529, 7
    %v531 = vsub.s32 %v528, %v530
    %v532 = vrot.slane %v504, %v531
    %v533 = vcombine.low %v511, %v518
    %v534 = vcombine.low %v525, %v532
    %v536 = vunpack.c.l.s4 1966171168
    %v537 = vunpack.c.0.s8 %v536
    %v538 = vlaneseq
    %v539 = vshrl.u32 %v538, 7
    %v540 = vsub.s32 %v537, %v539
    %v541 = vrot.slane %v533, %v540
    %v543 = vunpack.c.l.s4 1966171168
    %v544 = vunpack.c.0.s8 %v543
    %v545 = vlaneseq
    %v546 = vshrl.u32 %v545, 7
    %v547 = vsub.s32 %v544, %v546
    %v548 = vrot.slane %v534, %v547
    %v549 = vcombine.low %v541, %v548
    %v550 = vcombine.low %v171, %v172
    %v551 = vcombine.low %v173, %v174
    %v552 = vcombine.low %v175, %v176
    %v553 = vcombine.low %v177, %v178
    %v555 = vunpack.c.l.s4 1966171168
    %v556 = vunpack.c.0.s8 %v555
    %v557 = vlaneseq
    %v558 = vshrl.u32 %v557, 7
    %v559 = vsub.s32 %v556, %v558
    %v560 = vrot.slane %v550, %v559
    %v562 = vunpack.c.l.s4 1966171168
    %v563 = vunpack.c.0.s8 %v562
    %v564 = vlaneseq
    %v565 = vshrl.u32 %v564, 7
    %v566 = vsub.s32 %v563, %v565
    %v567 = vrot.slane %v551, %v566
    %v569 = vunpack.c.l.s4 1966171168
    %v570 = vunpack.c.0.s8 %v569
    %v571 = vlaneseq
    %v572 = vshrl.u32 %v571, 7
    %v573 = vsub.s32 %v570, %v572
    %v574 = vrot.slane %v552, %v573
    %v576 = vunpack.c.l.s4 1966171168
    %v577 = vunpack.c.0.s8 %v576
    %v578 = vlaneseq
    %v579 = vshrl.u32 %v578, 7
    %v580 = vsub.s32 %v577, %v579
    %v581 = vrot.slane %v553, %v580
    %v582 = vcombine.low %v560, %v567
    %v583 = vcombine.low %v574, %v581
    %v585 = vunpack.c.l.s4 1966171168
    %v586 = vunpack.c.0.s8 %v585
    %v587 = vlaneseq
    %v588 = vshrl.u32 %v587, 7
    %v589 = vsub.s32 %v586, %v588
    %v590 = vrot.slane %v582, %v589
    %v592 = vunpack.c.l.s4 1966171168
    %v593 = vunpack.c.0.s8 %v592
    %v594 = vlaneseq
    %v595 = vshrl.u32 %v594, 7
    %v596 = vsub.s32 %v593, %v595
    %v597 = vrot.slane %v583, %v596
    %v598 = vcombine.low %v590, %v597
    %v599 = vcombine.low %v179, %v180
    %v600 = vcombine.low %v181, %v182
    %v601 = vcombine.low %v183, %v184
    %v602 = vcombine.low %v185, %v186
    %v604 = vunpack.c.l.s4 1966171168
    %v605 = vunpack.c.0.s8 %v604
    %v606 = vlaneseq
    %v607 = vshrl.u32 %v606, 7
    %v608 = vsub.s32 %v605, %v607
    %v609 = vrot.slane %v599, %v608
    %v611 = vunpack.c.l.s4 1966171168
    %v612 = vunpack.c.0.s8 %v611
    %v613 = vlaneseq
    %v614 = vshrl.u32 %v613, 7
    %v615 = vsub.s32 %v612, %v614
    %v616 = vrot.slane %v600, %v615
    %v618 = vunpack.c.l.s4 1966171168
    %v619 = vunpack.c.0.s8 %v618
    %v620 = vlaneseq
    %v621 = vshrl.u32 %v620, 7
    %v622 = vsub.s32 %v619, %v621
    %v623 = vrot.slane %v601, %v622
    %v625 = vunpack.c.l.s4 1966171168
    %v626 = vunpack.c.0.s8 %v625
    %v627 = vlaneseq
    %v628 = vshrl.u32 %v627, 7
    %v629 = vsub.s32 %v626, %v628
    %v630 = vrot.slane %v602, %v629
    %v631 = vcombine.low %v609, %v616
    %v632 = vcombine.low %v623, %v630
    %v634 = vunpack.c.l.s4 1966171168
    %v635 = vunpack.c.0.s8 %v634
    %v636 = vlaneseq
    %v637 = vshrl.u32 %v636, 7
    %v638 = vsub.s32 %v635, %v637
    %v639 = vrot.slane %v631, %v638
    %v641 = vunpack.c.l.s4 1966171168
    %v642 = vunpack.c.0.s8 %v641
    %v643 = vlaneseq
    %v644 = vshrl.u32 %v643, 7
    %v645 = vsub.s32 %v642, %v644
    %v646 = vrot.slane %v632, %v645
    %v647 = vcombine.low %v639, %v646
    %v653 = vunpack.c.l.b16 %v187
    %v654 = vunpack.c.l.b16 %v188
    %v655 = vunpack.c.l.b16 %v189
    %v656 = vunpack.c.l.b16 %v190
    %v657 = vunpack.c.l.b16 %v191
    %v658 = vpack.c.b16 %v654, %v653
    %v659 = vpack.c.b16 %v656, %v655
    %v660 = vpack.c.b16 %v657, %v657
    %vm663 = vcmask 293888
    %v665 = vsel %vm663, %v304, 0
    %v668 = vsel %vm663, %v353, 0
    %v671 = vsel %vm663, %v402, 0
    %v674 = vsel %vm663, %v451, 0
    %v677 = vsel %vm663, %v500, 0
    %v680 = vsel %vm663, %v549, 0
    %v683 = vsel %vm663, %v598, 0
    %v686 = vsel %vm663, %v647, 0
    %vm688 = vcmask 1041408
    %v690 = vsel %vm688, %v660, 0
    %692 = vmatprep.subr.bf16.mxu0 0
    %693 = vmatpush1.bf16.msra.mxu0 %v658
    %694 = vmatprep.subr.bf16.mxu0 0
    %695 = vmatpush1.bf16.msra.mxu0 %v659
    %696 = vmatprep.subr.bf16.mxu0 0
    %697 = vmatpush1.bf16.msra.mxu0 %v690
    %698 = vmatprep.subr.bf16.mxu0 0
    %699 = vmatpush1.bf16.msra.mxu0 0
    %700 = vmatprep.subr.bf16.mxu0 0
    %701 = vmatpush1.bf16.msra.mxu0 0
    %702 = vmatprep.subr.bf16.mxu0 0
    %703 = vmatpush1.bf16.msra.mxu0 0
    %704 = vmatprep.subr.bf16.mxu0 0
    %705 = vmatpush1.bf16.msra.mxu0 0
    %706 = vmatprep.subr.bf16.mxu0 0
    %707 = vmatpush1.bf16.msra.mxu0 0
    %708 = vmatprep.subr.bf16.mxu0 0
    %709 = vmatpush1.bf16.msra.mxu0 0
    %710 = vmatprep.subr.bf16.mxu0 0
    %711 = vmatpush1.bf16.msra.mxu0 0
    %712 = vmatprep.subr.bf16.mxu0 0
    %713 = vmatpush1.bf16.msra.mxu0 0
    %714 = vmatprep.subr.bf16.mxu0 0
    %715 = vmatpush1.bf16.msra.mxu0 0
    %716 = vmatprep.subr.bf16.mxu0 0
    %717 = vmatpush1.bf16.msra.mxu0 0
    %718 = vmatprep.subr.bf16.mxu0 0
    %719 = vmatpush1.bf16.msra.mxu0 0
    %720 = vmatprep.subr.bf16.mxu0 0
    %721 = vmatpush1.bf16.msra.mxu0 0
    %722 = vmatprep.subr.bf16.mxu0 0
    %723 = vmatpush1.bf16.msra.mxu0 0
    %724 = vmatprep.mubr.bf16.mxu0 0
    %725 = vmatmul.mubr.bf16.gmra.mrb[0].mxu0 %v665
    %v726 = vpop.f32.mrb[0].mxu0
    %v727 = vadd.f32 0.0, %v726
    %v728 = vpop.f32.mrb[0].mxu0
    %v729 = vpop.f32.mrb[0].mxu0
    %v730 = vadd.f32 0.0, %v729
    %v731 = vpop.f32.mrb[0].mxu0
    %732 = vmatprep.mubr.bf16.mxu0 0
    %733 = vmatmul.mubr.bf16.gmra.mrb[0].mxu0 %v668
    %v734 = vpop.f32.mrb[0].mxu0
    %v735 = vadd.f32 0.0, %v734
    %v736 = vpop.f32.mrb[0].mxu0
    %v737 = vpop.f32.mrb[0].mxu0
    %v738 = vadd.f32 0.0, %v737
    %v739 = vpop.f32.mrb[0].mxu0
    %740 = vmatprep.mubr.bf16.mxu0 0
    %741 = vmatmul.mubr.bf16.gmra.mrb[0].mxu0 %v671
    %v742 = vpop.f32.mrb[0].mxu0
    %v743 = vadd.f32 0.0, %v742
    %v744 = vpop.f32.mrb[0].mxu0
    %v745 = vpop.f32.mrb[0].mxu0
    %v746 = vadd.f32 0.0, %v745
    %v747 = vpop.f32.mrb[0].mxu0
    %748 = vmatprep.mubr.bf16.mxu0 0
    %749 = vmatmul.mubr.bf16.gmra.mrb[0].mxu0 %v674
    %v750 = vpop.f32.mrb[0].mxu0
    %v751 = vadd.f32 0.0, %v750
    %v752 = vpop.f32.mrb[0].mxu0
    %v753 = vpop.f32.mrb[0].mxu0
    %v754 = vadd.f32 0.0, %v753
    %v755 = vpop.f32.mrb[0].mxu0
    %756 = vmatprep.mubr.bf16.mxu0 0
    %757 = vmatmul.mubr.bf16.gmra.mrb[0].mxu0 %v677
    %v758 = vpop.f32.mrb[0].mxu0
    %v759 = vadd.f32 0.0, %v758
    %v760 = vpop.f32.mrb[0].mxu0
    %v761 = vpop.f32.mrb[0].mxu0
    %v762 = vadd.f32 0.0, %v761
    %v763 = vpop.f32.mrb[0].mxu0
    %764 = vmatprep.mubr.bf16.mxu0 0
    %765 = vmatmul.mubr.bf16.gmra.mrb[0].mxu0 %v680
    %v766 = vpop.f32.mrb[0].mxu0
    %v767 = vadd.f32 0.0, %v766
    %v768 = vpop.f32.mrb[0].mxu0
    %v769 = vpop.f32.mrb[0].mxu0
    %v770 = vadd.f32 0.0, %v769
    %v771 = vpop.f32.mrb[0].mxu0
    %772 = vmatprep.mubr.bf16.mxu0 0
    %773 = vmatmul.mubr.bf16.gmra.mrb[0].mxu0 %v683
    %v774 = vpop.f32.mrb[0].mxu0
    %v775 = vadd.f32 0.0, %v774
    %v776 = vpop.f32.mrb[0].mxu0
    %v777 = vpop.f32.mrb[0].mxu0
    %v778 = vadd.f32 0.0, %v777
    %v779 = vpop.f32.mrb[0].mxu0
    %780 = vmatprep.mubr.bf16.mxu0 0
    %781 = vmatmul.mubr.bf16.gmra.mrb[0].mxu0 %v686
    %v782 = vpop.f32.mrb[0].mxu0
    %v783 = vadd.f32 0.0, %v782
    %v784 = vpop.f32.mrb[0].mxu0
    %v785 = vpop.f32.mrb[0].mxu0
    %v786 = vadd.f32 0.0, %v785
    %v787 = vpop.f32.mrb[0].mxu0
    %788 = vdwg.mxu0
    %v789 = vld [vmem:[%s6] sm:$0x1]
    %v791 = vlaneseq
    %v792 = vshrl.u32 %v791, 7
    %v793 = vsub.s32 0, %v792
    %v794 = vrot.slane %v789, %v793
    %v796 = vmul.f32 %v727, %v794
    %v797 = vmul.f32 %v730, %v794
    %v798 = vmul.f32 %v735, %v794
    %v799 = vmul.f32 %v738, %v794
    %v800 = vmul.f32 %v743, %v794
    %v801 = vmul.f32 %v746, %v794
    %v802 = vmul.f32 %v751, %v794
    %v803 = vmul.f32 %v754, %v794
    %v804 = vmul.f32 %v759, %v794
    %v805 = vmul.f32 %v762, %v794
    %v806 = vmul.f32 %v767, %v794
    %v807 = vmul.f32 %v770, %v794
    %v808 = vmul.f32 %v775, %v794
    %v809 = vmul.f32 %v778, %v794
    %v810 = vmul.f32 %v783, %v794
    %v811 = vmul.f32 %v786, %v794
    %v812 = vld [vmem:[%s11] sm:$0x1]
    %v814 = vlaneseq
    %v815 = vshrl.u32 %v814, 7
    %v816 = vsub.s32 0, %v815
    %v817 = vrot.slane %v812, %v816
    %v819 = vadd.f32 %v796, %v817
    %v820 = vadd.f32 %v797, %v817
    %v821 = vadd.f32 %v798, %v817
    %v822 = vadd.f32 %v799, %v817
    %v823 = vadd.f32 %v800, %v817
    %v824 = vadd.f32 %v801, %v817
    %v825 = vadd.f32 %v802, %v817
    %v826 = vadd.f32 %v803, %v817
    %v827 = vadd.f32 %v804, %v817
    %v828 = vadd.f32 %v805, %v817
    %v829 = vadd.f32 %v806, %v817
    %v830 = vadd.f32 %v807, %v817
    %v831 = vadd.f32 %v808, %v817
    %v832 = vadd.f32 %v809, %v817
    %v833 = vadd.f32 %v810, %v817
    %v834 = vadd.f32 %v811, %v817
    %vm835 = vcmp.gt.f32.partialorder %v819, 0.0
    %vm836 = vcmp.gt.f32.partialorder %v820, 0.0
    %vm837 = vcmp.gt.f32.partialorder %v821, 0.0
    %vm838 = vcmp.gt.f32.partialorder %v822, 0.0
    %vm839 = vcmp.gt.f32.partialorder %v823, 0.0
    %vm840 = vcmp.gt.f32.partialorder %v824, 0.0
    %vm841 = vcmp.gt.f32.partialorder %v825, 0.0
    %vm842 = vcmp.gt.f32.partialorder %v826, 0.0
    %vm843 = vcmp.gt.f32.partialorder %v827, 0.0
    %vm844 = vcmp.gt.f32.partialorder %v828, 0.0
    %vm845 = vcmp.gt.f32.partialorder %v829, 0.0
    %vm846 = vcmp.gt.f32.partialorder %v830, 0.0
    %vm847 = vcmp.gt.f32.partialorder %v831, 0.0
    %vm848 = vcmp.gt.f32.partialorder %v832, 0.0
    %vm849 = vcmp.gt.f32.partialorder %v833, 0.0
    %vm850 = vcmp.gt.f32.partialorder %v834, 0.0
    %v851 = vmul.f32 %v819, 0.2
    %v852 = vmul.f32 %v820, 0.2
    %v853 = vmul.f32 %v821, 0.2
    %v854 = vmul.f32 %v822, 0.2
    %v855 = vmul.f32 %v823, 0.2
    %v856 = vmul.f32 %v824, 0.2
    %v857 = vmul.f32 %v825, 0.2
    %v858 = vmul.f32 %v826, 0.2
    %v859 = vmul.f32 %v827, 0.2
    %v860 = vmul.f32 %v828, 0.2
    %v861 = vmul.f32 %v829, 0.2
    %v862 = vmul.f32 %v830, 0.2
    %v863 = vmul.f32 %v831, 0.2
    %v864 = vmul.f32 %v832, 0.2
    %v865 = vmul.f32 %v833, 0.2
    %v866 = vmul.f32 %v834, 0.2
    %v867 = vsel %vm835, %v819, %v851
    %v868 = vsel %vm836, %v820, %v852
    %v869 = vsel %vm837, %v821, %v853
    %v870 = vsel %vm838, %v822, %v854
    %v871 = vsel %vm839, %v823, %v855
    %v872 = vsel %vm840, %v824, %v856
    %v873 = vsel %vm841, %v825, %v857
    %v874 = vsel %vm842, %v826, %v858
    %v875 = vsel %vm843, %v827, %v859
    %v876 = vsel %vm844, %v828, %v860
    %v877 = vsel %vm845, %v829, %v861
    %v878 = vsel %vm846, %v830, %v862
    %v879 = vsel %vm847, %v831, %v863
    %v880 = vsel %vm848, %v832, %v864
    %v881 = vsel %vm849, %v833, %v865
    %v882 = vsel %vm850, %v834, %v866
    %v883 = vpack.c.bf16 %v868, %v867
    %v884 = vpack.c.bf16 %v870, %v869
    %v885 = vpack.c.bf16 %v872, %v871
    %v886 = vpack.c.bf16 %v874, %v873
    %v887 = vpack.c.bf16 %v876, %v875
    %v888 = vpack.c.bf16 %v878, %v877
    %v889 = vpack.c.bf16 %v880, %v879
    %v890 = vpack.c.bf16 %v882, %v881
    %v899 = vcombine.high %v883, %v883
    %v901 = vunpack.c.l.s4 1966171168
    %v902 = vunpack.c.0.s8 %v901
    %v903 = vlaneseq
    %v904 = vshrl.u32 %v903, 7
    %v905 = vsub.s32 %v902, %v904
    %v906 = vrot.slane %v883, %v905
    %v908 = vunpack.c.l.s4 1966171168
    %v909 = vunpack.c.0.s8 %v908
    %v910 = vlaneseq
    %v911 = vshrl.u32 %v910, 7
    %v912 = vsub.s32 %v909, %v911
    %v913 = vrot.slane %v899, %v912
    %v914 = vcombine.high %v906, %v906
    %v915 = vcombine.high %v913, %v913
    %v917 = vunpack.c.l.s4 1966171168
    %v918 = vunpack.c.0.s8 %v917
    %v919 = vlaneseq
    %v920 = vshrl.u32 %v919, 7
    %v921 = vsub.s32 %v918, %v920
    %v922 = vrot.slane %v906, %v921
    %v924 = vunpack.c.l.s4 1966171168
    %v925 = vunpack.c.0.s8 %v924
    %v926 = vlaneseq
    %v927 = vshrl.u32 %v926, 7
    %v928 = vsub.s32 %v925, %v927
    %v929 = vrot.slane %v913, %v928
    %v931 = vunpack.c.l.s4 1966171168
    %v932 = vunpack.c.0.s8 %v931
    %v933 = vlaneseq
    %v934 = vshrl.u32 %v933, 7
    %v935 = vsub.s32 %v932, %v934
    %v936 = vrot.slane %v914, %v935
    %v938 = vunpack.c.l.s4 1966171168
    %v939 = vunpack.c.0.s8 %v938
    %v940 = vlaneseq
    %v941 = vshrl.u32 %v940, 7
    %v942 = vsub.s32 %v939, %v941
    %v943 = vrot.slane %v915, %v942
    %v944 = vcombine.high %v922, %v922
    %v945 = vcombine.high %v929, %v929
    %v946 = vcombine.high %v936, %v936
    %v947 = vcombine.high %v943, %v943
    %v948 = vcombine.high %v884, %v884
    %v950 = vunpack.c.l.s4 1966171168
    %v951 = vunpack.c.0.s8 %v950
    %v952 = vlaneseq
    %v953 = vshrl.u32 %v952, 7
    %v954 = vsub.s32 %v951, %v953
    %v955 = vrot.slane %v884, %v954
    %v957 = vunpack.c.l.s4 1966171168
    %v958 = vunpack.c.0.s8 %v957
    %v959 = vlaneseq
    %v960 = vshrl.u32 %v959, 7
    %v961 = vsub.s32 %v958, %v960
    %v962 = vrot.slane %v948, %v961
    %v963 = vcombine.high %v955, %v955
    %v964 = vcombine.high %v962, %v962
    %v966 = vunpack.c.l.s4 1966171168
    %v967 = vunpack.c.0.s8 %v966
    %v968 = vlaneseq
    %v969 = vshrl.u32 %v968, 7
    %v970 = vsub.s32 %v967, %v969
    %v971 = vrot.slane %v955, %v970
    %v973 = vunpack.c.l.s4 1966171168
    %v974 = vunpack.c.0.s8 %v973
    %v975 = vlaneseq
    %v976 = vshrl.u32 %v975, 7
    %v977 = vsub.s32 %v974, %v976
    %v978 = vrot.slane %v962, %v977
    %v980 = vunpack.c.l.s4 1966171168
    %v981 = vunpack.c.0.s8 %v980
    %v982 = vlaneseq
    %v983 = vshrl.u32 %v982, 7
    %v984 = vsub.s32 %v981, %v983
    %v985 = vrot.slane %v963, %v984
    %v987 = vunpack.c.l.s4 1966171168
    %v988 = vunpack.c.0.s8 %v987
    %v989 = vlaneseq
    %v990 = vshrl.u32 %v989, 7
    %v991 = vsub.s32 %v988, %v990
    %v992 = vrot.slane %v964, %v991
    %v993 = vcombine.high %v971, %v971
    %v994 = vcombine.high %v978, %v978
    %v995 = vcombine.high %v985, %v985
    %v996 = vcombine.high %v992, %v992
    %v997 = vcombine.high %v885, %v885
    %v999 = vunpack.c.l.s4 1966171168
    %v1000 = vunpack.c.0.s8 %v999
    %v1001 = vlaneseq
    %v1002 = vshrl.u32 %v1001, 7
    %v1003 = vsub.s32 %v1000, %v1002
    %v1004 = vrot.slane %v885, %v1003
    %v1006 = vunpack.c.l.s4 1966171168
    %v1007 = vunpack.c.0.s8 %v1006
    %v1008 = vlaneseq
    %v1009 = vshrl.u32 %v1008, 7
    %v1010 = vsub.s32 %v1007, %v1009
    %v1011 = vrot.slane %v997, %v1010
    %v1012 = vcombine.high %v1004, %v1004
    %v1013 = vcombine.high %v1011, %v1011
    %v1015 = vunpack.c.l.s4 1966171168
    %v1016 = vunpack.c.0.s8 %v1015
    %v1017 = vlaneseq
    %v1018 = vshrl.u32 %v1017, 7
    %v1019 = vsub.s32 %v1016, %v1018
    %v1020 = vrot.slane %v1004, %v1019
    %v1022 = vunpack.c.l.s4 1966171168
    %v1023 = vunpack.c.0.s8 %v1022
    %v1024 = vlaneseq
    %v1025 = vshrl.u32 %v1024, 7
    %v1026 = vsub.s32 %v1023, %v1025
    %v1027 = vrot.slane %v1011, %v1026
    %v1029 = vunpack.c.l.s4 1966171168
    %v1030 = vunpack.c.0.s8 %v1029
    %v1031 = vlaneseq
    %v1032 = vshrl.u32 %v1031, 7
    %v1033 = vsub.s32 %v1030, %v1032
    %v1034 = vrot.slane %v1012, %v1033
    %v1036 = vunpack.c.l.s4 1966171168
    %v1037 = vunpack.c.0.s8 %v1036
    %v1038 = vlaneseq
    %v1039 = vshrl.u32 %v1038, 7
    %v1040 = vsub.s32 %v1037, %v1039
    %v1041 = vrot.slane %v1013, %v1040
    %v1042 = vcombine.high %v1020, %v1020
    %v1043 = vcombine.high %v1027, %v1027
    %v1044 = vcombine.high %v1034, %v1034
    %v1045 = vcombine.high %v1041, %v1041
    %v1046 = vcombine.high %v886, %v886
    %v1048 = vunpack.c.l.s4 1966171168
    %v1049 = vunpack.c.0.s8 %v1048
    %v1050 = vlaneseq
    %v1051 = vshrl.u32 %v1050, 7
    %v1052 = vsub.s32 %v1049, %v1051
    %v1053 = vrot.slane %v886, %v1052
    %v1055 = vunpack.c.l.s4 1966171168
    %v1056 = vunpack.c.0.s8 %v1055
    %v1057 = vlaneseq
    %v1058 = vshrl.u32 %v1057, 7
    %v1059 = vsub.s32 %v1056, %v1058
    %v1060 = vrot.slane %v1046, %v1059
    %v1061 = vcombine.high %v1053, %v1053
    %v1062 = vcombine.high %v1060, %v1060
    %v1064 = vunpack.c.l.s4 1966171168
    %v1065 = vunpack.c.0.s8 %v1064
    %v1066 = vlaneseq
    %v1067 = vshrl.u32 %v1066, 7
    %v1068 = vsub.s32 %v1065, %v1067
    %v1069 = vrot.slane %v1053, %v1068
    %v1071 = vunpack.c.l.s4 1966171168
    %v1072 = vunpack.c.0.s8 %v1071
    %v1073 = vlaneseq
    %v1074 = vshrl.u32 %v1073, 7
    %v1075 = vsub.s32 %v1072, %v1074
    %v1076 = vrot.slane %v1060, %v1075
    %v1078 = vunpack.c.l.s4 1966171168
    %v1079 = vunpack.c.0.s8 %v1078
    %v1080 = vlaneseq
    %v1081 = vshrl.u32 %v1080, 7
    %v1082 = vsub.s32 %v1079, %v1081
    %v1083 = vrot.slane %v1061, %v1082
    %v1085 = vunpack.c.l.s4 1966171168
    %v1086 = vunpack.c.0.s8 %v1085
    %v1087 = vlaneseq
    %v1088 = vshrl.u32 %v1087, 7
    %v1089 = vsub.s32 %v1086, %v1088
    %v1090 = vrot.slane %v1062, %v1089
    %v1091 = vcombine.high %v1069, %v1069
    %v1092 = vcombine.high %v1076, %v1076
    %v1093 = vcombine.high %v1083, %v1083
    %v1094 = vcombine.high %v1090, %v1090
    %v1095 = vcombine.high %v887, %v887
    %v1097 = vunpack.c.l.s4 1966171168
    %v1098 = vunpack.c.0.s8 %v1097
    %v1099 = vlaneseq
    %v1100 = vshrl.u32 %v1099, 7
    %v1101 = vsub.s32 %v1098, %v1100
    %v1102 = vrot.slane %v887, %v1101
    %v1104 = vunpack.c.l.s4 1966171168
    %v1105 = vunpack.c.0.s8 %v1104
    %v1106 = vlaneseq
    %v1107 = vshrl.u32 %v1106, 7
    %v1108 = vsub.s32 %v1105, %v1107
    %v1109 = vrot.slane %v1095, %v1108
    %v1110 = vcombine.high %v1102, %v1102
    %v1111 = vcombine.high %v1109, %v1109
    %v1113 = vunpack.c.l.s4 1966171168
    %v1114 = vunpack.c.0.s8 %v1113
    %v1115 = vlaneseq
    %v1116 = vshrl.u32 %v1115, 7
    %v1117 = vsub.s32 %v1114, %v1116
    %v1118 = vrot.slane %v1102, %v1117
    %v1120 = vunpack.c.l.s4 1966171168
    %v1121 = vunpack.c.0.s8 %v1120
    %v1122 = vlaneseq
    %v1123 = vshrl.u32 %v1122, 7
    %v1124 = vsub.s32 %v1121, %v1123
    %v1125 = vrot.slane %v1109, %v1124
    %v1127 = vunpack.c.l.s4 1966171168
    %v1128 = vunpack.c.0.s8 %v1127
    %v1129 = vlaneseq
    %v1130 = vshrl.u32 %v1129, 7
    %v1131 = vsub.s32 %v1128, %v1130
    %v1132 = vrot.slane %v1110, %v1131
    %v1134 = vunpack.c.l.s4 1966171168
    %v1135 = vunpack.c.0.s8 %v1134
    %v1136 = vlaneseq
    %v1137 = vshrl.u32 %v1136, 7
    %v1138 = vsub.s32 %v1135, %v1137
    %v1139 = vrot.slane %v1111, %v1138
    %v1140 = vcombine.high %v1118, %v1118
    %v1141 = vcombine.high %v1125, %v1125
    %v1142 = vcombine.high %v1132, %v1132
    %v1143 = vcombine.high %v1139, %v1139
    %v1144 = vcombine.high %v888, %v888
    %v1146 = vunpack.c.l.s4 1966171168
    %v1147 = vunpack.c.0.s8 %v1146
    %v1148 = vlaneseq
    %v1149 = vshrl.u32 %v1148, 7
    %v1150 = vsub.s32 %v1147, %v1149
    %v1151 = vrot.slane %v888, %v1150
    %v1153 = vunpack.c.l.s4 1966171168
    %v1154 = vunpack.c.0.s8 %v1153
    %v1155 = vlaneseq
    %v1156 = vshrl.u32 %v1155, 7
    %v1157 = vsub.s32 %v1154, %v1156
    %v1158 = vrot.slane %v1144, %v1157
    %v1159 = vcombine.high %v1151, %v1151
    %v1160 = vcombine.high %v1158, %v1158
    %v1162 = vunpack.c.l.s4 1966171168
    %v1163 = vunpack.c.0.s8 %v1162
    %v1164 = vlaneseq
    %v1165 = vshrl.u32 %v1164, 7
    %v1166 = vsub.s32 %v1163, %v1165
    %v1167 = vrot.slane %v1151, %v1166
    %v1169 = vunpack.c.l.s4 1966171168
    %v1170 = vunpack.c.0.s8 %v1169
    %v1171 = vlaneseq
    %v1172 = vshrl.u32 %v1171, 7
    %v1173 = vsub.s32 %v1170, %v1172
    %v1174 = vrot.slane %v1158, %v1173
    %v1176 = vunpack.c.l.s4 1966171168
    %v1177 = vunpack.c.0.s8 %v1176
    %v1178 = vlaneseq
    %v1179 = vshrl.u32 %v1178, 7
    %v1180 = vsub.s32 %v1177, %v1179
    %v1181 = vrot.slane %v1159, %v1180
    %v1183 = vunpack.c.l.s4 1966171168
    %v1184 = vunpack.c.0.s8 %v1183
    %v1185 = vlaneseq
    %v1186 = vshrl.u32 %v1185, 7
    %v1187 = vsub.s32 %v1184, %v1186
    %v1188 = vrot.slane %v1160, %v1187
    %v1189 = vcombine.high %v1167, %v1167
    %v1190 = vcombine.high %v1174, %v1174
    %v1191 = vcombine.high %v1181, %v1181
    %v1192 = vcombine.high %v1188, %v1188
    %v1193 = vcombine.high %v889, %v889
    %v1195 = vunpack.c.l.s4 1966171168
    %v1196 = vunpack.c.0.s8 %v1195
    %v1197 = vlaneseq
    %v1198 = vshrl.u32 %v1197, 7
    %v1199 = vsub.s32 %v1196, %v1198
    %v1200 = vrot.slane %v889, %v1199
    %v1202 = vunpack.c.l.s4 1966171168
    %v1203 = vunpack.c.0.s8 %v1202
    %v1204 = vlaneseq
    %v1205 = vshrl.u32 %v1204, 7
    %v1206 = vsub.s32 %v1203, %v1205
    %v1207 = vrot.slane %v1193, %v1206
    %v1208 = vcombine.high %v1200, %v1200
    %v1209 = vcombine.high %v1207, %v1207
    %v1211 = vunpack.c.l.s4 1966171168
    %v1212 = vunpack.c.0.s8 %v1211
    %v1213 = vlaneseq
    %v1214 = vshrl.u32 %v1213, 7
    %v1215 = vsub.s32 %v1212, %v1214
    %v1216 = vrot.slane %v1200, %v1215
    %v1218 = vunpack.c.l.s4 1966171168
    %v1219 = vunpack.c.0.s8 %v1218
    %v1220 = vlaneseq
    %v1221 = vshrl.u32 %v1220, 7
    %v1222 = vsub.s32 %v1219, %v1221
    %v1223 = vrot.slane %v1207, %v1222
    %v1225 = vunpack.c.l.s4 1966171168
    %v1226 = vunpack.c.0.s8 %v1225
    %v1227 = vlaneseq
    %v1228 = vshrl.u32 %v1227, 7
    %v1229 = vsub.s32 %v1226, %v1228
    %v1230 = vrot.slane %v1208, %v1229
    %v1232 = vunpack.c.l.s4 1966171168
    %v1233 = vunpack.c.0.s8 %v1232
    %v1234 = vlaneseq
    %v1235 = vshrl.u32 %v1234, 7
    %v1236 = vsub.s32 %v1233, %v1235
    %v1237 = vrot.slane %v1209, %v1236
    %v1238 = vcombine.high %v1216, %v1216
    %v1239 = vcombine.high %v1223, %v1223
    %v1240 = vcombine.high %v1230, %v1230
    %v1241 = vcombine.high %v1237, %v1237
    %v1242 = vcombine.high %v890, %v890
    %v1244 = vunpack.c.l.s4 1966171168
    %v1245 = vunpack.c.0.s8 %v1244
    %v1246 = vlaneseq
    %v1247 = vshrl.u32 %v1246, 7
    %v1248 = vsub.s32 %v1245, %v1247
    %v1249 = vrot.slane %v890, %v1248
    %v1251 = vunpack.c.l.s4 1966171168
    %v1252 = vunpack.c.0.s8 %v1251
    %v1253 = vlaneseq
    %v1254 = vshrl.u32 %v1253, 7
    %v1255 = vsub.s32 %v1252, %v1254
    %v1256 = vrot.slane %v1242, %v1255
    %v1257 = vcombine.high %v1249, %v1249
    %v1258 = vcombine.high %v1256, %v1256
    %v1260 = vunpack.c.l.s4 1966171168
    %v1261 = vunpack.c.0.s8 %v1260
    %v1262 = vlaneseq
    %v1263 = vshrl.u32 %v1262, 7
    %v1264 = vsub.s32 %v1261, %v1263
    %v1265 = vrot.slane %v1249, %v1264
    %v1267 = vunpack.c.l.s4 1966171168
    %v1268 = vunpack.c.0.s8 %v1267
    %v1269 = vlaneseq
    %v1270 = vshrl.u32 %v1269, 7
    %v1271 = vsub.s32 %v1268, %v1270
    %v1272 = vrot.slane %v1256, %v1271
    %v1274 = vunpack.c.l.s4 1966171168
    %v1275 = vunpack.c.0.s8 %v1274
    %v1276 = vlaneseq
    %v1277 = vshrl.u32 %v1276, 7
    %v1278 = vsub.s32 %v1275, %v1277
    %v1279 = vrot.slane %v1257, %v1278
    %v1281 = vunpack.c.l.s4 1966171168
    %v1282 = vunpack.c.0.s8 %v1281
    %v1283 = vlaneseq
    %v1284 = vshrl.u32 %v1283, 7
    %v1285 = vsub.s32 %v1282, %v1284
    %v1286 = vrot.slane %v1258, %v1285
    %v1287 = vcombine.high %v1265, %v1265
    %v1288 = vcombine.high %v1272, %v1272
    %v1289 = vcombine.high %v1279, %v1279
    %v1290 = vcombine.high %v1286, %v1286
    %vm1355 = vcmask 253952
    %1356 = vst.msk [vmem:[#allocation2] sm:$0x1] %vm1355, 0
    %1357 = vst.msk [vmem:[#allocation2 + $0x1] sm:$0x1] %vm1355, 0
    %1358 = vst.msk [vmem:[#allocation2 + $0x2] sm:$0x1] %vm1355, 0
    %1359 = vst.msk [vmem:[#allocation2 + $0x3] sm:$0x1] %vm1355, 0
    %1360 = vst.msk [vmem:[#allocation2 + $0x4] sm:$0x1] %vm1355, 0
    %1361 = vst.msk [vmem:[#allocation2 + $0x5] sm:$0x1] %vm1355, 0
    %1362 = vst.msk [vmem:[#allocation2 + $0x6] sm:$0x1] %vm1355, 0
    %1363 = vst.msk [vmem:[#allocation2 + $0x7] sm:$0x1] %vm1355, 0
    %1364 = vst.msk [vmem:[#allocation2 + $0x8] sm:$0x1] %vm1355, 0
    %1365 = vst.msk [vmem:[#allocation2 + $0x9] sm:$0x1] %vm1355, 0
    %s1366 = scalar_lea.vmem [#allocation2], 90
    %1367 = vst.msk [vmem:[%s1366] sm:$0x1] %vm1355, 0
    %1368 = vst.msk [vmem:[%s1366 + $0x1] sm:$0x1] %vm1355, 0
    %1369 = vst.msk [vmem:[%s1366 + $0x2] sm:$0x1] %vm1355, 0
    %1370 = vst.msk [vmem:[%s1366 + $0x3] sm:$0x1] %vm1355, 0
    %1371 = vst.msk [vmem:[%s1366 + $0x4] sm:$0x1] %vm1355, 0
    %1372 = vst.msk [vmem:[%s1366 + $0x5] sm:$0x1] %vm1355, 0
    %1373 = vst.msk [vmem:[%s1366 + $0x6] sm:$0x1] %vm1355, 0
    %1374 = vst.msk [vmem:[%s1366 + $0x7] sm:$0x1] %vm1355, 0
    %1375 = vst.msk [vmem:[%s1366 + $0x8] sm:$0x1] %vm1355, 0
    %1376 = vst.msk [vmem:[%s1366 + $0x9] sm:$0x1] %vm1355, 0
    %s1377 = scalar_lea.vmem [#allocation2], 10
    %1378 = vst.msk [vmem:[%s1377] sm:$0x1] %vm1355, 0
    %1379 = vst.msk [vmem:[%s1377 + $0xa] sm:$0x1] %vm1355, 0
    %1380 = vst.msk [vmem:[%s1377 + $0x14] sm:$0x1] %vm1355, 0
    %1381 = vst.msk [vmem:[%s1377 + $0x1e] sm:$0x1] %vm1355, 0
    %1382 = vst.msk [vmem:[%s1377 + $0x28] sm:$0x1] %vm1355, 0
    %1383 = vst.msk [vmem:[%s1377 + $0x32] sm:$0x1] %vm1355, 0
    %1384 = vst.msk [vmem:[%s1377 + $0x3c] sm:$0x1] %vm1355, 0
    %1385 = vst.msk [vmem:[%s1377 + $0x46] sm:$0x1] %vm1355, 0
    %s1386 = scalar_lea.vmem [#allocation2], 19
    %1387 = vst.msk [vmem:[%s1386] sm:$0x1] %vm1355, 0
    %1388 = vst.msk [vmem:[%s1386 + $0xa] sm:$0x1] %vm1355, 0
    %1389 = vst.msk [vmem:[%s1386 + $0x14] sm:$0x1] %vm1355, 0
    %1390 = vst.msk [vmem:[%s1386 + $0x1e] sm:$0x1] %vm1355, 0
    %1391 = vst.msk [vmem:[%s1386 + $0x28] sm:$0x1] %vm1355, 0
    %1392 = vst.msk [vmem:[%s1386 + $0x32] sm:$0x1] %vm1355, 0
    %1393 = vst.msk [vmem:[%s1386 + $0x3c] sm:$0x1] %vm1355, 0
    %1394 = vst.msk [vmem:[%s1386 + $0x46] sm:$0x1] %vm1355, 0
    %s1395 = scalar_lea.vmem [#allocation2], 11
    %1396 = vst.msk [vmem:[%s1395] sm:$0x1] %vm1355, %v922
    %1397 = vst.msk [vmem:[%s1395 + $0x1] sm:$0x1] %vm1355, %v936
    %1398 = vst.msk [vmem:[%s1395 + $0x2] sm:$0x1] %vm1355, %v944
    %1399 = vst.msk [vmem:[%s1395 + $0x3] sm:$0x1] %vm1355, %v946
    %1400 = vst.msk [vmem:[%s1395 + $0x4] sm:$0x1] %vm1355, %v929
    %1401 = vst.msk [vmem:[%s1395 + $0x5] sm:$0x1] %vm1355, %v943
    %1402 = vst.msk [vmem:[%s1395 + $0x6] sm:$0x1] %vm1355, %v945
    %1403 = vst.msk [vmem:[%s1395 + $0x7] sm:$0x1] %vm1355, %v947
    %1404 = vst.msk [vmem:[%s1395 + $0xa] sm:$0x1] %vm1355, %v971
    %1405 = vst.msk [vmem:[%s1395 + $0xb] sm:$0x1] %vm1355, %v985
    %1406 = vst.msk [vmem:[%s1395 + $0xc] sm:$0x1] %vm1355, %v993
    %1407 = vst.msk [vmem:[%s1395 + $0xd] sm:$0x1] %vm1355, %v995
    %1408 = vst.msk [vmem:[%s1395 + $0xe] sm:$0x1] %vm1355, %v978
    %1409 = vst.msk [vmem:[%s1395 + $0xf] sm:$0x1] %vm1355, %v992
    %1410 = vst.msk [vmem:[%s1395 + $0x10] sm:$0x1] %vm1355, %v994
    %1411 = vst.msk [vmem:[%s1395 + $0x11] sm:$0x1] %vm1355, %v996
    %1412 = vst.msk [vmem:[%s1395 + $0x14] sm:$0x1] %vm1355, %v1020
    %1413 = vst.msk [vmem:[%s1395 + $0x15] sm:$0x1] %vm1355, %v1034
    %1414 = vst.msk [vmem:[%s1395 + $0x16] sm:$0x1] %vm1355, %v1042
    %1415 = vst.msk [vmem:[%s1395 + $0x17] sm:$0x1] %vm1355, %v1044
    %1416 = vst.msk [vmem:[%s1395 + $0x18] sm:$0x1] %vm1355, %v1027
    %1417 = vst.msk [vmem:[%s1395 + $0x19] sm:$0x1] %vm1355, %v1041
    %1418 = vst.msk [vmem:[%s1395 + $0x1a] sm:$0x1] %vm1355, %v1043
    %1419 = vst.msk [vmem:[%s1395 + $0x1b] sm:$0x1] %vm1355, %v1045
    %1420 = vst.msk [vmem:[%s1395 + $0x1e] sm:$0x1] %vm1355, %v1069
    %1421 = vst.msk [vmem:[%s1395 + $0x1f] sm:$0x1] %vm1355, %v1083
    %1422 = vst.msk [vmem:[%s1395 + $0x20] sm:$0x1] %vm1355, %v1091
    %1423 = vst.msk [vmem:[%s1395 + $0x21] sm:$0x1] %vm1355, %v1093
    %1424 = vst.msk [vmem:[%s1395 + $0x22] sm:$0x1] %vm1355, %v1076
    %1425 = vst.msk [vmem:[%s1395 + $0x23] sm:$0x1] %vm1355, %v1090
    %1426 = vst.msk [vmem:[%s1395 + $0x24] sm:$0x1] %vm1355, %v1092
    %1427 = vst.msk [vmem:[%s1395 + $0x25] sm:$0x1] %vm1355, %v1094
    %1428 = vst.msk [vmem:[%s1395 + $0x28] sm:$0x1] %vm1355, %v1118
    %1429 = vst.msk [vmem:[%s1395 + $0x29] sm:$0x1] %vm1355, %v1132
    %1430 = vst.msk [vmem:[%s1395 + $0x2a] sm:$0x1] %vm1355, %v1140
    %1431 = vst.msk [vmem:[%s1395 + $0x2b] sm:$0x1] %vm1355, %v1142
    %1432 = vst.msk [vmem:[%s1395 + $0x2c] sm:$0x1] %vm1355, %v1125
    %1433 = vst.msk [vmem:[%s1395 + $0x2d] sm:$0x1] %vm1355, %v1139
    %1434 = vst.msk [vmem:[%s1395 + $0x2e] sm:$0x1] %vm1355, %v1141
    %1435 = vst.msk [vmem:[%s1395 + $0x2f] sm:$0x1] %vm1355, %v1143
    %1436 = vst.msk [vmem:[%s1395 + $0x32] sm:$0x1] %vm1355, %v1167
    %1437 = vst.msk [vmem:[%s1395 + $0x33] sm:$0x1] %vm1355, %v1181
    %1438 = vst.msk [vmem:[%s1395 + $0x34] sm:$0x1] %vm1355, %v1189
    %1439 = vst.msk [vmem:[%s1395 + $0x35] sm:$0x1] %vm1355, %v1191
    %1440 = vst.msk [vmem:[%s1395 + $0x36] sm:$0x1] %vm1355, %v1174
    %1441 = vst.msk [vmem:[%s1395 + $0x37] sm:$0x1] %vm1355, %v1188
    %1442 = vst.msk [vmem:[%s1395 + $0x38] sm:$0x1] %vm1355, %v1190
    %1443 = vst.msk [vmem:[%s1395 + $0x39] sm:$0x1] %vm1355, %v1192
    %1444 = vst.msk [vmem:[%s1395 + $0x3c] sm:$0x1] %vm1355, %v1216
    %1445 = vst.msk [vmem:[%s1395 + $0x3d] sm:$0x1] %vm1355, %v1230
    %1446 = vst.msk [vmem:[%s1395 + $0x3e] sm:$0x1] %vm1355, %v1238
    %1447 = vst.msk [vmem:[%s1395 + $0x3f] sm:$0x1] %vm1355, %v1240
    %1448 = vst.msk [vmem:[%s1395 + $0x40] sm:$0x1] %vm1355, %v1223
    %1449 = vst.msk [vmem:[%s1395 + $0x41] sm:$0x1] %vm1355, %v1237
    %1450 = vst.msk [vmem:[%s1395 + $0x42] sm:$0x1] %vm1355, %v1239
    %1451 = vst.msk [vmem:[%s1395 + $0x43] sm:$0x1] %vm1355, %v1241
    %1452 = vst.msk [vmem:[%s1395 + $0x46] sm:$0x1] %vm1355, %v1265
    %1453 = vst.msk [vmem:[%s1395 + $0x47] sm:$0x1] %vm1355, %v1279
    %1454 = vst.msk [vmem:[%s1395 + $0x48] sm:$0x1] %vm1355, %v1287
    %1455 = vst.msk [vmem:[%s1395 + $0x49] sm:$0x1] %vm1355, %v1289
    %1456 = vst.msk [vmem:[%s1395 + $0x4a] sm:$0x1] %vm1355, %v1272
    %1457 = vst.msk [vmem:[%s1395 + $0x4b] sm:$0x1] %vm1355, %v1286
    %1458 = vst.msk [vmem:[%s1395 + $0x4c] sm:$0x1] %vm1355, %v1288
    %1459 = vst.msk [vmem:[%s1395 + $0x4d] sm:$0x1] %vm1355, %v1290
    %v1460 = vld [vmem:[#allocation2] sm:$0x1]
    %v1461 = vld [vmem:[#allocation2 + $0x1] sm:$0x1]
    %v1462 = vld [vmem:[#allocation2 + $0x2] sm:$0x1]
    %v1463 = vld [vmem:[#allocation2 + $0x3] sm:$0x1]
    %v1464 = vld [vmem:[#allocation2 + $0x4] sm:$0x1]
    %v1465 = vld [vmem:[#allocation2 + $0x5] sm:$0x1]
    %v1466 = vld [vmem:[#allocation2 + $0x6] sm:$0x1]
    %v1467 = vld [vmem:[#allocation2 + $0x7] sm:$0x1]
    %v1468 = vld [vmem:[#allocation2 + $0x8] sm:$0x1]
    %v1469 = vld [vmem:[#allocation2 + $0x9] sm:$0x1]
    %v1470 = vld [vmem:[#allocation2 + $0xa] sm:$0x1]
    %v1471 = vld [vmem:[#allocation2 + $0xb] sm:$0x1]
    %v1472 = vld [vmem:[#allocation2 + $0xc] sm:$0x1]
    %v1473 = vld [vmem:[#allocation2 + $0xd] sm:$0x1]
    %v1474 = vld [vmem:[#allocation2 + $0xe] sm:$0x1]
    %v1475 = vld [vmem:[#allocation2 + $0xf] sm:$0x1]
    %v1476 = vld [vmem:[#allocation2 + $0x10] sm:$0x1]
    %v1477 = vld [vmem:[#allocation2 + $0x11] sm:$0x1]
    %v1478 = vld [vmem:[#allocation2 + $0x12] sm:$0x1]
    %v1479 = vld [vmem:[#allocation2 + $0x13] sm:$0x1]
    %v1480 = vld [vmem:[#allocation2 + $0x14] sm:$0x1]
    %v1481 = vld [vmem:[#allocation2 + $0x15] sm:$0x1]
    %v1482 = vld [vmem:[#allocation2 + $0x16] sm:$0x1]
    %v1483 = vld [vmem:[#allocation2 + $0x17] sm:$0x1]
    %v1484 = vld [vmem:[#allocation2 + $0x18] sm:$0x1]
    %v1485 = vld [vmem:[#allocation2 + $0x19] sm:$0x1]
    %v1486 = vld [vmem:[#allocation2 + $0x1a] sm:$0x1]
    %v1487 = vld [vmem:[#allocation2 + $0x1b] sm:$0x1]
    %v1488 = vld [vmem:[#allocation2 + $0x1c] sm:$0x1]
    %v1489 = vld [vmem:[#allocation2 + $0x1d] sm:$0x1]
    %v1490 = vld [vmem:[#allocation2 + $0x1e] sm:$0x1]
    %v1491 = vld [vmem:[#allocation2 + $0x1f] sm:$0x1]
    %v1492 = vld [vmem:[#allocation2 + $0x20] sm:$0x1]
    %v1493 = vld [vmem:[#allocation2 + $0x21] sm:$0x1]
    %v1494 = vld [vmem:[#allocation2 + $0x22] sm:$0x1]
    %v1495 = vld [vmem:[#allocation2 + $0x23] sm:$0x1]
    %v1496 = vld [vmem:[#allocation2 + $0x24] sm:$0x1]
    %v1497 = vld [vmem:[#allocation2 + $0x25] sm:$0x1]
    %v1498 = vld [vmem:[#allocation2 + $0x26] sm:$0x1]
    %v1499 = vld [vmem:[#allocation2 + $0x27] sm:$0x1]
    %v1500 = vld [vmem:[#allocation2 + $0x28] sm:$0x1]
    %v1501 = vld [vmem:[#allocation2 + $0x29] sm:$0x1]
    %v1502 = vld [vmem:[#allocation2 + $0x2a] sm:$0x1]
    %v1503 = vld [vmem:[#allocation2 + $0x2b] sm:$0x1]
    %v1504 = vld [vmem:[#allocation2 + $0x2c] sm:$0x1]
    %v1505 = vld [vmem:[#allocation2 + $0x2d] sm:$0x1]
    %v1506 = vld [vmem:[#allocation2 + $0x2e] sm:$0x1]
    %v1507 = vld [vmem:[#allocation2 + $0x2f] sm:$0x1]
    %v1508 = vld [vmem:[#allocation2 + $0x30] sm:$0x1]
    %v1509 = vld [vmem:[#allocation2 + $0x31] sm:$0x1]
    %v1510 = vld [vmem:[#allocation2 + $0x32] sm:$0x1]
    %v1511 = vld [vmem:[#allocation2 + $0x33] sm:$0x1]
    %v1512 = vld [vmem:[#allocation2 + $0x34] sm:$0x1]
    %v1513 = vld [vmem:[#allocation2 + $0x35] sm:$0x1]
    %v1514 = vld [vmem:[#allocation2 + $0x36] sm:$0x1]
    %v1515 = vld [vmem:[#allocation2 + $0x37] sm:$0x1]
    %v1516 = vld [vmem:[#allocation2 + $0x38] sm:$0x1]
    %v1517 = vld [vmem:[#allocation2 + $0x39] sm:$0x1]
    %v1518 = vld [vmem:[#allocation2 + $0x3a] sm:$0x1]
    %v1519 = vld [vmem:[#allocation2 + $0x3b] sm:$0x1]
    %v1520 = vld [vmem:[#allocation2 + $0x3c] sm:$0x1]
    %v1521 = vld [vmem:[#allocation2 + $0x3d] sm:$0x1]
    %v1522 = vld [vmem:[#allocation2 + $0x3e] sm:$0x1]
    %v1523 = vld [vmem:[#allocation2 + $0x3f] sm:$0x1]
    %v1524 = vld [vmem:[#allocation2 + $0x40] sm:$0x1]
    %v1525 = vld [vmem:[#allocation2 + $0x41] sm:$0x1]
    %v1526 = vld [vmem:[#allocation2 + $0x42] sm:$0x1]
    %v1527 = vld [vmem:[#allocation2 + $0x43] sm:$0x1]
    %v1528 = vld [vmem:[#allocation2 + $0x44] sm:$0x1]
    %v1529 = vld [vmem:[#allocation2 + $0x45] sm:$0x1]
    %v1530 = vld [vmem:[#allocation2 + $0x46] sm:$0x1]
    %v1531 = vld [vmem:[#allocation2 + $0x47] sm:$0x1]
    %v1532 = vld [vmem:[#allocation2 + $0x48] sm:$0x1]
    %v1533 = vld [vmem:[#allocation2 + $0x49] sm:$0x1]
    %v1534 = vld [vmem:[#allocation2 + $0x4a] sm:$0x1]
    %v1535 = vld [vmem:[#allocation2 + $0x4b] sm:$0x1]
    %v1536 = vld [vmem:[#allocation2 + $0x4c] sm:$0x1]
    %v1537 = vld [vmem:[#allocation2 + $0x4d] sm:$0x1]
    %v1538 = vld [vmem:[#allocation2 + $0x4e] sm:$0x1]
    %v1539 = vld [vmem:[#allocation2 + $0x4f] sm:$0x1]
    %v1540 = vld [vmem:[#allocation2 + $0x50] sm:$0x1]
    %v1541 = vld [vmem:[#allocation2 + $0x51] sm:$0x1]
    %v1542 = vld [vmem:[#allocation2 + $0x52] sm:$0x1]
    %v1543 = vld [vmem:[#allocation2 + $0x53] sm:$0x1]
    %v1544 = vld [vmem:[#allocation2 + $0x54] sm:$0x1]
    %v1545 = vld [vmem:[#allocation2 + $0x55] sm:$0x1]
    %v1546 = vld [vmem:[#allocation2 + $0x56] sm:$0x1]
    %v1547 = vld [vmem:[#allocation2 + $0x57] sm:$0x1]
    %v1548 = vld [vmem:[#allocation2 + $0x58] sm:$0x1]
    %v1549 = vld [vmem:[#allocation2 + $0x59] sm:$0x1]
    %v1550 = vld [vmem:[#allocation2 + $0x5a] sm:$0x1]
    %v1551 = vld [vmem:[#allocation2 + $0x5b] sm:$0x1]
    %v1552 = vld [vmem:[#allocation2 + $0x5c] sm:$0x1]
    %v1553 = vld [vmem:[#allocation2 + $0x5d] sm:$0x1]
    %v1554 = vld [vmem:[#allocation2 + $0x5e] sm:$0x1]
    %v1555 = vld [vmem:[#allocation2 + $0x5f] sm:$0x1]
    %v1556 = vld [vmem:[#allocation2 + $0x60] sm:$0x1]
    %v1557 = vld [vmem:[#allocation2 + $0x61] sm:$0x1]
    %v1558 = vld [vmem:[#allocation2 + $0x62] sm:$0x1]
    %v1559 = vld [vmem:[#allocation2 + $0x63] sm:$0x1]
    %v1560 = vld [vmem:[#allocation9] sm:$0xf]
    %v1561 = vld [vmem:[#allocation9 + $0x4] sm:$0xf]
    %v1562 = vld [vmem:[#allocation9 + $0x8] sm:$0xf]
    %v1563 = vld [vmem:[#allocation9 + $0xc] sm:$0xf]
    %s1564 = scalar_lea.vmem [#allocation9], 16
    %v1565 = vld [vmem:[%s1564] sm:$0xf]
    %v1566 = vld [vmem:[%s1564 + $0x4] sm:$0xf]
    %v1567 = vld [vmem:[%s1564 + $0x8] sm:$0xf]
    %v1568 = vld [vmem:[%s1564 + $0xc] sm:$0xf]
    %v1633 = vcombine.low %v1461, %v1462
    %v1634 = vcombine.low %v1463, %v1464
    %v1635 = vcombine.low %v1465, %v1466
    %v1636 = vcombine.low %v1467, %v1468
    %v1638 = vunpack.c.l.s4 1966171168
    %v1639 = vunpack.c.0.s8 %v1638
    %v1640 = vlaneseq
    %v1641 = vshrl.u32 %v1640, 7
    %v1642 = vsub.s32 %v1639, %v1641
    %v1643 = vrot.slane %v1633, %v1642
    %v1645 = vunpack.c.l.s4 1966171168
    %v1646 = vunpack.c.0.s8 %v1645
    %v1647 = vlaneseq
    %v1648 = vshrl.u32 %v1647, 7
    %v1649 = vsub.s32 %v1646, %v1648
    %v1650 = vrot.slane %v1634, %v1649
    %v1652 = vunpack.c.l.s4 1966171168
    %v1653 = vunpack.c.0.s8 %v1652
    %v1654 = vlaneseq
    %v1655 = vshrl.u32 %v1654, 7
    %v1656 = vsub.s32 %v1653, %v1655
    %v1657 = vrot.slane %v1635, %v1656
    %v1659 = vunpack.c.l.s4 1966171168
    %v1660 = vunpack.c.0.s8 %v1659
    %v1661 = vlaneseq
    %v1662 = vshrl.u32 %v1661, 7
    %v1663 = vsub.s32 %v1660, %v1662
    %v1664 = vrot.slane %v1636, %v1663
    %v1665 = vcombine.low %v1643, %v1650
    %v1666 = vcombine.low %v1657, %v1664
    %v1668 = vunpack.c.l.s4 1966171168
    %v1669 = vunpack.c.0.s8 %v1668
    %v1670 = vlaneseq
    %v1671 = vshrl.u32 %v1670, 7
    %v1672 = vsub.s32 %v1669, %v1671
    %v1673 = vrot.slane %v1665, %v1672
    %v1675 = vunpack.c.l.s4 1966171168
    %v1676 = vunpack.c.0.s8 %v1675
    %v1677 = vlaneseq
    %v1678 = vshrl.u32 %v1677, 7
    %v1679 = vsub.s32 %v1676, %v1678
    %v1680 = vrot.slane %v1666, %v1679
    %v1681 = vcombine.low %v1673, %v1680
    %v1682 = vcombine.low %v1471, %v1472
    %v1683 = vcombine.low %v1473, %v1474
    %v1684 = vcombine.low %v1475, %v1476
    %v1685 = vcombine.low %v1477, %v1478
    %v1687 = vunpack.c.l.s4 1966171168
    %v1688 = vunpack.c.0.s8 %v1687
    %v1689 = vlaneseq
    %v1690 = vshrl.u32 %v1689, 7
    %v1691 = vsub.s32 %v1688, %v1690
    %v1692 = vrot.slane %v1682, %v1691
    %v1694 = vunpack.c.l.s4 1966171168
    %v1695 = vunpack.c.0.s8 %v1694
    %v1696 = vlaneseq
    %v1697 = vshrl.u32 %v1696, 7
    %v1698 = vsub.s32 %v1695, %v1697
    %v1699 = vrot.slane %v1683, %v1698
    %v1701 = vunpack.c.l.s4 1966171168
    %v1702 = vunpack.c.0.s8 %v1701
    %v1703 = vlaneseq
    %v1704 = vshrl.u32 %v1703, 7
    %v1705 = vsub.s32 %v1702, %v1704
    %v1706 = vrot.slane %v1684, %v1705
    %v1708 = vunpack.c.l.s4 1966171168
    %v1709 = vunpack.c.0.s8 %v1708
    %v1710 = vlaneseq
    %v1711 = vshrl.u32 %v1710, 7
    %v1712 = vsub.s32 %v1709, %v1711
    %v1713 = vrot.slane %v1685, %v1712
    %v1714 = vcombine.low %v1692, %v1699
    %v1715 = vcombine.low %v1706, %v1713
    %v1717 = vunpack.c.l.s4 1966171168
    %v1718 = vunpack.c.0.s8 %v1717
    %v1719 = vlaneseq
    %v1720 = vshrl.u32 %v1719, 7
    %v1721 = vsub.s32 %v1718, %v1720
    %v1722 = vrot.slane %v1714, %v1721
    %v1724 = vunpack.c.l.s4 1966171168
    %v1725 = vunpack.c.0.s8 %v1724
    %v1726 = vlaneseq
    %v1727 = vshrl.u32 %v1726, 7
    %v1728 = vsub.s32 %v1725, %v1727
    %v1729 = vrot.slane %v1715, %v1728
    %v1730 = vcombine.low %v1722, %v1729
    %v1731 = vcombine.low %v1481, %v1482
    %v1732 = vcombine.low %v1483, %v1484
    %v1733 = vcombine.low %v1485, %v1486
    %v1734 = vcombine.low %v1487, %v1488
    %v1736 = vunpack.c.l.s4 1966171168
    %v1737 = vunpack.c.0.s8 %v1736
    %v1738 = vlaneseq
    %v1739 = vshrl.u32 %v1738, 7
    %v1740 = vsub.s32 %v1737, %v1739
    %v1741 = vrot.slane %v1731, %v1740
    %v1743 = vunpack.c.l.s4 1966171168
    %v1744 = vunpack.c.0.s8 %v1743
    %v1745 = vlaneseq
    %v1746 = vshrl.u32 %v1745, 7
    %v1747 = vsub.s32 %v1744, %v1746
    %v1748 = vrot.slane %v1732, %v1747
    %v1750 = vunpack.c.l.s4 1966171168
    %v1751 = vunpack.c.0.s8 %v1750
    %v1752 = vlaneseq
    %v1753 = vshrl.u32 %v1752, 7
    %v1754 = vsub.s32 %v1751, %v1753
    %v1755 = vrot.slane %v1733, %v1754
    %v1757 = vunpack.c.l.s4 1966171168
    %v1758 = vunpack.c.0.s8 %v1757
    %v1759 = vlaneseq
    %v1760 = vshrl.u32 %v1759, 7
    %v1761 = vsub.s32 %v1758, %v1760
    %v1762 = vrot.slane %v1734, %v1761
    %v1763 = vcombine.low %v1741, %v1748
    %v1764 = vcombine.low %v1755, %v1762
    %v1766 = vunpack.c.l.s4 1966171168
    %v1767 = vunpack.c.0.s8 %v1766
    %v1768 = vlaneseq
    %v1769 = vshrl.u32 %v1768, 7
    %v1770 = vsub.s32 %v1767, %v1769
    %v1771 = vrot.slane %v1763, %v1770
    %v1773 = vunpack.c.l.s4 1966171168
    %v1774 = vunpack.c.0.s8 %v1773
    %v1775 = vlaneseq
    %v1776 = vshrl.u32 %v1775, 7
    %v1777 = vsub.s32 %v1774, %v1776
    %v1778 = vrot.slane %v1764, %v1777
    %v1779 = vcombine.low %v1771, %v1778
    %v1780 = vcombine.low %v1491, %v1492
    %v1781 = vcombine.low %v1493, %v1494
    %v1782 = vcombine.low %v1495, %v1496
    %v1783 = vcombine.low %v1497, %v1498
    %v1785 = vunpack.c.l.s4 1966171168
    %v1786 = vunpack.c.0.s8 %v1785
    %v1787 = vlaneseq
    %v1788 = vshrl.u32 %v1787, 7
    %v1789 = vsub.s32 %v1786, %v1788
    %v1790 = vrot.slane %v1780, %v1789
    %v1792 = vunpack.c.l.s4 1966171168
    %v1793 = vunpack.c.0.s8 %v1792
    %v1794 = vlaneseq
    %v1795 = vshrl.u32 %v1794, 7
    %v1796 = vsub.s32 %v1793, %v1795
    %v1797 = vrot.slane %v1781, %v1796
    %v1799 = vunpack.c.l.s4 1966171168
    %v1800 = vunpack.c.0.s8 %v1799
    %v1801 = vlaneseq
    %v1802 = vshrl.u32 %v1801, 7
    %v1803 = vsub.s32 %v1800, %v1802
    %v1804 = vrot.slane %v1782, %v1803
    %v1806 = vunpack.c.l.s4 1966171168
    %v1807 = vunpack.c.0.s8 %v1806
    %v1808 = vlaneseq
    %v1809 = vshrl.u32 %v1808, 7
    %v1810 = vsub.s32 %v1807, %v1809
    %v1811 = vrot.slane %v1783, %v1810
    %v1812 = vcombine.low %v1790, %v1797
    %v1813 = vcombine.low %v1804, %v1811
    %v1815 = vunpack.c.l.s4 1966171168
    %v1816 = vunpack.c.0.s8 %v1815
    %v1817 = vlaneseq
    %v1818 = vshrl.u32 %v1817, 7
    %v1819 = vsub.s32 %v1816, %v1818
    %v1820 = vrot.slane %v1812, %v1819
    %v1822 = vunpack.c.l.s4 1966171168
    %v1823 = vunpack.c.0.s8 %v1822
    %v1824 = vlaneseq
    %v1825 = vshrl.u32 %v1824, 7
    %v1826 = vsub.s32 %v1823, %v1825
    %v1827 = vrot.slane %v1813, %v1826
    %v1828 = vcombine.low %v1820, %v1827
    %v1829 = vcombine.low %v1501, %v1502
    %v1830 = vcombine.low %v1503, %v1504
    %v1831 = vcombine.low %v1505, %v1506
    %v1832 = vcombine.low %v1507, %v1508
    %v1834 = vunpack.c.l.s4 1966171168
    %v1835 = vunpack.c.0.s8 %v1834
    %v1836 = vlaneseq
    %v1837 = vshrl.u32 %v1836, 7
    %v1838 = vsub.s32 %v1835, %v1837
    %v1839 = vrot.slane %v1829, %v1838
    %v1841 = vunpack.c.l.s4 1966171168
    %v1842 = vunpack.c.0.s8 %v1841
    %v1843 = vlaneseq
    %v1844 = vshrl.u32 %v1843, 7
    %v1845 = vsub.s32 %v1842, %v1844
    %v1846 = vrot.slane %v1830, %v1845
    %v1848 = vunpack.c.l.s4 1966171168
    %v1849 = vunpack.c.0.s8 %v1848
    %v1850 = vlaneseq
    %v1851 = vshrl.u32 %v1850, 7
    %v1852 = vsub.s32 %v1849, %v1851
    %v1853 = vrot.slane %v1831, %v1852
    %v1855 = vunpack.c.l.s4 1966171168
    %v1856 = vunpack.c.0.s8 %v1855
    %v1857 = vlaneseq
    %v1858 = vshrl.u32 %v1857, 7
    %v1859 = vsub.s32 %v1856, %v1858
    %v1860 = vrot.slane %v1832, %v1859
    %v1861 = vcombine.low %v1839, %v1846
    %v1862 = vcombine.low %v1853, %v1860
    %v1864 = vunpack.c.l.s4 1966171168
    %v1865 = vunpack.c.0.s8 %v1864
    %v1866 = vlaneseq
    %v1867 = vshrl.u32 %v1866, 7
    %v1868 = vsub.s32 %v1865, %v1867
    %v1869 = vrot.slane %v1861, %v1868
    %v1871 = vunpack.c.l.s4 1966171168
    %v1872 = vunpack.c.0.s8 %v1871
    %v1873 = vlaneseq
    %v1874 = vshrl.u32 %v1873, 7
    %v1875 = vsub.s32 %v1872, %v1874
    %v1876 = vrot.slane %v1862, %v1875
    %v1877 = vcombine.low %v1869, %v1876
    %v1878 = vcombine.low %v1511, %v1512
    %v1879 = vcombine.low %v1513, %v1514
    %v1880 = vcombine.low %v1515, %v1516
    %v1881 = vcombine.low %v1517, %v1518
    %v1883 = vunpack.c.l.s4 1966171168
    %v1884 = vunpack.c.0.s8 %v1883
    %v1885 = vlaneseq
    %v1886 = vshrl.u32 %v1885, 7
    %v1887 = vsub.s32 %v1884, %v1886
    %v1888 = vrot.slane %v1878, %v1887
    %v1890 = vunpack.c.l.s4 1966171168
    %v1891 = vunpack.c.0.s8 %v1890
    %v1892 = vlaneseq
    %v1893 = vshrl.u32 %v1892, 7
    %v1894 = vsub.s32 %v1891, %v1893
    %v1895 = vrot.slane %v1879, %v1894
    %v1897 = vunpack.c.l.s4 1966171168
    %v1898 = vunpack.c.0.s8 %v1897
    %v1899 = vlaneseq
    %v1900 = vshrl.u32 %v1899, 7
    %v1901 = vsub.s32 %v1898, %v1900
    %v1902 = vrot.slane %v1880, %v1901
    %v1904 = vunpack.c.l.s4 1966171168
    %v1905 = vunpack.c.0.s8 %v1904
    %v1906 = vlaneseq
    %v1907 = vshrl.u32 %v1906, 7
    %v1908 = vsub.s32 %v1905, %v1907
    %v1909 = vrot.slane %v1881, %v1908
    %v1910 = vcombine.low %v1888, %v1895
    %v1911 = vcombine.low %v1902, %v1909
    %v1913 = vunpack.c.l.s4 1966171168
    %v1914 = vunpack.c.0.s8 %v1913
    %v1915 = vlaneseq
    %v1916 = vshrl.u32 %v1915, 7
    %v1917 = vsub.s32 %v1914, %v1916
    %v1918 = vrot.slane %v1910, %v1917
    %v1920 = vunpack.c.l.s4 1966171168
    %v1921 = vunpack.c.0.s8 %v1920
    %v1922 = vlaneseq
    %v1923 = vshrl.u32 %v1922, 7
    %v1924 = vsub.s32 %v1921, %v1923
    %v1925 = vrot.slane %v1911, %v1924
    %v1926 = vcombine.low %v1918, %v1925
    %v1927 = vcombine.low %v1521, %v1522
    %v1928 = vcombine.low %v1523, %v1524
    %v1929 = vcombine.low %v1525, %v1526
    %v1930 = vcombine.low %v1527, %v1528
    %v1932 = vunpack.c.l.s4 1966171168
    %v1933 = vunpack.c.0.s8 %v1932
    %v1934 = vlaneseq
    %v1935 = vshrl.u32 %v1934, 7
    %v1936 = vsub.s32 %v1933, %v1935
    %v1937 = vrot.slane %v1927, %v1936
    %v1939 = vunpack.c.l.s4 1966171168
    %v1940 = vunpack.c.0.s8 %v1939
    %v1941 = vlaneseq
    %v1942 = vshrl.u32 %v1941, 7
    %v1943 = vsub.s32 %v1940, %v1942
    %v1944 = vrot.slane %v1928, %v1943
    %v1946 = vunpack.c.l.s4 1966171168
    %v1947 = vunpack.c.0.s8 %v1946
    %v1948 = vlaneseq
    %v1949 = vshrl.u32 %v1948, 7
    %v1950 = vsub.s32 %v1947, %v1949
    %v1951 = vrot.slane %v1929, %v1950
    %v1953 = vunpack.c.l.s4 1966171168
    %v1954 = vunpack.c.0.s8 %v1953
    %v1955 = vlaneseq
    %v1956 = vshrl.u32 %v1955, 7
    %v1957 = vsub.s32 %v1954, %v1956
    %v1958 = vrot.slane %v1930, %v1957
    %v1959 = vcombine.low %v1937, %v1944
    %v1960 = vcombine.low %v1951, %v1958
    %v1962 = vunpack.c.l.s4 1966171168
    %v1963 = vunpack.c.0.s8 %v1962
    %v1964 = vlaneseq
    %v1965 = vshrl.u32 %v1964, 7
    %v1966 = vsub.s32 %v1963, %v1965
    %v1967 = vrot.slane %v1959, %v1966
    %v1969 = vunpack.c.l.s4 1966171168
    %v1970 = vunpack.c.0.s8 %v1969
    %v1971 = vlaneseq
    %v1972 = vshrl.u32 %v1971, 7
    %v1973 = vsub.s32 %v1970, %v1972
    %v1974 = vrot.slane %v1960, %v1973
    %v1975 = vcombine.low %v1967, %v1974
    %v1976 = vcombine.low %v1531, %v1532
    %v1977 = vcombine.low %v1533, %v1534
    %v1978 = vcombine.low %v1535, %v1536
    %v1979 = vcombine.low %v1537, %v1538
    %v1981 = vunpack.c.l.s4 1966171168
    %v1982 = vunpack.c.0.s8 %v1981
    %v1983 = vlaneseq
    %v1984 = vshrl.u32 %v1983, 7
    %v1985 = vsub.s32 %v1982, %v1984
    %v1986 = vrot.slane %v1976, %v1985
    %v1988 = vunpack.c.l.s4 1966171168
    %v1989 = vunpack.c.0.s8 %v1988
    %v1990 = vlaneseq
    %v1991 = vshrl.u32 %v1990, 7
    %v1992 = vsub.s32 %v1989, %v1991
    %v1993 = vrot.slane %v1977, %v1992
    %v1995 = vunpack.c.l.s4 1966171168
    %v1996 = vunpack.c.0.s8 %v1995
    %v1997 = vlaneseq
    %v1998 = vshrl.u32 %v1997, 7
    %v1999 = vsub.s32 %v1996, %v1998
    %v2000 = vrot.slane %v1978, %v1999
    %v2002 = vunpack.c.l.s4 1966171168
    %v2003 = vunpack.c.0.s8 %v2002
    %v2004 = vlaneseq
    %v2005 = vshrl.u32 %v2004, 7
    %v2006 = vsub.s32 %v2003, %v2005
    %v2007 = vrot.slane %v1979, %v2006
    %v2008 = vcombine.low %v1986, %v1993
    %v2009 = vcombine.low %v2000, %v2007
    %v2011 = vunpack.c.l.s4 1966171168
    %v2012 = vunpack.c.0.s8 %v2011
    %v2013 = vlaneseq
    %v2014 = vshrl.u32 %v2013, 7
    %v2015 = vsub.s32 %v2012, %v2014
    %v2016 = vrot.slane %v2008, %v2015
    %v2018 = vunpack.c.l.s4 1966171168
    %v2019 = vunpack.c.0.s8 %v2018
    %v2020 = vlaneseq
    %v2021 = vshrl.u32 %v2020, 7
    %v2022 = vsub.s32 %v2019, %v2021
    %v2023 = vrot.slane %v2009, %v2022
    %v2024 = vcombine.low %v2016, %v2023
    %v2029 = vunpack.c.l.b16 %v1565
    %v2030 = vunpack.c.l.b16 %v1566
    %v2031 = vunpack.c.l.b16 %v1567
    %v2032 = vunpack.c.l.b16 %v1568
    %v2033 = vpack.c.b16 %v2030, %v2029
    %v2034 = vpack.c.b16 %v2032, %v2031
    %vm2037 = vcmask 261120
    %v2039 = vsel %vm2037, %v1681, 0
    %v2042 = vsel %vm2037, %v1730, 0
    %v2045 = vsel %vm2037, %v1779, 0
    %v2048 = vsel %vm2037, %v1828, 0
    %v2051 = vsel %vm2037, %v1877, 0
    %v2054 = vsel %vm2037, %v1926, 0
    %v2057 = vsel %vm2037, %v1975, 0
    %v2060 = vsel %vm2037, %v2024, 0
    %2062 = vmatprep.subr.bf16.mxu0 0
    %2063 = vmatpush1.bf16.msra.mxu0 %v2033
    %2064 = vmatprep.subr.bf16.mxu0 0
    %2065 = vmatpush1.bf16.msra.mxu0 %v2034
    %2066 = vmatprep.subr.bf16.mxu0 0
    %2067 = vmatpush1.bf16.msra.mxu0 0
    %2068 = vmatprep.subr.bf16.mxu0 0
    %2069 = vmatpush1.bf16.msra.mxu0 0
    %2070 = vmatprep.subr.bf16.mxu0 0
    %2071 = vmatpush1.bf16.msra.mxu0 0
    %2072 = vmatprep.subr.bf16.mxu0 0
    %2073 = vmatpush1.bf16.msra.mxu0 0
    %2074 = vmatprep.subr.bf16.mxu0 0
    %2075 = vmatpush1.bf16.msra.mxu0 0
    %2076 = vmatprep.subr.bf16.mxu0 0
    %2077 = vmatpush1.bf16.msra.mxu0 0
    %2078 = vmatprep.subr.bf16.mxu0 0
    %2079 = vmatpush1.bf16.msra.mxu0 0
    %2080 = vmatprep.subr.bf16.mxu0 0
    %2081 = vmatpush1.bf16.msra.mxu0 0
    %2082 = vmatprep.subr.bf16.mxu0 0
    %2083 = vmatpush1.bf16.msra.mxu0 0
    %2084 = vmatprep.subr.bf16.mxu0 0
    %2085 = vmatpush1.bf16.msra.mxu0 0
    %2086 = vmatprep.subr.bf16.mxu0 0
    %2087 = vmatpush1.bf16.msra.mxu0 0
    %2088 = vmatprep.subr.bf16.mxu0 0
    %2089 = vmatpush1.bf16.msra.mxu0 0
    %2090 = vmatprep.subr.bf16.mxu0 0
    %2091 = vmatpush1.bf16.msra.mxu0 0
    %2092 = vmatprep.subr.bf16.mxu0 0
    %2093 = vmatpush1.bf16.msra.mxu0 0
    %2094 = vmatprep.mubr.bf16.mxu0 0
    %2095 = vmatmul.mubr.bf16.gmra.mrb[0].mxu0 %v2039
    %v2096 = vpop.f32.mrb[0].mxu0
    %v2097 = vadd.f32 0.0, %v2096
    %v2098 = vpop.f32.mrb[0].mxu0
    %v2099 = vpop.f32.mrb[0].mxu0
    %v2100 = vadd.f32 0.0, %v2099
    %v2101 = vpop.f32.mrb[0].mxu0
    %2102 = vmatprep.mubr.bf16.mxu0 0
    %2103 = vmatmul.mubr.bf16.gmra.mrb[0].mxu0 %v2042
    %v2104 = vpop.f32.mrb[0].mxu0
    %v2105 = vadd.f32 0.0, %v2104
    %v2106 = vpop.f32.mrb[0].mxu0
    %v2107 = vpop.f32.mrb[0].mxu0
    %v2108 = vadd.f32 0.0, %v2107
    %v2109 = vpop.f32.mrb[0].mxu0
    %2110 = vmatprep.mubr.bf16.mxu0 0
    %2111 = vmatmul.mubr.bf16.gmra.mrb[0].mxu0 %v2045
    %v2112 = vpop.f32.mrb[0].mxu0
    %v2113 = vadd.f32 0.0, %v2112
    %v2114 = vpop.f32.mrb[0].mxu0
    %v2115 = vpop.f32.mrb[0].mxu0
    %v2116 = vadd.f32 0.0, %v2115
    %v2117 = vpop.f32.mrb[0].mxu0
    %2118 = vmatprep.mubr.bf16.mxu0 0
    %2119 = vmatmul.mubr.bf16.gmra.mrb[0].mxu0 %v2048
    %v2120 = vpop.f32.mrb[0].mxu0
    %v2121 = vadd.f32 0.0, %v2120
    %v2122 = vpop.f32.mrb[0].mxu0
    %v2123 = vpop.f32.mrb[0].mxu0
    %v2124 = vadd.f32 0.0, %v2123
    %v2125 = vpop.f32.mrb[0].mxu0
    %2126 = vmatprep.mubr.bf16.mxu0 0
    %2127 = vmatmul.mubr.bf16.gmra.mrb[0].mxu0 %v2051
    %v2128 = vpop.f32.mrb[0].mxu0
    %v2129 = vadd.f32 0.0, %v2128
    %v2130 = vpop.f32.mrb[0].mxu0
    %v2131 = vpop.f32.mrb[0].mxu0
    %v2132 = vadd.f32 0.0, %v2131
    %v2133 = vpop.f32.mrb[0].mxu0
    %2134 = vmatprep.mubr.bf16.mxu0 0
    %2135 = vmatmul.mubr.bf16.gmra.mrb[0].mxu0 %v2054
    %v2136 = vpop.f32.mrb[0].mxu0
    %v2137 = vadd.f32 0.0, %v2136
    %v2138 = vpop.f32.mrb[0].mxu0
    %v2139 = vpop.f32.mrb[0].mxu0
    %v2140 = vadd.f32 0.0, %v2139
    %v2141 = vpop.f32.mrb[0].mxu0
    %2142 = vmatprep.mubr.bf16.mxu0 0
    %2143 = vmatmul.mubr.bf16.gmra.mrb[0].mxu0 %v2057
    %v2144 = vpop.f32.mrb[0].mxu0
    %v2145 = vadd.f32 0.0, %v2144
    %v2146 = vpop.f32.mrb[0].mxu0
    %v2147 = vpop.f32.mrb[0].mxu0
    %v2148 = vadd.f32 0.0, %v2147
    %v2149 = vpop.f32.mrb[0].mxu0
    %2150 = vmatprep.mubr.bf16.mxu0 0
    %2151 = vmatmul.mubr.bf16.gmra.mrb[0].mxu0 %v2060
    %v2152 = vpop.f32.mrb[0].mxu0
    %v2153 = vadd.f32 0.0, %v2152
    %v2154 = vpop.f32.mrb[0].mxu0
    %v2155 = vpop.f32.mrb[0].mxu0
    %v2156 = vadd.f32 0.0, %v2155
    %v2157 = vpop.f32.mrb[0].mxu0
    %2158 = vdwg.mxu0
    %v2167 = vcombine.low %v1460, %v1461
    %v2168 = vcombine.low %v1462, %v1463
    %v2169 = vcombine.low %v1464, %v1465
    %v2170 = vcombine.low %v1466, %v1467
    %v2172 = vunpack.c.l.s4 1966171168
    %v2173 = vunpack.c.0.s8 %v2172
    %v2174 = vlaneseq
    %v2175 = vshrl.u32 %v2174, 7
    %v2176 = vsub.s32 %v2173, %v2175
    %v2177 = vrot.slane %v2167, %v2176
    %v2179 = vunpack.c.l.s4 1966171168
    %v2180 = vunpack.c.0.s8 %v2179
    %v2181 = vlaneseq
    %v2182 = vshrl.u32 %v2181, 7
    %v2183 = vsub.s32 %v2180, %v2182
    %v2184 = vrot.slane %v2168, %v2183
    %v2186 = vunpack.c.l.s4 1966171168
    %v2187 = vunpack.c.0.s8 %v2186
    %v2188 = vlaneseq
    %v2189 = vshrl.u32 %v2188, 7
    %v2190 = vsub.s32 %v2187, %v2189
    %v2191 = vrot.slane %v2169, %v2190
    %v2193 = vunpack.c.l.s4 1966171168
    %v2194 = vunpack.c.0.s8 %v2193
    %v2195 = vlaneseq
    %v2196 = vshrl.u32 %v2195, 7
    %v2197 = vsub.s32 %v2194, %v2196
    %v2198 = vrot.slane %v2170, %v2197
    %v2199 = vcombine.low %v2177, %v2184
    %v2200 = vcombine.low %v2191, %v2198
    %v2202 = vunpack.c.l.s4 1966171168
    %v2203 = vunpack.c.0.s8 %v2202
    %v2204 = vlaneseq
    %v2205 = vshrl.u32 %v2204, 7
    %v2206 = vsub.s32 %v2203, %v2205
    %v2207 = vrot.slane %v2199, %v2206
    %v2209 = vunpack.c.l.s4 1966171168
    %v2210 = vunpack.c.0.s8 %v2209
    %v2211 = vlaneseq
    %v2212 = vshrl.u32 %v2211, 7
    %v2213 = vsub.s32 %v2210, %v2212
    %v2214 = vrot.slane %v2200, %v2213
    %v2215 = vcombine.low %v2207, %v2214
    %v2216 = vcombine.low %v1470, %v1471
    %v2217 = vcombine.low %v1472, %v1473
    %v2218 = vcombine.low %v1474, %v1475
    %v2219 = vcombine.low %v1476, %v1477
    %v2221 = vunpack.c.l.s4 1966171168
    %v2222 = vunpack.c.0.s8 %v2221
    %v2223 = vlaneseq
    %v2224 = vshrl.u32 %v2223, 7
    %v2225 = vsub.s32 %v2222, %v2224
    %v2226 = vrot.slane %v2216, %v2225
    %v2228 = vunpack.c.l.s4 1966171168
    %v2229 = vunpack.c.0.s8 %v2228
    %v2230 = vlaneseq
    %v2231 = vshrl.u32 %v2230, 7
    %v2232 = vsub.s32 %v2229, %v2231
    %v2233 = vrot.slane %v2217, %v2232
    %v2235 = vunpack.c.l.s4 1966171168
    %v2236 = vunpack.c.0.s8 %v2235
    %v2237 = vlaneseq
    %v2238 = vshrl.u32 %v2237, 7
    %v2239 = vsub.s32 %v2236, %v2238
    %v2240 = vrot.slane %v2218, %v2239
    %v2242 = vunpack.c.l.s4 1966171168
    %v2243 = vunpack.c.0.s8 %v2242
    %v2244 = vlaneseq
    %v2245 = vshrl.u32 %v2244, 7
    %v2246 = vsub.s32 %v2243, %v2245
    %v2247 = vrot.slane %v2219, %v2246
    %v2248 = vcombine.low %v2226, %v2233
    %v2249 = vcombine.low %v2240, %v2247
    %v2251 = vunpack.c.l.s4 1966171168
    %v2252 = vunpack.c.0.s8 %v2251
    %v2253 = vlaneseq
    %v2254 = vshrl.u32 %v2253, 7
    %v2255 = vsub.s32 %v2252, %v2254
    %v2256 = vrot.slane %v2248, %v2255
    %v2258 = vunpack.c.l.s4 1966171168
    %v2259 = vunpack.c.0.s8 %v2258
    %v2260 = vlaneseq
    %v2261 = vshrl.u32 %v2260, 7
    %v2262 = vsub.s32 %v2259, %v2261
    %v2263 = vrot.slane %v2249, %v2262
    %v2264 = vcombine.low %v2256, %v2263
    %v2265 = vcombine.low %v1480, %v1481
    %v2266 = vcombine.low %v1482, %v1483
    %v2267 = vcombine.low %v1484, %v1485
    %v2268 = vcombine.low %v1486, %v1487
    %v2270 = vunpack.c.l.s4 1966171168
    %v2271 = vunpack.c.0.s8 %v2270
    %v2272 = vlaneseq
    %v2273 = vshrl.u32 %v2272, 7
    %v2274 = vsub.s32 %v2271, %v2273
    %v2275 = vrot.slane %v2265, %v2274
    %v2277 = vunpack.c.l.s4 1966171168
    %v2278 = vunpack.c.0.s8 %v2277
    %v2279 = vlaneseq
    %v2280 = vshrl.u32 %v2279, 7
    %v2281 = vsub.s32 %v2278, %v2280
    %v2282 = vrot.slane %v2266, %v2281
    %v2284 = vunpack.c.l.s4 1966171168
    %v2285 = vunpack.c.0.s8 %v2284
    %v2286 = vlaneseq
    %v2287 = vshrl.u32 %v2286, 7
    %v2288 = vsub.s32 %v2285, %v2287
    %v2289 = vrot.slane %v2267, %v2288
    %v2291 = vunpack.c.l.s4 1966171168
    %v2292 = vunpack.c.0.s8 %v2291
    %v2293 = vlaneseq
    %v2294 = vshrl.u32 %v2293, 7
    %v2295 = vsub.s32 %v2292, %v2294
    %v2296 = vrot.slane %v2268, %v2295
    %v2297 = vcombine.low %v2275, %v2282
    %v2298 = vcombine.low %v2289, %v2296
    %v2300 = vunpack.c.l.s4 1966171168
    %v2301 = vunpack.c.0.s8 %v2300
    %v2302 = vlaneseq
    %v2303 = vshrl.u32 %v2302, 7
    %v2304 = vsub.s32 %v2301, %v2303
    %v2305 = vrot.slane %v2297, %v2304
    %v2307 = vunpack.c.l.s4 1966171168
    %v2308 = vunpack.c.0.s8 %v2307
    %v2309 = vlaneseq
    %v2310 = vshrl.u32 %v2309, 7
    %v2311 = vsub.s32 %v2308, %v2310
    %v2312 = vrot.slane %v2298, %v2311
    %v2313 = vcombine.low %v2305, %v2312
    %v2314 = vcombine.low %v1490, %v1491
    %v2315 = vcombine.low %v1492, %v1493
    %v2316 = vcombine.low %v1494, %v1495
    %v2317 = vcombine.low %v1496, %v1497
    %v2319 = vunpack.c.l.s4 1966171168
    %v2320 = vunpack.c.0.s8 %v2319
    %v2321 = vlaneseq
    %v2322 = vshrl.u32 %v2321, 7
    %v2323 = vsub.s32 %v2320, %v2322
    %v2324 = vrot.slane %v2314, %v2323
    %v2326 = vunpack.c.l.s4 1966171168
    %v2327 = vunpack.c.0.s8 %v2326
    %v2328 = vlaneseq
    %v2329 = vshrl.u32 %v2328, 7
    %v2330 = vsub.s32 %v2327, %v2329
    %v2331 = vrot.slane %v2315, %v2330
    %v2333 = vunpack.c.l.s4 1966171168
    %v2334 = vunpack.c.0.s8 %v2333
    %v2335 = vlaneseq
    %v2336 = vshrl.u32 %v2335, 7
    %v2337 = vsub.s32 %v2334, %v2336
    %v2338 = vrot.slane %v2316, %v2337
    %v2340 = vunpack.c.l.s4 1966171168
    %v2341 = vunpack.c.0.s8 %v2340
    %v2342 = vlaneseq
    %v2343 = vshrl.u32 %v2342, 7
    %v2344 = vsub.s32 %v2341, %v2343
    %v2345 = vrot.slane %v2317, %v2344
    %v2346 = vcombine.low %v2324, %v2331
    %v2347 = vcombine.low %v2338, %v2345
    %v2349 = vunpack.c.l.s4 1966171168
    %v2350 = vunpack.c.0.s8 %v2349
    %v2351 = vlaneseq
    %v2352 = vshrl.u32 %v2351, 7
    %v2353 = vsub.s32 %v2350, %v2352
    %v2354 = vrot.slane %v2346, %v2353
    %v2356 = vunpack.c.l.s4 1966171168
    %v2357 = vunpack.c.0.s8 %v2356
    %v2358 = vlaneseq
    %v2359 = vshrl.u32 %v2358, 7
    %v2360 = vsub.s32 %v2357, %v2359
    %v2361 = vrot.slane %v2347, %v2360
    %v2362 = vcombine.low %v2354, %v2361
    %v2363 = vcombine.low %v1500, %v1501
    %v2364 = vcombine.low %v1502, %v1503
    %v2365 = vcombine.low %v1504, %v1505
    %v2366 = vcombine.low %v1506, %v1507
    %v2368 = vunpack.c.l.s4 1966171168
    %v2369 = vunpack.c.0.s8 %v2368
    %v2370 = vlaneseq
    %v2371 = vshrl.u32 %v2370, 7
    %v2372 = vsub.s32 %v2369, %v2371
    %v2373 = vrot.slane %v2363, %v2372
    %v2375 = vunpack.c.l.s4 1966171168
    %v2376 = vunpack.c.0.s8 %v2375
    %v2377 = vlaneseq
    %v2378 = vshrl.u32 %v2377, 7
    %v2379 = vsub.s32 %v2376, %v2378
    %v2380 = vrot.slane %v2364, %v2379
    %v2382 = vunpack.c.l.s4 1966171168
    %v2383 = vunpack.c.0.s8 %v2382
    %v2384 = vlaneseq
    %v2385 = vshrl.u32 %v2384, 7
    %v2386 = vsub.s32 %v2383, %v2385
    %v2387 = vrot.slane %v2365, %v2386
    %v2389 = vunpack.c.l.s4 1966171168
    %v2390 = vunpack.c.0.s8 %v2389
    %v2391 = vlaneseq
    %v2392 = vshrl.u32 %v2391, 7
    %v2393 = vsub.s32 %v2390, %v2392
    %v2394 = vrot.slane %v2366, %v2393
    %v2395 = vcombine.low %v2373, %v2380
    %v2396 = vcombine.low %v2387, %v2394
    %v2398 = vunpack.c.l.s4 1966171168
    %v2399 = vunpack.c.0.s8 %v2398
    %v2400 = vlaneseq
    %v2401 = vshrl.u32 %v2400, 7
    %v2402 = vsub.s32 %v2399, %v2401
    %v2403 = vrot.slane %v2395, %v2402
    %v2405 = vunpack.c.l.s4 1966171168
    %v2406 = vunpack.c.0.s8 %v2405
    %v2407 = vlaneseq
    %v2408 = vshrl.u32 %v2407, 7
    %v2409 = vsub.s32 %v2406, %v2408
    %v2410 = vrot.slane %v2396, %v2409
    %v2411 = vcombine.low %v2403, %v2410
    %v2412 = vcombine.low %v1510, %v1511
    %v2413 = vcombine.low %v1512, %v1513
    %v2414 = vcombine.low %v1514, %v1515
    %v2415 = vcombine.low %v1516, %v1517
    %v2417 = vunpack.c.l.s4 1966171168
    %v2418 = vunpack.c.0.s8 %v2417
    %v2419 = vlaneseq
    %v2420 = vshrl.u32 %v2419, 7
    %v2421 = vsub.s32 %v2418, %v2420
    %v2422 = vrot.slane %v2412, %v2421
    %v2424 = vunpack.c.l.s4 1966171168
    %v2425 = vunpack.c.0.s8 %v2424
    %v2426 = vlaneseq
    %v2427 = vshrl.u32 %v2426, 7
    %v2428 = vsub.s32 %v2425, %v2427
    %v2429 = vrot.slane %v2413, %v2428
    %v2431 = vunpack.c.l.s4 1966171168
    %v2432 = vunpack.c.0.s8 %v2431
    %v2433 = vlaneseq
    %v2434 = vshrl.u32 %v2433, 7
    %v2435 = vsub.s32 %v2432, %v2434
    %v2436 = vrot.slane %v2414, %v2435
    %v2438 = vunpack.c.l.s4 1966171168
    %v2439 = vunpack.c.0.s8 %v2438
    %v2440 = vlaneseq
    %v2441 = vshrl.u32 %v2440, 7
    %v2442 = vsub.s32 %v2439, %v2441
    %v2443 = vrot.slane %v2415, %v2442
    %v2444 = vcombine.low %v2422, %v2429
    %v2445 = vcombine.low %v2436, %v2443
    %v2447 = vunpack.c.l.s4 1966171168
    %v2448 = vunpack.c.0.s8 %v2447
    %v2449 = vlaneseq
    %v2450 = vshrl.u32 %v2449, 7
    %v2451 = vsub.s32 %v2448, %v2450
    %v2452 = vrot.slane %v2444, %v2451
    %v2454 = vunpack.c.l.s4 1966171168
    %v2455 = vunpack.c.0.s8 %v2454
    %v2456 = vlaneseq
    %v2457 = vshrl.u32 %v2456, 7
    %v2458 = vsub.s32 %v2455, %v2457
    %v2459 = vrot.slane %v2445, %v2458
    %v2460 = vcombine.low %v2452, %v2459
    %v2461 = vcombine.low %v1520, %v1521
    %v2462 = vcombine.low %v1522, %v1523
    %v2463 = vcombine.low %v1524, %v1525
    %v2464 = vcombine.low %v1526, %v1527
    %v2466 = vunpack.c.l.s4 1966171168
    %v2467 = vunpack.c.0.s8 %v2466
    %v2468 = vlaneseq
    %v2469 = vshrl.u32 %v2468, 7
    %v2470 = vsub.s32 %v2467, %v2469
    %v2471 = vrot.slane %v2461, %v2470
    %v2473 = vunpack.c.l.s4 1966171168
    %v2474 = vunpack.c.0.s8 %v2473
    %v2475 = vlaneseq
    %v2476 = vshrl.u32 %v2475, 7
    %v2477 = vsub.s32 %v2474, %v2476
    %v2478 = vrot.slane %v2462, %v2477
    %v2480 = vunpack.c.l.s4 1966171168
    %v2481 = vunpack.c.0.s8 %v2480
    %v2482 = vlaneseq
    %v2483 = vshrl.u32 %v2482, 7
    %v2484 = vsub.s32 %v2481, %v2483
    %v2485 = vrot.slane %v2463, %v2484
    %v2487 = vunpack.c.l.s4 1966171168
    %v2488 = vunpack.c.0.s8 %v2487
    %v2489 = vlaneseq
    %v2490 = vshrl.u32 %v2489, 7
    %v2491 = vsub.s32 %v2488, %v2490
    %v2492 = vrot.slane %v2464, %v2491
    %v2493 = vcombine.low %v2471, %v2478
    %v2494 = vcombine.low %v2485, %v2492
    %v2496 = vunpack.c.l.s4 1966171168
    %v2497 = vunpack.c.0.s8 %v2496
    %v2498 = vlaneseq
    %v2499 = vshrl.u32 %v2498, 7
    %v2500 = vsub.s32 %v2497, %v2499
    %v2501 = vrot.slane %v2493, %v2500
    %v2503 = vunpack.c.l.s4 1966171168
    %v2504 = vunpack.c.0.s8 %v2503
    %v2505 = vlaneseq
    %v2506 = vshrl.u32 %v2505, 7
    %v2507 = vsub.s32 %v2504, %v2506
    %v2508 = vrot.slane %v2494, %v2507
    %v2509 = vcombine.low %v2501, %v2508
    %v2510 = vcombine.low %v1530, %v1531
    %v2511 = vcombine.low %v1532, %v1533
    %v2512 = vcombine.low %v1534, %v1535
    %v2513 = vcombine.low %v1536, %v1537
    %v2515 = vunpack.c.l.s4 1966171168
    %v2516 = vunpack.c.0.s8 %v2515
    %v2517 = vlaneseq
    %v2518 = vshrl.u32 %v2517, 7
    %v2519 = vsub.s32 %v2516, %v2518
    %v2520 = vrot.slane %v2510, %v2519
    %v2522 = vunpack.c.l.s4 1966171168
    %v2523 = vunpack.c.0.s8 %v2522
    %v2524 = vlaneseq
    %v2525 = vshrl.u32 %v2524, 7
    %v2526 = vsub.s32 %v2523, %v2525
    %v2527 = vrot.slane %v2511, %v2526
    %v2529 = vunpack.c.l.s4 1966171168
    %v2530 = vunpack.c.0.s8 %v2529
    %v2531 = vlaneseq
    %v2532 = vshrl.u32 %v2531, 7
    %v2533 = vsub.s32 %v2530, %v2532
    %v2534 = vrot.slane %v2512, %v2533
    %v2536 = vunpack.c.l.s4 1966171168
    %v2537 = vunpack.c.0.s8 %v2536
    %v2538 = vlaneseq
    %v2539 = vshrl.u32 %v2538, 7
    %v2540 = vsub.s32 %v2537, %v2539
    %v2541 = vrot.slane %v2513, %v2540
    %v2542 = vcombine.low %v2520, %v2527
    %v2543 = vcombine.low %v2534, %v2541
    %v2545 = vunpack.c.l.s4 1966171168
    %v2546 = vunpack.c.0.s8 %v2545
    %v2547 = vlaneseq
    %v2548 = vshrl.u32 %v2547, 7
    %v2549 = vsub.s32 %v2546, %v2548
    %v2550 = vrot.slane %v2542, %v2549
    %v2552 = vunpack.c.l.s4 1966171168
    %v2553 = vunpack.c.0.s8 %v2552
    %v2554 = vlaneseq
    %v2555 = vshrl.u32 %v2554, 7
    %v2556 = vsub.s32 %v2553, %v2555
    %v2557 = vrot.slane %v2543, %v2556
    %v2558 = vcombine.low %v2550, %v2557
    %v2563 = vunpack.c.l.b16 %v1560
    %v2564 = vunpack.c.l.b16 %v1561
    %v2565 = vunpack.c.l.b16 %v1562
    %v2566 = vunpack.c.l.b16 %v1563
    %v2567 = vpack.c.b16 %v2564, %v2563
    %v2568 = vpack.c.b16 %v2566, %v2565
    %v2572 = vsel %vm2037, %v2215, 0
    %v2575 = vsel %vm2037, %v2264, 0
    %v2578 = vsel %vm2037, %v2313, 0
    %v2581 = vsel %vm2037, %v2362, 0
    %v2584 = vsel %vm2037, %v2411, 0
    %v2587 = vsel %vm2037, %v2460, 0
    %v2590 = vsel %vm2037, %v2509, 0
    %v2593 = vsel %vm2037, %v2558, 0
    %2595 = vmatprep.subr.bf16.mxu0 0
    %2596 = vmatpush1.bf16.msra.mxu0 %v2567
    %2597 = vmatprep.subr.bf16.mxu0 0
    %2598 = vmatpush1.bf16.msra.mxu0 %v2568
    %2599 = vmatprep.subr.bf16.mxu0 0
    %2600 = vmatpush1.bf16.msra.mxu0 0
    %2601 = vmatprep.subr.bf16.mxu0 0
    %2602 = vmatpush1.bf16.msra.mxu0 0
    %2603 = vmatprep.subr.bf16.mxu0 0
    %2604 = vmatpush1.bf16.msra.mxu0 0
    %2605 = vmatprep.subr.bf16.mxu0 0
    %2606 = vmatpush1.bf16.msra.mxu0 0
    %2607 = vmatprep.subr.bf16.mxu0 0
    %2608 = vmatpush1.bf16.msra.mxu0 0
    %2609 = vmatprep.subr.bf16.mxu0 0
    %2610 = vmatpush1.bf16.msra.mxu0 0
    %2611 = vmatprep.subr.bf16.mxu0 0
    %2612 = vmatpush1.bf16.msra.mxu0 0
    %2613 = vmatprep.subr.bf16.mxu0 0
    %2614 = vmatpush1.bf16.msra.mxu0 0
    %2615 = vmatprep.subr.bf16.mxu0 0
    %2616 = vmatpush1.bf16.msra.mxu0 0
    %2617 = vmatprep.subr.bf16.mxu0 0
    %2618 = vmatpush1.bf16.msra.mxu0 0
    %2619 = vmatprep.subr.bf16.mxu0 0
    %2620 = vmatpush1.bf16.msra.mxu0 0
    %2621 = vmatprep.subr.bf16.mxu0 0
    %2622 = vmatpush1.bf16.msra.mxu0 0
    %2623 = vmatprep.subr.bf16.mxu0 0
    %2624 = vmatpush1.bf16.msra.mxu0 0
    %2625 = vmatprep.subr.bf16.mxu0 0
    %2626 = vmatpush1.bf16.msra.mxu0 0
    %2627 = vmatprep.mubr.bf16.mxu0 0
    %2628 = vmatmul.mubr.bf16.gmra.mrb[0].mxu0 %v2572
    %v2629 = vpop.f32.mrb[0].mxu0
    %v2630 = vadd.f32 %v2097, %v2629
    %v2631 = vpop.f32.mrb[0].mxu0
    %v2632 = vpop.f32.mrb[0].mxu0
    %v2633 = vadd.f32 %v2100, %v2632
    %v2634 = vpop.f32.mrb[0].mxu0
    %2635 = vmatprep.mubr.bf16.mxu0 0
    %2636 = vmatmul.mubr.bf16.gmra.mrb[0].mxu0 %v2575
    %v2637 = vpop.f32.mrb[0].mxu0
    %v2638 = vadd.f32 %v2105, %v2637
    %v2639 = vpop.f32.mrb[0].mxu0
    %v2640 = vpop.f32.mrb[0].mxu0
    %v2641 = vadd.f32 %v2108, %v2640
    %v2642 = vpop.f32.mrb[0].mxu0
    %2643 = vmatprep.mubr.bf16.mxu0 0
    %2644 = vmatmul.mubr.bf16.gmra.mrb[0].mxu0 %v2578
    %v2645 = vpop.f32.mrb[0].mxu0
    %v2646 = vadd.f32 %v2113, %v2645
    %v2647 = vpop.f32.mrb[0].mxu0
    %v2648 = vpop.f32.mrb[0].mxu0
    %v2649 = vadd.f32 %v2116, %v2648
    %v2650 = vpop.f32.mrb[0].mxu0
    %2651 = vmatprep.mubr.bf16.mxu0 0
    %2652 = vmatmul.mubr.bf16.gmra.mrb[0].mxu0 %v2581
    %v2653 = vpop.f32.mrb[0].mxu0
    %v2654 = vadd.f32 %v2121, %v2653
    %v2655 = vpop.f32.mrb[0].mxu0
    %v2656 = vpop.f32.mrb[0].mxu0
    %v2657 = vadd.f32 %v2124, %v2656
    %v2658 = vpop.f32.mrb[0].mxu0
    %2659 = vmatprep.mubr.bf16.mxu0 0
    %2660 = vmatmul.mubr.bf16.gmra.mrb[0].mxu0 %v2584
    %v2661 = vpop.f32.mrb[0].mxu0
    %v2662 = vadd.f32 %v2129, %v2661
    %v2663 = vpop.f32.mrb[0].mxu0
    %v2664 = vpop.f32.mrb[0].mxu0
    %v2665 = vadd.f32 %v2132, %v2664
    %v2666 = vpop.f32.mrb[0].mxu0
    %2667 = vmatprep.mubr.bf16.mxu0 0
    %2668 = vmatmul.mubr.bf16.gmra.mrb[0].mxu0 %v2587
    %v2669 = vpop.f32.mrb[0].mxu0
    %v2670 = vadd.f32 %v2137, %v2669
    %v2671 = vpop.f32.mrb[0].mxu0
    %v2672 = vpop.f32.mrb[0].mxu0
    %v2673 = vadd.f32 %v2140, %v2672
    %v2674 = vpop.f32.mrb[0].mxu0
    %2675 = vmatprep.mubr.bf16.mxu0 0
    %2676 = vmatmul.mubr.bf16.gmra.mrb[0].mxu0 %v2590
    %v2677 = vpop.f32.mrb[0].mxu0
    %v2678 = vadd.f32 %v2145, %v2677
    %v2679 = vpop.f32.mrb[0].mxu0
    %v2680 = vpop.f32.mrb[0].mxu0
    %v2681 = vadd.f32 %v2148, %v2680
    %v2682 = vpop.f32.mrb[0].mxu0
    %2683 = vmatprep.mubr.bf16.mxu0 0
    %2684 = vmatmul.mubr.bf16.gmra.mrb[0].mxu0 %v2593
    %v2685 = vpop.f32.mrb[0].mxu0
    %v2686 = vadd.f32 %v2153, %v2685
    %v2687 = vpop.f32.mrb[0].mxu0
    %v2688 = vpop.f32.mrb[0].mxu0
    %v2689 = vadd.f32 %v2156, %v2688
    %v2690 = vpop.f32.mrb[0].mxu0
    %2691 = vdwg.mxu0
    %s2692 = scalar_lea.vmem [#allocation9], 32
    %v2693 = vld [vmem:[%s2692] sm:$0xf]
    %v2694 = vld [vmem:[%s2692 + $0x4] sm:$0xf]
    %v2695 = vld [vmem:[%s2692 + $0x8] sm:$0xf]
    %v2696 = vld [vmem:[%s2692 + $0xc] sm:$0xf]
    %v2705 = vcombine.low %v1468, %v1469
    %v2707 = vunpack.c.l.s4 1966171168
    %v2708 = vunpack.c.0.s8 %v2707
    %v2709 = vlaneseq
    %v2710 = vshrl.u32 %v2709, 7
    %v2711 = vsub.s32 %v2708, %v2710
    %v2712 = vrot.slane %v2705, %v2711
    %v2713 = vcombine.low %v2184, %v2191
    %v2714 = vcombine.low %v2198, %v2712
    %v2716 = vunpack.c.l.s4 1966171168
    %v2717 = vunpack.c.0.s8 %v2716
    %v2718 = vlaneseq
    %v2719 = vshrl.u32 %v2718, 7
    %v2720 = vsub.s32 %v2717, %v2719
    %v2721 = vrot.slane %v2713, %v2720
    %v2723 = vunpack.c.l.s4 1966171168
    %v2724 = vunpack.c.0.s8 %v2723
    %v2725 = vlaneseq
    %v2726 = vshrl.u32 %v2725, 7
    %v2727 = vsub.s32 %v2724, %v2726
    %v2728 = vrot.slane %v2714, %v2727
    %v2729 = vcombine.low %v2721, %v2728
    %v2730 = vcombine.low %v1478, %v1479
    %v2732 = vunpack.c.l.s4 1966171168
    %v2733 = vunpack.c.0.s8 %v2732
    %v2734 = vlaneseq
    %v2735 = vshrl.u32 %v2734, 7
    %v2736 = vsub.s32 %v2733, %v2735
    %v2737 = vrot.slane %v2730, %v2736
    %v2738 = vcombine.low %v2233, %v2240
    %v2739 = vcombine.low %v2247, %v2737
    %v2741 = vunpack.c.l.s4 1966171168
    %v2742 = vunpack.c.0.s8 %v2741
    %v2743 = vlaneseq
    %v2744 = vshrl.u32 %v2743, 7
    %v2745 = vsub.s32 %v2742, %v2744
    %v2746 = vrot.slane %v2738, %v2745
    %v2748 = vunpack.c.l.s4 1966171168
    %v2749 = vunpack.c.0.s8 %v2748
    %v2750 = vlaneseq
    %v2751 = vshrl.u32 %v2750, 7
    %v2752 = vsub.s32 %v2749, %v2751
    %v2753 = vrot.slane %v2739, %v2752
    %v2754 = vcombine.low %v2746, %v2753
    %v2755 = vcombine.low %v1488, %v1489
    %v2757 = vunpack.c.l.s4 1966171168
    %v2758 = vunpack.c.0.s8 %v2757
    %v2759 = vlaneseq
    %v2760 = vshrl.u32 %v2759, 7
    %v2761 = vsub.s32 %v2758, %v2760
    %v2762 = vrot.slane %v2755, %v2761
    %v2763 = vcombine.low %v2282, %v2289
    %v2764 = vcombine.low %v2296, %v2762
    %v2766 = vunpack.c.l.s4 1966171168
    %v2767 = vunpack.c.0.s8 %v2766
    %v2768 = vlaneseq
    %v2769 = vshrl.u32 %v2768, 7
    %v2770 = vsub.s32 %v2767, %v2769
    %v2771 = vrot.slane %v2763, %v2770
    %v2773 = vunpack.c.l.s4 1966171168
    %v2774 = vunpack.c.0.s8 %v2773
    %v2775 = vlaneseq
    %v2776 = vshrl.u32 %v2775, 7
    %v2777 = vsub.s32 %v2774, %v2776
    %v2778 = vrot.slane %v2764, %v2777
    %v2779 = vcombine.low %v2771, %v2778
    %v2780 = vcombine.low %v1498, %v1499
    %v2782 = vunpack.c.l.s4 1966171168
    %v2783 = vunpack.c.0.s8 %v2782
    %v2784 = vlaneseq
    %v2785 = vshrl.u32 %v2784, 7
    %v2786 = vsub.s32 %v2783, %v2785
    %v2787 = vrot.slane %v2780, %v2786
    %v2788 = vcombine.low %v2331, %v2338
    %v2789 = vcombine.low %v2345, %v2787
    %v2791 = vunpack.c.l.s4 1966171168
    %v2792 = vunpack.c.0.s8 %v2791
    %v2793 = vlaneseq
    %v2794 = vshrl.u32 %v2793, 7
    %v2795 = vsub.s32 %v2792, %v2794
    %v2796 = vrot.slane %v2788, %v2795
    %v2798 = vunpack.c.l.s4 1966171168
    %v2799 = vunpack.c.0.s8 %v2798
    %v2800 = vlaneseq
    %v2801 = vshrl.u32 %v2800, 7
    %v2802 = vsub.s32 %v2799, %v2801
    %v2803 = vrot.slane %v2789, %v2802
    %v2804 = vcombine.low %v2796, %v2803
    %v2805 = vcombine.low %v1508, %v1509
    %v2807 = vunpack.c.l.s4 1966171168
    %v2808 = vunpack.c.0.s8 %v2807
    %v2809 = vlaneseq
    %v2810 = vshrl.u32 %v2809, 7
    %v2811 = vsub.s32 %v2808, %v2810
    %v2812 = vrot.slane %v2805, %v2811
    %v2813 = vcombine.low %v2380, %v2387
    %v2814 = vcombine.low %v2394, %v2812
    %v2816 = vunpack.c.l.s4 1966171168
    %v2817 = vunpack.c.0.s8 %v2816
    %v2818 = vlaneseq
    %v2819 = vshrl.u32 %v2818, 7
    %v2820 = vsub.s32 %v2817, %v2819
    %v2821 = vrot.slane %v2813, %v2820
    %v2823 = vunpack.c.l.s4 1966171168
    %v2824 = vunpack.c.0.s8 %v2823
    %v2825 = vlaneseq
    %v2826 = vshrl.u32 %v2825, 7
    %v2827 = vsub.s32 %v2824, %v2826
    %v2828 = vrot.slane %v2814, %v2827
    %v2829 = vcombine.low %v2821, %v2828
    %v2830 = vcombine.low %v1518, %v1519
    %v2832 = vunpack.c.l.s4 1966171168
    %v2833 = vunpack.c.0.s8 %v2832
    %v2834 = vlaneseq
    %v2835 = vshrl.u32 %v2834, 7
    %v2836 = vsub.s32 %v2833, %v2835
    %v2837 = vrot.slane %v2830, %v2836
    %v2838 = vcombine.low %v2429, %v2436
    %v2839 = vcombine.low %v2443, %v2837
    %v2841 = vunpack.c.l.s4 1966171168
    %v2842 = vunpack.c.0.s8 %v2841
    %v2843 = vlaneseq
    %v2844 = vshrl.u32 %v2843, 7
    %v2845 = vsub.s32 %v2842, %v2844
    %v2846 = vrot.slane %v2838, %v2845
    %v2848 = vunpack.c.l.s4 1966171168
    %v2849 = vunpack.c.0.s8 %v2848
    %v2850 = vlaneseq
    %v2851 = vshrl.u32 %v2850, 7
    %v2852 = vsub.s32 %v2849, %v2851
    %v2853 = vrot.slane %v2839, %v2852
    %v2854 = vcombine.low %v2846, %v2853
    %v2855 = vcombine.low %v1528, %v1529
    %v2857 = vunpack.c.l.s4 1966171168
    %v2858 = vunpack.c.0.s8 %v2857
    %v2859 = vlaneseq
    %v2860 = vshrl.u32 %v2859, 7
    %v2861 = vsub.s32 %v2858, %v2860
    %v2862 = vrot.slane %v2855, %v2861
    %v2863 = vcombine.low %v2478, %v2485
    %v2864 = vcombine.low %v2492, %v2862
    %v2866 = vunpack.c.l.s4 1966171168
    %v2867 = vunpack.c.0.s8 %v2866
    %v2868 = vlaneseq
    %v2869 = vshrl.u32 %v2868, 7
    %v2870 = vsub.s32 %v2867, %v2869
    %v2871 = vrot.slane %v2863, %v2870
    %v2873 = vunpack.c.l.s4 1966171168
    %v2874 = vunpack.c.0.s8 %v2873
    %v2875 = vlaneseq
    %v2876 = vshrl.u32 %v2875, 7
    %v2877 = vsub.s32 %v2874, %v2876
    %v2878 = vrot.slane %v2864, %v2877
    %v2879 = vcombine.low %v2871, %v2878
    %v2880 = vcombine.low %v1538, %v1539
    %v2882 = vunpack.c.l.s4 1966171168
    %v2883 = vunpack.c.0.s8 %v2882
    %v2884 = vlaneseq
    %v2885 = vshrl.u32 %v2884, 7
    %v2886 = vsub.s32 %v2883, %v2885
    %v2887 = vrot.slane %v2880, %v2886
    %v2888 = vcombine.low %v2527, %v2534
    %v2889 = vcombine.low %v2541, %v2887
    %v2891 = vunpack.c.l.s4 1966171168
    %v2892 = vunpack.c.0.s8 %v2891
    %v2893 = vlaneseq
    %v2894 = vshrl.u32 %v2893, 7
    %v2895 = vsub.s32 %v2892, %v2894
    %v2896 = vrot.slane %v2888, %v2895
    %v2898 = vunpack.c.l.s4 1966171168
    %v2899 = vunpack.c.0.s8 %v2898
    %v2900 = vlaneseq
    %v2901 = vshrl.u32 %v2900, 7
    %v2902 = vsub.s32 %v2899, %v2901
    %v2903 = vrot.slane %v2889, %v2902
    %v2904 = vcombine.low %v2896, %v2903
    %v2909 = vunpack.c.l.b16 %v2693
    %v2910 = vunpack.c.l.b16 %v2694
    %v2911 = vunpack.c.l.b16 %v2695
    %v2912 = vunpack.c.l.b16 %v2696
    %v2913 = vpack.c.b16 %v2910, %v2909
    %v2914 = vpack.c.b16 %v2912, %v2911
    %v2918 = vsel %vm2037, %v2729, 0
    %v2921 = vsel %vm2037, %v2754, 0
    %v2924 = vsel %vm2037, %v2779, 0
    %v2927 = vsel %vm2037, %v2804, 0
    %v2930 = vsel %vm2037, %v2829, 0
    %v2933 = vsel %vm2037, %v2854, 0
    %v2936 = vsel %vm2037, %v2879, 0
    %v2939 = vsel %vm2037, %v2904, 0
    %2941 = vmatprep.subr.bf16.mxu0 0
    %2942 = vmatpush1.bf16.msra.mxu0 %v2913
    %2943 = vmatprep.subr.bf16.mxu0 0
    %2944 = vmatpush1.bf16.msra.mxu0 %v2914
    %2945 = vmatprep.subr.bf16.mxu0 0
    %2946 = vmatpush1.bf16.msra.mxu0 0
    %2947 = vmatprep.subr.bf16.mxu0 0
    %2948 = vmatpush1.bf16.msra.mxu0 0
    %2949 = vmatprep.subr.bf16.mxu0 0
    %2950 = vmatpush1.bf16.msra.mxu0 0
    %2951 = vmatprep.subr.bf16.mxu0 0
    %2952 = vmatpush1.bf16.msra.mxu0 0
    %2953 = vmatprep.subr.bf16.mxu0 0
    %2954 = vmatpush1.bf16.msra.mxu0 0
    %2955 = vmatprep.subr.bf16.mxu0 0
    %2956 = vmatpush1.bf16.msra.mxu0 0
    %2957 = vmatprep.subr.bf16.mxu0 0
    %2958 = vmatpush1.bf16.msra.mxu0 0
    %2959 = vmatprep.subr.bf16.mxu0 0
    %2960 = vmatpush1.bf16.msra.mxu0 0
    %2961 = vmatprep.subr.bf16.mxu0 0
    %2962 = vmatpush1.bf16.msra.mxu0 0
    %2963 = vmatprep.subr.bf16.mxu0 0
    %2964 = vmatpush1.bf16.msra.mxu0 0
    %2965 = vmatprep.subr.bf16.mxu0 0
    %2966 = vmatpush1.bf16.msra.mxu0 0
    %2967 = vmatprep.subr.bf16.mxu0 0
    %2968 = vmatpush1.bf16.msra.mxu0 0
    %2969 = vmatprep.subr.bf16.mxu0 0
    %2970 = vmatpush1.bf16.msra.mxu0 0
    %2971 = vmatprep.subr.bf16.mxu0 0
    %2972 = vmatpush1.bf16.msra.mxu0 0
    %2973 = vmatprep.mubr.bf16.mxu0 0
    %2974 = vmatmul.mubr.bf16.gmra.mrb[0].mxu0 %v2918
    %v2975 = vpop.f32.mrb[0].mxu0
    %v2976 = vadd.f32 0.0, %v2975
    %v2977 = vpop.f32.mrb[0].mxu0
    %v2978 = vpop.f32.mrb[0].mxu0
    %v2979 = vadd.f32 0.0, %v2978
    %v2980 = vpop.f32.mrb[0].mxu0
    %2981 = vmatprep.mubr.bf16.mxu0 0
    %2982 = vmatmul.mubr.bf16.gmra.mrb[0].mxu0 %v2921
    %v2983 = vpop.f32.mrb[0].mxu0
    %v2984 = vadd.f32 0.0, %v2983
    %v2985 = vpop.f32.mrb[0].mxu0
    %v2986 = vpop.f32.mrb[0].mxu0
    %v2987 = vadd.f32 0.0, %v2986
    %v2988 = vpop.f32.mrb[0].mxu0
    %2989 = vmatprep.mubr.bf16.mxu0 0
    %2990 = vmatmul.mubr.bf16.gmra.mrb[0].mxu0 %v2924
    %v2991 = vpop.f32.mrb[0].mxu0
    %v2992 = vadd.f32 0.0, %v2991
    %v2993 = vpop.f32.mrb[0].mxu0
    %v2994 = vpop.f32.mrb[0].mxu0
    %v2995 = vadd.f32 0.0, %v2994
    %v2996 = vpop.f32.mrb[0].mxu0
    %2997 = vmatprep.mubr.bf16.mxu0 0
    %2998 = vmatmul.mubr.bf16.gmra.mrb[0].mxu0 %v2927
    %v2999 = vpop.f32.mrb[0].mxu0
    %v3000 = vadd.f32 0.0, %v2999
    %v3001 = vpop.f32.mrb[0].mxu0
    %v3002 = vpop.f32.mrb[0].mxu0
    %v3003 = vadd.f32 0.0, %v3002
    %v3004 = vpop.f32.mrb[0].mxu0
    %3005 = vmatprep.mubr.bf16.mxu0 0
    %3006 = vmatmul.mubr.bf16.gmra.mrb[0].mxu0 %v2930
    %v3007 = vpop.f32.mrb[0].mxu0
    %v3008 = vadd.f32 0.0, %v3007
    %v3009 = vpop.f32.mrb[0].mxu0
    %v3010 = vpop.f32.mrb[0].mxu0
    %v3011 = vadd.f32 0.0, %v3010
    %v3012 = vpop.f32.mrb[0].mxu0
    %3013 = vmatprep.mubr.bf16.mxu0 0
    %3014 = vmatmul.mubr.bf16.gmra.mrb[0].mxu0 %v2933
    %v3015 = vpop.f32.mrb[0].mxu0
    %v3016 = vadd.f32 0.0, %v3015
    %v3017 = vpop.f32.mrb[0].mxu0
    %v3018 = vpop.f32.mrb[0].mxu0
    %v3019 = vadd.f32 0.0, %v3018
    %v3020 = vpop.f32.mrb[0].mxu0
    %3021 = vmatprep.mubr.bf16.mxu0 0
    %3022 = vmatmul.mubr.bf16.gmra.mrb[0].mxu0 %v2936
    %v3023 = vpop.f32.mrb[0].mxu0
    %v3024 = vadd.f32 0.0, %v3023
    %v3025 = vpop.f32.mrb[0].mxu0
    %v3026 = vpop.f32.mrb[0].mxu0
    %v3027 = vadd.f32 0.0, %v3026
    %v3028 = vpop.f32.mrb[0].mxu0
    %3029 = vmatprep.mubr.bf16.mxu0 0
    %3030 = vmatmul.mubr.bf16.gmra.mrb[0].mxu0 %v2939
    %v3031 = vpop.f32.mrb[0].mxu0
    %v3032 = vadd.f32 0.0, %v3031
    %v3033 = vpop.f32.mrb[0].mxu0
    %v3034 = vpop.f32.mrb[0].mxu0
    %v3035 = vadd.f32 0.0, %v3034
    %v3036 = vpop.f32.mrb[0].mxu0
    %3037 = vdwg.mxu0
    %v3038 = vadd.f32 %v2630, %v2976
    %v3039 = vadd.f32 %v2633, %v2979
    %v3040 = vadd.f32 %v2638, %v2984
    %v3041 = vadd.f32 %v2641, %v2987
    %v3042 = vadd.f32 %v2646, %v2992
    %v3043 = vadd.f32 %v2649, %v2995
    %v3044 = vadd.f32 %v2654, %v3000
    %v3045 = vadd.f32 %v2657, %v3003
    %v3046 = vadd.f32 %v2662, %v3008
    %v3047 = vadd.f32 %v2665, %v3011
    %v3048 = vadd.f32 %v2670, %v3016
    %v3049 = vadd.f32 %v2673, %v3019
    %v3050 = vadd.f32 %v2678, %v3024
    %v3051 = vadd.f32 %v2681, %v3027
    %v3052 = vadd.f32 %v2686, %v3032
    %v3053 = vadd.f32 %v2689, %v3035
    %s3054 = scalar_lea.vmem [#allocation9], 48
    %v3055 = vld [vmem:[%s3054] sm:$0xf]
    %v3056 = vld [vmem:[%s3054 + $0x4] sm:$0xf]
    %v3057 = vld [vmem:[%s3054 + $0x8] sm:$0xf]
    %v3058 = vld [vmem:[%s3054 + $0xc] sm:$0xf]
    %v3067 = vcombine.low %v1540, %v1541
    %v3068 = vcombine.low %v1542, %v1543
    %v3069 = vcombine.low %v1544, %v1545
    %v3070 = vcombine.low %v1546, %v1547
    %v3072 = vunpack.c.l.s4 1966171168
    %v3073 = vunpack.c.0.s8 %v3072
    %v3074 = vlaneseq
    %v3075 = vshrl.u32 %v3074, 7
    %v3076 = vsub.s32 %v3073, %v3075
    %v3077 = vrot.slane %v3067, %v3076
    %v3079 = vunpack.c.l.s4 1966171168
    %v3080 = vunpack.c.0.s8 %v3079
    %v3081 = vlaneseq
    %v3082 = vshrl.u32 %v3081, 7
    %v3083 = vsub.s32 %v3080, %v3082
    %v3084 = vrot.slane %v3068, %v3083
    %v3086 = vunpack.c.l.s4 1966171168
    %v3087 = vunpack.c.0.s8 %v3086
    %v3088 = vlaneseq
    %v3089 = vshrl.u32 %v3088, 7
    %v3090 = vsub.s32 %v3087, %v3089
    %v3091 = vrot.slane %v3069, %v3090
    %v3093 = vunpack.c.l.s4 1966171168
    %v3094 = vunpack.c.0.s8 %v3093
    %v3095 = vlaneseq
    %v3096 = vshrl.u32 %v3095, 7
    %v3097 = vsub.s32 %v3094, %v3096
    %v3098 = vrot.slane %v3070, %v3097
    %v3099 = vcombine.low %v3077, %v3084
    %v3100 = vcombine.low %v3091, %v3098
    %v3102 = vunpack.c.l.s4 1966171168
    %v3103 = vunpack.c.0.s8 %v3102
    %v3104 = vlaneseq
    %v3105 = vshrl.u32 %v3104, 7
    %v3106 = vsub.s32 %v3103, %v3105
    %v3107 = vrot.slane %v3099, %v3106
    %v3109 = vunpack.c.l.s4 1966171168
    %v3110 = vunpack.c.0.s8 %v3109
    %v3111 = vlaneseq
    %v3112 = vshrl.u32 %v3111, 7
    %v3113 = vsub.s32 %v3110, %v3112
    %v3114 = vrot.slane %v3100, %v3113
    %v3115 = vcombine.low %v3107, %v3114
    %v3120 = vunpack.c.l.b16 %v3055
    %v3121 = vunpack.c.l.b16 %v3056
    %v3122 = vunpack.c.l.b16 %v3057
    %v3123 = vunpack.c.l.b16 %v3058
    %v3124 = vpack.c.b16 %v3121, %v3120
    %v3125 = vpack.c.b16 %v3123, %v3122
    %v3129 = vsel %vm2037, %v3115, 0
    %3131 = vmatprep.subr.bf16.mxu0 0
    %3132 = vmatpush1.bf16.msra.mxu0 %v3124
    %3133 = vmatprep.subr.bf16.mxu0 0
    %3134 = vmatpush1.bf16.msra.mxu0 %v3125
    %3135 = vmatprep.subr.bf16.mxu0 0
    %3136 = vmatpush1.bf16.msra.mxu0 0
    %3137 = vmatprep.subr.bf16.mxu0 0
    %3138 = vmatpush1.bf16.msra.mxu0 0
    %3139 = vmatprep.subr.bf16.mxu0 0
    %3140 = vmatpush1.bf16.msra.mxu0 0
    %3141 = vmatprep.subr.bf16.mxu0 0
    %3142 = vmatpush1.bf16.msra.mxu0 0
    %3143 = vmatprep.subr.bf16.mxu0 0
    %3144 = vmatpush1.bf16.msra.mxu0 0
    %3145 = vmatprep.subr.bf16.mxu0 0
    %3146 = vmatpush1.bf16.msra.mxu0 0
    %3147 = vmatprep.subr.bf16.mxu0 0
    %3148 = vmatpush1.bf16.msra.mxu0 0
    %3149 = vmatprep.subr.bf16.mxu0 0
    %3150 = vmatpush1.bf16.msra.mxu0 0
    %3151 = vmatprep.subr.bf16.mxu0 0
    %3152 = vmatpush1.bf16.msra.mxu0 0
    %3153 = vmatprep.subr.bf16.mxu0 0
    %3154 = vmatpush1.bf16.msra.mxu0 0
    %3155 = vmatprep.subr.bf16.mxu0 0
    %3156 = vmatpush1.bf16.msra.mxu0 0
    %3157 = vmatprep.subr.bf16.mxu0 0
    %3158 = vmatpush1.bf16.msra.mxu0 0
    %3159 = vmatprep.subr.bf16.mxu0 0
    %3160 = vmatpush1.bf16.msra.mxu0 0
    %3161 = vmatprep.subr.bf16.mxu0 0
    %3162 = vmatpush1.bf16.msra.mxu0 0
    %3163 = vmatprep.mubr.bf16.mxu0 0
    %3164 = vmatmul.mubr.bf16.gmra.mrb[0].mxu0 %v2575
    %v3165 = vpop.f32.mrb[0].mxu0
    %v3166 = vadd.f32 0.0, %v3165
    %v3167 = vpop.f32.mrb[0].mxu0
    %v3168 = vpop.f32.mrb[0].mxu0
    %v3169 = vadd.f32 0.0, %v3168
    %v3170 = vpop.f32.mrb[0].mxu0
    %3171 = vmatprep.mubr.bf16.mxu0 0
    %3172 = vmatmul.mubr.bf16.gmra.mrb[0].mxu0 %v2578
    %v3173 = vpop.f32.mrb[0].mxu0
    %v3174 = vadd.f32 0.0, %v3173
    %v3175 = vpop.f32.mrb[0].mxu0
    %v3176 = vpop.f32.mrb[0].mxu0
    %v3177 = vadd.f32 0.0, %v3176
    %v3178 = vpop.f32.mrb[0].mxu0
    %3179 = vmatprep.mubr.bf16.mxu0 0
    %3180 = vmatmul.mubr.bf16.gmra.mrb[0].mxu0 %v2581
    %v3181 = vpop.f32.mrb[0].mxu0
    %v3182 = vadd.f32 0.0, %v3181
    %v3183 = vpop.f32.mrb[0].mxu0
    %v3184 = vpop.f32.mrb[0].mxu0
    %v3185 = vadd.f32 0.0, %v3184
    %v3186 = vpop.f32.mrb[0].mxu0
    %3187 = vmatprep.mubr.bf16.mxu0 0
    %3188 = vmatmul.mubr.bf16.gmra.mrb[0].mxu0 %v2584
    %v3189 = vpop.f32.mrb[0].mxu0
    %v3190 = vadd.f32 0.0, %v3189
    %v3191 = vpop.f32.mrb[0].mxu0
    %v3192 = vpop.f32.mrb[0].mxu0
    %v3193 = vadd.f32 0.0, %v3192
    %v3194 = vpop.f32.mrb[0].mxu0
    %3195 = vmatprep.mubr.bf16.mxu0 0
    %3196 = vmatmul.mubr.bf16.gmra.mrb[0].mxu0 %v2587
    %v3197 = vpop.f32.mrb[0].mxu0
    %v3198 = vadd.f32 0.0, %v3197
    %v3199 = vpop.f32.mrb[0].mxu0
    %v3200 = vpop.f32.mrb[0].mxu0
    %v3201 = vadd.f32 0.0, %v3200
    %v3202 = vpop.f32.mrb[0].mxu0
    %3203 = vmatprep.mubr.bf16.mxu0 0
    %3204 = vmatmul.mubr.bf16.gmra.mrb[0].mxu0 %v2590
    %v3205 = vpop.f32.mrb[0].mxu0
    %v3206 = vadd.f32 0.0, %v3205
    %v3207 = vpop.f32.mrb[0].mxu0
    %v3208 = vpop.f32.mrb[0].mxu0
    %v3209 = vadd.f32 0.0, %v3208
    %v3210 = vpop.f32.mrb[0].mxu0
    %3211 = vmatprep.mubr.bf16.mxu0 0
    %3212 = vmatmul.mubr.bf16.gmra.mrb[0].mxu0 %v2593
    %v3213 = vpop.f32.mrb[0].mxu0
    %v3214 = vadd.f32 0.0, %v3213
    %v3215 = vpop.f32.mrb[0].mxu0
    %v3216 = vpop.f32.mrb[0].mxu0
    %v3217 = vadd.f32 0.0, %v3216
    %v3218 = vpop.f32.mrb[0].mxu0
    %3219 = vmatprep.mubr.bf16.mxu0 0
    %3220 = vmatmul.mubr.bf16.gmra.mrb[0].mxu0 %v3129
    %v3221 = vpop.f32.mrb[0].mxu0
    %v3222 = vadd.f32 0.0, %v3221
    %v3223 = vpop.f32.mrb[0].mxu0
    %v3224 = vpop.f32.mrb[0].mxu0
    %v3225 = vadd.f32 0.0, %v3224
    %v3226 = vpop.f32.mrb[0].mxu0
    %3227 = vdwg.mxu0
    %v3228 = vadd.f32 %v3038, %v3166
    %v3229 = vadd.f32 %v3039, %v3169
    %v3230 = vadd.f32 %v3040, %v3174
    %v3231 = vadd.f32 %v3041, %v3177
    %v3232 = vadd.f32 %v3042, %v3182
    %v3233 = vadd.f32 %v3043, %v3185
    %v3234 = vadd.f32 %v3044, %v3190
    %v3235 = vadd.f32 %v3045, %v3193
    %v3236 = vadd.f32 %v3046, %v3198
    %v3237 = vadd.f32 %v3047, %v3201
    %v3238 = vadd.f32 %v3048, %v3206
    %v3239 = vadd.f32 %v3049, %v3209
    %v3240 = vadd.f32 %v3050, %v3214
    %v3241 = vadd.f32 %v3051, %v3217
    %v3242 = vadd.f32 %v3052, %v3222
    %v3243 = vadd.f32 %v3053, %v3225
    %s3244 = scalar_lea.vmem [#allocation9], 64
    %v3245 = vld [vmem:[%s3244] sm:$0xf]
    %v3246 = vld [vmem:[%s3244 + $0x4] sm:$0xf]
    %v3247 = vld [vmem:[%s3244 + $0x8] sm:$0xf]
    %v3248 = vld [vmem:[%s3244 + $0xc] sm:$0xf]
    %v3250 = vcombine.low %v1541, %v1542
    %v3251 = vcombine.low %v1543, %v1544
    %v3252 = vcombine.low %v1545, %v1546
    %v3253 = vcombine.low %v1547, %v1548
    %v3255 = vunpack.c.l.s4 1966171168
    %v3256 = vunpack.c.0.s8 %v3255
    %v3257 = vlaneseq
    %v3258 = vshrl.u32 %v3257, 7
    %v3259 = vsub.s32 %v3256, %v3258
    %v3260 = vrot.slane %v3250, %v3259
    %v3262 = vunpack.c.l.s4 1966171168
    %v3263 = vunpack.c.0.s8 %v3262
    %v3264 = vlaneseq
    %v3265 = vshrl.u32 %v3264, 7
    %v3266 = vsub.s32 %v3263, %v3265
    %v3267 = vrot.slane %v3251, %v3266
    %v3269 = vunpack.c.l.s4 1966171168
    %v3270 = vunpack.c.0.s8 %v3269
    %v3271 = vlaneseq
    %v3272 = vshrl.u32 %v3271, 7
    %v3273 = vsub.s32 %v3270, %v3272
    %v3274 = vrot.slane %v3252, %v3273
    %v3276 = vunpack.c.l.s4 1966171168
    %v3277 = vunpack.c.0.s8 %v3276
    %v3278 = vlaneseq
    %v3279 = vshrl.u32 %v3278, 7
    %v3280 = vsub.s32 %v3277, %v3279
    %v3281 = vrot.slane %v3253, %v3280
    %v3282 = vcombine.low %v3260, %v3267
    %v3283 = vcombine.low %v3274, %v3281
    %v3285 = vunpack.c.l.s4 1966171168
    %v3286 = vunpack.c.0.s8 %v3285
    %v3287 = vlaneseq
    %v3288 = vshrl.u32 %v3287, 7
    %v3289 = vsub.s32 %v3286, %v3288
    %v3290 = vrot.slane %v3282, %v3289
    %v3292 = vunpack.c.l.s4 1966171168
    %v3293 = vunpack.c.0.s8 %v3292
    %v3294 = vlaneseq
    %v3295 = vshrl.u32 %v3294, 7
    %v3296 = vsub.s32 %v3293, %v3295
    %v3297 = vrot.slane %v3283, %v3296
    %v3298 = vcombine.low %v3290, %v3297
    %v3303 = vunpack.c.l.b16 %v3245
    %v3304 = vunpack.c.l.b16 %v3246
    %v3305 = vunpack.c.l.b16 %v3247
    %v3306 = vunpack.c.l.b16 %v3248
    %v3307 = vpack.c.b16 %v3304, %v3303
    %v3308 = vpack.c.b16 %v3306, %v3305
    %v3312 = vsel %vm2037, %v3298, 0
    %3314 = vmatprep.subr.bf16.mxu0 0
    %3315 = vmatpush1.bf16.msra.mxu0 %v3307
    %3316 = vmatprep.subr.bf16.mxu0 0
    %3317 = vmatpush1.bf16.msra.mxu0 %v3308
    %3318 = vmatprep.subr.bf16.mxu0 0
    %3319 = vmatpush1.bf16.msra.mxu0 0
    %3320 = vmatprep.subr.bf16.mxu0 0
    %3321 = vmatpush1.bf16.msra.mxu0 0
    %3322 = vmatprep.subr.bf16.mxu0 0
    %3323 = vmatpush1.bf16.msra.mxu0 0
    %3324 = vmatprep.subr.bf16.mxu0 0
    %3325 = vmatpush1.bf16.msra.mxu0 0
    %3326 = vmatprep.subr.bf16.mxu0 0
    %3327 = vmatpush1.bf16.msra.mxu0 0
    %3328 = vmatprep.subr.bf16.mxu0 0
    %3329 = vmatpush1.bf16.msra.mxu0 0
    %3330 = vmatprep.subr.bf16.mxu0 0
    %3331 = vmatpush1.bf16.msra.mxu0 0
    %3332 = vmatprep.subr.bf16.mxu0 0
    %3333 = vmatpush1.bf16.msra.mxu0 0
    %3334 = vmatprep.subr.bf16.mxu0 0
    %3335 = vmatpush1.bf16.msra.mxu0 0
    %3336 = vmatprep.subr.bf16.mxu0 0
    %3337 = vmatpush1.bf16.msra.mxu0 0
    %3338 = vmatprep.subr.bf16.mxu0 0
    %3339 = vmatpush1.bf16.msra.mxu0 0
    %3340 = vmatprep.subr.bf16.mxu0 0
    %3341 = vmatpush1.bf16.msra.mxu0 0
    %3342 = vmatprep.subr.bf16.mxu0 0
    %3343 = vmatpush1.bf16.msra.mxu0 0
    %3344 = vmatprep.subr.bf16.mxu0 0
    %3345 = vmatpush1.bf16.msra.mxu0 0
    %3346 = vmatprep.mubr.bf16.mxu0 0
    %3347 = vmatmul.mubr.bf16.gmra.mrb[0].mxu0 %v2042
    %v3348 = vpop.f32.mrb[0].mxu0
    %v3349 = vadd.f32 0.0, %v3348
    %v3350 = vpop.f32.mrb[0].mxu0
    %v3351 = vpop.f32.mrb[0].mxu0
    %v3352 = vadd.f32 0.0, %v3351
    %v3353 = vpop.f32.mrb[0].mxu0
    %3354 = vmatprep.mubr.bf16.mxu0 0
    %3355 = vmatmul.mubr.bf16.gmra.mrb[0].mxu0 %v2045
    %v3356 = vpop.f32.mrb[0].mxu0
    %v3357 = vadd.f32 0.0, %v3356
    %v3358 = vpop.f32.mrb[0].mxu0
    %v3359 = vpop.f32.mrb[0].mxu0
    %v3360 = vadd.f32 0.0, %v3359
    %v3361 = vpop.f32.mrb[0].mxu0
    %3362 = vmatprep.mubr.bf16.mxu0 0
    %3363 = vmatmul.mubr.bf16.gmra.mrb[0].mxu0 %v2048
    %v3364 = vpop.f32.mrb[0].mxu0
    %v3365 = vadd.f32 0.0, %v3364
    %v3366 = vpop.f32.mrb[0].mxu0
    %v3367 = vpop.f32.mrb[0].mxu0
    %v3368 = vadd.f32 0.0, %v3367
    %v3369 = vpop.f32.mrb[0].mxu0
    %3370 = vmatprep.mubr.bf16.mxu0 0
    %3371 = vmatmul.mubr.bf16.gmra.mrb[0].mxu0 %v2051
    %v3372 = vpop.f32.mrb[0].mxu0
    %v3373 = vadd.f32 0.0, %v3372
    %v3374 = vpop.f32.mrb[0].mxu0
    %v3375 = vpop.f32.mrb[0].mxu0
    %v3376 = vadd.f32 0.0, %v3375
    %v3377 = vpop.f32.mrb[0].mxu0
    %3378 = vmatprep.mubr.bf16.mxu0 0
    %3379 = vmatmul.mubr.bf16.gmra.mrb[0].mxu0 %v2054
    %v3380 = vpop.f32.mrb[0].mxu0
    %v3381 = vadd.f32 0.0, %v3380
    %v3382 = vpop.f32.mrb[0].mxu0
    %v3383 = vpop.f32.mrb[0].mxu0
    %v3384 = vadd.f32 0.0, %v3383
    %v3385 = vpop.f32.mrb[0].mxu0
    %3386 = vmatprep.mubr.bf16.mxu0 0
    %3387 = vmatmul.mubr.bf16.gmra.mrb[0].mxu0 %v2057
    %v3388 = vpop.f32.mrb[0].mxu0
    %v3389 = vadd.f32 0.0, %v3388
    %v3390 = vpop.f32.mrb[0].mxu0
    %v3391 = vpop.f32.mrb[0].mxu0
    %v3392 = vadd.f32 0.0, %v3391
    %v3393 = vpop.f32.mrb[0].mxu0
    %3394 = vmatprep.mubr.bf16.mxu0 0
    %3395 = vmatmul.mubr.bf16.gmra.mrb[0].mxu0 %v2060
    %v3396 = vpop.f32.mrb[0].mxu0
    %v3397 = vadd.f32 0.0, %v3396
    %v3398 = vpop.f32.mrb[0].mxu0
    %v3399 = vpop.f32.mrb[0].mxu0
    %v3400 = vadd.f32 0.0, %v3399
    %v3401 = vpop.f32.mrb[0].mxu0
    %3402 = vmatprep.mubr.bf16.mxu0 0
    %3403 = vmatmul.mubr.bf16.gmra.mrb[0].mxu0 %v3312
    %v3404 = vpop.f32.mrb[0].mxu0
    %v3405 = vadd.f32 0.0, %v3404
    %v3406 = vpop.f32.mrb[0].mxu0
    %v3407 = vpop.f32.mrb[0].mxu0
    %v3408 = vadd.f32 0.0, %v3407
    %v3409 = vpop.f32.mrb[0].mxu0
    %3410 = vdwg.mxu0
    %v3411 = vadd.f32 %v3228, %v3349
    %v3412 = vadd.f32 %v3229, %v3352
    %v3413 = vadd.f32 %v3230, %v3357
    %v3414 = vadd.f32 %v3231, %v3360
    %v3415 = vadd.f32 %v3232, %v3365
    %v3416 = vadd.f32 %v3233, %v3368
    %v3417 = vadd.f32 %v3234, %v3373
    %v3418 = vadd.f32 %v3235, %v3376
    %v3419 = vadd.f32 %v3236, %v3381
    %v3420 = vadd.f32 %v3237, %v3384
    %v3421 = vadd.f32 %v3238, %v3389
    %v3422 = vadd.f32 %v3239, %v3392
    %v3423 = vadd.f32 %v3240, %v3397
    %v3424 = vadd.f32 %v3241, %v3400
    %v3425 = vadd.f32 %v3242, %v3405
    %v3426 = vadd.f32 %v3243, %v3408
    %s3427 = scalar_lea.vmem [#allocation9], 80
    %v3428 = vld [vmem:[%s3427] sm:$0xf]
    %v3429 = vld [vmem:[%s3427 + $0x4] sm:$0xf]
    %v3430 = vld [vmem:[%s3427 + $0x8] sm:$0xf]
    %v3431 = vld [vmem:[%s3427 + $0xc] sm:$0xf]
    %v3433 = vcombine.low %v1548, %v1549
    %v3435 = vunpack.c.l.s4 1966171168
    %v3436 = vunpack.c.0.s8 %v3435
    %v3437 = vlaneseq
    %v3438 = vshrl.u32 %v3437, 7
    %v3439 = vsub.s32 %v3436, %v3438
    %v3440 = vrot.slane %v3433, %v3439
    %v3441 = vcombine.low %v3084, %v3091
    %v3442 = vcombine.low %v3098, %v3440
    %v3444 = vunpack.c.l.s4 1966171168
    %v3445 = vunpack.c.0.s8 %v3444
    %v3446 = vlaneseq
    %v3447 = vshrl.u32 %v3446, 7
    %v3448 = vsub.s32 %v3445, %v3447
    %v3449 = vrot.slane %v3441, %v3448
    %v3451 = vunpack.c.l.s4 1966171168
    %v3452 = vunpack.c.0.s8 %v3451
    %v3453 = vlaneseq
    %v3454 = vshrl.u32 %v3453, 7
    %v3455 = vsub.s32 %v3452, %v3454
    %v3456 = vrot.slane %v3442, %v3455
    %v3457 = vcombine.low %v3449, %v3456
    %v3462 = vunpack.c.l.b16 %v3428
    %v3463 = vunpack.c.l.b16 %v3429
    %v3464 = vunpack.c.l.b16 %v3430
    %v3465 = vunpack.c.l.b16 %v3431
    %v3466 = vpack.c.b16 %v3463, %v3462
    %v3467 = vpack.c.b16 %v3465, %v3464
    %v3471 = vsel %vm2037, %v3457, 0
    %3473 = vmatprep.subr.bf16.mxu0 0
    %3474 = vmatpush1.bf16.msra.mxu0 %v3466
    %3475 = vmatprep.subr.bf16.mxu0 0
    %3476 = vmatpush1.bf16.msra.mxu0 %v3467
    %3477 = vmatprep.subr.bf16.mxu0 0
    %3478 = vmatpush1.bf16.msra.mxu0 0
    %3479 = vmatprep.subr.bf16.mxu0 0
    %3480 = vmatpush1.bf16.msra.mxu0 0
    %3481 = vmatprep.subr.bf16.mxu0 0
    %3482 = vmatpush1.bf16.msra.mxu0 0
    %3483 = vmatprep.subr.bf16.mxu0 0
    %3484 = vmatpush1.bf16.msra.mxu0 0
    %3485 = vmatprep.subr.bf16.mxu0 0
    %3486 = vmatpush1.bf16.msra.mxu0 0
    %3487 = vmatprep.subr.bf16.mxu0 0
    %3488 = vmatpush1.bf16.msra.mxu0 0
    %3489 = vmatprep.subr.bf16.mxu0 0
    %3490 = vmatpush1.bf16.msra.mxu0 0
    %3491 = vmatprep.subr.bf16.mxu0 0
    %3492 = vmatpush1.bf16.msra.mxu0 0
    %3493 = vmatprep.subr.bf16.mxu0 0
    %3494 = vmatpush1.bf16.msra.mxu0 0
    %3495 = vmatprep.subr.bf16.mxu0 0
    %3496 = vmatpush1.bf16.msra.mxu0 0
    %3497 = vmatprep.subr.bf16.mxu0 0
    %3498 = vmatpush1.bf16.msra.mxu0 0
    %3499 = vmatprep.subr.bf16.mxu0 0
    %3500 = vmatpush1.bf16.msra.mxu0 0
    %3501 = vmatprep.subr.bf16.mxu0 0
    %3502 = vmatpush1.bf16.msra.mxu0 0
    %3503 = vmatprep.subr.bf16.mxu0 0
    %3504 = vmatpush1.bf16.msra.mxu0 0
    %3505 = vmatprep.mubr.bf16.mxu0 0
    %3506 = vmatmul.mubr.bf16.gmra.mrb[0].mxu0 %v2921
    %v3507 = vpop.f32.mrb[0].mxu0
    %v3508 = vadd.f32 0.0, %v3507
    %v3509 = vpop.f32.mrb[0].mxu0
    %v3510 = vpop.f32.mrb[0].mxu0
    %v3511 = vadd.f32 0.0, %v3510
    %v3512 = vpop.f32.mrb[0].mxu0
    %3513 = vmatprep.mubr.bf16.mxu0 0
    %3514 = vmatmul.mubr.bf16.gmra.mrb[0].mxu0 %v2924
    %v3515 = vpop.f32.mrb[0].mxu0
    %v3516 = vadd.f32 0.0, %v3515
    %v3517 = vpop.f32.mrb[0].mxu0
    %v3518 = vpop.f32.mrb[0].mxu0
    %v3519 = vadd.f32 0.0, %v3518
    %v3520 = vpop.f32.mrb[0].mxu0
    %3521 = vmatprep.mubr.bf16.mxu0 0
    %3522 = vmatmul.mubr.bf16.gmra.mrb[0].mxu0 %v2927
    %v3523 = vpop.f32.mrb[0].mxu0
    %v3524 = vadd.f32 0.0, %v3523
    %v3525 = vpop.f32.mrb[0].mxu0
    %v3526 = vpop.f32.mrb[0].mxu0
    %v3527 = vadd.f32 0.0, %v3526
    %v3528 = vpop.f32.mrb[0].mxu0
    %3529 = vmatprep.mubr.bf16.mxu0 0
    %3530 = vmatmul.mubr.bf16.gmra.mrb[0].mxu0 %v2930
    %v3531 = vpop.f32.mrb[0].mxu0
    %v3532 = vadd.f32 0.0, %v3531
    %v3533 = vpop.f32.mrb[0].mxu0
    %v3534 = vpop.f32.mrb[0].mxu0
    %v3535 = vadd.f32 0.0, %v3534
    %v3536 = vpop.f32.mrb[0].mxu0
    %3537 = vmatprep.mubr.bf16.mxu0 0
    %3538 = vmatmul.mubr.bf16.gmra.mrb[0].mxu0 %v2933
    %v3539 = vpop.f32.mrb[0].mxu0
    %v3540 = vadd.f32 0.0, %v3539
    %v3541 = vpop.f32.mrb[0].mxu0
    %v3542 = vpop.f32.mrb[0].mxu0
    %v3543 = vadd.f32 0.0, %v3542
    %v3544 = vpop.f32.mrb[0].mxu0
    %3545 = vmatprep.mubr.bf16.mxu0 0
    %3546 = vmatmul.mubr.bf16.gmra.mrb[0].mxu0 %v2936
    %v3547 = vpop.f32.mrb[0].mxu0
    %v3548 = vadd.f32 0.0, %v3547
    %v3549 = vpop.f32.mrb[0].mxu0
    %v3550 = vpop.f32.mrb[0].mxu0
    %v3551 = vadd.f32 0.0, %v3550
    %v3552 = vpop.f32.mrb[0].mxu0
    %3553 = vmatprep.mubr.bf16.mxu0 0
    %3554 = vmatmul.mubr.bf16.gmra.mrb[0].mxu0 %v2939
    %v3555 = vpop.f32.mrb[0].mxu0
    %v3556 = vadd.f32 0.0, %v3555
    %v3557 = vpop.f32.mrb[0].mxu0
    %v3558 = vpop.f32.mrb[0].mxu0
    %v3559 = vadd.f32 0.0, %v3558
    %v3560 = vpop.f32.mrb[0].mxu0
    %3561 = vmatprep.mubr.bf16.mxu0 0
    %3562 = vmatmul.mubr.bf16.gmra.mrb[0].mxu0 %v3471
    %v3563 = vpop.f32.mrb[0].mxu0
    %v3564 = vadd.f32 0.0, %v3563
    %v3565 = vpop.f32.mrb[0].mxu0
    %v3566 = vpop.f32.mrb[0].mxu0
    %v3567 = vadd.f32 0.0, %v3566
    %v3568 = vpop.f32.mrb[0].mxu0
    %3569 = vdwg.mxu0
    %v3570 = vadd.f32 %v3411, %v3508
    %v3571 = vadd.f32 %v3412, %v3511
    %v3572 = vadd.f32 %v3413, %v3516
    %v3573 = vadd.f32 %v3414, %v3519
    %v3574 = vadd.f32 %v3415, %v3524
    %v3575 = vadd.f32 %v3416, %v3527
    %v3576 = vadd.f32 %v3417, %v3532
    %v3577 = vadd.f32 %v3418, %v3535
    %v3578 = vadd.f32 %v3419, %v3540
    %v3579 = vadd.f32 %v3420, %v3543
    %v3580 = vadd.f32 %v3421, %v3548
    %v3581 = vadd.f32 %v3422, %v3551
    %v3582 = vadd.f32 %v3423, %v3556
    %v3583 = vadd.f32 %v3424, %v3559
    %v3584 = vadd.f32 %v3425, %v3564
    %v3585 = vadd.f32 %v3426, %v3567
    %s3586 = scalar_lea.vmem [#allocation9], 96
    %v3587 = vld [vmem:[%s3586] sm:$0xf]
    %v3588 = vld [vmem:[%s3586 + $0x4] sm:$0xf]
    %v3589 = vld [vmem:[%s3586 + $0x8] sm:$0xf]
    %v3590 = vld [vmem:[%s3586 + $0xc] sm:$0xf]
    %v3599 = vcombine.low %v1550, %v1551
    %v3600 = vcombine.low %v1552, %v1553
    %v3601 = vcombine.low %v1554, %v1555
    %v3602 = vcombine.low %v1556, %v1557
    %v3604 = vunpack.c.l.s4 1966171168
    %v3605 = vunpack.c.0.s8 %v3604
    %v3606 = vlaneseq
    %v3607 = vshrl.u32 %v3606, 7
    %v3608 = vsub.s32 %v3605, %v3607
    %v3609 = vrot.slane %v3599, %v3608
    %v3611 = vunpack.c.l.s4 1966171168
    %v3612 = vunpack.c.0.s8 %v3611
    %v3613 = vlaneseq
    %v3614 = vshrl.u32 %v3613, 7
    %v3615 = vsub.s32 %v3612, %v3614
    %v3616 = vrot.slane %v3600, %v3615
    %v3618 = vunpack.c.l.s4 1966171168
    %v3619 = vunpack.c.0.s8 %v3618
    %v3620 = vlaneseq
    %v3621 = vshrl.u32 %v3620, 7
    %v3622 = vsub.s32 %v3619, %v3621
    %v3623 = vrot.slane %v3601, %v3622
    %v3625 = vunpack.c.l.s4 1966171168
    %v3626 = vunpack.c.0.s8 %v3625
    %v3627 = vlaneseq
    %v3628 = vshrl.u32 %v3627, 7
    %v3629 = vsub.s32 %v3626, %v3628
    %v3630 = vrot.slane %v3602, %v3629
    %v3631 = vcombine.low %v3609, %v3616
    %v3632 = vcombine.low %v3623, %v3630
    %v3634 = vunpack.c.l.s4 1966171168
    %v3635 = vunpack.c.0.s8 %v3634
    %v3636 = vlaneseq
    %v3637 = vshrl.u32 %v3636, 7
    %v3638 = vsub.s32 %v3635, %v3637
    %v3639 = vrot.slane %v3631, %v3638
    %v3641 = vunpack.c.l.s4 1966171168
    %v3642 = vunpack.c.0.s8 %v3641
    %v3643 = vlaneseq
    %v3644 = vshrl.u32 %v3643, 7
    %v3645 = vsub.s32 %v3642, %v3644
    %v3646 = vrot.slane %v3632, %v3645
    %v3647 = vcombine.low %v3639, %v3646
    %v3652 = vunpack.c.l.b16 %v3587
    %v3653 = vunpack.c.l.b16 %v3588
    %v3654 = vunpack.c.l.b16 %v3589
    %v3655 = vunpack.c.l.b16 %v3590
    %v3656 = vpack.c.b16 %v3653, %v3652
    %v3657 = vpack.c.b16 %v3655, %v3654
    %v3661 = vsel %vm2037, %v3647, 0
    %3663 = vmatprep.subr.bf16.mxu0 0
    %3664 = vmatpush1.bf16.msra.mxu0 %v3656
    %3665 = vmatprep.subr.bf16.mxu0 0
    %3666 = vmatpush1.bf16.msra.mxu0 %v3657
    %3667 = vmatprep.subr.bf16.mxu0 0
    %3668 = vmatpush1.bf16.msra.mxu0 0
    %3669 = vmatprep.subr.bf16.mxu0 0
    %3670 = vmatpush1.bf16.msra.mxu0 0
    %3671 = vmatprep.subr.bf16.mxu0 0
    %3672 = vmatpush1.bf16.msra.mxu0 0
    %3673 = vmatprep.subr.bf16.mxu0 0
    %3674 = vmatpush1.bf16.msra.mxu0 0
    %3675 = vmatprep.subr.bf16.mxu0 0
    %3676 = vmatpush1.bf16.msra.mxu0 0
    %3677 = vmatprep.subr.bf16.mxu0 0
    %3678 = vmatpush1.bf16.msra.mxu0 0
    %3679 = vmatprep.subr.bf16.mxu0 0
    %3680 = vmatpush1.bf16.msra.mxu0 0
    %3681 = vmatprep.subr.bf16.mxu0 0
    %3682 = vmatpush1.bf16.msra.mxu0 0
    %3683 = vmatprep.subr.bf16.mxu0 0
    %3684 = vmatpush1.bf16.msra.mxu0 0
    %3685 = vmatprep.subr.bf16.mxu0 0
    %3686 = vmatpush1.bf16.msra.mxu0 0
    %3687 = vmatprep.subr.bf16.mxu0 0
    %3688 = vmatpush1.bf16.msra.mxu0 0
    %3689 = vmatprep.subr.bf16.mxu0 0
    %3690 = vmatpush1.bf16.msra.mxu0 0
    %3691 = vmatprep.subr.bf16.mxu0 0
    %3692 = vmatpush1.bf16.msra.mxu0 0
    %3693 = vmatprep.subr.bf16.mxu0 0
    %3694 = vmatpush1.bf16.msra.mxu0 0
    %3695 = vmatprep.mubr.bf16.mxu0 0
    %3696 = vmatmul.mubr.bf16.gmra.mrb[0].mxu0 %v2578
    %v3697 = vpop.f32.mrb[0].mxu0
    %v3698 = vadd.f32 0.0, %v3697
    %v3699 = vpop.f32.mrb[0].mxu0
    %v3700 = vpop.f32.mrb[0].mxu0
    %v3701 = vadd.f32 0.0, %v3700
    %v3702 = vpop.f32.mrb[0].mxu0
    %3703 = vmatprep.mubr.bf16.mxu0 0
    %3704 = vmatmul.mubr.bf16.gmra.mrb[0].mxu0 %v2581
    %v3705 = vpop.f32.mrb[0].mxu0
    %v3706 = vadd.f32 0.0, %v3705
    %v3707 = vpop.f32.mrb[0].mxu0
    %v3708 = vpop.f32.mrb[0].mxu0
    %v3709 = vadd.f32 0.0, %v3708
    %v3710 = vpop.f32.mrb[0].mxu0
    %3711 = vmatprep.mubr.bf16.mxu0 0
    %3712 = vmatmul.mubr.bf16.gmra.mrb[0].mxu0 %v2584
    %v3713 = vpop.f32.mrb[0].mxu0
    %v3714 = vadd.f32 0.0, %v3713
    %v3715 = vpop.f32.mrb[0].mxu0
    %v3716 = vpop.f32.mrb[0].mxu0
    %v3717 = vadd.f32 0.0, %v3716
    %v3718 = vpop.f32.mrb[0].mxu0
    %3719 = vmatprep.mubr.bf16.mxu0 0
    %3720 = vmatmul.mubr.bf16.gmra.mrb[0].mxu0 %v2587
    %v3721 = vpop.f32.mrb[0].mxu0
    %v3722 = vadd.f32 0.0, %v3721
    %v3723 = vpop.f32.mrb[0].mxu0
    %v3724 = vpop.f32.mrb[0].mxu0
    %v3725 = vadd.f32 0.0, %v3724
    %v3726 = vpop.f32.mrb[0].mxu0
    %3727 = vmatprep.mubr.bf16.mxu0 0
    %3728 = vmatmul.mubr.bf16.gmra.mrb[0].mxu0 %v2590
    %v3729 = vpop.f32.mrb[0].mxu0
    %v3730 = vadd.f32 0.0, %v3729
    %v3731 = vpop.f32.mrb[0].mxu0
    %v3732 = vpop.f32.mrb[0].mxu0
    %v3733 = vadd.f32 0.0, %v3732
    %v3734 = vpop.f32.mrb[0].mxu0
    %3735 = vmatprep.mubr.bf16.mxu0 0
    %3736 = vmatmul.mubr.bf16.gmra.mrb[0].mxu0 %v2593
    %v3737 = vpop.f32.mrb[0].mxu0
    %v3738 = vadd.f32 0.0, %v3737
    %v3739 = vpop.f32.mrb[0].mxu0
    %v3740 = vpop.f32.mrb[0].mxu0
    %v3741 = vadd.f32 0.0, %v3740
    %v3742 = vpop.f32.mrb[0].mxu0
    %3743 = vmatprep.mubr.bf16.mxu0 0
    %3744 = vmatmul.mubr.bf16.gmra.mrb[0].mxu0 %v3129
    %v3745 = vpop.f32.mrb[0].mxu0
    %v3746 = vadd.f32 0.0, %v3745
    %v3747 = vpop.f32.mrb[0].mxu0
    %v3748 = vpop.f32.mrb[0].mxu0
    %v3749 = vadd.f32 0.0, %v3748
    %v3750 = vpop.f32.mrb[0].mxu0
    %3751 = vmatprep.mubr.bf16.mxu0 0
    %3752 = vmatmul.mubr.bf16.gmra.mrb[0].mxu0 %v3661
    %v3753 = vpop.f32.mrb[0].mxu0
    %v3754 = vadd.f32 0.0, %v3753
    %v3755 = vpop.f32.mrb[0].mxu0
    %v3756 = vpop.f32.mrb[0].mxu0
    %v3757 = vadd.f32 0.0, %v3756
    %v3758 = vpop.f32.mrb[0].mxu0
    %3759 = vdwg.mxu0
    %v3760 = vadd.f32 %v3570, %v3698
    %v3761 = vadd.f32 %v3571, %v3701
    %v3762 = vadd.f32 %v3572, %v3706
    %v3763 = vadd.f32 %v3573, %v3709
    %v3764 = vadd.f32 %v3574, %v3714
    %v3765 = vadd.f32 %v3575, %v3717
    %v3766 = vadd.f32 %v3576, %v3722
    %v3767 = vadd.f32 %v3577, %v3725
    %v3768 = vadd.f32 %v3578, %v3730
    %v3769 = vadd.f32 %v3579, %v3733
    %v3770 = vadd.f32 %v3580, %v3738
    %v3771 = vadd.f32 %v3581, %v3741
    %v3772 = vadd.f32 %v3582, %v3746
    %v3773 = vadd.f32 %v3583, %v3749
    %v3774 = vadd.f32 %v3584, %v3754
    %v3775 = vadd.f32 %v3585, %v3757
    %s3776 = scalar_lea.vmem [#allocation9], 112
    %v3777 = vld [vmem:[%s3776] sm:$0xf]
    %v3778 = vld [vmem:[%s3776 + $0x4] sm:$0xf]
    %v3779 = vld [vmem:[%s3776 + $0x8] sm:$0xf]
    %v3780 = vld [vmem:[%s3776 + $0xc] sm:$0xf]
    %v3782 = vcombine.low %v1551, %v1552
    %v3783 = vcombine.low %v1553, %v1554
    %v3784 = vcombine.low %v1555, %v1556
    %v3785 = vcombine.low %v1557, %v1558
    %v3787 = vunpack.c.l.s4 1966171168
    %v3788 = vunpack.c.0.s8 %v3787
    %v3789 = vlaneseq
    %v3790 = vshrl.u32 %v3789, 7
    %v3791 = vsub.s32 %v3788, %v3790
    %v3792 = vrot.slane %v3782, %v3791
    %v3794 = vunpack.c.l.s4 1966171168
    %v3795 = vunpack.c.0.s8 %v3794
    %v3796 = vlaneseq
    %v3797 = vshrl.u32 %v3796, 7
    %v3798 = vsub.s32 %v3795, %v3797
    %v3799 = vrot.slane %v3783, %v3798
    %v3801 = vunpack.c.l.s4 1966171168
    %v3802 = vunpack.c.0.s8 %v3801
    %v3803 = vlaneseq
    %v3804 = vshrl.u32 %v3803, 7
    %v3805 = vsub.s32 %v3802, %v3804
    %v3806 = vrot.slane %v3784, %v3805
    %v3808 = vunpack.c.l.s4 1966171168
    %v3809 = vunpack.c.0.s8 %v3808
    %v3810 = vlaneseq
    %v3811 = vshrl.u32 %v3810, 7
    %v3812 = vsub.s32 %v3809, %v3811
    %v3813 = vrot.slane %v3785, %v3812
    %v3814 = vcombine.low %v3792, %v3799
    %v3815 = vcombine.low %v3806, %v3813
    %v3817 = vunpack.c.l.s4 1966171168
    %v3818 = vunpack.c.0.s8 %v3817
    %v3819 = vlaneseq
    %v3820 = vshrl.u32 %v3819, 7
    %v3821 = vsub.s32 %v3818, %v3820
    %v3822 = vrot.slane %v3814, %v3821
    %v3824 = vunpack.c.l.s4 1966171168
    %v3825 = vunpack.c.0.s8 %v3824
    %v3826 = vlaneseq
    %v3827 = vshrl.u32 %v3826, 7
    %v3828 = vsub.s32 %v3825, %v3827
    %v3829 = vrot.slane %v3815, %v3828
    %v3830 = vcombine.low %v3822, %v3829
    %v3835 = vunpack.c.l.b16 %v3777
    %v3836 = vunpack.c.l.b16 %v3778
    %v3837 = vunpack.c.l.b16 %v3779
    %v3838 = vunpack.c.l.b16 %v3780
    %v3839 = vpack.c.b16 %v3836, %v3835
    %v3840 = vpack.c.b16 %v3838, %v3837
    %v3844 = vsel %vm2037, %v3830, 0
    %3846 = vmatprep.subr.bf16.mxu0 0
    %3847 = vmatpush1.bf16.msra.mxu0 %v3839
    %3848 = vmatprep.subr.bf16.mxu0 0
    %3849 = vmatpush1.bf16.msra.mxu0 %v3840
    %3850 = vmatprep.subr.bf16.mxu0 0
    %3851 = vmatpush1.bf16.msra.mxu0 0
    %3852 = vmatprep.subr.bf16.mxu0 0
    %3853 = vmatpush1.bf16.msra.mxu0 0
    %3854 = vmatprep.subr.bf16.mxu0 0
    %3855 = vmatpush1.bf16.msra.mxu0 0
    %3856 = vmatprep.subr.bf16.mxu0 0
    %3857 = vmatpush1.bf16.msra.mxu0 0
    %3858 = vmatprep.subr.bf16.mxu0 0
    %3859 = vmatpush1.bf16.msra.mxu0 0
    %3860 = vmatprep.subr.bf16.mxu0 0
    %3861 = vmatpush1.bf16.msra.mxu0 0
    %3862 = vmatprep.subr.bf16.mxu0 0
    %3863 = vmatpush1.bf16.msra.mxu0 0
    %3864 = vmatprep.subr.bf16.mxu0 0
    %3865 = vmatpush1.bf16.msra.mxu0 0
    %3866 = vmatprep.subr.bf16.mxu0 0
    %3867 = vmatpush1.bf16.msra.mxu0 0
    %3868 = vmatprep.subr.bf16.mxu0 0
    %3869 = vmatpush1.bf16.msra.mxu0 0
    %3870 = vmatprep.subr.bf16.mxu0 0
    %3871 = vmatpush1.bf16.msra.mxu0 0
    %3872 = vmatprep.subr.bf16.mxu0 0
    %3873 = vmatpush1.bf16.msra.mxu0 0
    %3874 = vmatprep.subr.bf16.mxu0 0
    %3875 = vmatpush1.bf16.msra.mxu0 0
    %3876 = vmatprep.subr.bf16.mxu0 0
    %3877 = vmatpush1.bf16.msra.mxu0 0
    %3878 = vmatprep.mubr.bf16.mxu0 0
    %3879 = vmatmul.mubr.bf16.gmra.mrb[0].mxu0 %v2045
    %v3880 = vpop.f32.mrb[0].mxu0
    %v3881 = vadd.f32 0.0, %v3880
    %v3882 = vpop.f32.mrb[0].mxu0
    %v3883 = vpop.f32.mrb[0].mxu0
    %v3884 = vadd.f32 0.0, %v3883
    %v3885 = vpop.f32.mrb[0].mxu0
    %3886 = vmatprep.mubr.bf16.mxu0 0
    %3887 = vmatmul.mubr.bf16.gmra.mrb[0].mxu0 %v2048
    %v3888 = vpop.f32.mrb[0].mxu0
    %v3889 = vadd.f32 0.0, %v3888
    %v3890 = vpop.f32.mrb[0].mxu0
    %v3891 = vpop.f32.mrb[0].mxu0
    %v3892 = vadd.f32 0.0, %v3891
    %v3893 = vpop.f32.mrb[0].mxu0
    %3894 = vmatprep.mubr.bf16.mxu0 0
    %3895 = vmatmul.mubr.bf16.gmra.mrb[0].mxu0 %v2051
    %v3896 = vpop.f32.mrb[0].mxu0
    %v3897 = vadd.f32 0.0, %v3896
    %v3898 = vpop.f32.mrb[0].mxu0
    %v3899 = vpop.f32.mrb[0].mxu0
    %v3900 = vadd.f32 0.0, %v3899
    %v3901 = vpop.f32.mrb[0].mxu0
    %3902 = vmatprep.mubr.bf16.mxu0 0
    %3903 = vmatmul.mubr.bf16.gmra.mrb[0].mxu0 %v2054
    %v3904 = vpop.f32.mrb[0].mxu0
    %v3905 = vadd.f32 0.0, %v3904
    %v3906 = vpop.f32.mrb[0].mxu0
    %v3907 = vpop.f32.mrb[0].mxu0
    %v3908 = vadd.f32 0.0, %v3907
    %v3909 = vpop.f32.mrb[0].mxu0
    %3910 = vmatprep.mubr.bf16.mxu0 0
    %3911 = vmatmul.mubr.bf16.gmra.mrb[0].mxu0 %v2057
    %v3912 = vpop.f32.mrb[0].mxu0
    %v3913 = vadd.f32 0.0, %v3912
    %v3914 = vpop.f32.mrb[0].mxu0
    %v3915 = vpop.f32.mrb[0].mxu0
    %v3916 = vadd.f32 0.0, %v3915
    %v3917 = vpop.f32.mrb[0].mxu0
    %3918 = vmatprep.mubr.bf16.mxu0 0
    %3919 = vmatmul.mubr.bf16.gmra.mrb[0].mxu0 %v2060
    %v3920 = vpop.f32.mrb[0].mxu0
    %v3921 = vadd.f32 0.0, %v3920
    %v3922 = vpop.f32.mrb[0].mxu0
    %v3923 = vpop.f32.mrb[0].mxu0
    %v3924 = vadd.f32 0.0, %v3923
    %v3925 = vpop.f32.mrb[0].mxu0
    %3926 = vmatprep.mubr.bf16.mxu0 0
    %3927 = vmatmul.mubr.bf16.gmra.mrb[0].mxu0 %v3312
    %v3928 = vpop.f32.mrb[0].mxu0
    %v3929 = vadd.f32 0.0, %v3928
    %v3930 = vpop.f32.mrb[0].mxu0
    %v3931 = vpop.f32.mrb[0].mxu0
    %v3932 = vadd.f32 0.0, %v3931
    %v3933 = vpop.f32.mrb[0].mxu0
    %3934 = vmatprep.mubr.bf16.mxu0 0
    %3935 = vmatmul.mubr.bf16.gmra.mrb[0].mxu0 %v3844
    %v3936 = vpop.f32.mrb[0].mxu0
    %v3937 = vadd.f32 0.0, %v3936
    %v3938 = vpop.f32.mrb[0].mxu0
    %v3939 = vpop.f32.mrb[0].mxu0
    %v3940 = vadd.f32 0.0, %v3939
    %v3941 = vpop.f32.mrb[0].mxu0
    %3942 = vdwg.mxu0
    %v3943 = vadd.f32 %v3760, %v3881
    %v3944 = vadd.f32 %v3761, %v3884
    %v3945 = vadd.f32 %v3762, %v3889
    %v3946 = vadd.f32 %v3763, %v3892
    %v3947 = vadd.f32 %v3764, %v3897
    %v3948 = vadd.f32 %v3765, %v3900
    %v3949 = vadd.f32 %v3766, %v3905
    %v3950 = vadd.f32 %v3767, %v3908
    %v3951 = vadd.f32 %v3768, %v3913
    %v3952 = vadd.f32 %v3769, %v3916
    %v3953 = vadd.f32 %v3770, %v3921
    %v3954 = vadd.f32 %v3771, %v3924
    %v3955 = vadd.f32 %v3772, %v3929
    %v3956 = vadd.f32 %v3773, %v3932
    %v3957 = vadd.f32 %v3774, %v3937
    %v3958 = vadd.f32 %v3775, %v3940
    %s3959 = scalar_lea.vmem [#allocation9], 128
    %v3960 = vld [vmem:[%s3959] sm:$0xf]
    %v3961 = vld [vmem:[%s3959 + $0x4] sm:$0xf]
    %v3962 = vld [vmem:[%s3959 + $0x8] sm:$0xf]
    %v3963 = vld [vmem:[%s3959 + $0xc] sm:$0xf]
    %v3965 = vcombine.low %v1558, %v1559
    %v3967 = vunpack.c.l.s4 1966171168
    %v3968 = vunpack.c.0.s8 %v3967
    %v3969 = vlaneseq
    %v3970 = vshrl.u32 %v3969, 7
    %v3971 = vsub.s32 %v3968, %v3970
    %v3972 = vrot.slane %v3965, %v3971
    %v3973 = vcombine.low %v3616, %v3623
    %v3974 = vcombine.low %v3630, %v3972
    %v3976 = vunpack.c.l.s4 1966171168
    %v3977 = vunpack.c.0.s8 %v3976
    %v3978 = vlaneseq
    %v3979 = vshrl.u32 %v3978, 7
    %v3980 = vsub.s32 %v3977, %v3979
    %v3981 = vrot.slane %v3973, %v3980
    %v3983 = vunpack.c.l.s4 1966171168
    %v3984 = vunpack.c.0.s8 %v3983
    %v3985 = vlaneseq
    %v3986 = vshrl.u32 %v3985, 7
    %v3987 = vsub.s32 %v3984, %v3986
    %v3988 = vrot.slane %v3974, %v3987
    %v3989 = vcombine.low %v3981, %v3988
    %v3994 = vunpack.c.l.b16 %v3960
    %v3995 = vunpack.c.l.b16 %v3961
    %v3996 = vunpack.c.l.b16 %v3962
    %v3997 = vunpack.c.l.b16 %v3963
    %v3998 = vpack.c.b16 %v3995, %v3994
    %v3999 = vpack.c.b16 %v3997, %v3996
    %v4003 = vsel %vm2037, %v3989, 0
    %4005 = vmatprep.subr.bf16.mxu0 0
    %4006 = vmatpush1.bf16.msra.mxu0 %v3998
    %4007 = vmatprep.subr.bf16.mxu0 0
    %4008 = vmatpush1.bf16.msra.mxu0 %v3999
    %4009 = vmatprep.subr.bf16.mxu0 0
    %4010 = vmatpush1.bf16.msra.mxu0 0
    %4011 = vmatprep.subr.bf16.mxu0 0
    %4012 = vmatpush1.bf16.msra.mxu0 0
    %4013 = vmatprep.subr.bf16.mxu0 0
    %4014 = vmatpush1.bf16.msra.mxu0 0
    %4015 = vmatprep.subr.bf16.mxu0 0
    %4016 = vmatpush1.bf16.msra.mxu0 0
    %4017 = vmatprep.subr.bf16.mxu0 0
    %4018 = vmatpush1.bf16.msra.mxu0 0
    %4019 = vmatprep.subr.bf16.mxu0 0
    %4020 = vmatpush1.bf16.msra.mxu0 0
    %4021 = vmatprep.subr.bf16.mxu0 0
    %4022 = vmatpush1.bf16.msra.mxu0 0
    %4023 = vmatprep.subr.bf16.mxu0 0
    %4024 = vmatpush1.bf16.msra.mxu0 0
    %4025 = vmatprep.subr.bf16.mxu0 0
    %4026 = vmatpush1.bf16.msra.mxu0 0
    %4027 = vmatprep.subr.bf16.mxu0 0
    %4028 = vmatpush1.bf16.msra.mxu0 0
    %4029 = vmatprep.subr.bf16.mxu0 0
    %4030 = vmatpush1.bf16.msra.mxu0 0
    %4031 = vmatprep.subr.bf16.mxu0 0
    %4032 = vmatpush1.bf16.msra.mxu0 0
    %4033 = vmatprep.subr.bf16.mxu0 0
    %4034 = vmatpush1.bf16.msra.mxu0 0
    %4035 = vmatprep.subr.bf16.mxu0 0
    %4036 = vmatpush1.bf16.msra.mxu0 0
    %4037 = vmatprep.mubr.bf16.mxu0 0
    %4038 = vmatmul.mubr.bf16.gmra.mrb[0].mxu0 %v2924
    %v4039 = vpop.f32.mrb[0].mxu0
    %v4040 = vadd.f32 0.0, %v4039
    %v4041 = vpop.f32.mrb[0].mxu0
    %v4042 = vpop.f32.mrb[0].mxu0
    %v4043 = vadd.f32 0.0, %v4042
    %v4044 = vpop.f32.mrb[0].mxu0
    %4045 = vmatprep.mubr.bf16.mxu0 0
    %4046 = vmatmul.mubr.bf16.gmra.mrb[0].mxu0 %v2927
    %v4047 = vpop.f32.mrb[0].mxu0
    %v4048 = vadd.f32 0.0, %v4047
    %v4049 = vpop.f32.mrb[0].mxu0
    %v4050 = vpop.f32.mrb[0].mxu0
    %v4051 = vadd.f32 0.0, %v4050
    %v4052 = vpop.f32.mrb[0].mxu0
    %4053 = vmatprep.mubr.bf16.mxu0 0
    %4054 = vmatmul.mubr.bf16.gmra.mrb[0].mxu0 %v2930
    %v4055 = vpop.f32.mrb[0].mxu0
    %v4056 = vadd.f32 0.0, %v4055
    %v4057 = vpop.f32.mrb[0].mxu0
    %v4058 = vpop.f32.mrb[0].mxu0
    %v4059 = vadd.f32 0.0, %v4058
    %v4060 = vpop.f32.mrb[0].mxu0
    %4061 = vmatprep.mubr.bf16.mxu0 0
    %4062 = vmatmul.mubr.bf16.gmra.mrb[0].mxu0 %v2933
    %v4063 = vpop.f32.mrb[0].mxu0
    %v4064 = vadd.f32 0.0, %v4063
    %v4065 = vpop.f32.mrb[0].mxu0
    %v4066 = vpop.f32.mrb[0].mxu0
    %v4067 = vadd.f32 0.0, %v4066
    %v4068 = vpop.f32.mrb[0].mxu0
    %4069 = vmatprep.mubr.bf16.mxu0 0
    %4070 = vmatmul.mubr.bf16.gmra.mrb[0].mxu0 %v2936
    %v4071 = vpop.f32.mrb[0].mxu0
    %v4072 = vadd.f32 0.0, %v4071
    %v4073 = vpop.f32.mrb[0].mxu0
    %v4074 = vpop.f32.mrb[0].mxu0
    %v4075 = vadd.f32 0.0, %v4074
    %v4076 = vpop.f32.mrb[0].mxu0
    %4077 = vmatprep.mubr.bf16.mxu0 0
    %4078 = vmatmul.mubr.bf16.gmra.mrb[0].mxu0 %v2939
    %v4079 = vpop.f32.mrb[0].mxu0
    %v4080 = vadd.f32 0.0, %v4079
    %v4081 = vpop.f32.mrb[0].mxu0
    %v4082 = vpop.f32.mrb[0].mxu0
    %v4083 = vadd.f32 0.0, %v4082
    %v4084 = vpop.f32.mrb[0].mxu0
    %4085 = vmatprep.mubr.bf16.mxu0 0
    %4086 = vmatmul.mubr.bf16.gmra.mrb[0].mxu0 %v3471
    %v4087 = vpop.f32.mrb[0].mxu0
    %v4088 = vadd.f32 0.0, %v4087
    %v4089 = vpop.f32.mrb[0].mxu0
    %v4090 = vpop.f32.mrb[0].mxu0
    %v4091 = vadd.f32 0.0, %v4090
    %v4092 = vpop.f32.mrb[0].mxu0
    %4093 = vmatprep.mubr.bf16.mxu0 0
    %4094 = vmatmul.mubr.bf16.gmra.mrb[0].mxu0 %v4003
    %v4095 = vpop.f32.mrb[0].mxu0
    %v4096 = vadd.f32 0.0, %v4095
    %v4097 = vpop.f32.mrb[0].mxu0
    %v4098 = vpop.f32.mrb[0].mxu0
    %v4099 = vadd.f32 0.0, %v4098
    %v4100 = vpop.f32.mrb[0].mxu0
    %4101 = vdwg.mxu0
    %v4102 = vadd.f32 %v3943, %v4040
    %v4103 = vadd.f32 %v3944, %v4043
    %v4104 = vadd.f32 %v3945, %v4048
    %v4105 = vadd.f32 %v3946, %v4051
    %v4106 = vadd.f32 %v3947, %v4056
    %v4107 = vadd.f32 %v3948, %v4059
    %v4108 = vadd.f32 %v3949, %v4064
    %v4109 = vadd.f32 %v3950, %v4067
    %v4110 = vadd.f32 %v3951, %v4072
    %v4111 = vadd.f32 %v3952, %v4075
    %v4112 = vadd.f32 %v3953, %v4080
    %v4113 = vadd.f32 %v3954, %v4083
    %v4114 = vadd.f32 %v3955, %v4088
    %v4115 = vadd.f32 %v3956, %v4091
    %v4116 = vadd.f32 %v3957, %v4096
    %v4117 = vadd.f32 %v3958, %v4099
    %v4118 = vld [vmem:[%s7] sm:$0x1]
    %v4120 = vlaneseq
    %v4121 = vshrl.u32 %v4120, 7
    %v4122 = vsub.s32 0, %v4121
    %v4123 = vrot.slane %v4118, %v4122
    %v4125 = vmul.f32 %v4102, %v4123
    %v4126 = vmul.f32 %v4103, %v4123
    %v4127 = vmul.f32 %v4104, %v4123
    %v4128 = vmul.f32 %v4105, %v4123
    %v4129 = vmul.f32 %v4106, %v4123
    %v4130 = vmul.f32 %v4107, %v4123
    %v4131 = vmul.f32 %v4108, %v4123
    %v4132 = vmul.f32 %v4109, %v4123
    %v4133 = vmul.f32 %v4110, %v4123
    %v4134 = vmul.f32 %v4111, %v4123
    %v4135 = vmul.f32 %v4112, %v4123
    %v4136 = vmul.f32 %v4113, %v4123
    %v4137 = vmul.f32 %v4114, %v4123
    %v4138 = vmul.f32 %v4115, %v4123
    %v4139 = vmul.f32 %v4116, %v4123
    %v4140 = vmul.f32 %v4117, %v4123
    %v4141 = vld [vmem:[%s12] sm:$0x1]
    %v4143 = vlaneseq
    %v4144 = vshrl.u32 %v4143, 7
    %v4145 = vsub.s32 0, %v4144
    %v4146 = vrot.slane %v4141, %v4145
    %v4148 = vadd.f32 %v4125, %v4146
    %v4149 = vadd.f32 %v4126, %v4146
    %v4150 = vadd.f32 %v4127, %v4146
    %v4151 = vadd.f32 %v4128, %v4146
    %v4152 = vadd.f32 %v4129, %v4146
    %v4153 = vadd.f32 %v4130, %v4146
    %v4154 = vadd.f32 %v4131, %v4146
    %v4155 = vadd.f32 %v4132, %v4146
    %v4156 = vadd.f32 %v4133, %v4146
    %v4157 = vadd.f32 %v4134, %v4146
    %v4158 = vadd.f32 %v4135, %v4146
    %v4159 = vadd.f32 %v4136, %v4146
    %v4160 = vadd.f32 %v4137, %v4146
    %v4161 = vadd.f32 %v4138, %v4146
    %v4162 = vadd.f32 %v4139, %v4146
    %v4163 = vadd.f32 %v4140, %v4146
    %vm4164 = vcmp.gt.f32.partialorder %v4148, 0.0
    %vm4165 = vcmp.gt.f32.partialorder %v4149, 0.0
    %vm4166 = vcmp.gt.f32.partialorder %v4150, 0.0
    %vm4167 = vcmp.gt.f32.partialorder %v4151, 0.0
    %vm4168 = vcmp.gt.f32.partialorder %v4152, 0.0
    %vm4169 = vcmp.gt.f32.partialorder %v4153, 0.0
    %vm4170 = vcmp.gt.f32.partialorder %v4154, 0.0
    %vm4171 = vcmp.gt.f32.partialorder %v4155, 0.0
    %vm4172 = vcmp.gt.f32.partialorder %v4156, 0.0
    %vm4173 = vcmp.gt.f32.partialorder %v4157, 0.0
    %vm4174 = vcmp.gt.f32.partialorder %v4158, 0.0
    %vm4175 = vcmp.gt.f32.partialorder %v4159, 0.0
    %vm4176 = vcmp.gt.f32.partialorder %v4160, 0.0
    %vm4177 = vcmp.gt.f32.partialorder %v4161, 0.0
    %vm4178 = vcmp.gt.f32.partialorder %v4162, 0.0
    %vm4179 = vcmp.gt.f32.partialorder %v4163, 0.0
    %v4180 = vmul.f32 %v4148, 0.2
    %v4181 = vmul.f32 %v4149, 0.2
    %v4182 = vmul.f32 %v4150, 0.2
    %v4183 = vmul.f32 %v4151, 0.2
    %v4184 = vmul.f32 %v4152, 0.2
    %v4185 = vmul.f32 %v4153, 0.2
    %v4186 = vmul.f32 %v4154, 0.2
    %v4187 = vmul.f32 %v4155, 0.2
    %v4188 = vmul.f32 %v4156, 0.2
    %v4189 = vmul.f32 %v4157, 0.2
    %v4190 = vmul.f32 %v4158, 0.2
    %v4191 = vmul.f32 %v4159, 0.2
    %v4192 = vmul.f32 %v4160, 0.2
    %v4193 = vmul.f32 %v4161, 0.2
    %v4194 = vmul.f32 %v4162, 0.2
    %v4195 = vmul.f32 %v4163, 0.2
    %v4196 = vsel %vm4164, %v4148, %v4180
    %v4197 = vsel %vm4165, %v4149, %v4181
    %v4198 = vsel %vm4166, %v4150, %v4182
    %v4199 = vsel %vm4167, %v4151, %v4183
    %v4200 = vsel %vm4168, %v4152, %v4184
    %v4201 = vsel %vm4169, %v4153, %v4185
    %v4202 = vsel %vm4170, %v4154, %v4186
    %v4203 = vsel %vm4171, %v4155, %v4187
    %v4204 = vsel %vm4172, %v4156, %v4188
    %v4205 = vsel %vm4173, %v4157, %v4189
    %v4206 = vsel %vm4174, %v4158, %v4190
    %v4207 = vsel %vm4175, %v4159, %v4191
    %v4208 = vsel %vm4176, %v4160, %v4192
    %v4209 = vsel %vm4177, %v4161, %v4193
    %v4210 = vsel %vm4178, %v4162, %v4194
    %v4211 = vsel %vm4179, %v4163, %v4195
    %v4212 = vpack.c.bf16 %v4197, %v4196
    %v4213 = vpack.c.bf16 %v4199, %v4198
    %v4214 = vpack.c.bf16 %v4201, %v4200
    %v4215 = vpack.c.bf16 %v4203, %v4202
    %v4216 = vpack.c.bf16 %v4205, %v4204
    %v4217 = vpack.c.bf16 %v4207, %v4206
    %v4218 = vpack.c.bf16 %v4209, %v4208
    %v4219 = vpack.c.bf16 %v4211, %v4210
    %v4228 = vcombine.high %v4212, %v4212
    %v4230 = vunpack.c.l.s4 1966171168
    %v4231 = vunpack.c.0.s8 %v4230
    %v4232 = vlaneseq
    %v4233 = vshrl.u32 %v4232, 7
    %v4234 = vsub.s32 %v4231, %v4233
    %v4235 = vrot.slane %v4212, %v4234
    %v4237 = vunpack.c.l.s4 1966171168
    %v4238 = vunpack.c.0.s8 %v4237
    %v4239 = vlaneseq
    %v4240 = vshrl.u32 %v4239, 7
    %v4241 = vsub.s32 %v4238, %v4240
    %v4242 = vrot.slane %v4228, %v4241
    %v4243 = vcombine.high %v4235, %v4235
    %v4244 = vcombine.high %v4242, %v4242
    %v4246 = vunpack.c.l.s4 1966171168
    %v4247 = vunpack.c.0.s8 %v4246
    %v4248 = vlaneseq
    %v4249 = vshrl.u32 %v4248, 7
    %v4250 = vsub.s32 %v4247, %v4249
    %v4251 = vrot.slane %v4235, %v4250
    %v4253 = vunpack.c.l.s4 1966171168
    %v4254 = vunpack.c.0.s8 %v4253
    %v4255 = vlaneseq
    %v4256 = vshrl.u32 %v4255, 7
    %v4257 = vsub.s32 %v4254, %v4256
    %v4258 = vrot.slane %v4242, %v4257
    %v4260 = vunpack.c.l.s4 1966171168
    %v4261 = vunpack.c.0.s8 %v4260
    %v4262 = vlaneseq
    %v4263 = vshrl.u32 %v4262, 7
    %v4264 = vsub.s32 %v4261, %v4263
    %v4265 = vrot.slane %v4243, %v4264
    %v4267 = vunpack.c.l.s4 1966171168
    %v4268 = vunpack.c.0.s8 %v4267
    %v4269 = vlaneseq
    %v4270 = vshrl.u32 %v4269, 7
    %v4271 = vsub.s32 %v4268, %v4270
    %v4272 = vrot.slane %v4244, %v4271
    %v4273 = vcombine.high %v4251, %v4251
    %v4274 = vcombine.high %v4258, %v4258
    %v4275 = vcombine.high %v4265, %v4265
    %v4276 = vcombine.high %v4272, %v4272
    %v4277 = vcombine.high %v4213, %v4213
    %v4279 = vunpack.c.l.s4 1966171168
    %v4280 = vunpack.c.0.s8 %v4279
    %v4281 = vlaneseq
    %v4282 = vshrl.u32 %v4281, 7
    %v4283 = vsub.s32 %v4280, %v4282
    %v4284 = vrot.slane %v4213, %v4283
    %v4286 = vunpack.c.l.s4 1966171168
    %v4287 = vunpack.c.0.s8 %v4286
    %v4288 = vlaneseq
    %v4289 = vshrl.u32 %v4288, 7
    %v4290 = vsub.s32 %v4287, %v4289
    %v4291 = vrot.slane %v4277, %v4290
    %v4292 = vcombine.high %v4284, %v4284
    %v4293 = vcombine.high %v4291, %v4291
    %v4295 = vunpack.c.l.s4 1966171168
    %v4296 = vunpack.c.0.s8 %v4295
    %v4297 = vlaneseq
    %v4298 = vshrl.u32 %v4297, 7
    %v4299 = vsub.s32 %v4296, %v4298
    %v4300 = vrot.slane %v4284, %v4299
    %v4302 = vunpack.c.l.s4 1966171168
    %v4303 = vunpack.c.0.s8 %v4302
    %v4304 = vlaneseq
    %v4305 = vshrl.u32 %v4304, 7
    %v4306 = vsub.s32 %v4303, %v4305
    %v4307 = vrot.slane %v4291, %v4306
    %v4309 = vunpack.c.l.s4 1966171168
    %v4310 = vunpack.c.0.s8 %v4309
    %v4311 = vlaneseq
    %v4312 = vshrl.u32 %v4311, 7
    %v4313 = vsub.s32 %v4310, %v4312
    %v4314 = vrot.slane %v4292, %v4313
    %v4316 = vunpack.c.l.s4 1966171168
    %v4317 = vunpack.c.0.s8 %v4316
    %v4318 = vlaneseq
    %v4319 = vshrl.u32 %v4318, 7
    %v4320 = vsub.s32 %v4317, %v4319
    %v4321 = vrot.slane %v4293, %v4320
    %v4322 = vcombine.high %v4300, %v4300
    %v4323 = vcombine.high %v4307, %v4307
    %v4324 = vcombine.high %v4314, %v4314
    %v4325 = vcombine.high %v4321, %v4321
    %v4326 = vcombine.high %v4214, %v4214
    %v4328 = vunpack.c.l.s4 1966171168
    %v4329 = vunpack.c.0.s8 %v4328
    %v4330 = vlaneseq
    %v4331 = vshrl.u32 %v4330, 7
    %v4332 = vsub.s32 %v4329, %v4331
    %v4333 = vrot.slane %v4214, %v4332
    %v4335 = vunpack.c.l.s4 1966171168
    %v4336 = vunpack.c.0.s8 %v4335
    %v4337 = vlaneseq
    %v4338 = vshrl.u32 %v4337, 7
    %v4339 = vsub.s32 %v4336, %v4338
    %v4340 = vrot.slane %v4326, %v4339
    %v4341 = vcombine.high %v4333, %v4333
    %v4342 = vcombine.high %v4340, %v4340
    %v4344 = vunpack.c.l.s4 1966171168
    %v4345 = vunpack.c.0.s8 %v4344
    %v4346 = vlaneseq
    %v4347 = vshrl.u32 %v4346, 7
    %v4348 = vsub.s32 %v4345, %v4347
    %v4349 = vrot.slane %v4333, %v4348
    %v4351 = vunpack.c.l.s4 1966171168
    %v4352 = vunpack.c.0.s8 %v4351
    %v4353 = vlaneseq
    %v4354 = vshrl.u32 %v4353, 7
    %v4355 = vsub.s32 %v4352, %v4354
    %v4356 = vrot.slane %v4340, %v4355
    %v4358 = vunpack.c.l.s4 1966171168
    %v4359 = vunpack.c.0.s8 %v4358
    %v4360 = vlaneseq
    %v4361 = vshrl.u32 %v4360, 7
    %v4362 = vsub.s32 %v4359, %v4361
    %v4363 = vrot.slane %v4341, %v4362
    %v4365 = vunpack.c.l.s4 1966171168
    %v4366 = vunpack.c.0.s8 %v4365
    %v4367 = vlaneseq
    %v4368 = vshrl.u32 %v4367, 7
    %v4369 = vsub.s32 %v4366, %v4368
    %v4370 = vrot.slane %v4342, %v4369
    %v4371 = vcombine.high %v4349, %v4349
    %v4372 = vcombine.high %v4356, %v4356
    %v4373 = vcombine.high %v4363, %v4363
    %v4374 = vcombine.high %v4370, %v4370
    %v4375 = vcombine.high %v4215, %v4215
    %v4377 = vunpack.c.l.s4 1966171168
    %v4378 = vunpack.c.0.s8 %v4377
    %v4379 = vlaneseq
    %v4380 = vshrl.u32 %v4379, 7
    %v4381 = vsub.s32 %v4378, %v4380
    %v4382 = vrot.slane %v4215, %v4381
    %v4384 = vunpack.c.l.s4 1966171168
    %v4385 = vunpack.c.0.s8 %v4384
    %v4386 = vlaneseq
    %v4387 = vshrl.u32 %v4386, 7
    %v4388 = vsub.s32 %v4385, %v4387
    %v4389 = vrot.slane %v4375, %v4388
    %v4390 = vcombine.high %v4382, %v4382
    %v4391 = vcombine.high %v4389, %v4389
    %v4393 = vunpack.c.l.s4 1966171168
    %v4394 = vunpack.c.0.s8 %v4393
    %v4395 = vlaneseq
    %v4396 = vshrl.u32 %v4395, 7
    %v4397 = vsub.s32 %v4394, %v4396
    %v4398 = vrot.slane %v4382, %v4397
    %v4400 = vunpack.c.l.s4 1966171168
    %v4401 = vunpack.c.0.s8 %v4400
    %v4402 = vlaneseq
    %v4403 = vshrl.u32 %v4402, 7
    %v4404 = vsub.s32 %v4401, %v4403
    %v4405 = vrot.slane %v4389, %v4404
    %v4407 = vunpack.c.l.s4 1966171168
    %v4408 = vunpack.c.0.s8 %v4407
    %v4409 = vlaneseq
    %v4410 = vshrl.u32 %v4409, 7
    %v4411 = vsub.s32 %v4408, %v4410
    %v4412 = vrot.slane %v4390, %v4411
    %v4414 = vunpack.c.l.s4 1966171168
    %v4415 = vunpack.c.0.s8 %v4414
    %v4416 = vlaneseq
    %v4417 = vshrl.u32 %v4416, 7
    %v4418 = vsub.s32 %v4415, %v4417
    %v4419 = vrot.slane %v4391, %v4418
    %v4420 = vcombine.high %v4398, %v4398
    %v4421 = vcombine.high %v4405, %v4405
    %v4422 = vcombine.high %v4412, %v4412
    %v4423 = vcombine.high %v4419, %v4419
    %v4424 = vcombine.high %v4216, %v4216
    %v4426 = vunpack.c.l.s4 1966171168
    %v4427 = vunpack.c.0.s8 %v4426
    %v4428 = vlaneseq
    %v4429 = vshrl.u32 %v4428, 7
    %v4430 = vsub.s32 %v4427, %v4429
    %v4431 = vrot.slane %v4216, %v4430
    %v4433 = vunpack.c.l.s4 1966171168
    %v4434 = vunpack.c.0.s8 %v4433
    %v4435 = vlaneseq
    %v4436 = vshrl.u32 %v4435, 7
    %v4437 = vsub.s32 %v4434, %v4436
    %v4438 = vrot.slane %v4424, %v4437
    %v4439 = vcombine.high %v4431, %v4431
    %v4440 = vcombine.high %v4438, %v4438
    %v4442 = vunpack.c.l.s4 1966171168
    %v4443 = vunpack.c.0.s8 %v4442
    %v4444 = vlaneseq
    %v4445 = vshrl.u32 %v4444, 7
    %v4446 = vsub.s32 %v4443, %v4445
    %v4447 = vrot.slane %v4431, %v4446
    %v4449 = vunpack.c.l.s4 1966171168
    %v4450 = vunpack.c.0.s8 %v4449
    %v4451 = vlaneseq
    %v4452 = vshrl.u32 %v4451, 7
    %v4453 = vsub.s32 %v4450, %v4452
    %v4454 = vrot.slane %v4438, %v4453
    %v4456 = vunpack.c.l.s4 1966171168
    %v4457 = vunpack.c.0.s8 %v4456
    %v4458 = vlaneseq
    %v4459 = vshrl.u32 %v4458, 7
    %v4460 = vsub.s32 %v4457, %v4459
    %v4461 = vrot.slane %v4439, %v4460
    %v4463 = vunpack.c.l.s4 1966171168
    %v4464 = vunpack.c.0.s8 %v4463
    %v4465 = vlaneseq
    %v4466 = vshrl.u32 %v4465, 7
    %v4467 = vsub.s32 %v4464, %v4466
    %v4468 = vrot.slane %v4440, %v4467
    %v4469 = vcombine.high %v4447, %v4447
    %v4470 = vcombine.high %v4454, %v4454
    %v4471 = vcombine.high %v4461, %v4461
    %v4472 = vcombine.high %v4468, %v4468
    %v4473 = vcombine.high %v4217, %v4217
    %v4475 = vunpack.c.l.s4 1966171168
    %v4476 = vunpack.c.0.s8 %v4475
    %v4477 = vlaneseq
    %v4478 = vshrl.u32 %v4477, 7
    %v4479 = vsub.s32 %v4476, %v4478
    %v4480 = vrot.slane %v4217, %v4479
    %v4482 = vunpack.c.l.s4 1966171168
    %v4483 = vunpack.c.0.s8 %v4482
    %v4484 = vlaneseq
    %v4485 = vshrl.u32 %v4484, 7
    %v4486 = vsub.s32 %v4483, %v4485
    %v4487 = vrot.slane %v4473, %v4486
    %v4488 = vcombine.high %v4480, %v4480
    %v4489 = vcombine.high %v4487, %v4487
    %v4491 = vunpack.c.l.s4 1966171168
    %v4492 = vunpack.c.0.s8 %v4491
    %v4493 = vlaneseq
    %v4494 = vshrl.u32 %v4493, 7
    %v4495 = vsub.s32 %v4492, %v4494
    %v4496 = vrot.slane %v4480, %v4495
    %v4498 = vunpack.c.l.s4 1966171168
    %v4499 = vunpack.c.0.s8 %v4498
    %v4500 = vlaneseq
    %v4501 = vshrl.u32 %v4500, 7
    %v4502 = vsub.s32 %v4499, %v4501
    %v4503 = vrot.slane %v4487, %v4502
    %v4505 = vunpack.c.l.s4 1966171168
    %v4506 = vunpack.c.0.s8 %v4505
    %v4507 = vlaneseq
    %v4508 = vshrl.u32 %v4507, 7
    %v4509 = vsub.s32 %v4506, %v4508
    %v4510 = vrot.slane %v4488, %v4509
    %v4512 = vunpack.c.l.s4 1966171168
    %v4513 = vunpack.c.0.s8 %v4512
    %v4514 = vlaneseq
    %v4515 = vshrl.u32 %v4514, 7
    %v4516 = vsub.s32 %v4513, %v4515
    %v4517 = vrot.slane %v4489, %v4516
    %v4518 = vcombine.high %v4496, %v4496
    %v4519 = vcombine.high %v4503, %v4503
    %v4520 = vcombine.high %v4510, %v4510
    %v4521 = vcombine.high %v4517, %v4517
    %v4522 = vcombine.high %v4218, %v4218
    %v4524 = vunpack.c.l.s4 1966171168
    %v4525 = vunpack.c.0.s8 %v4524
    %v4526 = vlaneseq
    %v4527 = vshrl.u32 %v4526, 7
    %v4528 = vsub.s32 %v4525, %v4527
    %v4529 = vrot.slane %v4218, %v4528
    %v4531 = vunpack.c.l.s4 1966171168
    %v4532 = vunpack.c.0.s8 %v4531
    %v4533 = vlaneseq
    %v4534 = vshrl.u32 %v4533, 7
    %v4535 = vsub.s32 %v4532, %v4534
    %v4536 = vrot.slane %v4522, %v4535
    %v4537 = vcombine.high %v4529, %v4529
    %v4538 = vcombine.high %v4536, %v4536
    %v4540 = vunpack.c.l.s4 1966171168
    %v4541 = vunpack.c.0.s8 %v4540
    %v4542 = vlaneseq
    %v4543 = vshrl.u32 %v4542, 7
    %v4544 = vsub.s32 %v4541, %v4543
    %v4545 = vrot.slane %v4529, %v4544
    %v4547 = vunpack.c.l.s4 1966171168
    %v4548 = vunpack.c.0.s8 %v4547
    %v4549 = vlaneseq
    %v4550 = vshrl.u32 %v4549, 7
    %v4551 = vsub.s32 %v4548, %v4550
    %v4552 = vrot.slane %v4536, %v4551
    %v4554 = vunpack.c.l.s4 1966171168
    %v4555 = vunpack.c.0.s8 %v4554
    %v4556 = vlaneseq
    %v4557 = vshrl.u32 %v4556, 7
    %v4558 = vsub.s32 %v4555, %v4557
    %v4559 = vrot.slane %v4537, %v4558
    %v4561 = vunpack.c.l.s4 1966171168
    %v4562 = vunpack.c.0.s8 %v4561
    %v4563 = vlaneseq
    %v4564 = vshrl.u32 %v4563, 7
    %v4565 = vsub.s32 %v4562, %v4564
    %v4566 = vrot.slane %v4538, %v4565
    %v4567 = vcombine.high %v4545, %v4545
    %v4568 = vcombine.high %v4552, %v4552
    %v4569 = vcombine.high %v4559, %v4559
    %v4570 = vcombine.high %v4566, %v4566
    %v4571 = vcombine.high %v4219, %v4219
    %v4573 = vunpack.c.l.s4 1966171168
    %v4574 = vunpack.c.0.s8 %v4573
    %v4575 = vlaneseq
    %v4576 = vshrl.u32 %v4575, 7
    %v4577 = vsub.s32 %v4574, %v4576
    %v4578 = vrot.slane %v4219, %v4577
    %v4580 = vunpack.c.l.s4 1966171168
    %v4581 = vunpack.c.0.s8 %v4580
    %v4582 = vlaneseq
    %v4583 = vshrl.u32 %v4582, 7
    %v4584 = vsub.s32 %v4581, %v4583
    %v4585 = vrot.slane %v4571, %v4584
    %v4586 = vcombine.high %v4578, %v4578
    %v4587 = vcombine.high %v4585, %v4585
    %v4589 = vunpack.c.l.s4 1966171168
    %v4590 = vunpack.c.0.s8 %v4589
    %v4591 = vlaneseq
    %v4592 = vshrl.u32 %v4591, 7
    %v4593 = vsub.s32 %v4590, %v4592
    %v4594 = vrot.slane %v4578, %v4593
    %v4596 = vunpack.c.l.s4 1966171168
    %v4597 = vunpack.c.0.s8 %v4596
    %v4598 = vlaneseq
    %v4599 = vshrl.u32 %v4598, 7
    %v4600 = vsub.s32 %v4597, %v4599
    %v4601 = vrot.slane %v4585, %v4600
    %v4603 = vunpack.c.l.s4 1966171168
    %v4604 = vunpack.c.0.s8 %v4603
    %v4605 = vlaneseq
    %v4606 = vshrl.u32 %v4605, 7
    %v4607 = vsub.s32 %v4604, %v4606
    %v4608 = vrot.slane %v4586, %v4607
    %v4610 = vunpack.c.l.s4 1966171168
    %v4611 = vunpack.c.0.s8 %v4610
    %v4612 = vlaneseq
    %v4613 = vshrl.u32 %v4612, 7
    %v4614 = vsub.s32 %v4611, %v4613
    %v4615 = vrot.slane %v4587, %v4614
    %v4616 = vcombine.high %v4594, %v4594
    %v4617 = vcombine.high %v4601, %v4601
    %v4618 = vcombine.high %v4608, %v4608
    %v4619 = vcombine.high %v4615, %v4615
    %4684 = vst.msk [vmem:[#allocation3] sm:$0x1] %vm1355, 0
    %4685 = vst.msk [vmem:[#allocation3 + $0x1] sm:$0x1] %vm1355, 0
    %4686 = vst.msk [vmem:[#allocation3 + $0x2] sm:$0x1] %vm1355, 0
    %4687 = vst.msk [vmem:[#allocation3 + $0x3] sm:$0x1] %vm1355, 0
    %4688 = vst.msk [vmem:[#allocation3 + $0x4] sm:$0x1] %vm1355, 0
    %4689 = vst.msk [vmem:[#allocation3 + $0x5] sm:$0x1] %vm1355, 0
    %4690 = vst.msk [vmem:[#allocation3 + $0x6] sm:$0x1] %vm1355, 0
    %4691 = vst.msk [vmem:[#allocation3 + $0x7] sm:$0x1] %vm1355, 0
    %4692 = vst.msk [vmem:[#allocation3 + $0x8] sm:$0x1] %vm1355, 0
    %4693 = vst.msk [vmem:[#allocation3 + $0x9] sm:$0x1] %vm1355, 0
    %s4694 = scalar_lea.vmem [#allocation3], 90
    %4695 = vst.msk [vmem:[%s4694] sm:$0x1] %vm1355, 0
    %4696 = vst.msk [vmem:[%s4694 + $0x1] sm:$0x1] %vm1355, 0
    %4697 = vst.msk [vmem:[%s4694 + $0x2] sm:$0x1] %vm1355, 0
    %4698 = vst.msk [vmem:[%s4694 + $0x3] sm:$0x1] %vm1355, 0
    %4699 = vst.msk [vmem:[%s4694 + $0x4] sm:$0x1] %vm1355, 0
    %4700 = vst.msk [vmem:[%s4694 + $0x5] sm:$0x1] %vm1355, 0
    %4701 = vst.msk [vmem:[%s4694 + $0x6] sm:$0x1] %vm1355, 0
    %4702 = vst.msk [vmem:[%s4694 + $0x7] sm:$0x1] %vm1355, 0
    %4703 = vst.msk [vmem:[%s4694 + $0x8] sm:$0x1] %vm1355, 0
    %4704 = vst.msk [vmem:[%s4694 + $0x9] sm:$0x1] %vm1355, 0
    %s4705 = scalar_lea.vmem [#allocation3], 10
    %4706 = vst.msk [vmem:[%s4705] sm:$0x1] %vm1355, 0
    %4707 = vst.msk [vmem:[%s4705 + $0xa] sm:$0x1] %vm1355, 0
    %4708 = vst.msk [vmem:[%s4705 + $0x14] sm:$0x1] %vm1355, 0
    %4709 = vst.msk [vmem:[%s4705 + $0x1e] sm:$0x1] %vm1355, 0
    %4710 = vst.msk [vmem:[%s4705 + $0x28] sm:$0x1] %vm1355, 0
    %4711 = vst.msk [vmem:[%s4705 + $0x32] sm:$0x1] %vm1355, 0
    %4712 = vst.msk [vmem:[%s4705 + $0x3c] sm:$0x1] %vm1355, 0
    %4713 = vst.msk [vmem:[%s4705 + $0x46] sm:$0x1] %vm1355, 0
    %s4714 = scalar_lea.vmem [#allocation3], 19
    %4715 = vst.msk [vmem:[%s4714] sm:$0x1] %vm1355, 0
    %4716 = vst.msk [vmem:[%s4714 + $0xa] sm:$0x1] %vm1355, 0
    %4717 = vst.msk [vmem:[%s4714 + $0x14] sm:$0x1] %vm1355, 0
    %4718 = vst.msk [vmem:[%s4714 + $0x1e] sm:$0x1] %vm1355, 0
    %4719 = vst.msk [vmem:[%s4714 + $0x28] sm:$0x1] %vm1355, 0
    %4720 = vst.msk [vmem:[%s4714 + $0x32] sm:$0x1] %vm1355, 0
    %4721 = vst.msk [vmem:[%s4714 + $0x3c] sm:$0x1] %vm1355, 0
    %4722 = vst.msk [vmem:[%s4714 + $0x46] sm:$0x1] %vm1355, 0
    %s4723 = scalar_lea.vmem [#allocation3], 11
    %4724 = vst.msk [vmem:[%s4723] sm:$0x1] %vm1355, %v4251
    %4725 = vst.msk [vmem:[%s4723 + $0x1] sm:$0x1] %vm1355, %v4265
    %4726 = vst.msk [vmem:[%s4723 + $0x2] sm:$0x1] %vm1355, %v4273
    %4727 = vst.msk [vmem:[%s4723 + $0x3] sm:$0x1] %vm1355, %v4275
    %4728 = vst.msk [vmem:[%s4723 + $0x4] sm:$0x1] %vm1355, %v4258
    %4729 = vst.msk [vmem:[%s4723 + $0x5] sm:$0x1] %vm1355, %v4272
    %4730 = vst.msk [vmem:[%s4723 + $0x6] sm:$0x1] %vm1355, %v4274
    %4731 = vst.msk [vmem:[%s4723 + $0x7] sm:$0x1] %vm1355, %v4276
    %4732 = vst.msk [vmem:[%s4723 + $0xa] sm:$0x1] %vm1355, %v4300
    %4733 = vst.msk [vmem:[%s4723 + $0xb] sm:$0x1] %vm1355, %v4314
    %4734 = vst.msk [vmem:[%s4723 + $0xc] sm:$0x1] %vm1355, %v4322
    %4735 = vst.msk [vmem:[%s4723 + $0xd] sm:$0x1] %vm1355, %v4324
    %4736 = vst.msk [vmem:[%s4723 + $0xe] sm:$0x1] %vm1355, %v4307
    %4737 = vst.msk [vmem:[%s4723 + $0xf] sm:$0x1] %vm1355, %v4321
    %4738 = vst.msk [vmem:[%s4723 + $0x10] sm:$0x1] %vm1355, %v4323
    %4739 = vst.msk [vmem:[%s4723 + $0x11] sm:$0x1] %vm1355, %v4325
    %4740 = vst.msk [vmem:[%s4723 + $0x14] sm:$0x1] %vm1355, %v4349
    %4741 = vst.msk [vmem:[%s4723 + $0x15] sm:$0x1] %vm1355, %v4363
    %4742 = vst.msk [vmem:[%s4723 + $0x16] sm:$0x1] %vm1355, %v4371
    %4743 = vst.msk [vmem:[%s4723 + $0x17] sm:$0x1] %vm1355, %v4373
    %4744 = vst.msk [vmem:[%s4723 + $0x18] sm:$0x1] %vm1355, %v4356
    %4745 = vst.msk [vmem:[%s4723 + $0x19] sm:$0x1] %vm1355, %v4370
    %4746 = vst.msk [vmem:[%s4723 + $0x1a] sm:$0x1] %vm1355, %v4372
    %4747 = vst.msk [vmem:[%s4723 + $0x1b] sm:$0x1] %vm1355, %v4374
    %4748 = vst.msk [vmem:[%s4723 + $0x1e] sm:$0x1] %vm1355, %v4398
    %4749 = vst.msk [vmem:[%s4723 + $0x1f] sm:$0x1] %vm1355, %v4412
    %4750 = vst.msk [vmem:[%s4723 + $0x20] sm:$0x1] %vm1355, %v4420
    %4751 = vst.msk [vmem:[%s4723 + $0x21] sm:$0x1] %vm1355, %v4422
    %4752 = vst.msk [vmem:[%s4723 + $0x22] sm:$0x1] %vm1355, %v4405
    %4753 = vst.msk [vmem:[%s4723 + $0x23] sm:$0x1] %vm1355, %v4419
    %4754 = vst.msk [vmem:[%s4723 + $0x24] sm:$0x1] %vm1355, %v4421
    %4755 = vst.msk [vmem:[%s4723 + $0x25] sm:$0x1] %vm1355, %v4423
    %4756 = vst.msk [vmem:[%s4723 + $0x28] sm:$0x1] %vm1355, %v4447
    %4757 = vst.msk [vmem:[%s4723 + $0x29] sm:$0x1] %vm1355, %v4461
    %4758 = vst.msk [vmem:[%s4723 + $0x2a] sm:$0x1] %vm1355, %v4469
    %4759 = vst.msk [vmem:[%s4723 + $0x2b] sm:$0x1] %vm1355, %v4471
    %4760 = vst.msk [vmem:[%s4723 + $0x2c] sm:$0x1] %vm1355, %v4454
    %4761 = vst.msk [vmem:[%s4723 + $0x2d] sm:$0x1] %vm1355, %v4468
    %4762 = vst.msk [vmem:[%s4723 + $0x2e] sm:$0x1] %vm1355, %v4470
    %4763 = vst.msk [vmem:[%s4723 + $0x2f] sm:$0x1] %vm1355, %v4472
    %4764 = vst.msk [vmem:[%s4723 + $0x32] sm:$0x1] %vm1355, %v4496
    %4765 = vst.msk [vmem:[%s4723 + $0x33] sm:$0x1] %vm1355, %v4510
    %4766 = vst.msk [vmem:[%s4723 + $0x34] sm:$0x1] %vm1355, %v4518
    %4767 = vst.msk [vmem:[%s4723 + $0x35] sm:$0x1] %vm1355, %v4520
    %4768 = vst.msk [vmem:[%s4723 + $0x36] sm:$0x1] %vm1355, %v4503
    %4769 = vst.msk [vmem:[%s4723 + $0x37] sm:$0x1] %vm1355, %v4517
    %4770 = vst.msk [vmem:[%s4723 + $0x38] sm:$0x1] %vm1355, %v4519
    %4771 = vst.msk [vmem:[%s4723 + $0x39] sm:$0x1] %vm1355, %v4521
    %4772 = vst.msk [vmem:[%s4723 + $0x3c] sm:$0x1] %vm1355, %v4545
    %4773 = vst.msk [vmem:[%s4723 + $0x3d] sm:$0x1] %vm1355, %v4559
    %4774 = vst.msk [vmem:[%s4723 + $0x3e] sm:$0x1] %vm1355, %v4567
    %4775 = vst.msk [vmem:[%s4723 + $0x3f] sm:$0x1] %vm1355, %v4569
    %4776 = vst.msk [vmem:[%s4723 + $0x40] sm:$0x1] %vm1355, %v4552
    %4777 = vst.msk [vmem:[%s4723 + $0x41] sm:$0x1] %vm1355, %v4566
    %4778 = vst.msk [vmem:[%s4723 + $0x42] sm:$0x1] %vm1355, %v4568
    %4779 = vst.msk [vmem:[%s4723 + $0x43] sm:$0x1] %vm1355, %v4570
    %4780 = vst.msk [vmem:[%s4723 + $0x46] sm:$0x1] %vm1355, %v4594
    %4781 = vst.msk [vmem:[%s4723 + $0x47] sm:$0x1] %vm1355, %v4608
    %4782 = vst.msk [vmem:[%s4723 + $0x48] sm:$0x1] %vm1355, %v4616
    %4783 = vst.msk [vmem:[%s4723 + $0x49] sm:$0x1] %vm1355, %v4618
    %4784 = vst.msk [vmem:[%s4723 + $0x4a] sm:$0x1] %vm1355, %v4601
    %4785 = vst.msk [vmem:[%s4723 + $0x4b] sm:$0x1] %vm1355, %v4615
    %4786 = vst.msk [vmem:[%s4723 + $0x4c] sm:$0x1] %vm1355, %v4617
    %4787 = vst.msk [vmem:[%s4723 + $0x4d] sm:$0x1] %vm1355, %v4619
    %v4788 = vld [vmem:[#allocation3] sm:$0x1]
    %v4789 = vld [vmem:[#allocation3 + $0x1] sm:$0x1]
    %v4790 = vld [vmem:[#allocation3 + $0x2] sm:$0x1]
    %v4791 = vld [vmem:[#allocation3 + $0x3] sm:$0x1]
    %v4792 = vld [vmem:[#allocation3 + $0x4] sm:$0x1]
    %v4793 = vld [vmem:[#allocation3 + $0x5] sm:$0x1]
    %v4794 = vld [vmem:[#allocation3 + $0x6] sm:$0x1]
    %v4795 = vld [vmem:[#allocation3 + $0x7] sm:$0x1]
    %v4796 = vld [vmem:[#allocation3 + $0x8] sm:$0x1]
    %v4797 = vld [vmem:[#allocation3 + $0xa] sm:$0x1]
    %v4798 = vld [vmem:[#allocation3 + $0xb] sm:$0x1]
    %v4799 = vld [vmem:[#allocation3 + $0xc] sm:$0x1]
    %v4800 = vld [vmem:[#allocation3 + $0xd] sm:$0x1]
    %v4801 = vld [vmem:[#allocation3 + $0xe] sm:$0x1]
    %v4802 = vld [vmem:[#allocation3 + $0xf] sm:$0x1]
    %v4803 = vld [vmem:[#allocation3 + $0x10] sm:$0x1]
    %v4804 = vld [vmem:[#allocation3 + $0x11] sm:$0x1]
    %v4805 = vld [vmem:[#allocation3 + $0x12] sm:$0x1]
    %v4806 = vld [vmem:[#allocation3 + $0x14] sm:$0x1]
    %v4807 = vld [vmem:[#allocation3 + $0x15] sm:$0x1]
    %v4808 = vld [vmem:[#allocation3 + $0x16] sm:$0x1]
    %v4809 = vld [vmem:[#allocation3 + $0x17] sm:$0x1]
    %v4810 = vld [vmem:[#allocation3 + $0x18] sm:$0x1]
    %v4811 = vld [vmem:[#allocation3 + $0x19] sm:$0x1]
    %v4812 = vld [vmem:[#allocation3 + $0x1a] sm:$0x1]
    %v4813 = vld [vmem:[#allocation3 + $0x1b] sm:$0x1]
    %v4814 = vld [vmem:[#allocation3 + $0x1c] sm:$0x1]
    %v4815 = vld [vmem:[#allocation3 + $0x1e] sm:$0x1]
    %v4816 = vld [vmem:[#allocation3 + $0x1f] sm:$0x1]
    %v4817 = vld [vmem:[#allocation3 + $0x20] sm:$0x1]
    %v4818 = vld [vmem:[#allocation3 + $0x21] sm:$0x1]
    %v4819 = vld [vmem:[#allocation3 + $0x22] sm:$0x1]
    %v4820 = vld [vmem:[#allocation3 + $0x23] sm:$0x1]
    %v4821 = vld [vmem:[#allocation3 + $0x24] sm:$0x1]
    %v4822 = vld [vmem:[#allocation3 + $0x25] sm:$0x1]
    %v4823 = vld [vmem:[#allocation3 + $0x26] sm:$0x1]
    %v4824 = vld [vmem:[#allocation3 + $0x28] sm:$0x1]
    %v4825 = vld [vmem:[#allocation3 + $0x29] sm:$0x1]
    %v4826 = vld [vmem:[#allocation3 + $0x2a] sm:$0x1]
    %v4827 = vld [vmem:[#allocation3 + $0x2b] sm:$0x1]
    %v4828 = vld [vmem:[#allocation3 + $0x2c] sm:$0x1]
    %v4829 = vld [vmem:[#allocation3 + $0x2d] sm:$0x1]
    %v4830 = vld [vmem:[#allocation3 + $0x2e] sm:$0x1]
    %v4831 = vld [vmem:[#allocation3 + $0x2f] sm:$0x1]
    %v4832 = vld [vmem:[#allocation3 + $0x30] sm:$0x1]
    %v4833 = vld [vmem:[#allocation3 + $0x32] sm:$0x1]
    %v4834 = vld [vmem:[#allocation3 + $0x33] sm:$0x1]
    %v4835 = vld [vmem:[#allocation3 + $0x34] sm:$0x1]
    %v4836 = vld [vmem:[#allocation3 + $0x35] sm:$0x1]
    %v4837 = vld [vmem:[#allocation3 + $0x36] sm:$0x1]
    %v4838 = vld [vmem:[#allocation3 + $0x37] sm:$0x1]
    %v4839 = vld [vmem:[#allocation3 + $0x38] sm:$0x1]
    %v4840 = vld [vmem:[#allocation3 + $0x39] sm:$0x1]
    %v4841 = vld [vmem:[#allocation3 + $0x3a] sm:$0x1]
    %v4842 = vld [vmem:[#allocation3 + $0x3c] sm:$0x1]
    %v4843 = vld [vmem:[#allocation3 + $0x3d] sm:$0x1]
    %v4844 = vld [vmem:[#allocation3 + $0x3e] sm:$0x1]
    %v4845 = vld [vmem:[#allocation3 + $0x3f] sm:$0x1]
    %v4846 = vld [vmem:[#allocation3 + $0x40] sm:$0x1]
    %v4847 = vld [vmem:[#allocation3 + $0x41] sm:$0x1]
    %v4848 = vld [vmem:[#allocation3 + $0x42] sm:$0x1]
    %v4849 = vld [vmem:[#allocation3 + $0x43] sm:$0x1]
    %v4850 = vld [vmem:[#allocation3 + $0x44] sm:$0x1]
    %v4851 = vld [vmem:[#allocation3 + $0x46] sm:$0x1]
    %v4852 = vld [vmem:[#allocation3 + $0x47] sm:$0x1]
    %v4853 = vld [vmem:[#allocation3 + $0x48] sm:$0x1]
    %v4854 = vld [vmem:[#allocation3 + $0x49] sm:$0x1]
    %v4855 = vld [vmem:[#allocation3 + $0x4a] sm:$0x1]
    %v4856 = vld [vmem:[#allocation3 + $0x4b] sm:$0x1]
    %v4857 = vld [vmem:[#allocation3 + $0x4c] sm:$0x1]
    %v4858 = vld [vmem:[#allocation3 + $0x4d] sm:$0x1]
    %v4859 = vld [vmem:[#allocation3 + $0x4e] sm:$0x1]
    %v4860 = vld [vmem:[#allocation3 + $0x50] sm:$0x1]
    %v4861 = vld [vmem:[#allocation3 + $0x51] sm:$0x1]
    %v4862 = vld [vmem:[#allocation3 + $0x52] sm:$0x1]
    %v4863 = vld [vmem:[#allocation3 + $0x53] sm:$0x1]
    %v4864 = vld [vmem:[#allocation3 + $0x54] sm:$0x1]
    %v4865 = vld [vmem:[#allocation3 + $0x55] sm:$0x1]
    %v4866 = vld [vmem:[#allocation3 + $0x56] sm:$0x1]
    %v4867 = vld [vmem:[#allocation3 + $0x57] sm:$0x1]
    %v4868 = vld [vmem:[#allocation3 + $0x58] sm:$0x1]
    %v4869 = vld [vmem:[#allocation11] sm:$0xf]
    %v4870 = vld [vmem:[#allocation11 + $0x4] sm:$0xf]
    %v4871 = vld [vmem:[#allocation11 + $0x8] sm:$0xf]
    %v4872 = vld [vmem:[#allocation11 + $0xc] sm:$0xf]
    %s4873 = scalar_lea.vmem [#allocation11], 16
    %v4874 = vld [vmem:[%s4873] sm:$0xf]
    %v4875 = vld [vmem:[%s4873 + $0x4] sm:$0xf]
    %v4876 = vld [vmem:[%s4873 + $0x8] sm:$0xf]
    %v4877 = vld [vmem:[%s4873 + $0xc] sm:$0xf]
    %v4894 = vcombine.low %v4789, %v4791
    %v4895 = vcombine.low %v4793, %v4795
    %v4896 = vcombine.low %v4807, %v4809
    %v4897 = vcombine.low %v4811, %v4813
    %v4899 = vunpack.c.l.s4 1966171168
    %v4900 = vunpack.c.0.s8 %v4899
    %v4901 = vlaneseq
    %v4902 = vshrl.u32 %v4901, 7
    %v4903 = vsub.s32 %v4900, %v4902
    %v4904 = vrot.slane %v4894, %v4903
    %v4906 = vunpack.c.l.s4 1966171168
    %v4907 = vunpack.c.0.s8 %v4906
    %v4908 = vlaneseq
    %v4909 = vshrl.u32 %v4908, 7
    %v4910 = vsub.s32 %v4907, %v4909
    %v4911 = vrot.slane %v4895, %v4910
    %v4913 = vunpack.c.l.s4 1966171168
    %v4914 = vunpack.c.0.s8 %v4913
    %v4915 = vlaneseq
    %v4916 = vshrl.u32 %v4915, 7
    %v4917 = vsub.s32 %v4914, %v4916
    %v4918 = vrot.slane %v4896, %v4917
    %v4920 = vunpack.c.l.s4 1966171168
    %v4921 = vunpack.c.0.s8 %v4920
    %v4922 = vlaneseq
    %v4923 = vshrl.u32 %v4922, 7
    %v4924 = vsub.s32 %v4921, %v4923
    %v4925 = vrot.slane %v4897, %v4924
    %v4926 = vcombine.low %v4904, %v4911
    %v4927 = vcombine.low %v4918, %v4925
    %v4929 = vunpack.c.l.s4 1966171168
    %v4930 = vunpack.c.0.s8 %v4929
    %v4931 = vlaneseq
    %v4932 = vshrl.u32 %v4931, 7
    %v4933 = vsub.s32 %v4930, %v4932
    %v4934 = vrot.slane %v4926, %v4933
    %v4936 = vunpack.c.l.s4 1966171168
    %v4937 = vunpack.c.0.s8 %v4936
    %v4938 = vlaneseq
    %v4939 = vshrl.u32 %v4938, 7
    %v4940 = vsub.s32 %v4937, %v4939
    %v4941 = vrot.slane %v4927, %v4940
    %v4942 = vcombine.low %v4934, %v4941
    %v4943 = vcombine.low %v4825, %v4827
    %v4944 = vcombine.low %v4829, %v4831
    %v4945 = vcombine.low %v4843, %v4845
    %v4946 = vcombine.low %v4847, %v4849
    %v4948 = vunpack.c.l.s4 1966171168
    %v4949 = vunpack.c.0.s8 %v4948
    %v4950 = vlaneseq
    %v4951 = vshrl.u32 %v4950, 7
    %v4952 = vsub.s32 %v4949, %v4951
    %v4953 = vrot.slane %v4943, %v4952
    %v4955 = vunpack.c.l.s4 1966171168
    %v4956 = vunpack.c.0.s8 %v4955
    %v4957 = vlaneseq
    %v4958 = vshrl.u32 %v4957, 7
    %v4959 = vsub.s32 %v4956, %v4958
    %v4960 = vrot.slane %v4944, %v4959
    %v4962 = vunpack.c.l.s4 1966171168
    %v4963 = vunpack.c.0.s8 %v4962
    %v4964 = vlaneseq
    %v4965 = vshrl.u32 %v4964, 7
    %v4966 = vsub.s32 %v4963, %v4965
    %v4967 = vrot.slane %v4945, %v4966
    %v4969 = vunpack.c.l.s4 1966171168
    %v4970 = vunpack.c.0.s8 %v4969
    %v4971 = vlaneseq
    %v4972 = vshrl.u32 %v4971, 7
    %v4973 = vsub.s32 %v4970, %v4972
    %v4974 = vrot.slane %v4946, %v4973
    %v4975 = vcombine.low %v4953, %v4960
    %v4976 = vcombine.low %v4967, %v4974
    %v4978 = vunpack.c.l.s4 1966171168
    %v4979 = vunpack.c.0.s8 %v4978
    %v4980 = vlaneseq
    %v4981 = vshrl.u32 %v4980, 7
    %v4982 = vsub.s32 %v4979, %v4981
    %v4983 = vrot.slane %v4975, %v4982
    %v4985 = vunpack.c.l.s4 1966171168
    %v4986 = vunpack.c.0.s8 %v4985
    %v4987 = vlaneseq
    %v4988 = vshrl.u32 %v4987, 7
    %v4989 = vsub.s32 %v4986, %v4988
    %v4990 = vrot.slane %v4976, %v4989
    %v4991 = vcombine.low %v4983, %v4990
    %v4996 = vunpack.c.l.b16 %v4874
    %v4997 = vunpack.c.l.b16 %v4875
    %v4998 = vunpack.c.l.b16 %v4876
    %v4999 = vunpack.c.l.b16 %v4877
    %v5000 = vpack.c.b16 %v4997, %v4996
    %v5001 = vpack.c.b16 %v4999, %v4998
    %v5005 = vsel %vm2037, %v4942, 0
    %v5008 = vsel %vm2037, %v4991, 0
    %5010 = vmatprep.subr.bf16.mxu0 0
    %5011 = vmatpush1.bf16.msra.mxu0 %v5000
    %5012 = vmatprep.subr.bf16.mxu0 0
    %5013 = vmatpush1.bf16.msra.mxu0 %v5001
    %5014 = vmatprep.subr.bf16.mxu0 0
    %5015 = vmatpush1.bf16.msra.mxu0 0
    %5016 = vmatprep.subr.bf16.mxu0 0
    %5017 = vmatpush1.bf16.msra.mxu0 0
    %5018 = vmatprep.subr.bf16.mxu0 0
    %5019 = vmatpush1.bf16.msra.mxu0 0
    %5020 = vmatprep.subr.bf16.mxu0 0
    %5021 = vmatpush1.bf16.msra.mxu0 0
    %5022 = vmatprep.subr.bf16.mxu0 0
    %5023 = vmatpush1.bf16.msra.mxu0 0
    %5024 = vmatprep.subr.bf16.mxu0 0
    %5025 = vmatpush1.bf16.msra.mxu0 0
    %5026 = vmatprep.subr.bf16.mxu0 0
    %5027 = vmatpush1.bf16.msra.mxu0 0
    %5028 = vmatprep.subr.bf16.mxu0 0
    %5029 = vmatpush1.bf16.msra.mxu0 0
    %5030 = vmatprep.subr.bf16.mxu0 0
    %5031 = vmatpush1.bf16.msra.mxu0 0
    %5032 = vmatprep.subr.bf16.mxu0 0
    %5033 = vmatpush1.bf16.msra.mxu0 0
    %5034 = vmatprep.subr.bf16.mxu0 0
    %5035 = vmatpush1.bf16.msra.mxu0 0
    %5036 = vmatprep.subr.bf16.mxu0 0
    %5037 = vmatpush1.bf16.msra.mxu0 0
    %5038 = vmatprep.subr.bf16.mxu0 0
    %5039 = vmatpush1.bf16.msra.mxu0 0
    %5040 = vmatprep.subr.bf16.mxu0 0
    %5041 = vmatpush1.bf16.msra.mxu0 0
    %5042 = vmatprep.mubr.bf16.mxu0 0
    %5043 = vmatmul.mubr.bf16.gmra.mrb[0].mxu0 %v5005
    %v5044 = vpop.f32.mrb[0].mxu0
    %v5045 = vadd.f32 0.0, %v5044
    %v5046 = vpop.f32.mrb[0].mxu0
    %v5047 = vpop.f32.mrb[0].mxu0
    %v5048 = vadd.f32 0.0, %v5047
    %v5049 = vpop.f32.mrb[0].mxu0
    %5050 = vmatprep.mubr.bf16.mxu0 0
    %5051 = vmatmul.mubr.bf16.gmra.mrb[0].mxu0 %v5008
    %v5052 = vpop.f32.mrb[0].mxu0
    %v5053 = vadd.f32 0.0, %v5052
    %v5054 = vpop.f32.mrb[0].mxu0
    %v5055 = vpop.f32.mrb[0].mxu0
    %v5056 = vadd.f32 0.0, %v5055
    %v5057 = vpop.f32.mrb[0].mxu0
    %5058 = vdwg.mxu0
    %v5075 = vcombine.low %v4788, %v4790
    %v5076 = vcombine.low %v4792, %v4794
    %v5077 = vcombine.low %v4806, %v4808
    %v5078 = vcombine.low %v4810, %v4812
    %v5080 = vunpack.c.l.s4 1966171168
    %v5081 = vunpack.c.0.s8 %v5080
    %v5082 = vlaneseq
    %v5083 = vshrl.u32 %v5082, 7
    %v5084 = vsub.s32 %v5081, %v5083
    %v5085 = vrot.slane %v5075, %v5084
    %v5087 = vunpack.c.l.s4 1966171168
    %v5088 = vunpack.c.0.s8 %v5087
    %v5089 = vlaneseq
    %v5090 = vshrl.u32 %v5089, 7
    %v5091 = vsub.s32 %v5088, %v5090
    %v5092 = vrot.slane %v5076, %v5091
    %v5094 = vunpack.c.l.s4 1966171168
    %v5095 = vunpack.c.0.s8 %v5094
    %v5096 = vlaneseq
    %v5097 = vshrl.u32 %v5096, 7
    %v5098 = vsub.s32 %v5095, %v5097
    %v5099 = vrot.slane %v5077, %v5098
    %v5101 = vunpack.c.l.s4 1966171168
    %v5102 = vunpack.c.0.s8 %v5101
    %v5103 = vlaneseq
    %v5104 = vshrl.u32 %v5103, 7
    %v5105 = vsub.s32 %v5102, %v5104
    %v5106 = vrot.slane %v5078, %v5105
    %v5107 = vcombine.low %v5085, %v5092
    %v5108 = vcombine.low %v5099, %v5106
    %v5110 = vunpack.c.l.s4 1966171168
    %v5111 = vunpack.c.0.s8 %v5110
    %v5112 = vlaneseq
    %v5113 = vshrl.u32 %v5112, 7
    %v5114 = vsub.s32 %v5111, %v5113
    %v5115 = vrot.slane %v5107, %v5114
    %v5117 = vunpack.c.l.s4 1966171168
    %v5118 = vunpack.c.0.s8 %v5117
    %v5119 = vlaneseq
    %v5120 = vshrl.u32 %v5119, 7
    %v5121 = vsub.s32 %v5118, %v5120
    %v5122 = vrot.slane %v5108, %v5121
    %v5123 = vcombine.low %v5115, %v5122
    %v5124 = vcombine.low %v4824, %v4826
    %v5125 = vcombine.low %v4828, %v4830
    %v5126 = vcombine.low %v4842, %v4844
    %v5127 = vcombine.low %v4846, %v4848
    %v5129 = vunpack.c.l.s4 1966171168
    %v5130 = vunpack.c.0.s8 %v5129
    %v5131 = vlaneseq
    %v5132 = vshrl.u32 %v5131, 7
    %v5133 = vsub.s32 %v5130, %v5132
    %v5134 = vrot.slane %v5124, %v5133
    %v5136 = vunpack.c.l.s4 1966171168
    %v5137 = vunpack.c.0.s8 %v5136
    %v5138 = vlaneseq
    %v5139 = vshrl.u32 %v5138, 7
    %v5140 = vsub.s32 %v5137, %v5139
    %v5141 = vrot.slane %v5125, %v5140
    %v5143 = vunpack.c.l.s4 1966171168
    %v5144 = vunpack.c.0.s8 %v5143
    %v5145 = vlaneseq
    %v5146 = vshrl.u32 %v5145, 7
    %v5147 = vsub.s32 %v5144, %v5146
    %v5148 = vrot.slane %v5126, %v5147
    %v5150 = vunpack.c.l.s4 1966171168
    %v5151 = vunpack.c.0.s8 %v5150
    %v5152 = vlaneseq
    %v5153 = vshrl.u32 %v5152, 7
    %v5154 = vsub.s32 %v5151, %v5153
    %v5155 = vrot.slane %v5127, %v5154
    %v5156 = vcombine.low %v5134, %v5141
    %v5157 = vcombine.low %v5148, %v5155
    %v5159 = vunpack.c.l.s4 1966171168
    %v5160 = vunpack.c.0.s8 %v5159
    %v5161 = vlaneseq
    %v5162 = vshrl.u32 %v5161, 7
    %v5163 = vsub.s32 %v5160, %v5162
    %v5164 = vrot.slane %v5156, %v5163
    %v5166 = vunpack.c.l.s4 1966171168
    %v5167 = vunpack.c.0.s8 %v5166
    %v5168 = vlaneseq
    %v5169 = vshrl.u32 %v5168, 7
    %v5170 = vsub.s32 %v5167, %v5169
    %v5171 = vrot.slane %v5157, %v5170
    %v5172 = vcombine.low %v5164, %v5171
    %v5177 = vunpack.c.l.b16 %v4869
    %v5178 = vunpack.c.l.b16 %v4870
    %v5179 = vunpack.c.l.b16 %v4871
    %v5180 = vunpack.c.l.b16 %v4872
    %v5181 = vpack.c.b16 %v5178, %v5177
    %v5182 = vpack.c.b16 %v5180, %v5179
    %v5186 = vsel %vm2037, %v5123, 0
    %v5189 = vsel %vm2037, %v5172, 0
    %5191 = vmatprep.subr.bf16.mxu0 0
    %5192 = vmatpush1.bf16.msra.mxu0 %v5181
    %5193 = vmatprep.subr.bf16.mxu0 0
    %5194 = vmatpush1.bf16.msra.mxu0 %v5182
    %5195 = vmatprep.subr.bf16.mxu0 0
    %5196 = vmatpush1.bf16.msra.mxu0 0
    %5197 = vmatprep.subr.bf16.mxu0 0
    %5198 = vmatpush1.bf16.msra.mxu0 0
    %5199 = vmatprep.subr.bf16.mxu0 0
    %5200 = vmatpush1.bf16.msra.mxu0 0
    %5201 = vmatprep.subr.bf16.mxu0 0
    %5202 = vmatpush1.bf16.msra.mxu0 0
    %5203 = vmatprep.subr.bf16.mxu0 0
    %5204 = vmatpush1.bf16.msra.mxu0 0
    %5205 = vmatprep.subr.bf16.mxu0 0
    %5206 = vmatpush1.bf16.msra.mxu0 0
    %5207 = vmatprep.subr.bf16.mxu0 0
    %5208 = vmatpush1.bf16.msra.mxu0 0
    %5209 = vmatprep.subr.bf16.mxu0 0
    %5210 = vmatpush1.bf16.msra.mxu0 0
    %5211 = vmatprep.subr.bf16.mxu0 0
    %5212 = vmatpush1.bf16.msra.mxu0 0
    %5213 = vmatprep.subr.bf16.mxu0 0
    %5214 = vmatpush1.bf16.msra.mxu0 0
    %5215 = vmatprep.subr.bf16.mxu0 0
    %5216 = vmatpush1.bf16.msra.mxu0 0
    %5217 = vmatprep.subr.bf16.mxu0 0
    %5218 = vmatpush1.bf16.msra.mxu0 0
    %5219 = vmatprep.subr.bf16.mxu0 0
    %5220 = vmatpush1.bf16.msra.mxu0 0
    %5221 = vmatprep.subr.bf16.mxu0 0
    %5222 = vmatpush1.bf16.msra.mxu0 0
    %5223 = vmatprep.mubr.bf16.mxu0 0
    %5224 = vmatmul.mubr.bf16.gmra.mrb[0].mxu0 %v5186
    %v5225 = vpop.f32.mrb[0].mxu0
    %v5226 = vadd.f32 %v5045, %v5225
    %v5227 = vpop.f32.mrb[0].mxu0
    %v5228 = vpop.f32.mrb[0].mxu0
    %v5229 = vadd.f32 %v5048, %v5228
    %v5230 = vpop.f32.mrb[0].mxu0
    %5231 = vmatprep.mubr.bf16.mxu0 0
    %5232 = vmatmul.mubr.bf16.gmra.mrb[0].mxu0 %v5189
    %v5233 = vpop.f32.mrb[0].mxu0
    %v5234 = vadd.f32 %v5053, %v5233
    %v5235 = vpop.f32.mrb[0].mxu0
    %v5236 = vpop.f32.mrb[0].mxu0
    %v5237 = vadd.f32 %v5056, %v5236
    %v5238 = vpop.f32.mrb[0].mxu0
    %5239 = vdwg.mxu0
    %s5240 = scalar_lea.vmem [#allocation11], 32
    %v5241 = vld [vmem:[%s5240] sm:$0xf]
    %v5242 = vld [vmem:[%s5240 + $0x4] sm:$0xf]
    %v5243 = vld [vmem:[%s5240 + $0x8] sm:$0xf]
    %v5244 = vld [vmem:[%s5240 + $0xc] sm:$0xf]
    %v5249 = vcombine.low %v4790, %v4792
    %v5250 = vcombine.low %v4794, %v4796
    %v5251 = vcombine.low %v4808, %v4810
    %v5252 = vcombine.low %v4812, %v4814
    %v5254 = vunpack.c.l.s4 1966171168
    %v5255 = vunpack.c.0.s8 %v5254
    %v5256 = vlaneseq
    %v5257 = vshrl.u32 %v5256, 7
    %v5258 = vsub.s32 %v5255, %v5257
    %v5259 = vrot.slane %v5249, %v5258
    %v5261 = vunpack.c.l.s4 1966171168
    %v5262 = vunpack.c.0.s8 %v5261
    %v5263 = vlaneseq
    %v5264 = vshrl.u32 %v5263, 7
    %v5265 = vsub.s32 %v5262, %v5264
    %v5266 = vrot.slane %v5250, %v5265
    %v5268 = vunpack.c.l.s4 1966171168
    %v5269 = vunpack.c.0.s8 %v5268
    %v5270 = vlaneseq
    %v5271 = vshrl.u32 %v5270, 7
    %v5272 = vsub.s32 %v5269, %v5271
    %v5273 = vrot.slane %v5251, %v5272
    %v5275 = vunpack.c.l.s4 1966171168
    %v5276 = vunpack.c.0.s8 %v5275
    %v5277 = vlaneseq
    %v5278 = vshrl.u32 %v5277, 7
    %v5279 = vsub.s32 %v5276, %v5278
    %v5280 = vrot.slane %v5252, %v5279
    %v5281 = vcombine.low %v5259, %v5266
    %v5282 = vcombine.low %v5273, %v5280
    %v5284 = vunpack.c.l.s4 1966171168
    %v5285 = vunpack.c.0.s8 %v5284
    %v5286 = vlaneseq
    %v5287 = vshrl.u32 %v5286, 7
    %v5288 = vsub.s32 %v5285, %v5287
    %v5289 = vrot.slane %v5281, %v5288
    %v5291 = vunpack.c.l.s4 1966171168
    %v5292 = vunpack.c.0.s8 %v5291
    %v5293 = vlaneseq
    %v5294 = vshrl.u32 %v5293, 7
    %v5295 = vsub.s32 %v5292, %v5294
    %v5296 = vrot.slane %v5282, %v5295
    %v5297 = vcombine.low %v5289, %v5296
    %v5298 = vcombine.low %v4826, %v4828
    %v5299 = vcombine.low %v4830, %v4832
    %v5300 = vcombine.low %v4844, %v4846
    %v5301 = vcombine.low %v4848, %v4850
    %v5303 = vunpack.c.l.s4 1966171168
    %v5304 = vunpack.c.0.s8 %v5303
    %v5305 = vlaneseq
    %v5306 = vshrl.u32 %v5305, 7
    %v5307 = vsub.s32 %v5304, %v5306
    %v5308 = vrot.slane %v5298, %v5307
    %v5310 = vunpack.c.l.s4 1966171168
    %v5311 = vunpack.c.0.s8 %v5310
    %v5312 = vlaneseq
    %v5313 = vshrl.u32 %v5312, 7
    %v5314 = vsub.s32 %v5311, %v5313
    %v5315 = vrot.slane %v5299, %v5314
    %v5317 = vunpack.c.l.s4 1966171168
    %v5318 = vunpack.c.0.s8 %v5317
    %v5319 = vlaneseq
    %v5320 = vshrl.u32 %v5319, 7
    %v5321 = vsub.s32 %v5318, %v5320
    %v5322 = vrot.slane %v5300, %v5321
    %v5324 = vunpack.c.l.s4 1966171168
    %v5325 = vunpack.c.0.s8 %v5324
    %v5326 = vlaneseq
    %v5327 = vshrl.u32 %v5326, 7
    %v5328 = vsub.s32 %v5325, %v5327
    %v5329 = vrot.slane %v5301, %v5328
    %v5330 = vcombine.low %v5308, %v5315
    %v5331 = vcombine.low %v5322, %v5329
    %v5333 = vunpack.c.l.s4 1966171168
    %v5334 = vunpack.c.0.s8 %v5333
    %v5335 = vlaneseq
    %v5336 = vshrl.u32 %v5335, 7
    %v5337 = vsub.s32 %v5334, %v5336
    %v5338 = vrot.slane %v5330, %v5337
    %v5340 = vunpack.c.l.s4 1966171168
    %v5341 = vunpack.c.0.s8 %v5340
    %v5342 = vlaneseq
    %v5343 = vshrl.u32 %v5342, 7
    %v5344 = vsub.s32 %v5341, %v5343
    %v5345 = vrot.slane %v5331, %v5344
    %v5346 = vcombine.low %v5338, %v5345
    %v5351 = vunpack.c.l.b16 %v5241
    %v5352 = vunpack.c.l.b16 %v5242
    %v5353 = vunpack.c.l.b16 %v5243
    %v5354 = vunpack.c.l.b16 %v5244
    %v5355 = vpack.c.b16 %v5352, %v5351
    %v5356 = vpack.c.b16 %v5354, %v5353
    %v5360 = vsel %vm2037, %v5297, 0
    %v5363 = vsel %vm2037, %v5346, 0
    %5365 = vmatprep.subr.bf16.mxu0 0
    %5366 = vmatpush1.bf16.msra.mxu0 %v5355
    %5367 = vmatprep.subr.bf16.mxu0 0
    %5368 = vmatpush1.bf16.msra.mxu0 %v5356
    %5369 = vmatprep.subr.bf16.mxu0 0
    %5370 = vmatpush1.bf16.msra.mxu0 0
    %5371 = vmatprep.subr.bf16.mxu0 0
    %5372 = vmatpush1.bf16.msra.mxu0 0
    %5373 = vmatprep.subr.bf16.mxu0 0
    %5374 = vmatpush1.bf16.msra.mxu0 0
    %5375 = vmatprep.subr.bf16.mxu0 0
    %5376 = vmatpush1.bf16.msra.mxu0 0
    %5377 = vmatprep.subr.bf16.mxu0 0
    %5378 = vmatpush1.bf16.msra.mxu0 0
    %5379 = vmatprep.subr.bf16.mxu0 0
    %5380 = vmatpush1.bf16.msra.mxu0 0
    %5381 = vmatprep.subr.bf16.mxu0 0
    %5382 = vmatpush1.bf16.msra.mxu0 0
    %5383 = vmatprep.subr.bf16.mxu0 0
    %5384 = vmatpush1.bf16.msra.mxu0 0
    %5385 = vmatprep.subr.bf16.mxu0 0
    %5386 = vmatpush1.bf16.msra.mxu0 0
    %5387 = vmatprep.subr.bf16.mxu0 0
    %5388 = vmatpush1.bf16.msra.mxu0 0
    %5389 = vmatprep.subr.bf16.mxu0 0
    %5390 = vmatpush1.bf16.msra.mxu0 0
    %5391 = vmatprep.subr.bf16.mxu0 0
    %5392 = vmatpush1.bf16.msra.mxu0 0
    %5393 = vmatprep.subr.bf16.mxu0 0
    %5394 = vmatpush1.bf16.msra.mxu0 0
    %5395 = vmatprep.subr.bf16.mxu0 0
    %5396 = vmatpush1.bf16.msra.mxu0 0
    %5397 = vmatprep.mubr.bf16.mxu0 0
    %5398 = vmatmul.mubr.bf16.gmra.mrb[0].mxu0 %v5360
    %v5399 = vpop.f32.mrb[0].mxu0
    %v5400 = vadd.f32 0.0, %v5399
    %v5401 = vpop.f32.mrb[0].mxu0
    %v5402 = vpop.f32.mrb[0].mxu0
    %v5403 = vadd.f32 0.0, %v5402
    %v5404 = vpop.f32.mrb[0].mxu0
    %5405 = vmatprep.mubr.bf16.mxu0 0
    %5406 = vmatmul.mubr.bf16.gmra.mrb[0].mxu0 %v5363
    %v5407 = vpop.f32.mrb[0].mxu0
    %v5408 = vadd.f32 0.0, %v5407
    %v5409 = vpop.f32.mrb[0].mxu0
    %v5410 = vpop.f32.mrb[0].mxu0
    %v5411 = vadd.f32 0.0, %v5410
    %v5412 = vpop.f32.mrb[0].mxu0
    %5413 = vdwg.mxu0
    %v5414 = vadd.f32 %v5226, %v5400
    %v5415 = vadd.f32 %v5229, %v5403
    %v5416 = vadd.f32 %v5234, %v5408
    %v5417 = vadd.f32 %v5237, %v5411
    %s5418 = scalar_lea.vmem [#allocation11], 48
    %v5419 = vld [vmem:[%s5418] sm:$0xf]
    %v5420 = vld [vmem:[%s5418 + $0x4] sm:$0xf]
    %v5421 = vld [vmem:[%s5418 + $0x8] sm:$0xf]
    %v5422 = vld [vmem:[%s5418 + $0xc] sm:$0xf]
    %v5439 = vcombine.low %v4797, %v4799
    %v5440 = vcombine.low %v4801, %v4803
    %v5441 = vcombine.low %v4815, %v4817
    %v5442 = vcombine.low %v4819, %v4821
    %v5444 = vunpack.c.l.s4 1966171168
    %v5445 = vunpack.c.0.s8 %v5444
    %v5446 = vlaneseq
    %v5447 = vshrl.u32 %v5446, 7
    %v5448 = vsub.s32 %v5445, %v5447
    %v5449 = vrot.slane %v5439, %v5448
    %v5451 = vunpack.c.l.s4 1966171168
    %v5452 = vunpack.c.0.s8 %v5451
    %v5453 = vlaneseq
    %v5454 = vshrl.u32 %v5453, 7
    %v5455 = vsub.s32 %v5452, %v5454
    %v5456 = vrot.slane %v5440, %v5455
    %v5458 = vunpack.c.l.s4 1966171168
    %v5459 = vunpack.c.0.s8 %v5458
    %v5460 = vlaneseq
    %v5461 = vshrl.u32 %v5460, 7
    %v5462 = vsub.s32 %v5459, %v5461
    %v5463 = vrot.slane %v5441, %v5462
    %v5465 = vunpack.c.l.s4 1966171168
    %v5466 = vunpack.c.0.s8 %v5465
    %v5467 = vlaneseq
    %v5468 = vshrl.u32 %v5467, 7
    %v5469 = vsub.s32 %v5466, %v5468
    %v5470 = vrot.slane %v5442, %v5469
    %v5471 = vcombine.low %v5449, %v5456
    %v5472 = vcombine.low %v5463, %v5470
    %v5474 = vunpack.c.l.s4 1966171168
    %v5475 = vunpack.c.0.s8 %v5474
    %v5476 = vlaneseq
    %v5477 = vshrl.u32 %v5476, 7
    %v5478 = vsub.s32 %v5475, %v5477
    %v5479 = vrot.slane %v5471, %v5478
    %v5481 = vunpack.c.l.s4 1966171168
    %v5482 = vunpack.c.0.s8 %v5481
    %v5483 = vlaneseq
    %v5484 = vshrl.u32 %v5483, 7
    %v5485 = vsub.s32 %v5482, %v5484
    %v5486 = vrot.slane %v5472, %v5485
    %v5487 = vcombine.low %v5479, %v5486
    %v5488 = vcombine.low %v4833, %v4835
    %v5489 = vcombine.low %v4837, %v4839
    %v5490 = vcombine.low %v4851, %v4853
    %v5491 = vcombine.low %v4855, %v4857
    %v5493 = vunpack.c.l.s4 1966171168
    %v5494 = vunpack.c.0.s8 %v5493
    %v5495 = vlaneseq
    %v5496 = vshrl.u32 %v5495, 7
    %v5497 = vsub.s32 %v5494, %v5496
    %v5498 = vrot.slane %v5488, %v5497
    %v5500 = vunpack.c.l.s4 1966171168
    %v5501 = vunpack.c.0.s8 %v5500
    %v5502 = vlaneseq
    %v5503 = vshrl.u32 %v5502, 7
    %v5504 = vsub.s32 %v5501, %v5503
    %v5505 = vrot.slane %v5489, %v5504
    %v5507 = vunpack.c.l.s4 1966171168
    %v5508 = vunpack.c.0.s8 %v5507
    %v5509 = vlaneseq
    %v5510 = vshrl.u32 %v5509, 7
    %v5511 = vsub.s32 %v5508, %v5510
    %v5512 = vrot.slane %v5490, %v5511
    %v5514 = vunpack.c.l.s4 1966171168
    %v5515 = vunpack.c.0.s8 %v5514
    %v5516 = vlaneseq
    %v5517 = vshrl.u32 %v5516, 7
    %v5518 = vsub.s32 %v5515, %v5517
    %v5519 = vrot.slane %v5491, %v5518
    %v5520 = vcombine.low %v5498, %v5505
    %v5521 = vcombine.low %v5512, %v5519
    %v5523 = vunpack.c.l.s4 1966171168
    %v5524 = vunpack.c.0.s8 %v5523
    %v5525 = vlaneseq
    %v5526 = vshrl.u32 %v5525, 7
    %v5527 = vsub.s32 %v5524, %v5526
    %v5528 = vrot.slane %v5520, %v5527
    %v5530 = vunpack.c.l.s4 1966171168
    %v5531 = vunpack.c.0.s8 %v5530
    %v5532 = vlaneseq
    %v5533 = vshrl.u32 %v5532, 7
    %v5534 = vsub.s32 %v5531, %v5533
    %v5535 = vrot.slane %v5521, %v5534
    %v5536 = vcombine.low %v5528, %v5535
    %v5541 = vunpack.c.l.b16 %v5419
    %v5542 = vunpack.c.l.b16 %v5420
    %v5543 = vunpack.c.l.b16 %v5421
    %v5544 = vunpack.c.l.b16 %v5422
    %v5545 = vpack.c.b16 %v5542, %v5541
    %v5546 = vpack.c.b16 %v5544, %v5543
    %v5550 = vsel %vm2037, %v5487, 0
    %v5553 = vsel %vm2037, %v5536, 0
    %5555 = vmatprep.subr.bf16.mxu0 0
    %5556 = vmatpush1.bf16.msra.mxu0 %v5545
    %5557 = vmatprep.subr.bf16.mxu0 0
    %5558 = vmatpush1.bf16.msra.mxu0 %v5546
    %5559 = vmatprep.subr.bf16.mxu0 0
    %5560 = vmatpush1.bf16.msra.mxu0 0
    %5561 = vmatprep.subr.bf16.mxu0 0
    %5562 = vmatpush1.bf16.msra.mxu0 0
    %5563 = vmatprep.subr.bf16.mxu0 0
    %5564 = vmatpush1.bf16.msra.mxu0 0
    %5565 = vmatprep.subr.bf16.mxu0 0
    %5566 = vmatpush1.bf16.msra.mxu0 0
    %5567 = vmatprep.subr.bf16.mxu0 0
    %5568 = vmatpush1.bf16.msra.mxu0 0
    %5569 = vmatprep.subr.bf16.mxu0 0
    %5570 = vmatpush1.bf16.msra.mxu0 0
    %5571 = vmatprep.subr.bf16.mxu0 0
    %5572 = vmatpush1.bf16.msra.mxu0 0
    %5573 = vmatprep.subr.bf16.mxu0 0
    %5574 = vmatpush1.bf16.msra.mxu0 0
    %5575 = vmatprep.subr.bf16.mxu0 0
    %5576 = vmatpush1.bf16.msra.mxu0 0
    %5577 = vmatprep.subr.bf16.mxu0 0
    %5578 = vmatpush1.bf16.msra.mxu0 0
    %5579 = vmatprep.subr.bf16.mxu0 0
    %5580 = vmatpush1.bf16.msra.mxu0 0
    %5581 = vmatprep.subr.bf16.mxu0 0
    %5582 = vmatpush1.bf16.msra.mxu0 0
    %5583 = vmatprep.subr.bf16.mxu0 0
    %5584 = vmatpush1.bf16.msra.mxu0 0
    %5585 = vmatprep.subr.bf16.mxu0 0
    %5586 = vmatpush1.bf16.msra.mxu0 0
    %5587 = vmatprep.mubr.bf16.mxu0 0
    %5588 = vmatmul.mubr.bf16.gmra.mrb[0].mxu0 %v5550
    %v5589 = vpop.f32.mrb[0].mxu0
    %v5590 = vadd.f32 0.0, %v5589
    %v5591 = vpop.f32.mrb[0].mxu0
    %v5592 = vpop.f32.mrb[0].mxu0
    %v5593 = vadd.f32 0.0, %v5592
    %v5594 = vpop.f32.mrb[0].mxu0
    %5595 = vmatprep.mubr.bf16.mxu0 0
    %5596 = vmatmul.mubr.bf16.gmra.mrb[0].mxu0 %v5553
    %v5597 = vpop.f32.mrb[0].mxu0
    %v5598 = vadd.f32 0.0, %v5597
    %v5599 = vpop.f32.mrb[0].mxu0
    %v5600 = vpop.f32.mrb[0].mxu0
    %v5601 = vadd.f32 0.0, %v5600
    %v5602 = vpop.f32.mrb[0].mxu0
    %5603 = vdwg.mxu0
    %v5604 = vadd.f32 %v5414, %v5590
    %v5605 = vadd.f32 %v5415, %v5593
    %v5606 = vadd.f32 %v5416, %v5598
    %v5607 = vadd.f32 %v5417, %v5601
    %s5608 = scalar_lea.vmem [#allocation11], 64
    %v5609 = vld [vmem:[%s5608] sm:$0xf]
    %v5610 = vld [vmem:[%s5608 + $0x4] sm:$0xf]
    %v5611 = vld [vmem:[%s5608 + $0x8] sm:$0xf]
    %v5612 = vld [vmem:[%s5608 + $0xc] sm:$0xf]
    %v5629 = vcombine.low %v4798, %v4800
    %v5630 = vcombine.low %v4802, %v4804
    %v5631 = vcombine.low %v4816, %v4818
    %v5632 = vcombine.low %v4820, %v4822
    %v5634 = vunpack.c.l.s4 1966171168
    %v5635 = vunpack.c.0.s8 %v5634
    %v5636 = vlaneseq
    %v5637 = vshrl.u32 %v5636, 7
    %v5638 = vsub.s32 %v5635, %v5637
    %v5639 = vrot.slane %v5629, %v5638
    %v5641 = vunpack.c.l.s4 1966171168
    %v5642 = vunpack.c.0.s8 %v5641
    %v5643 = vlaneseq
    %v5644 = vshrl.u32 %v5643, 7
    %v5645 = vsub.s32 %v5642, %v5644
    %v5646 = vrot.slane %v5630, %v5645
    %v5648 = vunpack.c.l.s4 1966171168
    %v5649 = vunpack.c.0.s8 %v5648
    %v5650 = vlaneseq
    %v5651 = vshrl.u32 %v5650, 7
    %v5652 = vsub.s32 %v5649, %v5651
    %v5653 = vrot.slane %v5631, %v5652
    %v5655 = vunpack.c.l.s4 1966171168
    %v5656 = vunpack.c.0.s8 %v5655
    %v5657 = vlaneseq
    %v5658 = vshrl.u32 %v5657, 7
    %v5659 = vsub.s32 %v5656, %v5658
    %v5660 = vrot.slane %v5632, %v5659
    %v5661 = vcombine.low %v5639, %v5646
    %v5662 = vcombine.low %v5653, %v5660
    %v5664 = vunpack.c.l.s4 1966171168
    %v5665 = vunpack.c.0.s8 %v5664
    %v5666 = vlaneseq
    %v5667 = vshrl.u32 %v5666, 7
    %v5668 = vsub.s32 %v5665, %v5667
    %v5669 = vrot.slane %v5661, %v5668
    %v5671 = vunpack.c.l.s4 1966171168
    %v5672 = vunpack.c.0.s8 %v5671
    %v5673 = vlaneseq
    %v5674 = vshrl.u32 %v5673, 7
    %v5675 = vsub.s32 %v5672, %v5674
    %v5676 = vrot.slane %v5662, %v5675
    %v5677 = vcombine.low %v5669, %v5676
    %v5678 = vcombine.low %v4834, %v4836
    %v5679 = vcombine.low %v4838, %v4840
    %v5680 = vcombine.low %v4852, %v4854
    %v5681 = vcombine.low %v4856, %v4858
    %v5683 = vunpack.c.l.s4 1966171168
    %v5684 = vunpack.c.0.s8 %v5683
    %v5685 = vlaneseq
    %v5686 = vshrl.u32 %v5685, 7
    %v5687 = vsub.s32 %v5684, %v5686
    %v5688 = vrot.slane %v5678, %v5687
    %v5690 = vunpack.c.l.s4 1966171168
    %v5691 = vunpack.c.0.s8 %v5690
    %v5692 = vlaneseq
    %v5693 = vshrl.u32 %v5692, 7
    %v5694 = vsub.s32 %v5691, %v5693
    %v5695 = vrot.slane %v5679, %v5694
    %v5697 = vunpack.c.l.s4 1966171168
    %v5698 = vunpack.c.0.s8 %v5697
    %v5699 = vlaneseq
    %v5700 = vshrl.u32 %v5699, 7
    %v5701 = vsub.s32 %v5698, %v5700
    %v5702 = vrot.slane %v5680, %v5701
    %v5704 = vunpack.c.l.s4 1966171168
    %v5705 = vunpack.c.0.s8 %v5704
    %v5706 = vlaneseq
    %v5707 = vshrl.u32 %v5706, 7
    %v5708 = vsub.s32 %v5705, %v5707
    %v5709 = vrot.slane %v5681, %v5708
    %v5710 = vcombine.low %v5688, %v5695
    %v5711 = vcombine.low %v5702, %v5709
    %v5713 = vunpack.c.l.s4 1966171168
    %v5714 = vunpack.c.0.s8 %v5713
    %v5715 = vlaneseq
    %v5716 = vshrl.u32 %v5715, 7
    %v5717 = vsub.s32 %v5714, %v5716
    %v5718 = vrot.slane %v5710, %v5717
    %v5720 = vunpack.c.l.s4 1966171168
    %v5721 = vunpack.c.0.s8 %v5720
    %v5722 = vlaneseq
    %v5723 = vshrl.u32 %v5722, 7
    %v5724 = vsub.s32 %v5721, %v5723
    %v5725 = vrot.slane %v5711, %v5724
    %v5726 = vcombine.low %v5718, %v5725
    %v5731 = vunpack.c.l.b16 %v5609
    %v5732 = vunpack.c.l.b16 %v5610
    %v5733 = vunpack.c.l.b16 %v5611
    %v5734 = vunpack.c.l.b16 %v5612
    %v5735 = vpack.c.b16 %v5732, %v5731
    %v5736 = vpack.c.b16 %v5734, %v5733
    %v5740 = vsel %vm2037, %v5677, 0
    %v5743 = vsel %vm2037, %v5726, 0
    %5745 = vmatprep.subr.bf16.mxu0 0
    %5746 = vmatpush1.bf16.msra.mxu0 %v5735
    %5747 = vmatprep.subr.bf16.mxu0 0
    %5748 = vmatpush1.bf16.msra.mxu0 %v5736
    %5749 = vmatprep.subr.bf16.mxu0 0
    %5750 = vmatpush1.bf16.msra.mxu0 0
    %5751 = vmatprep.subr.bf16.mxu0 0
    %5752 = vmatpush1.bf16.msra.mxu0 0
    %5753 = vmatprep.subr.bf16.mxu0 0
    %5754 = vmatpush1.bf16.msra.mxu0 0
    %5755 = vmatprep.subr.bf16.mxu0 0
    %5756 = vmatpush1.bf16.msra.mxu0 0
    %5757 = vmatprep.subr.bf16.mxu0 0
    %5758 = vmatpush1.bf16.msra.mxu0 0
    %5759 = vmatprep.subr.bf16.mxu0 0
    %5760 = vmatpush1.bf16.msra.mxu0 0
    %5761 = vmatprep.subr.bf16.mxu0 0
    %5762 = vmatpush1.bf16.msra.mxu0 0
    %5763 = vmatprep.subr.bf16.mxu0 0
    %5764 = vmatpush1.bf16.msra.mxu0 0
    %5765 = vmatprep.subr.bf16.mxu0 0
    %5766 = vmatpush1.bf16.msra.mxu0 0
    %5767 = vmatprep.subr.bf16.mxu0 0
    %5768 = vmatpush1.bf16.msra.mxu0 0
    %5769 = vmatprep.subr.bf16.mxu0 0
    %5770 = vmatpush1.bf16.msra.mxu0 0
    %5771 = vmatprep.subr.bf16.mxu0 0
    %5772 = vmatpush1.bf16.msra.mxu0 0
    %5773 = vmatprep.subr.bf16.mxu0 0
    %5774 = vmatpush1.bf16.msra.mxu0 0
    %5775 = vmatprep.subr.bf16.mxu0 0
    %5776 = vmatpush1.bf16.msra.mxu0 0
    %5777 = vmatprep.mubr.bf16.mxu0 0
    %5778 = vmatmul.mubr.bf16.gmra.mrb[0].mxu0 %v5740
    %v5779 = vpop.f32.mrb[0].mxu0
    %v5780 = vadd.f32 0.0, %v5779
    %v5781 = vpop.f32.mrb[0].mxu0
    %v5782 = vpop.f32.mrb[0].mxu0
    %v5783 = vadd.f32 0.0, %v5782
    %v5784 = vpop.f32.mrb[0].mxu0
    %5785 = vmatprep.mubr.bf16.mxu0 0
    %5786 = vmatmul.mubr.bf16.gmra.mrb[0].mxu0 %v5743
    %v5787 = vpop.f32.mrb[0].mxu0
    %v5788 = vadd.f32 0.0, %v5787
    %v5789 = vpop.f32.mrb[0].mxu0
    %v5790 = vpop.f32.mrb[0].mxu0
    %v5791 = vadd.f32 0.0, %v5790
    %v5792 = vpop.f32.mrb[0].mxu0
    %5793 = vdwg.mxu0
    %v5794 = vadd.f32 %v5604, %v5780
    %v5795 = vadd.f32 %v5605, %v5783
    %v5796 = vadd.f32 %v5606, %v5788
    %v5797 = vadd.f32 %v5607, %v5791
    %s5798 = scalar_lea.vmem [#allocation11], 80
    %v5799 = vld [vmem:[%s5798] sm:$0xf]
    %v5800 = vld [vmem:[%s5798 + $0x4] sm:$0xf]
    %v5801 = vld [vmem:[%s5798 + $0x8] sm:$0xf]
    %v5802 = vld [vmem:[%s5798 + $0xc] sm:$0xf]
    %v5807 = vcombine.low %v4799, %v4801
    %v5808 = vcombine.low %v4803, %v4805
    %v5809 = vcombine.low %v4817, %v4819
    %v5810 = vcombine.low %v4821, %v4823
    %v5812 = vunpack.c.l.s4 1966171168
    %v5813 = vunpack.c.0.s8 %v5812
    %v5814 = vlaneseq
    %v5815 = vshrl.u32 %v5814, 7
    %v5816 = vsub.s32 %v5813, %v5815
    %v5817 = vrot.slane %v5807, %v5816
    %v5819 = vunpack.c.l.s4 1966171168
    %v5820 = vunpack.c.0.s8 %v5819
    %v5821 = vlaneseq
    %v5822 = vshrl.u32 %v5821, 7
    %v5823 = vsub.s32 %v5820, %v5822
    %v5824 = vrot.slane %v5808, %v5823
    %v5826 = vunpack.c.l.s4 1966171168
    %v5827 = vunpack.c.0.s8 %v5826
    %v5828 = vlaneseq
    %v5829 = vshrl.u32 %v5828, 7
    %v5830 = vsub.s32 %v5827, %v5829
    %v5831 = vrot.slane %v5809, %v5830
    %v5833 = vunpack.c.l.s4 1966171168
    %v5834 = vunpack.c.0.s8 %v5833
    %v5835 = vlaneseq
    %v5836 = vshrl.u32 %v5835, 7
    %v5837 = vsub.s32 %v5834, %v5836
    %v5838 = vrot.slane %v5810, %v5837
    %v5839 = vcombine.low %v5817, %v5824
    %v5840 = vcombine.low %v5831, %v5838
    %v5842 = vunpack.c.l.s4 1966171168
    %v5843 = vunpack.c.0.s8 %v5842
    %v5844 = vlaneseq
    %v5845 = vshrl.u32 %v5844, 7
    %v5846 = vsub.s32 %v5843, %v5845
    %v5847 = vrot.slane %v5839, %v5846
    %v5849 = vunpack.c.l.s4 1966171168
    %v5850 = vunpack.c.0.s8 %v5849
    %v5851 = vlaneseq
    %v5852 = vshrl.u32 %v5851, 7
    %v5853 = vsub.s32 %v5850, %v5852
    %v5854 = vrot.slane %v5840, %v5853
    %v5855 = vcombine.low %v5847, %v5854
    %v5856 = vcombine.low %v4835, %v4837
    %v5857 = vcombine.low %v4839, %v4841
    %v5858 = vcombine.low %v4853, %v4855
    %v5859 = vcombine.low %v4857, %v4859
    %v5861 = vunpack.c.l.s4 1966171168
    %v5862 = vunpack.c.0.s8 %v5861
    %v5863 = vlaneseq
    %v5864 = vshrl.u32 %v5863, 7
    %v5865 = vsub.s32 %v5862, %v5864
    %v5866 = vrot.slane %v5856, %v5865
    %v5868 = vunpack.c.l.s4 1966171168
    %v5869 = vunpack.c.0.s8 %v5868
    %v5870 = vlaneseq
    %v5871 = vshrl.u32 %v5870, 7
    %v5872 = vsub.s32 %v5869, %v5871
    %v5873 = vrot.slane %v5857, %v5872
    %v5875 = vunpack.c.l.s4 1966171168
    %v5876 = vunpack.c.0.s8 %v5875
    %v5877 = vlaneseq
    %v5878 = vshrl.u32 %v5877, 7
    %v5879 = vsub.s32 %v5876, %v5878
    %v5880 = vrot.slane %v5858, %v5879
    %v5882 = vunpack.c.l.s4 1966171168
    %v5883 = vunpack.c.0.s8 %v5882
    %v5884 = vlaneseq
    %v5885 = vshrl.u32 %v5884, 7
    %v5886 = vsub.s32 %v5883, %v5885
    %v5887 = vrot.slane %v5859, %v5886
    %v5888 = vcombine.low %v5866, %v5873
    %v5889 = vcombine.low %v5880, %v5887
    %v5891 = vunpack.c.l.s4 1966171168
    %v5892 = vunpack.c.0.s8 %v5891
    %v5893 = vlaneseq
    %v5894 = vshrl.u32 %v5893, 7
    %v5895 = vsub.s32 %v5892, %v5894
    %v5896 = vrot.slane %v5888, %v5895
    %v5898 = vunpack.c.l.s4 1966171168
    %v5899 = vunpack.c.0.s8 %v5898
    %v5900 = vlaneseq
    %v5901 = vshrl.u32 %v5900, 7
    %v5902 = vsub.s32 %v5899, %v5901
    %v5903 = vrot.slane %v5889, %v5902
    %v5904 = vcombine.low %v5896, %v5903
    %v5909 = vunpack.c.l.b16 %v5799
    %v5910 = vunpack.c.l.b16 %v5800
    %v5911 = vunpack.c.l.b16 %v5801
    %v5912 = vunpack.c.l.b16 %v5802
    %v5913 = vpack.c.b16 %v5910, %v5909
    %v5914 = vpack.c.b16 %v5912, %v5911
    %v5918 = vsel %vm2037, %v5855, 0
    %v5921 = vsel %vm2037, %v5904, 0
    %5923 = vmatprep.subr.bf16.mxu0 0
    %5924 = vmatpush1.bf16.msra.mxu0 %v5913
    %5925 = vmatprep.subr.bf16.mxu0 0
    %5926 = vmatpush1.bf16.msra.mxu0 %v5914
    %5927 = vmatprep.subr.bf16.mxu0 0
    %5928 = vmatpush1.bf16.msra.mxu0 0
    %5929 = vmatprep.subr.bf16.mxu0 0
    %5930 = vmatpush1.bf16.msra.mxu0 0
    %5931 = vmatprep.subr.bf16.mxu0 0
    %5932 = vmatpush1.bf16.msra.mxu0 0
    %5933 = vmatprep.subr.bf16.mxu0 0
    %5934 = vmatpush1.bf16.msra.mxu0 0
    %5935 = vmatprep.subr.bf16.mxu0 0
    %5936 = vmatpush1.bf16.msra.mxu0 0
    %5937 = vmatprep.subr.bf16.mxu0 0
    %5938 = vmatpush1.bf16.msra.mxu0 0
    %5939 = vmatprep.subr.bf16.mxu0 0
    %5940 = vmatpush1.bf16.msra.mxu0 0
    %5941 = vmatprep.subr.bf16.mxu0 0
    %5942 = vmatpush1.bf16.msra.mxu0 0
    %5943 = vmatprep.subr.bf16.mxu0 0
    %5944 = vmatpush1.bf16.msra.mxu0 0
    %5945 = vmatprep.subr.bf16.mxu0 0
    %5946 = vmatpush1.bf16.msra.mxu0 0
    %5947 = vmatprep.subr.bf16.mxu0 0
    %5948 = vmatpush1.bf16.msra.mxu0 0
    %5949 = vmatprep.subr.bf16.mxu0 0
    %5950 = vmatpush1.bf16.msra.mxu0 0
    %5951 = vmatprep.subr.bf16.mxu0 0
    %5952 = vmatpush1.bf16.msra.mxu0 0
    %5953 = vmatprep.subr.bf16.mxu0 0
    %5954 = vmatpush1.bf16.msra.mxu0 0
    %5955 = vmatprep.mubr.bf16.mxu0 0
    %5956 = vmatmul.mubr.bf16.gmra.mrb[0].mxu0 %v5918
    %v5957 = vpop.f32.mrb[0].mxu0
    %v5958 = vadd.f32 0.0, %v5957
    %v5959 = vpop.f32.mrb[0].mxu0
    %v5960 = vpop.f32.mrb[0].mxu0
    %v5961 = vadd.f32 0.0, %v5960
    %v5962 = vpop.f32.mrb[0].mxu0
    %5963 = vmatprep.mubr.bf16.mxu0 0
    %5964 = vmatmul.mubr.bf16.gmra.mrb[0].mxu0 %v5921
    %v5965 = vpop.f32.mrb[0].mxu0
    %v5966 = vadd.f32 0.0, %v5965
    %v5967 = vpop.f32.mrb[0].mxu0
    %v5968 = vpop.f32.mrb[0].mxu0
    %v5969 = vadd.f32 0.0, %v5968
    %v5970 = vpop.f32.mrb[0].mxu0
    %5971 = vdwg.mxu0
    %v5972 = vadd.f32 %v5794, %v5958
    %v5973 = vadd.f32 %v5795, %v5961
    %v5974 = vadd.f32 %v5796, %v5966
    %v5975 = vadd.f32 %v5797, %v5969
    %s5976 = scalar_lea.vmem [#allocation11], 96
    %v5977 = vld [vmem:[%s5976] sm:$0xf]
    %v5978 = vld [vmem:[%s5976 + $0x4] sm:$0xf]
    %v5979 = vld [vmem:[%s5976 + $0x8] sm:$0xf]
    %v5980 = vld [vmem:[%s5976 + $0xc] sm:$0xf]
    %v5985 = vcombine.low %v5122, %v5164
    %v5986 = vcombine.low %v4860, %v4862
    %v5987 = vcombine.low %v4864, %v4866
    %v5989 = vunpack.c.l.s4 1966171168
    %v5990 = vunpack.c.0.s8 %v5989
    %v5991 = vlaneseq
    %v5992 = vshrl.u32 %v5991, 7
    %v5993 = vsub.s32 %v5990, %v5992
    %v5994 = vrot.slane %v5986, %v5993
    %v5996 = vunpack.c.l.s4 1966171168
    %v5997 = vunpack.c.0.s8 %v5996
    %v5998 = vlaneseq
    %v5999 = vshrl.u32 %v5998, 7
    %v6000 = vsub.s32 %v5997, %v5999
    %v6001 = vrot.slane %v5987, %v6000
    %v6002 = vcombine.low %v5994, %v6001
    %v6004 = vunpack.c.l.s4 1966171168
    %v6005 = vunpack.c.0.s8 %v6004
    %v6006 = vlaneseq
    %v6007 = vshrl.u32 %v6006, 7
    %v6008 = vsub.s32 %v6005, %v6007
    %v6009 = vrot.slane %v6002, %v6008
    %v6010 = vcombine.low %v5171, %v6009
    %v6015 = vunpack.c.l.b16 %v5977
    %v6016 = vunpack.c.l.b16 %v5978
    %v6017 = vunpack.c.l.b16 %v5979
    %v6018 = vunpack.c.l.b16 %v5980
    %v6019 = vpack.c.b16 %v6016, %v6015
    %v6020 = vpack.c.b16 %v6018, %v6017
    %v6024 = vsel %vm2037, %v5985, 0
    %v6027 = vsel %vm2037, %v6010, 0
    %6029 = vmatprep.subr.bf16.mxu0 0
    %6030 = vmatpush1.bf16.msra.mxu0 %v6019
    %6031 = vmatprep.subr.bf16.mxu0 0
    %6032 = vmatpush1.bf16.msra.mxu0 %v6020
    %6033 = vmatprep.subr.bf16.mxu0 0
    %6034 = vmatpush1.bf16.msra.mxu0 0
    %6035 = vmatprep.subr.bf16.mxu0 0
    %6036 = vmatpush1.bf16.msra.mxu0 0
    %6037 = vmatprep.subr.bf16.mxu0 0
    %6038 = vmatpush1.bf16.msra.mxu0 0
    %6039 = vmatprep.subr.bf16.mxu0 0
    %6040 = vmatpush1.bf16.msra.mxu0 0
    %6041 = vmatprep.subr.bf16.mxu0 0
    %6042 = vmatpush1.bf16.msra.mxu0 0
    %6043 = vmatprep.subr.bf16.mxu0 0
    %6044 = vmatpush1.bf16.msra.mxu0 0
    %6045 = vmatprep.subr.bf16.mxu0 0
    %6046 = vmatpush1.bf16.msra.mxu0 0
    %6047 = vmatprep.subr.bf16.mxu0 0
    %6048 = vmatpush1.bf16.msra.mxu0 0
    %6049 = vmatprep.subr.bf16.mxu0 0
    %6050 = vmatpush1.bf16.msra.mxu0 0
    %6051 = vmatprep.subr.bf16.mxu0 0
    %6052 = vmatpush1.bf16.msra.mxu0 0
    %6053 = vmatprep.subr.bf16.mxu0 0
    %6054 = vmatpush1.bf16.msra.mxu0 0
    %6055 = vmatprep.subr.bf16.mxu0 0
    %6056 = vmatpush1.bf16.msra.mxu0 0
    %6057 = vmatprep.subr.bf16.mxu0 0
    %6058 = vmatpush1.bf16.msra.mxu0 0
    %6059 = vmatprep.subr.bf16.mxu0 0
    %6060 = vmatpush1.bf16.msra.mxu0 0
    %6061 = vmatprep.mubr.bf16.mxu0 0
    %6062 = vmatmul.mubr.bf16.gmra.mrb[0].mxu0 %v6024
    %v6063 = vpop.f32.mrb[0].mxu0
    %v6064 = vadd.f32 0.0, %v6063
    %v6065 = vpop.f32.mrb[0].mxu0
    %v6066 = vpop.f32.mrb[0].mxu0
    %v6067 = vadd.f32 0.0, %v6066
    %v6068 = vpop.f32.mrb[0].mxu0
    %6069 = vmatprep.mubr.bf16.mxu0 0
    %6070 = vmatmul.mubr.bf16.gmra.mrb[0].mxu0 %v6027
    %v6071 = vpop.f32.mrb[0].mxu0
    %v6072 = vadd.f32 0.0, %v6071
    %v6073 = vpop.f32.mrb[0].mxu0
    %v6074 = vpop.f32.mrb[0].mxu0
    %v6075 = vadd.f32 0.0, %v6074
    %v6076 = vpop.f32.mrb[0].mxu0
    %6077 = vdwg.mxu0
    %v6078 = vadd.f32 %v5972, %v6064
    %v6079 = vadd.f32 %v5973, %v6067
    %v6080 = vadd.f32 %v5974, %v6072
    %v6081 = vadd.f32 %v5975, %v6075
    %s6082 = scalar_lea.vmem [#allocation11], 112
    %v6083 = vld [vmem:[%s6082] sm:$0xf]
    %v6084 = vld [vmem:[%s6082 + $0x4] sm:$0xf]
    %v6085 = vld [vmem:[%s6082 + $0x8] sm:$0xf]
    %v6086 = vld [vmem:[%s6082 + $0xc] sm:$0xf]
    %v6091 = vcombine.low %v4941, %v4983
    %v6092 = vcombine.low %v4861, %v4863
    %v6093 = vcombine.low %v4865, %v4867
    %v6095 = vunpack.c.l.s4 1966171168
    %v6096 = vunpack.c.0.s8 %v6095
    %v6097 = vlaneseq
    %v6098 = vshrl.u32 %v6097, 7
    %v6099 = vsub.s32 %v6096, %v6098
    %v6100 = vrot.slane %v6092, %v6099
    %v6102 = vunpack.c.l.s4 1966171168
    %v6103 = vunpack.c.0.s8 %v6102
    %v6104 = vlaneseq
    %v6105 = vshrl.u32 %v6104, 7
    %v6106 = vsub.s32 %v6103, %v6105
    %v6107 = vrot.slane %v6093, %v6106
    %v6108 = vcombine.low %v6100, %v6107
    %v6110 = vunpack.c.l.s4 1966171168
    %v6111 = vunpack.c.0.s8 %v6110
    %v6112 = vlaneseq
    %v6113 = vshrl.u32 %v6112, 7
    %v6114 = vsub.s32 %v6111, %v6113
    %v6115 = vrot.slane %v6108, %v6114
    %v6116 = vcombine.low %v4990, %v6115
    %v6121 = vunpack.c.l.b16 %v6083
    %v6122 = vunpack.c.l.b16 %v6084
    %v6123 = vunpack.c.l.b16 %v6085
    %v6124 = vunpack.c.l.b16 %v6086
    %v6125 = vpack.c.b16 %v6122, %v6121
    %v6126 = vpack.c.b16 %v6124, %v6123
    %v6130 = vsel %vm2037, %v6091, 0
    %v6133 = vsel %vm2037, %v6116, 0
    %6135 = vmatprep.subr.bf16.mxu0 0
    %6136 = vmatpush1.bf16.msra.mxu0 %v6125
    %6137 = vmatprep.subr.bf16.mxu0 0
    %6138 = vmatpush1.bf16.msra.mxu0 %v6126
    %6139 = vmatprep.subr.bf16.mxu0 0
    %6140 = vmatpush1.bf16.msra.mxu0 0
    %6141 = vmatprep.subr.bf16.mxu0 0
    %6142 = vmatpush1.bf16.msra.mxu0 0
    %6143 = vmatprep.subr.bf16.mxu0 0
    %6144 = vmatpush1.bf16.msra.mxu0 0
    %6145 = vmatprep.subr.bf16.mxu0 0
    %6146 = vmatpush1.bf16.msra.mxu0 0
    %6147 = vmatprep.subr.bf16.mxu0 0
    %6148 = vmatpush1.bf16.msra.mxu0 0
    %6149 = vmatprep.subr.bf16.mxu0 0
    %6150 = vmatpush1.bf16.msra.mxu0 0
    %6151 = vmatprep.subr.bf16.mxu0 0
    %6152 = vmatpush1.bf16.msra.mxu0 0
    %6153 = vmatprep.subr.bf16.mxu0 0
    %6154 = vmatpush1.bf16.msra.mxu0 0
    %6155 = vmatprep.subr.bf16.mxu0 0
    %6156 = vmatpush1.bf16.msra.mxu0 0
    %6157 = vmatprep.subr.bf16.mxu0 0
    %6158 = vmatpush1.bf16.msra.mxu0 0
    %6159 = vmatprep.subr.bf16.mxu0 0
    %6160 = vmatpush1.bf16.msra.mxu0 0
    %6161 = vmatprep.subr.bf16.mxu0 0
    %6162 = vmatpush1.bf16.msra.mxu0 0
    %6163 = vmatprep.subr.bf16.mxu0 0
    %6164 = vmatpush1.bf16.msra.mxu0 0
    %6165 = vmatprep.subr.bf16.mxu0 0
    %6166 = vmatpush1.bf16.msra.mxu0 0
    %6167 = vmatprep.mubr.bf16.mxu0 0
    %6168 = vmatmul.mubr.bf16.gmra.mrb[0].mxu0 %v6130
    %v6169 = vpop.f32.mrb[0].mxu0
    %v6170 = vadd.f32 0.0, %v6169
    %v6171 = vpop.f32.mrb[0].mxu0
    %v6172 = vpop.f32.mrb[0].mxu0
    %v6173 = vadd.f32 0.0, %v6172
    %v6174 = vpop.f32.mrb[0].mxu0
    %6175 = vmatprep.mubr.bf16.mxu0 0
    %6176 = vmatmul.mubr.bf16.gmra.mrb[0].mxu0 %v6133
    %v6177 = vpop.f32.mrb[0].mxu0
    %v6178 = vadd.f32 0.0, %v6177
    %v6179 = vpop.f32.mrb[0].mxu0
    %v6180 = vpop.f32.mrb[0].mxu0
    %v6181 = vadd.f32 0.0, %v6180
    %v6182 = vpop.f32.mrb[0].mxu0
    %6183 = vdwg.mxu0
    %v6184 = vadd.f32 %v6078, %v6170
    %v6185 = vadd.f32 %v6079, %v6173
    %v6186 = vadd.f32 %v6080, %v6178
    %v6187 = vadd.f32 %v6081, %v6181
    %s6188 = scalar_lea.vmem [#allocation11], 128
    %v6189 = vld [vmem:[%s6188] sm:$0xf]
    %v6190 = vld [vmem:[%s6188 + $0x4] sm:$0xf]
    %v6191 = vld [vmem:[%s6188 + $0x8] sm:$0xf]
    %v6192 = vld [vmem:[%s6188 + $0xc] sm:$0xf]
    %v6194 = vcombine.low %v5296, %v5338
    %v6195 = vcombine.low %v4862, %v4864
    %v6196 = vcombine.low %v4866, %v4868
    %v6198 = vunpack.c.l.s4 1966171168
    %v6199 = vunpack.c.0.s8 %v6198
    %v6200 = vlaneseq
    %v6201 = vshrl.u32 %v6200, 7
    %v6202 = vsub.s32 %v6199, %v6201
    %v6203 = vrot.slane %v6195, %v6202
    %v6205 = vunpack.c.l.s4 1966171168
    %v6206 = vunpack.c.0.s8 %v6205
    %v6207 = vlaneseq
    %v6208 = vshrl.u32 %v6207, 7
    %v6209 = vsub.s32 %v6206, %v6208
    %v6210 = vrot.slane %v6196, %v6209
    %v6211 = vcombine.low %v6203, %v6210
    %v6213 = vunpack.c.l.s4 1966171168
    %v6214 = vunpack.c.0.s8 %v6213
    %v6215 = vlaneseq
    %v6216 = vshrl.u32 %v6215, 7
    %v6217 = vsub.s32 %v6214, %v6216
    %v6218 = vrot.slane %v6211, %v6217
    %v6219 = vcombine.low %v5345, %v6218
    %v6224 = vunpack.c.l.b16 %v6189
    %v6225 = vunpack.c.l.b16 %v6190
    %v6226 = vunpack.c.l.b16 %v6191
    %v6227 = vunpack.c.l.b16 %v6192
    %v6228 = vpack.c.b16 %v6225, %v6224
    %v6229 = vpack.c.b16 %v6227, %v6226
    %v6233 = vsel %vm2037, %v6194, 0
    %v6236 = vsel %vm2037, %v6219, 0
    %6238 = vmatprep.subr.bf16.mxu0 0
    %6239 = vmatpush1.bf16.msra.mxu0 %v6228
    %6240 = vmatprep.subr.bf16.mxu0 0
    %6241 = vmatpush1.bf16.msra.mxu0 %v6229
    %6242 = vmatprep.subr.bf16.mxu0 0
    %6243 = vmatpush1.bf16.msra.mxu0 0
    %6244 = vmatprep.subr.bf16.mxu0 0
    %6245 = vmatpush1.bf16.msra.mxu0 0
    %6246 = vmatprep.subr.bf16.mxu0 0
    %6247 = vmatpush1.bf16.msra.mxu0 0
    %6248 = vmatprep.subr.bf16.mxu0 0
    %6249 = vmatpush1.bf16.msra.mxu0 0
    %6250 = vmatprep.subr.bf16.mxu0 0
    %6251 = vmatpush1.bf16.msra.mxu0 0
    %6252 = vmatprep.subr.bf16.mxu0 0
    %6253 = vmatpush1.bf16.msra.mxu0 0
    %6254 = vmatprep.subr.bf16.mxu0 0
    %6255 = vmatpush1.bf16.msra.mxu0 0
    %6256 = vmatprep.subr.bf16.mxu0 0
    %6257 = vmatpush1.bf16.msra.mxu0 0
    %6258 = vmatprep.subr.bf16.mxu0 0
    %6259 = vmatpush1.bf16.msra.mxu0 0
    %6260 = vmatprep.subr.bf16.mxu0 0
    %6261 = vmatpush1.bf16.msra.mxu0 0
    %6262 = vmatprep.subr.bf16.mxu0 0
    %6263 = vmatpush1.bf16.msra.mxu0 0
    %6264 = vmatprep.subr.bf16.mxu0 0
    %6265 = vmatpush1.bf16.msra.mxu0 0
    %6266 = vmatprep.subr.bf16.mxu0 0
    %6267 = vmatpush1.bf16.msra.mxu0 0
    %6268 = vmatprep.subr.bf16.mxu0 0
    %6269 = vmatpush1.bf16.msra.mxu0 0
    %6270 = vmatprep.mubr.bf16.mxu0 0
    %6271 = vmatmul.mubr.bf16.gmra.mrb[0].mxu0 %v6233
    %v6272 = vpop.f32.mrb[0].mxu0
    %v6273 = vadd.f32 0.0, %v6272
    %v6274 = vpop.f32.mrb[0].mxu0
    %v6275 = vpop.f32.mrb[0].mxu0
    %v6276 = vadd.f32 0.0, %v6275
    %v6277 = vpop.f32.mrb[0].mxu0
    %6278 = vmatprep.mubr.bf16.mxu0 0
    %6279 = vmatmul.mubr.bf16.gmra.mrb[0].mxu0 %v6236
    %v6280 = vpop.f32.mrb[0].mxu0
    %v6281 = vadd.f32 0.0, %v6280
    %v6282 = vpop.f32.mrb[0].mxu0
    %v6283 = vpop.f32.mrb[0].mxu0
    %v6284 = vadd.f32 0.0, %v6283
    %v6285 = vpop.f32.mrb[0].mxu0
    %6286 = vdwg.mxu0
    %v6287 = vadd.f32 %v6184, %v6273
    %v6288 = vadd.f32 %v6185, %v6276
    %v6289 = vadd.f32 %v6186, %v6281
    %v6290 = vadd.f32 %v6187, %v6284
    %v6291 = vld [vmem:[%s8] sm:$0x1]
    %v6293 = vlaneseq
    %v6294 = vshrl.u32 %v6293, 7
    %v6295 = vsub.s32 0, %v6294
    %v6296 = vrot.slane %v6291, %v6295
    %v6298 = vmul.f32 %v6287, %v6296
    %v6299 = vmul.f32 %v6288, %v6296
    %v6300 = vmul.f32 %v6289, %v6296
    %v6301 = vmul.f32 %v6290, %v6296
    %v6302 = vld [vmem:[%s13] sm:$0x1]
    %v6304 = vlaneseq
    %v6305 = vshrl.u32 %v6304, 7
    %v6306 = vsub.s32 0, %v6305
    %v6307 = vrot.slane %v6302, %v6306
    %v6309 = vadd.f32 %v6298, %v6307
    %v6310 = vadd.f32 %v6299, %v6307
    %v6311 = vadd.f32 %v6300, %v6307
    %v6312 = vadd.f32 %v6301, %v6307
    %vm6313 = vcmp.gt.f32.partialorder %v6309, 0.0
    %vm6314 = vcmp.gt.f32.partialorder %v6310, 0.0
    %vm6315 = vcmp.gt.f32.partialorder %v6311, 0.0
    %vm6316 = vcmp.gt.f32.partialorder %v6312, 0.0
    %v6317 = vmul.f32 %v6309, 0.2
    %v6318 = vmul.f32 %v6310, 0.2
    %v6319 = vmul.f32 %v6311, 0.2
    %v6320 = vmul.f32 %v6312, 0.2
    %v6321 = vsel %vm6313, %v6309, %v6317
    %v6322 = vsel %vm6314, %v6310, %v6318
    %v6323 = vsel %vm6315, %v6311, %v6319
    %v6324 = vsel %vm6316, %v6312, %v6320
    %v6325 = vpack.c.bf16 %v6322, %v6321
    %v6326 = vpack.c.bf16 %v6324, %v6323
    %v6329 = vcombine.high %v6325, %v6325
    %v6331 = vunpack.c.l.s4 1966171168
    %v6332 = vunpack.c.0.s8 %v6331
    %v6333 = vlaneseq
    %v6334 = vshrl.u32 %v6333, 7
    %v6335 = vsub.s32 %v6332, %v6334
    %v6336 = vrot.slane %v6325, %v6335
    %v6338 = vunpack.c.l.s4 1966171168
    %v6339 = vunpack.c.0.s8 %v6338
    %v6340 = vlaneseq
    %v6341 = vshrl.u32 %v6340, 7
    %v6342 = vsub.s32 %v6339, %v6341
    %v6343 = vrot.slane %v6329, %v6342
    %v6344 = vcombine.high %v6336, %v6336
    %v6345 = vcombine.high %v6343, %v6343
    %v6347 = vunpack.c.l.s4 1966171168
    %v6348 = vunpack.c.0.s8 %v6347
    %v6349 = vlaneseq
    %v6350 = vshrl.u32 %v6349, 7
    %v6351 = vsub.s32 %v6348, %v6350
    %v6352 = vrot.slane %v6336, %v6351
    %v6354 = vunpack.c.l.s4 1966171168
    %v6355 = vunpack.c.0.s8 %v6354
    %v6356 = vlaneseq
    %v6357 = vshrl.u32 %v6356, 7
    %v6358 = vsub.s32 %v6355, %v6357
    %v6359 = vrot.slane %v6343, %v6358
    %v6361 = vunpack.c.l.s4 1966171168
    %v6362 = vunpack.c.0.s8 %v6361
    %v6363 = vlaneseq
    %v6364 = vshrl.u32 %v6363, 7
    %v6365 = vsub.s32 %v6362, %v6364
    %v6366 = vrot.slane %v6344, %v6365
    %v6368 = vunpack.c.l.s4 1966171168
    %v6369 = vunpack.c.0.s8 %v6368
    %v6370 = vlaneseq
    %v6371 = vshrl.u32 %v6370, 7
    %v6372 = vsub.s32 %v6369, %v6371
    %v6373 = vrot.slane %v6345, %v6372
    %v6374 = vcombine.high %v6352, %v6352
    %v6375 = vcombine.high %v6359, %v6359
    %v6376 = vcombine.high %v6366, %v6366
    %v6377 = vcombine.high %v6373, %v6373
    %v6378 = vcombine.high %v6326, %v6326
    %v6380 = vunpack.c.l.s4 1966171168
    %v6381 = vunpack.c.0.s8 %v6380
    %v6382 = vlaneseq
    %v6383 = vshrl.u32 %v6382, 7
    %v6384 = vsub.s32 %v6381, %v6383
    %v6385 = vrot.slane %v6326, %v6384
    %v6387 = vunpack.c.l.s4 1966171168
    %v6388 = vunpack.c.0.s8 %v6387
    %v6389 = vlaneseq
    %v6390 = vshrl.u32 %v6389, 7
    %v6391 = vsub.s32 %v6388, %v6390
    %v6392 = vrot.slane %v6378, %v6391
    %v6393 = vcombine.high %v6385, %v6385
    %v6394 = vcombine.high %v6392, %v6392
    %v6396 = vunpack.c.l.s4 1966171168
    %v6397 = vunpack.c.0.s8 %v6396
    %v6398 = vlaneseq
    %v6399 = vshrl.u32 %v6398, 7
    %v6400 = vsub.s32 %v6397, %v6399
    %v6401 = vrot.slane %v6385, %v6400
    %v6403 = vunpack.c.l.s4 1966171168
    %v6404 = vunpack.c.0.s8 %v6403
    %v6405 = vlaneseq
    %v6406 = vshrl.u32 %v6405, 7
    %v6407 = vsub.s32 %v6404, %v6406
    %v6408 = vrot.slane %v6392, %v6407
    %v6410 = vunpack.c.l.s4 1966171168
    %v6411 = vunpack.c.0.s8 %v6410
    %v6412 = vlaneseq
    %v6413 = vshrl.u32 %v6412, 7
    %v6414 = vsub.s32 %v6411, %v6413
    %v6415 = vrot.slane %v6393, %v6414
    %v6417 = vunpack.c.l.s4 1966171168
    %v6418 = vunpack.c.0.s8 %v6417
    %v6419 = vlaneseq
    %v6420 = vshrl.u32 %v6419, 7
    %v6421 = vsub.s32 %v6418, %v6420
    %v6422 = vrot.slane %v6394, %v6421
    %v6423 = vcombine.high %v6401, %v6401
    %v6424 = vcombine.high %v6408, %v6408
    %v6425 = vcombine.high %v6415, %v6415
    %v6426 = vcombine.high %v6422, %v6422
    %vm6443 = vcmask 516096
    %6444 = vst.msk [vmem:[#allocation4] sm:$0x1] %vm6443, 0
    %6445 = vst.msk [vmem:[#allocation4 + $0x1] sm:$0x1] %vm6443, 0
    %6446 = vst.msk [vmem:[#allocation4 + $0x2] sm:$0x1] %vm6443, 0
    %6447 = vst.msk [vmem:[#allocation4 + $0x3] sm:$0x1] %vm6443, 0
    %6448 = vst.msk [vmem:[#allocation4 + $0x4] sm:$0x1] %vm6443, 0
    %6449 = vst.msk [vmem:[#allocation4 + $0x5] sm:$0x1] %vm6443, 0
    %s6450 = scalar_lea.vmem [#allocation4], 30
    %6451 = vst.msk [vmem:[%s6450] sm:$0x1] %vm6443, 0
    %6452 = vst.msk [vmem:[%s6450 + $0x1] sm:$0x1] %vm6443, 0
    %6453 = vst.msk [vmem:[%s6450 + $0x2] sm:$0x1] %vm6443, 0
    %6454 = vst.msk [vmem:[%s6450 + $0x3] sm:$0x1] %vm6443, 0
    %6455 = vst.msk [vmem:[%s6450 + $0x4] sm:$0x1] %vm6443, 0
    %6456 = vst.msk [vmem:[%s6450 + $0x5] sm:$0x1] %vm6443, 0
    %s6457 = scalar_lea.vmem [#allocation4], 6
    %6458 = vst.msk [vmem:[%s6457] sm:$0x1] %vm6443, 0
    %6459 = vst.msk [vmem:[%s6457 + $0x6] sm:$0x1] %vm6443, 0
    %6460 = vst.msk [vmem:[%s6457 + $0xc] sm:$0x1] %vm6443, 0
    %6461 = vst.msk [vmem:[%s6457 + $0x12] sm:$0x1] %vm6443, 0
    %s6462 = scalar_lea.vmem [#allocation4], 11
    %6463 = vst.msk [vmem:[%s6462] sm:$0x1] %vm6443, 0
    %6464 = vst.msk [vmem:[%s6462 + $0x6] sm:$0x1] %vm6443, 0
    %6465 = vst.msk [vmem:[%s6462 + $0xc] sm:$0x1] %vm6443, 0
    %6466 = vst.msk [vmem:[%s6462 + $0x12] sm:$0x1] %vm6443, 0
    %s6467 = scalar_lea.vmem [#allocation4], 7
    %6468 = vst.msk [vmem:[%s6467] sm:$0x1] %vm6443, %v6352
    %6469 = vst.msk [vmem:[%s6467 + $0x1] sm:$0x1] %vm6443, %v6366
    %6470 = vst.msk [vmem:[%s6467 + $0x2] sm:$0x1] %vm6443, %v6374
    %6471 = vst.msk [vmem:[%s6467 + $0x3] sm:$0x1] %vm6443, %v6376
    %6472 = vst.msk [vmem:[%s6467 + $0x6] sm:$0x1] %vm6443, %v6359
    %6473 = vst.msk [vmem:[%s6467 + $0x7] sm:$0x1] %vm6443, %v6373
    %6474 = vst.msk [vmem:[%s6467 + $0x8] sm:$0x1] %vm6443, %v6375
    %6475 = vst.msk [vmem:[%s6467 + $0x9] sm:$0x1] %vm6443, %v6377
    %6476 = vst.msk [vmem:[%s6467 + $0xc] sm:$0x1] %vm6443, %v6401
    %6477 = vst.msk [vmem:[%s6467 + $0xd] sm:$0x1] %vm6443, %v6415
    %6478 = vst.msk [vmem:[%s6467 + $0xe] sm:$0x1] %vm6443, %v6423
    %6479 = vst.msk [vmem:[%s6467 + $0xf] sm:$0x1] %vm6443, %v6425
    %6480 = vst.msk [vmem:[%s6467 + $0x12] sm:$0x1] %vm6443, %v6408
    %6481 = vst.msk [vmem:[%s6467 + $0x13] sm:$0x1] %vm6443, %v6422
    %6482 = vst.msk [vmem:[%s6467 + $0x14] sm:$0x1] %vm6443, %v6424
    %6483 = vst.msk [vmem:[%s6467 + $0x15] sm:$0x1] %vm6443, %v6426
    %v6484 = vld [vmem:[#allocation4] sm:$0x1]
    %v6485 = vld [vmem:[#allocation4 + $0x1] sm:$0x1]
    %v6486 = vld [vmem:[#allocation4 + $0x2] sm:$0x1]
    %v6487 = vld [vmem:[#allocation4 + $0x3] sm:$0x1]
    %v6488 = vld [vmem:[#allocation4 + $0x4] sm:$0x1]
    %v6489 = vld [vmem:[#allocation4 + $0x5] sm:$0x1]
    %v6490 = vld [vmem:[#allocation4 + $0x6] sm:$0x1]
    %v6491 = vld [vmem:[#allocation4 + $0x7] sm:$0x1]
    %v6492 = vld [vmem:[#allocation4 + $0x8] sm:$0x1]
    %v6493 = vld [vmem:[#allocation4 + $0x9] sm:$0x1]
    %v6494 = vld [vmem:[#allocation4 + $0xa] sm:$0x1]
    %v6495 = vld [vmem:[#allocation4 + $0xb] sm:$0x1]
    %v6496 = vld [vmem:[#allocation4 + $0xc] sm:$0x1]
    %v6497 = vld [vmem:[#allocation4 + $0xd] sm:$0x1]
    %v6498 = vld [vmem:[#allocation4 + $0xe] sm:$0x1]
    %v6499 = vld [vmem:[#allocation4 + $0xf] sm:$0x1]
    %v6500 = vld [vmem:[#allocation4 + $0x10] sm:$0x1]
    %v6501 = vld [vmem:[#allocation4 + $0x11] sm:$0x1]
    %v6502 = vld [vmem:[#allocation4 + $0x12] sm:$0x1]
    %v6503 = vld [vmem:[#allocation4 + $0x13] sm:$0x1]
    %v6504 = vld [vmem:[#allocation4 + $0x14] sm:$0x1]
    %v6505 = vld [vmem:[#allocation4 + $0x15] sm:$0x1]
    %v6506 = vld [vmem:[#allocation4 + $0x16] sm:$0x1]
    %v6507 = vld [vmem:[#allocation4 + $0x17] sm:$0x1]
    %v6508 = vld [vmem:[#allocation4 + $0x18] sm:$0x1]
    %v6509 = vld [vmem:[#allocation4 + $0x19] sm:$0x1]
    %v6510 = vld [vmem:[#allocation4 + $0x1a] sm:$0x1]
    %v6511 = vld [vmem:[#allocation4 + $0x1b] sm:$0x1]
    %v6512 = vld [vmem:[#allocation4 + $0x1c] sm:$0x1]
    %v6513 = vld [vmem:[#allocation4 + $0x1d] sm:$0x1]
    %v6514 = vld [vmem:[#allocation4 + $0x1e] sm:$0x1]
    %v6515 = vld [vmem:[#allocation4 + $0x1f] sm:$0x1]
    %v6516 = vld [vmem:[#allocation4 + $0x20] sm:$0x1]
    %v6517 = vld [vmem:[#allocation4 + $0x21] sm:$0x1]
    %v6518 = vld [vmem:[#allocation4 + $0x22] sm:$0x1]
    %v6519 = vld [vmem:[#allocation4 + $0x23] sm:$0x1]
    %v6520 = vld [vmem:[#allocation12] sm:$0xf]
    %v6521 = vld [vmem:[#allocation12 + $0x4] sm:$0xf]
    %v6522 = vld [vmem:[#allocation12 + $0x8] sm:$0xf]
    %v6523 = vld [vmem:[#allocation12 + $0xc] sm:$0xf]
    %v6524 = vld [vmem:[#allocation12 + $0x10] sm:$0xf]
    %v6525 = vld [vmem:[#allocation12 + $0x14] sm:$0xf]
    %v6526 = vld [vmem:[#allocation12 + $0x18] sm:$0xf]
    %v6527 = vld [vmem:[#allocation12 + $0x1c] sm:$0xf]
    %s6528 = scalar_lea.vmem [#allocation12], 32
    %v6529 = vld [vmem:[%s6528] sm:$0xf]
    %v6530 = vld [vmem:[%s6528 + $0x4] sm:$0xf]
    %v6531 = vld [vmem:[%s6528 + $0x8] sm:$0xf]
    %v6532 = vld [vmem:[%s6528 + $0xc] sm:$0xf]
    %v6533 = vld [vmem:[%s6528 + $0x10] sm:$0xf]
    %v6534 = vld [vmem:[%s6528 + $0x14] sm:$0xf]
    %v6535 = vld [vmem:[%s6528 + $0x18] sm:$0xf]
    %v6536 = vld [vmem:[%s6528 + $0x1c] sm:$0xf]
    %v6553 = vcombine.low %v6485, %v6486
    %v6554 = vcombine.low %v6487, %v6488
    %v6555 = vcombine.low %v6491, %v6492
    %v6556 = vcombine.low %v6493, %v6494
    %v6558 = vunpack.c.l.s4 1966171168
    %v6559 = vunpack.c.0.s8 %v6558
    %v6560 = vlaneseq
    %v6561 = vshrl.u32 %v6560, 7
    %v6562 = vsub.s32 %v6559, %v6561
    %v6563 = vrot.slane %v6553, %v6562
    %v6565 = vunpack.c.l.s4 1966171168
    %v6566 = vunpack.c.0.s8 %v6565
    %v6567 = vlaneseq
    %v6568 = vshrl.u32 %v6567, 7
    %v6569 = vsub.s32 %v6566, %v6568
    %v6570 = vrot.slane %v6554, %v6569
    %v6572 = vunpack.c.l.s4 1966171168
    %v6573 = vunpack.c.0.s8 %v6572
    %v6574 = vlaneseq
    %v6575 = vshrl.u32 %v6574, 7
    %v6576 = vsub.s32 %v6573, %v6575
    %v6577 = vrot.slane %v6555, %v6576
    %v6579 = vunpack.c.l.s4 1966171168
    %v6580 = vunpack.c.0.s8 %v6579
    %v6581 = vlaneseq
    %v6582 = vshrl.u32 %v6581, 7
    %v6583 = vsub.s32 %v6580, %v6582
    %v6584 = vrot.slane %v6556, %v6583
    %v6585 = vcombine.low %v6563, %v6570
    %v6586 = vcombine.low %v6577, %v6584
    %v6588 = vunpack.c.l.s4 1966171168
    %v6589 = vunpack.c.0.s8 %v6588
    %v6590 = vlaneseq
    %v6591 = vshrl.u32 %v6590, 7
    %v6592 = vsub.s32 %v6589, %v6591
    %v6593 = vrot.slane %v6585, %v6592
    %v6595 = vunpack.c.l.s4 1966171168
    %v6596 = vunpack.c.0.s8 %v6595
    %v6597 = vlaneseq
    %v6598 = vshrl.u32 %v6597, 7
    %v6599 = vsub.s32 %v6596, %v6598
    %v6600 = vrot.slane %v6586, %v6599
    %v6601 = vcombine.low %v6593, %v6600
    %v6602 = vcombine.low %v6497, %v6498
    %v6603 = vcombine.low %v6499, %v6500
    %v6604 = vcombine.low %v6503, %v6504
    %v6605 = vcombine.low %v6505, %v6506
    %v6607 = vunpack.c.l.s4 1966171168
    %v6608 = vunpack.c.0.s8 %v6607
    %v6609 = vlaneseq
    %v6610 = vshrl.u32 %v6609, 7
    %v6611 = vsub.s32 %v6608, %v6610
    %v6612 = vrot.slane %v6602, %v6611
    %v6614 = vunpack.c.l.s4 1966171168
    %v6615 = vunpack.c.0.s8 %v6614
    %v6616 = vlaneseq
    %v6617 = vshrl.u32 %v6616, 7
    %v6618 = vsub.s32 %v6615, %v6617
    %v6619 = vrot.slane %v6603, %v6618
    %v6621 = vunpack.c.l.s4 1966171168
    %v6622 = vunpack.c.0.s8 %v6621
    %v6623 = vlaneseq
    %v6624 = vshrl.u32 %v6623, 7
    %v6625 = vsub.s32 %v6622, %v6624
    %v6626 = vrot.slane %v6604, %v6625
    %v6628 = vunpack.c.l.s4 1966171168
    %v6629 = vunpack.c.0.s8 %v6628
    %v6630 = vlaneseq
    %v6631 = vshrl.u32 %v6630, 7
    %v6632 = vsub.s32 %v6629, %v6631
    %v6633 = vrot.slane %v6605, %v6632
    %v6634 = vcombine.low %v6612, %v6619
    %v6635 = vcombine.low %v6626, %v6633
    %v6637 = vunpack.c.l.s4 1966171168
    %v6638 = vunpack.c.0.s8 %v6637
    %v6639 = vlaneseq
    %v6640 = vshrl.u32 %v6639, 7
    %v6641 = vsub.s32 %v6638, %v6640
    %v6642 = vrot.slane %v6634, %v6641
    %v6644 = vunpack.c.l.s4 1966171168
    %v6645 = vunpack.c.0.s8 %v6644
    %v6646 = vlaneseq
    %v6647 = vshrl.u32 %v6646, 7
    %v6648 = vsub.s32 %v6645, %v6647
    %v6649 = vrot.slane %v6635, %v6648
    %v6650 = vcombine.low %v6642, %v6649
    %v6659 = vunpack.c.l.b16 %v6529
    %v6660 = vunpack.c.l.b16 %v6530
    %v6661 = vunpack.c.l.b16 %v6531
    %v6662 = vunpack.c.l.b16 %v6532
    %v6663 = vunpack.c.l.b16 %v6533
    %v6664 = vunpack.c.l.b16 %v6534
    %v6665 = vunpack.c.l.b16 %v6535
    %v6666 = vunpack.c.l.b16 %v6536
    %v6667 = vpack.c.b16 %v6660, %v6659
    %v6668 = vpack.c.b16 %v6662, %v6661
    %v6669 = vpack.c.b16 %v6664, %v6663
    %v6670 = vpack.c.b16 %v6666, %v6665
    %vm6675 = vcmask 523264
    %v6677 = vsel %vm6675, %v6601, 0
    %v6680 = vsel %vm6675, %v6650, 0
    %6682 = vmatprep.subr.bf16.mxu0 0
    %6683 = vmatpush1.bf16.msra.mxu0 %v6667
    %6684 = vmatprep.subr.bf16.mxu0 0
    %6685 = vmatpush1.bf16.msra.mxu0 %v6668
    %6686 = vmatprep.subr.bf16.mxu0 0
    %6687 = vmatpush1.bf16.msra.mxu0 %v6669
    %6688 = vmatprep.subr.bf16.mxu0 0
    %6689 = vmatpush1.bf16.msra.mxu0 %v6670
    %6690 = vmatprep.subr.bf16.mxu0 0
    %6691 = vmatpush1.bf16.msra.mxu0 0
    %6692 = vmatprep.subr.bf16.mxu0 0
    %6693 = vmatpush1.bf16.msra.mxu0 0
    %6694 = vmatprep.subr.bf16.mxu0 0
    %6695 = vmatpush1.bf16.msra.mxu0 0
    %6696 = vmatprep.subr.bf16.mxu0 0
    %6697 = vmatpush1.bf16.msra.mxu0 0
    %6698 = vmatprep.subr.bf16.mxu0 0
    %6699 = vmatpush1.bf16.msra.mxu0 0
    %6700 = vmatprep.subr.bf16.mxu0 0
    %6701 = vmatpush1.bf16.msra.mxu0 0
    %6702 = vmatprep.subr.bf16.mxu0 0
    %6703 = vmatpush1.bf16.msra.mxu0 0
    %6704 = vmatprep.subr.bf16.mxu0 0
    %6705 = vmatpush1.bf16.msra.mxu0 0
    %6706 = vmatprep.subr.bf16.mxu0 0
    %6707 = vmatpush1.bf16.msra.mxu0 0
    %6708 = vmatprep.subr.bf16.mxu0 0
    %6709 = vmatpush1.bf16.msra.mxu0 0
    %6710 = vmatprep.subr.bf16.mxu0 0
    %6711 = vmatpush1.bf16.msra.mxu0 0
    %6712 = vmatprep.subr.bf16.mxu0 0
    %6713 = vmatpush1.bf16.msra.mxu0 0
    %6714 = vmatprep.mubr.bf16.mxu0 0
    %6715 = vmatmul.mubr.bf16.gmra.mrb[0].mxu0 %v6677
    %v6716 = vpop.f32.mrb[0].mxu0
    %v6717 = vadd.f32 0.0, %v6716
    %v6718 = vpop.f32.mrb[0].mxu0
    %v6719 = vpop.f32.mrb[0].mxu0
    %v6720 = vadd.f32 0.0, %v6719
    %v6721 = vpop.f32.mrb[0].mxu0
    %6722 = vmatprep.mubr.bf16.mxu0 0
    %6723 = vmatmul.mubr.bf16.gmra.mrb[0].mxu0 %v6680
    %v6724 = vpop.f32.mrb[0].mxu0
    %v6725 = vadd.f32 0.0, %v6724
    %v6726 = vpop.f32.mrb[0].mxu0
    %v6727 = vpop.f32.mrb[0].mxu0
    %v6728 = vadd.f32 0.0, %v6727
    %v6729 = vpop.f32.mrb[0].mxu0
    %6730 = vdwg.mxu0
    %v6735 = vcombine.low %v6484, %v6485
    %v6736 = vcombine.low %v6486, %v6487
    %v6737 = vcombine.low %v6490, %v6491
    %v6738 = vcombine.low %v6492, %v6493
    %v6740 = vunpack.c.l.s4 1966171168
    %v6741 = vunpack.c.0.s8 %v6740
    %v6742 = vlaneseq
    %v6743 = vshrl.u32 %v6742, 7
    %v6744 = vsub.s32 %v6741, %v6743
    %v6745 = vrot.slane %v6735, %v6744
    %v6747 = vunpack.c.l.s4 1966171168
    %v6748 = vunpack.c.0.s8 %v6747
    %v6749 = vlaneseq
    %v6750 = vshrl.u32 %v6749, 7
    %v6751 = vsub.s32 %v6748, %v6750
    %v6752 = vrot.slane %v6736, %v6751
    %v6754 = vunpack.c.l.s4 1966171168
    %v6755 = vunpack.c.0.s8 %v6754
    %v6756 = vlaneseq
    %v6757 = vshrl.u32 %v6756, 7
    %v6758 = vsub.s32 %v6755, %v6757
    %v6759 = vrot.slane %v6737, %v6758
    %v6761 = vunpack.c.l.s4 1966171168
    %v6762 = vunpack.c.0.s8 %v6761
    %v6763 = vlaneseq
    %v6764 = vshrl.u32 %v6763, 7
    %v6765 = vsub.s32 %v6762, %v6764
    %v6766 = vrot.slane %v6738, %v6765
    %v6767 = vcombine.low %v6745, %v6752
    %v6768 = vcombine.low %v6759, %v6766
    %v6770 = vunpack.c.l.s4 1966171168
    %v6771 = vunpack.c.0.s8 %v6770
    %v6772 = vlaneseq
    %v6773 = vshrl.u32 %v6772, 7
    %v6774 = vsub.s32 %v6771, %v6773
    %v6775 = vrot.slane %v6767, %v6774
    %v6777 = vunpack.c.l.s4 1966171168
    %v6778 = vunpack.c.0.s8 %v6777
    %v6779 = vlaneseq
    %v6780 = vshrl.u32 %v6779, 7
    %v6781 = vsub.s32 %v6778, %v6780
    %v6782 = vrot.slane %v6768, %v6781
    %v6783 = vcombine.low %v6775, %v6782
    %v6784 = vcombine.low %v6496, %v6497
    %v6785 = vcombine.low %v6498, %v6499
    %v6786 = vcombine.low %v6502, %v6503
    %v6787 = vcombine.low %v6504, %v6505
    %v6789 = vunpack.c.l.s4 1966171168
    %v6790 = vunpack.c.0.s8 %v6789
    %v6791 = vlaneseq
    %v6792 = vshrl.u32 %v6791, 7
    %v6793 = vsub.s32 %v6790, %v6792
    %v6794 = vrot.slane %v6784, %v6793
    %v6796 = vunpack.c.l.s4 1966171168
    %v6797 = vunpack.c.0.s8 %v6796
    %v6798 = vlaneseq
    %v6799 = vshrl.u32 %v6798, 7
    %v6800 = vsub.s32 %v6797, %v6799
    %v6801 = vrot.slane %v6785, %v6800
    %v6803 = vunpack.c.l.s4 1966171168
    %v6804 = vunpack.c.0.s8 %v6803
    %v6805 = vlaneseq
    %v6806 = vshrl.u32 %v6805, 7
    %v6807 = vsub.s32 %v6804, %v6806
    %v6808 = vrot.slane %v6786, %v6807
    %v6810 = vunpack.c.l.s4 1966171168
    %v6811 = vunpack.c.0.s8 %v6810
    %v6812 = vlaneseq
    %v6813 = vshrl.u32 %v6812, 7
    %v6814 = vsub.s32 %v6811, %v6813
    %v6815 = vrot.slane %v6787, %v6814
    %v6816 = vcombine.low %v6794, %v6801
    %v6817 = vcombine.low %v6808, %v6815
    %v6819 = vunpack.c.l.s4 1966171168
    %v6820 = vunpack.c.0.s8 %v6819
    %v6821 = vlaneseq
    %v6822 = vshrl.u32 %v6821, 7
    %v6823 = vsub.s32 %v6820, %v6822
    %v6824 = vrot.slane %v6816, %v6823
    %v6826 = vunpack.c.l.s4 1966171168
    %v6827 = vunpack.c.0.s8 %v6826
    %v6828 = vlaneseq
    %v6829 = vshrl.u32 %v6828, 7
    %v6830 = vsub.s32 %v6827, %v6829
    %v6831 = vrot.slane %v6817, %v6830
    %v6832 = vcombine.low %v6824, %v6831
    %v6841 = vunpack.c.l.b16 %v6520
    %v6842 = vunpack.c.l.b16 %v6521
    %v6843 = vunpack.c.l.b16 %v6522
    %v6844 = vunpack.c.l.b16 %v6523
    %v6845 = vunpack.c.l.b16 %v6524
    %v6846 = vunpack.c.l.b16 %v6525
    %v6847 = vunpack.c.l.b16 %v6526
    %v6848 = vunpack.c.l.b16 %v6527
    %v6849 = vpack.c.b16 %v6842, %v6841
    %v6850 = vpack.c.b16 %v6844, %v6843
    %v6851 = vpack.c.b16 %v6846, %v6845
    %v6852 = vpack.c.b16 %v6848, %v6847
    %v6858 = vsel %vm6675, %v6783, 0
    %v6861 = vsel %vm6675, %v6832, 0
    %6863 = vmatprep.subr.bf16.mxu0 0
    %6864 = vmatpush1.bf16.msra.mxu0 %v6849
    %6865 = vmatprep.subr.bf16.mxu0 0
    %6866 = vmatpush1.bf16.msra.mxu0 %v6850
    %6867 = vmatprep.subr.bf16.mxu0 0
    %6868 = vmatpush1.bf16.msra.mxu0 %v6851
    %6869 = vmatprep.subr.bf16.mxu0 0
    %6870 = vmatpush1.bf16.msra.mxu0 %v6852
    %6871 = vmatprep.subr.bf16.mxu0 0
    %6872 = vmatpush1.bf16.msra.mxu0 0
    %6873 = vmatprep.subr.bf16.mxu0 0
    %6874 = vmatpush1.bf16.msra.mxu0 0
    %6875 = vmatprep.subr.bf16.mxu0 0
    %6876 = vmatpush1.bf16.msra.mxu0 0
    %6877 = vmatprep.subr.bf16.mxu0 0
    %6878 = vmatpush1.bf16.msra.mxu0 0
    %6879 = vmatprep.subr.bf16.mxu0 0
    %6880 = vmatpush1.bf16.msra.mxu0 0
    %6881 = vmatprep.subr.bf16.mxu0 0
    %6882 = vmatpush1.bf16.msra.mxu0 0
    %6883 = vmatprep.subr.bf16.mxu0 0
    %6884 = vmatpush1.bf16.msra.mxu0 0
    %6885 = vmatprep.subr.bf16.mxu0 0
    %6886 = vmatpush1.bf16.msra.mxu0 0
    %6887 = vmatprep.subr.bf16.mxu0 0
    %6888 = vmatpush1.bf16.msra.mxu0 0
    %6889 = vmatprep.subr.bf16.mxu0 0
    %6890 = vmatpush1.bf16.msra.mxu0 0
    %6891 = vmatprep.subr.bf16.mxu0 0
    %6892 = vmatpush1.bf16.msra.mxu0 0
    %6893 = vmatprep.subr.bf16.mxu0 0
    %6894 = vmatpush1.bf16.msra.mxu0 0
    %6895 = vmatprep.mubr.bf16.mxu0 0
    %6896 = vmatmul.mubr.bf16.gmra.mrb[0].mxu0 %v6858
    %v6897 = vpop.f32.mrb[0].mxu0
    %v6898 = vadd.f32 %v6717, %v6897
    %v6899 = vpop.f32.mrb[0].mxu0
    %v6900 = vpop.f32.mrb[0].mxu0
    %v6901 = vadd.f32 %v6720, %v6900
    %v6902 = vpop.f32.mrb[0].mxu0
    %6903 = vmatprep.mubr.bf16.mxu0 0
    %6904 = vmatmul.mubr.bf16.gmra.mrb[0].mxu0 %v6861
    %v6905 = vpop.f32.mrb[0].mxu0
    %v6906 = vadd.f32 %v6725, %v6905
    %v6907 = vpop.f32.mrb[0].mxu0
    %v6908 = vpop.f32.mrb[0].mxu0
    %v6909 = vadd.f32 %v6728, %v6908
    %v6910 = vpop.f32.mrb[0].mxu0
    %6911 = vdwg.mxu0
    %s6912 = scalar_lea.vmem [#allocation12], 64
    %v6913 = vld [vmem:[%s6912] sm:$0xf]
    %v6914 = vld [vmem:[%s6912 + $0x4] sm:$0xf]
    %v6915 = vld [vmem:[%s6912 + $0x8] sm:$0xf]
    %v6916 = vld [vmem:[%s6912 + $0xc] sm:$0xf]
    %v6917 = vld [vmem:[%s6912 + $0x10] sm:$0xf]
    %v6918 = vld [vmem:[%s6912 + $0x14] sm:$0xf]
    %v6919 = vld [vmem:[%s6912 + $0x18] sm:$0xf]
    %v6920 = vld [vmem:[%s6912 + $0x1c] sm:$0xf]
    %v6925 = vcombine.low %v6488, %v6489
    %v6926 = vcombine.low %v6494, %v6495
    %v6928 = vunpack.c.l.s4 1966171168
    %v6929 = vunpack.c.0.s8 %v6928
    %v6930 = vlaneseq
    %v6931 = vshrl.u32 %v6930, 7
    %v6932 = vsub.s32 %v6929, %v6931
    %v6933 = vrot.slane %v6925, %v6932
    %v6935 = vunpack.c.l.s4 1966171168
    %v6936 = vunpack.c.0.s8 %v6935
    %v6937 = vlaneseq
    %v6938 = vshrl.u32 %v6937, 7
    %v6939 = vsub.s32 %v6936, %v6938
    %v6940 = vrot.slane %v6926, %v6939
    %v6941 = vcombine.low %v6752, %v6933
    %v6942 = vcombine.low %v6766, %v6940
    %v6944 = vunpack.c.l.s4 1966171168
    %v6945 = vunpack.c.0.s8 %v6944
    %v6946 = vlaneseq
    %v6947 = vshrl.u32 %v6946, 7
    %v6948 = vsub.s32 %v6945, %v6947
    %v6949 = vrot.slane %v6941, %v6948
    %v6951 = vunpack.c.l.s4 1966171168
    %v6952 = vunpack.c.0.s8 %v6951
    %v6953 = vlaneseq
    %v6954 = vshrl.u32 %v6953, 7
    %v6955 = vsub.s32 %v6952, %v6954
    %v6956 = vrot.slane %v6942, %v6955
    %v6957 = vcombine.low %v6949, %v6956
    %v6958 = vcombine.low %v6500, %v6501
    %v6959 = vcombine.low %v6506, %v6507
    %v6961 = vunpack.c.l.s4 1966171168
    %v6962 = vunpack.c.0.s8 %v6961
    %v6963 = vlaneseq
    %v6964 = vshrl.u32 %v6963, 7
    %v6965 = vsub.s32 %v6962, %v6964
    %v6966 = vrot.slane %v6958, %v6965
    %v6968 = vunpack.c.l.s4 1966171168
    %v6969 = vunpack.c.0.s8 %v6968
    %v6970 = vlaneseq
    %v6971 = vshrl.u32 %v6970, 7
    %v6972 = vsub.s32 %v6969, %v6971
    %v6973 = vrot.slane %v6959, %v6972
    %v6974 = vcombine.low %v6801, %v6966
    %v6975 = vcombine.low %v6815, %v6973
    %v6977 = vunpack.c.l.s4 1966171168
    %v6978 = vunpack.c.0.s8 %v6977
    %v6979 = vlaneseq
    %v6980 = vshrl.u32 %v6979, 7
    %v6981 = vsub.s32 %v6978, %v6980
    %v6982 = vrot.slane %v6974, %v6981
    %v6984 = vunpack.c.l.s4 1966171168
    %v6985 = vunpack.c.0.s8 %v6984
    %v6986 = vlaneseq
    %v6987 = vshrl.u32 %v6986, 7
    %v6988 = vsub.s32 %v6985, %v6987
    %v6989 = vrot.slane %v6975, %v6988
    %v6990 = vcombine.low %v6982, %v6989
    %v6999 = vunpack.c.l.b16 %v6913
    %v7000 = vunpack.c.l.b16 %v6914
    %v7001 = vunpack.c.l.b16 %v6915
    %v7002 = vunpack.c.l.b16 %v6916
    %v7003 = vunpack.c.l.b16 %v6917
    %v7004 = vunpack.c.l.b16 %v6918
    %v7005 = vunpack.c.l.b16 %v6919
    %v7006 = vunpack.c.l.b16 %v6920
    %v7007 = vpack.c.b16 %v7000, %v6999
    %v7008 = vpack.c.b16 %v7002, %v7001
    %v7009 = vpack.c.b16 %v7004, %v7003
    %v7010 = vpack.c.b16 %v7006, %v7005
    %v7016 = vsel %vm6675, %v6957, 0
    %v7019 = vsel %vm6675, %v6990, 0
    %7021 = vmatprep.subr.bf16.mxu0 0
    %7022 = vmatpush1.bf16.msra.mxu0 %v7007
    %7023 = vmatprep.subr.bf16.mxu0 0
    %7024 = vmatpush1.bf16.msra.mxu0 %v7008
    %7025 = vmatprep.subr.bf16.mxu0 0
    %7026 = vmatpush1.bf16.msra.mxu0 %v7009
    %7027 = vmatprep.subr.bf16.mxu0 0
    %7028 = vmatpush1.bf16.msra.mxu0 %v7010
    %7029 = vmatprep.subr.bf16.mxu0 0
    %7030 = vmatpush1.bf16.msra.mxu0 0
    %7031 = vmatprep.subr.bf16.mxu0 0
    %7032 = vmatpush1.bf16.msra.mxu0 0
    %7033 = vmatprep.subr.bf16.mxu0 0
    %7034 = vmatpush1.bf16.msra.mxu0 0
    %7035 = vmatprep.subr.bf16.mxu0 0
    %7036 = vmatpush1.bf16.msra.mxu0 0
    %7037 = vmatprep.subr.bf16.mxu0 0
    %7038 = vmatpush1.bf16.msra.mxu0 0
    %7039 = vmatprep.subr.bf16.mxu0 0
    %7040 = vmatpush1.bf16.msra.mxu0 0
    %7041 = vmatprep.subr.bf16.mxu0 0
    %7042 = vmatpush1.bf16.msra.mxu0 0
    %7043 = vmatprep.subr.bf16.mxu0 0
    %7044 = vmatpush1.bf16.msra.mxu0 0
    %7045 = vmatprep.subr.bf16.mxu0 0
    %7046 = vmatpush1.bf16.msra.mxu0 0
    %7047 = vmatprep.subr.bf16.mxu0 0
    %7048 = vmatpush1.bf16.msra.mxu0 0
    %7049 = vmatprep.subr.bf16.mxu0 0
    %7050 = vmatpush1.bf16.msra.mxu0 0
    %7051 = vmatprep.subr.bf16.mxu0 0
    %7052 = vmatpush1.bf16.msra.mxu0 0
    %7053 = vmatprep.mubr.bf16.mxu0 0
    %7054 = vmatmul.mubr.bf16.gmra.mrb[0].mxu0 %v7016
    %v7055 = vpop.f32.mrb[0].mxu0
    %v7056 = vadd.f32 0.0, %v7055
    %v7057 = vpop.f32.mrb[0].mxu0
    %v7058 = vpop.f32.mrb[0].mxu0
    %v7059 = vadd.f32 0.0, %v7058
    %v7060 = vpop.f32.mrb[0].mxu0
    %7061 = vmatprep.mubr.bf16.mxu0 0
    %7062 = vmatmul.mubr.bf16.gmra.mrb[0].mxu0 %v7019
    %v7063 = vpop.f32.mrb[0].mxu0
    %v7064 = vadd.f32 0.0, %v7063
    %v7065 = vpop.f32.mrb[0].mxu0
    %v7066 = vpop.f32.mrb[0].mxu0
    %v7067 = vadd.f32 0.0, %v7066
    %v7068 = vpop.f32.mrb[0].mxu0
    %7069 = vdwg.mxu0
    %v7070 = vadd.f32 %v6898, %v7056
    %v7071 = vadd.f32 %v6901, %v7059
    %v7072 = vadd.f32 %v6906, %v7064
    %v7073 = vadd.f32 %v6909, %v7067
    %s7074 = scalar_lea.vmem [#allocation12], 96
    %v7075 = vld [vmem:[%s7074] sm:$0xf]
    %v7076 = vld [vmem:[%s7074 + $0x4] sm:$0xf]
    %v7077 = vld [vmem:[%s7074 + $0x8] sm:$0xf]
    %v7078 = vld [vmem:[%s7074 + $0xc] sm:$0xf]
    %v7079 = vld [vmem:[%s7074 + $0x10] sm:$0xf]
    %v7080 = vld [vmem:[%s7074 + $0x14] sm:$0xf]
    %v7081 = vld [vmem:[%s7074 + $0x18] sm:$0xf]
    %v7082 = vld [vmem:[%s7074 + $0x1c] sm:$0xf]
    %v7087 = vcombine.low %v6782, %v6824
    %v7088 = vcombine.low %v6508, %v6509
    %v7089 = vcombine.low %v6510, %v6511
    %v7091 = vunpack.c.l.s4 1966171168
    %v7092 = vunpack.c.0.s8 %v7091
    %v7093 = vlaneseq
    %v7094 = vshrl.u32 %v7093, 7
    %v7095 = vsub.s32 %v7092, %v7094
    %v7096 = vrot.slane %v7088, %v7095
    %v7098 = vunpack.c.l.s4 1966171168
    %v7099 = vunpack.c.0.s8 %v7098
    %v7100 = vlaneseq
    %v7101 = vshrl.u32 %v7100, 7
    %v7102 = vsub.s32 %v7099, %v7101
    %v7103 = vrot.slane %v7089, %v7102
    %v7104 = vcombine.low %v7096, %v7103
    %v7106 = vunpack.c.l.s4 1966171168
    %v7107 = vunpack.c.0.s8 %v7106
    %v7108 = vlaneseq
    %v7109 = vshrl.u32 %v7108, 7
    %v7110 = vsub.s32 %v7107, %v7109
    %v7111 = vrot.slane %v7104, %v7110
    %v7112 = vcombine.low %v6831, %v7111
    %v7121 = vunpack.c.l.b16 %v7075
    %v7122 = vunpack.c.l.b16 %v7076
    %v7123 = vunpack.c.l.b16 %v7077
    %v7124 = vunpack.c.l.b16 %v7078
    %v7125 = vunpack.c.l.b16 %v7079
    %v7126 = vunpack.c.l.b16 %v7080
    %v7127 = vunpack.c.l.b16 %v7081
    %v7128 = vunpack.c.l.b16 %v7082
    %v7129 = vpack.c.b16 %v7122, %v7121
    %v7130 = vpack.c.b16 %v7124, %v7123
    %v7131 = vpack.c.b16 %v7126, %v7125
    %v7132 = vpack.c.b16 %v7128, %v7127
    %v7138 = vsel %vm6675, %v7087, 0
    %v7141 = vsel %vm6675, %v7112, 0
    %7143 = vmatprep.subr.bf16.mxu0 0
    %7144 = vmatpush1.bf16.msra.mxu0 %v7129
    %7145 = vmatprep.subr.bf16.mxu0 0
    %7146 = vmatpush1.bf16.msra.mxu0 %v7130
    %7147 = vmatprep.subr.bf16.mxu0 0
    %7148 = vmatpush1.bf16.msra.mxu0 %v7131
    %7149 = vmatprep.subr.bf16.mxu0 0
    %7150 = vmatpush1.bf16.msra.mxu0 %v7132
    %7151 = vmatprep.subr.bf16.mxu0 0
    %7152 = vmatpush1.bf16.msra.mxu0 0
    %7153 = vmatprep.subr.bf16.mxu0 0
    %7154 = vmatpush1.bf16.msra.mxu0 0
    %7155 = vmatprep.subr.bf16.mxu0 0
    %7156 = vmatpush1.bf16.msra.mxu0 0
    %7157 = vmatprep.subr.bf16.mxu0 0
    %7158 = vmatpush1.bf16.msra.mxu0 0
    %7159 = vmatprep.subr.bf16.mxu0 0
    %7160 = vmatpush1.bf16.msra.mxu0 0
    %7161 = vmatprep.subr.bf16.mxu0 0
    %7162 = vmatpush1.bf16.msra.mxu0 0
    %7163 = vmatprep.subr.bf16.mxu0 0
    %7164 = vmatpush1.bf16.msra.mxu0 0
    %7165 = vmatprep.subr.bf16.mxu0 0
    %7166 = vmatpush1.bf16.msra.mxu0 0
    %7167 = vmatprep.subr.bf16.mxu0 0
    %7168 = vmatpush1.bf16.msra.mxu0 0
    %7169 = vmatprep.subr.bf16.mxu0 0
    %7170 = vmatpush1.bf16.msra.mxu0 0
    %7171 = vmatprep.subr.bf16.mxu0 0
    %7172 = vmatpush1.bf16.msra.mxu0 0
    %7173 = vmatprep.subr.bf16.mxu0 0
    %7174 = vmatpush1.bf16.msra.mxu0 0
    %7175 = vmatprep.mubr.bf16.mxu0 0
    %7176 = vmatmul.mubr.bf16.gmra.mrb[0].mxu0 %v7138
    %v7177 = vpop.f32.mrb[0].mxu0
    %v7178 = vadd.f32 0.0, %v7177
    %v7179 = vpop.f32.mrb[0].mxu0
    %v7180 = vpop.f32.mrb[0].mxu0
    %v7181 = vadd.f32 0.0, %v7180
    %v7182 = vpop.f32.mrb[0].mxu0
    %7183 = vmatprep.mubr.bf16.mxu0 0
    %7184 = vmatmul.mubr.bf16.gmra.mrb[0].mxu0 %v7141
    %v7185 = vpop.f32.mrb[0].mxu0
    %v7186 = vadd.f32 0.0, %v7185
    %v7187 = vpop.f32.mrb[0].mxu0
    %v7188 = vpop.f32.mrb[0].mxu0
    %v7189 = vadd.f32 0.0, %v7188
    %v7190 = vpop.f32.mrb[0].mxu0
    %7191 = vdwg.mxu0
    %v7192 = vadd.f32 %v7070, %v7178
    %v7193 = vadd.f32 %v7071, %v7181
    %v7194 = vadd.f32 %v7072, %v7186
    %v7195 = vadd.f32 %v7073, %v7189
    %s7196 = scalar_lea.vmem [#allocation12], 128
    %v7197 = vld [vmem:[%s7196] sm:$0xf]
    %v7198 = vld [vmem:[%s7196 + $0x4] sm:$0xf]
    %v7199 = vld [vmem:[%s7196 + $0x8] sm:$0xf]
    %v7200 = vld [vmem:[%s7196 + $0xc] sm:$0xf]
    %v7201 = vld [vmem:[%s7196 + $0x10] sm:$0xf]
    %v7202 = vld [vmem:[%s7196 + $0x14] sm:$0xf]
    %v7203 = vld [vmem:[%s7196 + $0x18] sm:$0xf]
    %v7204 = vld [vmem:[%s7196 + $0x1c] sm:$0xf]
    %v7206 = vcombine.low %v6600, %v6642
    %v7207 = vcombine.low %v6509, %v6510
    %v7208 = vcombine.low %v6511, %v6512
    %v7210 = vunpack.c.l.s4 1966171168
    %v7211 = vunpack.c.0.s8 %v7210
    %v7212 = vlaneseq
    %v7213 = vshrl.u32 %v7212, 7
    %v7214 = vsub.s32 %v7211, %v7213
    %v7215 = vrot.slane %v7207, %v7214
    %v7217 = vunpack.c.l.s4 1966171168
    %v7218 = vunpack.c.0.s8 %v7217
    %v7219 = vlaneseq
    %v7220 = vshrl.u32 %v7219, 7
    %v7221 = vsub.s32 %v7218, %v7220
    %v7222 = vrot.slane %v7208, %v7221
    %v7223 = vcombine.low %v7215, %v7222
    %v7225 = vunpack.c.l.s4 1966171168
    %v7226 = vunpack.c.0.s8 %v7225
    %v7227 = vlaneseq
    %v7228 = vshrl.u32 %v7227, 7
    %v7229 = vsub.s32 %v7226, %v7228
    %v7230 = vrot.slane %v7223, %v7229
    %v7231 = vcombine.low %v6649, %v7230
    %v7240 = vunpack.c.l.b16 %v7197
    %v7241 = vunpack.c.l.b16 %v7198
    %v7242 = vunpack.c.l.b16 %v7199
    %v7243 = vunpack.c.l.b16 %v7200
    %v7244 = vunpack.c.l.b16 %v7201
    %v7245 = vunpack.c.l.b16 %v7202
    %v7246 = vunpack.c.l.b16 %v7203
    %v7247 = vunpack.c.l.b16 %v7204
    %v7248 = vpack.c.b16 %v7241, %v7240
    %v7249 = vpack.c.b16 %v7243, %v7242
    %v7250 = vpack.c.b16 %v7245, %v7244
    %v7251 = vpack.c.b16 %v7247, %v7246
    %v7257 = vsel %vm6675, %v7206, 0
    %v7260 = vsel %vm6675, %v7231, 0
    %7262 = vmatprep.subr.bf16.mxu0 0
    %7263 = vmatpush1.bf16.msra.mxu0 %v7248
    %7264 = vmatprep.subr.bf16.mxu0 0
    %7265 = vmatpush1.bf16.msra.mxu0 %v7249
    %7266 = vmatprep.subr.bf16.mxu0 0
    %7267 = vmatpush1.bf16.msra.mxu0 %v7250
    %7268 = vmatprep.subr.bf16.mxu0 0
    %7269 = vmatpush1.bf16.msra.mxu0 %v7251
    %7270 = vmatprep.subr.bf16.mxu0 0
    %7271 = vmatpush1.bf16.msra.mxu0 0
    %7272 = vmatprep.subr.bf16.mxu0 0
    %7273 = vmatpush1.bf16.msra.mxu0 0
    %7274 = vmatprep.subr.bf16.mxu0 0
    %7275 = vmatpush1.bf16.msra.mxu0 0
    %7276 = vmatprep.subr.bf16.mxu0 0
    %7277 = vmatpush1.bf16.msra.mxu0 0
    %7278 = vmatprep.subr.bf16.mxu0 0
    %7279 = vmatpush1.bf16.msra.mxu0 0
    %7280 = vmatprep.subr.bf16.mxu0 0
    %7281 = vmatpush1.bf16.msra.mxu0 0
    %7282 = vmatprep.subr.bf16.mxu0 0
    %7283 = vmatpush1.bf16.msra.mxu0 0
    %7284 = vmatprep.subr.bf16.mxu0 0
    %7285 = vmatpush1.bf16.msra.mxu0 0
    %7286 = vmatprep.subr.bf16.mxu0 0
    %7287 = vmatpush1.bf16.msra.mxu0 0
    %7288 = vmatprep.subr.bf16.mxu0 0
    %7289 = vmatpush1.bf16.msra.mxu0 0
    %7290 = vmatprep.subr.bf16.mxu0 0
    %7291 = vmatpush1.bf16.msra.mxu0 0
    %7292 = vmatprep.subr.bf16.mxu0 0
    %7293 = vmatpush1.bf16.msra.mxu0 0
    %7294 = vmatprep.mubr.bf16.mxu0 0
    %7295 = vmatmul.mubr.bf16.gmra.mrb[0].mxu0 %v7257
    %v7296 = vpop.f32.mrb[0].mxu0
    %v7297 = vadd.f32 0.0, %v7296
    %v7298 = vpop.f32.mrb[0].mxu0
    %v7299 = vpop.f32.mrb[0].mxu0
    %v7300 = vadd.f32 0.0, %v7299
    %v7301 = vpop.f32.mrb[0].mxu0
    %7302 = vmatprep.mubr.bf16.mxu0 0
    %7303 = vmatmul.mubr.bf16.gmra.mrb[0].mxu0 %v7260
    %v7304 = vpop.f32.mrb[0].mxu0
    %v7305 = vadd.f32 0.0, %v7304
    %v7306 = vpop.f32.mrb[0].mxu0
    %v7307 = vpop.f32.mrb[0].mxu0
    %v7308 = vadd.f32 0.0, %v7307
    %v7309 = vpop.f32.mrb[0].mxu0
    %7310 = vdwg.mxu0
    %v7311 = vadd.f32 %v7192, %v7297
    %v7312 = vadd.f32 %v7193, %v7300
    %v7313 = vadd.f32 %v7194, %v7305
    %v7314 = vadd.f32 %v7195, %v7308
    %s7315 = scalar_lea.vmem [#allocation12], 160
    %v7316 = vld [vmem:[%s7315] sm:$0xf]
    %v7317 = vld [vmem:[%s7315 + $0x4] sm:$0xf]
    %v7318 = vld [vmem:[%s7315 + $0x8] sm:$0xf]
    %v7319 = vld [vmem:[%s7315 + $0xc] sm:$0xf]
    %v7320 = vld [vmem:[%s7315 + $0x10] sm:$0xf]
    %v7321 = vld [vmem:[%s7315 + $0x14] sm:$0xf]
    %v7322 = vld [vmem:[%s7315 + $0x18] sm:$0xf]
    %v7323 = vld [vmem:[%s7315 + $0x1c] sm:$0xf]
    %v7325 = vcombine.low %v6956, %v6982
    %v7326 = vcombine.low %v6512, %v6513
    %v7328 = vunpack.c.l.s4 1966171168
    %v7329 = vunpack.c.0.s8 %v7328
    %v7330 = vlaneseq
    %v7331 = vshrl.u32 %v7330, 7
    %v7332 = vsub.s32 %v7329, %v7331
    %v7333 = vrot.slane %v7326, %v7332
    %v7334 = vcombine.low %v7103, %v7333
    %v7336 = vunpack.c.l.s4 1966171168
    %v7337 = vunpack.c.0.s8 %v7336
    %v7338 = vlaneseq
    %v7339 = vshrl.u32 %v7338, 7
    %v7340 = vsub.s32 %v7337, %v7339
    %v7341 = vrot.slane %v7334, %v7340
    %v7342 = vcombine.low %v6989, %v7341
    %v7351 = vunpack.c.l.b16 %v7316
    %v7352 = vunpack.c.l.b16 %v7317
    %v7353 = vunpack.c.l.b16 %v7318
    %v7354 = vunpack.c.l.b16 %v7319
    %v7355 = vunpack.c.l.b16 %v7320
    %v7356 = vunpack.c.l.b16 %v7321
    %v7357 = vunpack.c.l.b16 %v7322
    %v7358 = vunpack.c.l.b16 %v7323
    %v7359 = vpack.c.b16 %v7352, %v7351
    %v7360 = vpack.c.b16 %v7354, %v7353
    %v7361 = vpack.c.b16 %v7356, %v7355
    %v7362 = vpack.c.b16 %v7358, %v7357
    %v7368 = vsel %vm6675, %v7325, 0
    %v7371 = vsel %vm6675, %v7342, 0
    %7373 = vmatprep.subr.bf16.mxu0 0
    %7374 = vmatpush1.bf16.msra.mxu0 %v7359
    %7375 = vmatprep.subr.bf16.mxu0 0
    %7376 = vmatpush1.bf16.msra.mxu0 %v7360
    %7377 = vmatprep.subr.bf16.mxu0 0
    %7378 = vmatpush1.bf16.msra.mxu0 %v7361
    %7379 = vmatprep.subr.bf16.mxu0 0
    %7380 = vmatpush1.bf16.msra.mxu0 %v7362
    %7381 = vmatprep.subr.bf16.mxu0 0
    %7382 = vmatpush1.bf16.msra.mxu0 0
    %7383 = vmatprep.subr.bf16.mxu0 0
    %7384 = vmatpush1.bf16.msra.mxu0 0
    %7385 = vmatprep.subr.bf16.mxu0 0
    %7386 = vmatpush1.bf16.msra.mxu0 0
    %7387 = vmatprep.subr.bf16.mxu0 0
    %7388 = vmatpush1.bf16.msra.mxu0 0
    %7389 = vmatprep.subr.bf16.mxu0 0
    %7390 = vmatpush1.bf16.msra.mxu0 0
    %7391 = vmatprep.subr.bf16.mxu0 0
    %7392 = vmatpush1.bf16.msra.mxu0 0
    %7393 = vmatprep.subr.bf16.mxu0 0
    %7394 = vmatpush1.bf16.msra.mxu0 0
    %7395 = vmatprep.subr.bf16.mxu0 0
    %7396 = vmatpush1.bf16.msra.mxu0 0
    %7397 = vmatprep.subr.bf16.mxu0 0
    %7398 = vmatpush1.bf16.msra.mxu0 0
    %7399 = vmatprep.subr.bf16.mxu0 0
    %7400 = vmatpush1.bf16.msra.mxu0 0
    %7401 = vmatprep.subr.bf16.mxu0 0
    %7402 = vmatpush1.bf16.msra.mxu0 0
    %7403 = vmatprep.subr.bf16.mxu0 0
    %7404 = vmatpush1.bf16.msra.mxu0 0
    %7405 = vmatprep.mubr.bf16.mxu0 0
    %7406 = vmatmul.mubr.bf16.gmra.mrb[0].mxu0 %v7368
    %v7407 = vpop.f32.mrb[0].mxu0
    %v7408 = vadd.f32 0.0, %v7407
    %v7409 = vpop.f32.mrb[0].mxu0
    %v7410 = vpop.f32.mrb[0].mxu0
    %v7411 = vadd.f32 0.0, %v7410
    %v7412 = vpop.f32.mrb[0].mxu0
    %7413 = vmatprep.mubr.bf16.mxu0 0
    %7414 = vmatmul.mubr.bf16.gmra.mrb[0].mxu0 %v7371
    %v7415 = vpop.f32.mrb[0].mxu0
    %v7416 = vadd.f32 0.0, %v7415
    %v7417 = vpop.f32.mrb[0].mxu0
    %v7418 = vpop.f32.mrb[0].mxu0
    %v7419 = vadd.f32 0.0, %v7418
    %v7420 = vpop.f32.mrb[0].mxu0
    %7421 = vdwg.mxu0
    %v7422 = vadd.f32 %v7311, %v7408
    %v7423 = vadd.f32 %v7312, %v7411
    %v7424 = vadd.f32 %v7313, %v7416
    %v7425 = vadd.f32 %v7314, %v7419
    %s7426 = scalar_lea.vmem [#allocation12], 192
    %v7427 = vld [vmem:[%s7426] sm:$0xf]
    %v7428 = vld [vmem:[%s7426 + $0x4] sm:$0xf]
    %v7429 = vld [vmem:[%s7426 + $0x8] sm:$0xf]
    %v7430 = vld [vmem:[%s7426 + $0xc] sm:$0xf]
    %v7431 = vld [vmem:[%s7426 + $0x10] sm:$0xf]
    %v7432 = vld [vmem:[%s7426 + $0x14] sm:$0xf]
    %v7433 = vld [vmem:[%s7426 + $0x18] sm:$0xf]
    %v7434 = vld [vmem:[%s7426 + $0x1c] sm:$0xf]
    %v7439 = vcombine.low %v6514, %v6515
    %v7440 = vcombine.low %v6516, %v6517
    %v7442 = vunpack.c.l.s4 1966171168
    %v7443 = vunpack.c.0.s8 %v7442
    %v7444 = vlaneseq
    %v7445 = vshrl.u32 %v7444, 7
    %v7446 = vsub.s32 %v7443, %v7445
    %v7447 = vrot.slane %v7439, %v7446
    %v7449 = vunpack.c.l.s4 1966171168
    %v7450 = vunpack.c.0.s8 %v7449
    %v7451 = vlaneseq
    %v7452 = vshrl.u32 %v7451, 7
    %v7453 = vsub.s32 %v7450, %v7452
    %v7454 = vrot.slane %v7440, %v7453
    %v7455 = vcombine.low %v7447, %v7454
    %v7457 = vunpack.c.l.s4 1966171168
    %v7458 = vunpack.c.0.s8 %v7457
    %v7459 = vlaneseq
    %v7460 = vshrl.u32 %v7459, 7
    %v7461 = vsub.s32 %v7458, %v7460
    %v7462 = vrot.slane %v7455, %v7461
    %v7463 = vcombine.low %v7111, %v7462
    %v7472 = vunpack.c.l.b16 %v7427
    %v7473 = vunpack.c.l.b16 %v7428
    %v7474 = vunpack.c.l.b16 %v7429
    %v7475 = vunpack.c.l.b16 %v7430
    %v7476 = vunpack.c.l.b16 %v7431
    %v7477 = vunpack.c.l.b16 %v7432
    %v7478 = vunpack.c.l.b16 %v7433
    %v7479 = vunpack.c.l.b16 %v7434
    %v7480 = vpack.c.b16 %v7473, %v7472
    %v7481 = vpack.c.b16 %v7475, %v7474
    %v7482 = vpack.c.b16 %v7477, %v7476
    %v7483 = vpack.c.b16 %v7479, %v7478
    %v7489 = vsel %vm6675, %v7463, 0
    %7491 = vmatprep.subr.bf16.mxu0 0
    %7492 = vmatpush1.bf16.msra.mxu0 %v7480
    %7493 = vmatprep.subr.bf16.mxu0 0
    %7494 = vmatpush1.bf16.msra.mxu0 %v7481
    %7495 = vmatprep.subr.bf16.mxu0 0
    %7496 = vmatpush1.bf16.msra.mxu0 %v7482
    %7497 = vmatprep.subr.bf16.mxu0 0
    %7498 = vmatpush1.bf16.msra.mxu0 %v7483
    %7499 = vmatprep.subr.bf16.mxu0 0
    %7500 = vmatpush1.bf16.msra.mxu0 0
    %7501 = vmatprep.subr.bf16.mxu0 0
    %7502 = vmatpush1.bf16.msra.mxu0 0
    %7503 = vmatprep.subr.bf16.mxu0 0
    %7504 = vmatpush1.bf16.msra.mxu0 0
    %7505 = vmatprep.subr.bf16.mxu0 0
    %7506 = vmatpush1.bf16.msra.mxu0 0
    %7507 = vmatprep.subr.bf16.mxu0 0
    %7508 = vmatpush1.bf16.msra.mxu0 0
    %7509 = vmatprep.subr.bf16.mxu0 0
    %7510 = vmatpush1.bf16.msra.mxu0 0
    %7511 = vmatprep.subr.bf16.mxu0 0
    %7512 = vmatpush1.bf16.msra.mxu0 0
    %7513 = vmatprep.subr.bf16.mxu0 0
    %7514 = vmatpush1.bf16.msra.mxu0 0
    %7515 = vmatprep.subr.bf16.mxu0 0
    %7516 = vmatpush1.bf16.msra.mxu0 0
    %7517 = vmatprep.subr.bf16.mxu0 0
    %7518 = vmatpush1.bf16.msra.mxu0 0
    %7519 = vmatprep.subr.bf16.mxu0 0
    %7520 = vmatpush1.bf16.msra.mxu0 0
    %7521 = vmatprep.subr.bf16.mxu0 0
    %7522 = vmatpush1.bf16.msra.mxu0 0
    %7523 = vmatprep.mubr.bf16.mxu0 0
    %7524 = vmatmul.mubr.bf16.gmra.mrb[0].mxu0 %v6861
    %v7525 = vpop.f32.mrb[0].mxu0
    %v7526 = vadd.f32 0.0, %v7525
    %v7527 = vpop.f32.mrb[0].mxu0
    %v7528 = vpop.f32.mrb[0].mxu0
    %v7529 = vadd.f32 0.0, %v7528
    %v7530 = vpop.f32.mrb[0].mxu0
    %7531 = vmatprep.mubr.bf16.mxu0 0
    %7532 = vmatmul.mubr.bf16.gmra.mrb[0].mxu0 %v7489
    %v7533 = vpop.f32.mrb[0].mxu0
    %v7534 = vadd.f32 0.0, %v7533
    %v7535 = vpop.f32.mrb[0].mxu0
    %v7536 = vpop.f32.mrb[0].mxu0
    %v7537 = vadd.f32 0.0, %v7536
    %v7538 = vpop.f32.mrb[0].mxu0
    %7539 = vdwg.mxu0
    %v7540 = vadd.f32 %v7422, %v7526
    %v7541 = vadd.f32 %v7423, %v7529
    %v7542 = vadd.f32 %v7424, %v7534
    %v7543 = vadd.f32 %v7425, %v7537
    %s7544 = scalar_lea.vmem [#allocation12], 224
    %v7545 = vld [vmem:[%s7544] sm:$0xf]
    %v7546 = vld [vmem:[%s7544 + $0x4] sm:$0xf]
    %v7547 = vld [vmem:[%s7544 + $0x8] sm:$0xf]
    %v7548 = vld [vmem:[%s7544 + $0xc] sm:$0xf]
    %v7549 = vld [vmem:[%s7544 + $0x10] sm:$0xf]
    %v7550 = vld [vmem:[%s7544 + $0x14] sm:$0xf]
    %v7551 = vld [vmem:[%s7544 + $0x18] sm:$0xf]
    %v7552 = vld [vmem:[%s7544 + $0x1c] sm:$0xf]
    %v7554 = vcombine.low %v6515, %v6516
    %v7555 = vcombine.low %v6517, %v6518
    %v7557 = vunpack.c.l.s4 1966171168
    %v7558 = vunpack.c.0.s8 %v7557
    %v7559 = vlaneseq
    %v7560 = vshrl.u32 %v7559, 7
    %v7561 = vsub.s32 %v7558, %v7560
    %v7562 = vrot.slane %v7554, %v7561
    %v7564 = vunpack.c.l.s4 1966171168
    %v7565 = vunpack.c.0.s8 %v7564
    %v7566 = vlaneseq
    %v7567 = vshrl.u32 %v7566, 7
    %v7568 = vsub.s32 %v7565, %v7567
    %v7569 = vrot.slane %v7555, %v7568
    %v7570 = vcombine.low %v7562, %v7569
    %v7572 = vunpack.c.l.s4 1966171168
    %v7573 = vunpack.c.0.s8 %v7572
    %v7574 = vlaneseq
    %v7575 = vshrl.u32 %v7574, 7
    %v7576 = vsub.s32 %v7573, %v7575
    %v7577 = vrot.slane %v7570, %v7576
    %v7578 = vcombine.low %v7230, %v7577
    %v7587 = vunpack.c.l.b16 %v7545
    %v7588 = vunpack.c.l.b16 %v7546
    %v7589 = vunpack.c.l.b16 %v7547
    %v7590 = vunpack.c.l.b16 %v7548
    %v7591 = vunpack.c.l.b16 %v7549
    %v7592 = vunpack.c.l.b16 %v7550
    %v7593 = vunpack.c.l.b16 %v7551
    %v7594 = vunpack.c.l.b16 %v7552
    %v7595 = vpack.c.b16 %v7588, %v7587
    %v7596 = vpack.c.b16 %v7590, %v7589
    %v7597 = vpack.c.b16 %v7592, %v7591
    %v7598 = vpack.c.b16 %v7594, %v7593
    %v7604 = vsel %vm6675, %v7578, 0
    %7606 = vmatprep.subr.bf16.mxu0 0
    %7607 = vmatpush1.bf16.msra.mxu0 %v7595
    %7608 = vmatprep.subr.bf16.mxu0 0
    %7609 = vmatpush1.bf16.msra.mxu0 %v7596
    %7610 = vmatprep.subr.bf16.mxu0 0
    %7611 = vmatpush1.bf16.msra.mxu0 %v7597
    %7612 = vmatprep.subr.bf16.mxu0 0
    %7613 = vmatpush1.bf16.msra.mxu0 %v7598
    %7614 = vmatprep.subr.bf16.mxu0 0
    %7615 = vmatpush1.bf16.msra.mxu0 0
    %7616 = vmatprep.subr.bf16.mxu0 0
    %7617 = vmatpush1.bf16.msra.mxu0 0
    %7618 = vmatprep.subr.bf16.mxu0 0
    %7619 = vmatpush1.bf16.msra.mxu0 0
    %7620 = vmatprep.subr.bf16.mxu0 0
    %7621 = vmatpush1.bf16.msra.mxu0 0
    %7622 = vmatprep.subr.bf16.mxu0 0
    %7623 = vmatpush1.bf16.msra.mxu0 0
    %7624 = vmatprep.subr.bf16.mxu0 0
    %7625 = vmatpush1.bf16.msra.mxu0 0
    %7626 = vmatprep.subr.bf16.mxu0 0
    %7627 = vmatpush1.bf16.msra.mxu0 0
    %7628 = vmatprep.subr.bf16.mxu0 0
    %7629 = vmatpush1.bf16.msra.mxu0 0
    %7630 = vmatprep.subr.bf16.mxu0 0
    %7631 = vmatpush1.bf16.msra.mxu0 0
    %7632 = vmatprep.subr.bf16.mxu0 0
    %7633 = vmatpush1.bf16.msra.mxu0 0
    %7634 = vmatprep.subr.bf16.mxu0 0
    %7635 = vmatpush1.bf16.msra.mxu0 0
    %7636 = vmatprep.subr.bf16.mxu0 0
    %7637 = vmatpush1.bf16.msra.mxu0 0
    %7638 = vmatprep.mubr.bf16.mxu0 0
    %7639 = vmatmul.mubr.bf16.gmra.mrb[0].mxu0 %v6680
    %v7640 = vpop.f32.mrb[0].mxu0
    %v7641 = vadd.f32 0.0, %v7640
    %v7642 = vpop.f32.mrb[0].mxu0
    %v7643 = vpop.f32.mrb[0].mxu0
    %v7644 = vadd.f32 0.0, %v7643
    %v7645 = vpop.f32.mrb[0].mxu0
    %7646 = vmatprep.mubr.bf16.mxu0 0
    %7647 = vmatmul.mubr.bf16.gmra.mrb[0].mxu0 %v7604
    %v7648 = vpop.f32.mrb[0].mxu0
    %v7649 = vadd.f32 0.0, %v7648
    %v7650 = vpop.f32.mrb[0].mxu0
    %v7651 = vpop.f32.mrb[0].mxu0
    %v7652 = vadd.f32 0.0, %v7651
    %v7653 = vpop.f32.mrb[0].mxu0
    %7654 = vdwg.mxu0
    %v7655 = vadd.f32 %v7540, %v7641
    %v7656 = vadd.f32 %v7541, %v7644
    %v7657 = vadd.f32 %v7542, %v7649
    %v7658 = vadd.f32 %v7543, %v7652
    %s7659 = scalar_lea.vmem [#allocation12], 256
    %v7660 = vld [vmem:[%s7659] sm:$0xf]
    %v7661 = vld [vmem:[%s7659 + $0x4] sm:$0xf]
    %v7662 = vld [vmem:[%s7659 + $0x8] sm:$0xf]
    %v7663 = vld [vmem:[%s7659 + $0xc] sm:$0xf]
    %v7664 = vld [vmem:[%s7659 + $0x10] sm:$0xf]
    %v7665 = vld [vmem:[%s7659 + $0x14] sm:$0xf]
    %v7666 = vld [vmem:[%s7659 + $0x18] sm:$0xf]
    %v7667 = vld [vmem:[%s7659 + $0x1c] sm:$0xf]
    %v7669 = vcombine.low %v6518, %v6519
    %v7671 = vunpack.c.l.s4 1966171168
    %v7672 = vunpack.c.0.s8 %v7671
    %v7673 = vlaneseq
    %v7674 = vshrl.u32 %v7673, 7
    %v7675 = vsub.s32 %v7672, %v7674
    %v7676 = vrot.slane %v7669, %v7675
    %v7677 = vcombine.low %v7454, %v7676
    %v7679 = vunpack.c.l.s4 1966171168
    %v7680 = vunpack.c.0.s8 %v7679
    %v7681 = vlaneseq
    %v7682 = vshrl.u32 %v7681, 7
    %v7683 = vsub.s32 %v7680, %v7682
    %v7684 = vrot.slane %v7677, %v7683
    %v7685 = vcombine.low %v7341, %v7684
    %v7694 = vunpack.c.l.b16 %v7660
    %v7695 = vunpack.c.l.b16 %v7661
    %v7696 = vunpack.c.l.b16 %v7662
    %v7697 = vunpack.c.l.b16 %v7663
    %v7698 = vunpack.c.l.b16 %v7664
    %v7699 = vunpack.c.l.b16 %v7665
    %v7700 = vunpack.c.l.b16 %v7666
    %v7701 = vunpack.c.l.b16 %v7667
    %v7702 = vpack.c.b16 %v7695, %v7694
    %v7703 = vpack.c.b16 %v7697, %v7696
    %v7704 = vpack.c.b16 %v7699, %v7698
    %v7705 = vpack.c.b16 %v7701, %v7700
    %v7711 = vsel %vm6675, %v7685, 0
    %7713 = vmatprep.subr.bf16.mxu0 0
    %7714 = vmatpush1.bf16.msra.mxu0 %v7702
    %7715 = vmatprep.subr.bf16.mxu0 0
    %7716 = vmatpush1.bf16.msra.mxu0 %v7703
    %7717 = vmatprep.subr.bf16.mxu0 0
    %7718 = vmatpush1.bf16.msra.mxu0 %v7704
    %7719 = vmatprep.subr.bf16.mxu0 0
    %7720 = vmatpush1.bf16.msra.mxu0 %v7705
    %7721 = vmatprep.subr.bf16.mxu0 0
    %7722 = vmatpush1.bf16.msra.mxu0 0
    %7723 = vmatprep.subr.bf16.mxu0 0
    %7724 = vmatpush1.bf16.msra.mxu0 0
    %7725 = vmatprep.subr.bf16.mxu0 0
    %7726 = vmatpush1.bf16.msra.mxu0 0
    %7727 = vmatprep.subr.bf16.mxu0 0
    %7728 = vmatpush1.bf16.msra.mxu0 0
    %7729 = vmatprep.subr.bf16.mxu0 0
    %7730 = vmatpush1.bf16.msra.mxu0 0
    %7731 = vmatprep.subr.bf16.mxu0 0
    %7732 = vmatpush1.bf16.msra.mxu0 0
    %7733 = vmatprep.subr.bf16.mxu0 0
    %7734 = vmatpush1.bf16.msra.mxu0 0
    %7735 = vmatprep.subr.bf16.mxu0 0
    %7736 = vmatpush1.bf16.msra.mxu0 0
    %7737 = vmatprep.subr.bf16.mxu0 0
    %7738 = vmatpush1.bf16.msra.mxu0 0
    %7739 = vmatprep.subr.bf16.mxu0 0
    %7740 = vmatpush1.bf16.msra.mxu0 0
    %7741 = vmatprep.subr.bf16.mxu0 0
    %7742 = vmatpush1.bf16.msra.mxu0 0
    %7743 = vmatprep.subr.bf16.mxu0 0
    %7744 = vmatpush1.bf16.msra.mxu0 0
    %7745 = vmatprep.mubr.bf16.mxu0 0
    %7746 = vmatmul.mubr.bf16.gmra.mrb[0].mxu0 %v7019
    %v7747 = vpop.f32.mrb[0].mxu0
    %v7748 = vadd.f32 0.0, %v7747
    %v7749 = vpop.f32.mrb[0].mxu0
    %v7750 = vpop.f32.mrb[0].mxu0
    %v7751 = vadd.f32 0.0, %v7750
    %v7752 = vpop.f32.mrb[0].mxu0
    %7753 = vmatprep.mubr.bf16.mxu0 0
    %7754 = vmatmul.mubr.bf16.gmra.mrb[0].mxu0 %v7711
    %v7755 = vpop.f32.mrb[0].mxu0
    %v7756 = vadd.f32 0.0, %v7755
    %v7757 = vpop.f32.mrb[0].mxu0
    %v7758 = vpop.f32.mrb[0].mxu0
    %v7759 = vadd.f32 0.0, %v7758
    %v7760 = vpop.f32.mrb[0].mxu0
    %7761 = vdwg.mxu0
    %v7762 = vadd.f32 %v7655, %v7748
    %v7763 = vadd.f32 %v7656, %v7751
    %v7764 = vadd.f32 %v7657, %v7756
    %v7765 = vadd.f32 %v7658, %v7759
    %v7766 = vld [vmem:[%s9] sm:$0x1]
    %v7768 = vlaneseq
    %v7769 = vshrl.u32 %v7768, 7
    %v7770 = vsub.s32 0, %v7769
    %v7771 = vrot.slane %v7766, %v7770
    %v7773 = vmul.f32 %v7762, %v7771
    %v7774 = vmul.f32 %v7763, %v7771
    %v7775 = vmul.f32 %v7764, %v7771
    %v7776 = vmul.f32 %v7765, %v7771
    %v7777 = vld [vmem:[%s14] sm:$0x1]
    %v7779 = vlaneseq
    %v7780 = vshrl.u32 %v7779, 7
    %v7781 = vsub.s32 0, %v7780
    %v7782 = vrot.slane %v7777, %v7781
    %v7784 = vadd.f32 %v7773, %v7782
    %v7785 = vadd.f32 %v7774, %v7782
    %v7786 = vadd.f32 %v7775, %v7782
    %v7787 = vadd.f32 %v7776, %v7782
    %vm7788 = vcmp.gt.f32.partialorder %v7784, 0.0
    %vm7789 = vcmp.gt.f32.partialorder %v7785, 0.0
    %vm7790 = vcmp.gt.f32.partialorder %v7786, 0.0
    %vm7791 = vcmp.gt.f32.partialorder %v7787, 0.0
    %v7792 = vmul.f32 %v7784, 0.2
    %v7793 = vmul.f32 %v7785, 0.2
    %v7794 = vmul.f32 %v7786, 0.2
    %v7795 = vmul.f32 %v7787, 0.2
    %v7796 = vsel %vm7788, %v7784, %v7792
    %v7797 = vsel %vm7789, %v7785, %v7793
    %v7798 = vsel %vm7790, %v7786, %v7794
    %v7799 = vsel %vm7791, %v7787, %v7795
    %v7800 = vpack.c.bf16 %v7797, %v7796
    %v7801 = vpack.c.bf16 %v7799, %v7798
    %v7804 = vcombine.high %v7800, %v7800
    %v7806 = vunpack.c.l.s4 1966171168
    %v7807 = vunpack.c.0.s8 %v7806
    %v7808 = vlaneseq
    %v7809 = vshrl.u32 %v7808, 7
    %v7810 = vsub.s32 %v7807, %v7809
    %v7811 = vrot.slane %v7800, %v7810
    %v7813 = vunpack.c.l.s4 1966171168
    %v7814 = vunpack.c.0.s8 %v7813
    %v7815 = vlaneseq
    %v7816 = vshrl.u32 %v7815, 7
    %v7817 = vsub.s32 %v7814, %v7816
    %v7818 = vrot.slane %v7804, %v7817
    %v7819 = vcombine.high %v7811, %v7811
    %v7820 = vcombine.high %v7818, %v7818
    %v7822 = vunpack.c.l.s4 1966171168
    %v7823 = vunpack.c.0.s8 %v7822
    %v7824 = vlaneseq
    %v7825 = vshrl.u32 %v7824, 7
    %v7826 = vsub.s32 %v7823, %v7825
    %v7827 = vrot.slane %v7811, %v7826
    %v7829 = vunpack.c.l.s4 1966171168
    %v7830 = vunpack.c.0.s8 %v7829
    %v7831 = vlaneseq
    %v7832 = vshrl.u32 %v7831, 7
    %v7833 = vsub.s32 %v7830, %v7832
    %v7834 = vrot.slane %v7818, %v7833
    %v7836 = vunpack.c.l.s4 1966171168
    %v7837 = vunpack.c.0.s8 %v7836
    %v7838 = vlaneseq
    %v7839 = vshrl.u32 %v7838, 7
    %v7840 = vsub.s32 %v7837, %v7839
    %v7841 = vrot.slane %v7819, %v7840
    %v7843 = vunpack.c.l.s4 1966171168
    %v7844 = vunpack.c.0.s8 %v7843
    %v7845 = vlaneseq
    %v7846 = vshrl.u32 %v7845, 7
    %v7847 = vsub.s32 %v7844, %v7846
    %v7848 = vrot.slane %v7820, %v7847
    %v7849 = vcombine.high %v7827, %v7827
    %v7850 = vcombine.high %v7834, %v7834
    %v7851 = vcombine.high %v7841, %v7841
    %v7852 = vcombine.high %v7848, %v7848
    %v7853 = vcombine.high %v7801, %v7801
    %v7855 = vunpack.c.l.s4 1966171168
    %v7856 = vunpack.c.0.s8 %v7855
    %v7857 = vlaneseq
    %v7858 = vshrl.u32 %v7857, 7
    %v7859 = vsub.s32 %v7856, %v7858
    %v7860 = vrot.slane %v7801, %v7859
    %v7862 = vunpack.c.l.s4 1966171168
    %v7863 = vunpack.c.0.s8 %v7862
    %v7864 = vlaneseq
    %v7865 = vshrl.u32 %v7864, 7
    %v7866 = vsub.s32 %v7863, %v7865
    %v7867 = vrot.slane %v7853, %v7866
    %v7868 = vcombine.high %v7860, %v7860
    %v7869 = vcombine.high %v7867, %v7867
    %v7871 = vunpack.c.l.s4 1966171168
    %v7872 = vunpack.c.0.s8 %v7871
    %v7873 = vlaneseq
    %v7874 = vshrl.u32 %v7873, 7
    %v7875 = vsub.s32 %v7872, %v7874
    %v7876 = vrot.slane %v7860, %v7875
    %v7878 = vunpack.c.l.s4 1966171168
    %v7879 = vunpack.c.0.s8 %v7878
    %v7880 = vlaneseq
    %v7881 = vshrl.u32 %v7880, 7
    %v7882 = vsub.s32 %v7879, %v7881
    %v7883 = vrot.slane %v7867, %v7882
    %v7885 = vunpack.c.l.s4 1966171168
    %v7886 = vunpack.c.0.s8 %v7885
    %v7887 = vlaneseq
    %v7888 = vshrl.u32 %v7887, 7
    %v7889 = vsub.s32 %v7886, %v7888
    %v7890 = vrot.slane %v7868, %v7889
    %v7892 = vunpack.c.l.s4 1966171168
    %v7893 = vunpack.c.0.s8 %v7892
    %v7894 = vlaneseq
    %v7895 = vshrl.u32 %v7894, 7
    %v7896 = vsub.s32 %v7893, %v7895
    %v7897 = vrot.slane %v7869, %v7896
    %v7898 = vcombine.high %v7876, %v7876
    %v7899 = vcombine.high %v7883, %v7883
    %v7900 = vcombine.high %v7890, %v7890
    %v7901 = vcombine.high %v7897, %v7897
    %7918 = vst.msk [vmem:[#allocation5] sm:$0x1] %vm6443, 0
    %7919 = vst.msk [vmem:[#allocation5 + $0x1] sm:$0x1] %vm6443, 0
    %7920 = vst.msk [vmem:[#allocation5 + $0x2] sm:$0x1] %vm6443, 0
    %7921 = vst.msk [vmem:[#allocation5 + $0x3] sm:$0x1] %vm6443, 0
    %7922 = vst.msk [vmem:[#allocation5 + $0x4] sm:$0x1] %vm6443, 0
    %7923 = vst.msk [vmem:[#allocation5 + $0x5] sm:$0x1] %vm6443, 0
    %s7924 = scalar_lea.vmem [#allocation5], 30
    %7925 = vst.msk [vmem:[%s7924] sm:$0x1] %vm6443, 0
    %7926 = vst.msk [vmem:[%s7924 + $0x1] sm:$0x1] %vm6443, 0
    %7927 = vst.msk [vmem:[%s7924 + $0x2] sm:$0x1] %vm6443, 0
    %7928 = vst.msk [vmem:[%s7924 + $0x3] sm:$0x1] %vm6443, 0
    %7929 = vst.msk [vmem:[%s7924 + $0x4] sm:$0x1] %vm6443, 0
    %7930 = vst.msk [vmem:[%s7924 + $0x5] sm:$0x1] %vm6443, 0
    %s7931 = scalar_lea.vmem [#allocation5], 6
    %7932 = vst.msk [vmem:[%s7931] sm:$0x1] %vm6443, 0
    %7933 = vst.msk [vmem:[%s7931 + $0x6] sm:$0x1] %vm6443, 0
    %7934 = vst.msk [vmem:[%s7931 + $0xc] sm:$0x1] %vm6443, 0
    %7935 = vst.msk [vmem:[%s7931 + $0x12] sm:$0x1] %vm6443, 0
    %s7936 = scalar_lea.vmem [#allocation5], 11
    %7937 = vst.msk [vmem:[%s7936] sm:$0x1] %vm6443, 0
    %7938 = vst.msk [vmem:[%s7936 + $0x6] sm:$0x1] %vm6443, 0
    %7939 = vst.msk [vmem:[%s7936 + $0xc] sm:$0x1] %vm6443, 0
    %7940 = vst.msk [vmem:[%s7936 + $0x12] sm:$0x1] %vm6443, 0
    %s7941 = scalar_lea.vmem [#allocation5], 7
    %7942 = vst.msk [vmem:[%s7941] sm:$0x1] %vm6443, %v7827
    %7943 = vst.msk [vmem:[%s7941 + $0x1] sm:$0x1] %vm6443, %v7841
    %7944 = vst.msk [vmem:[%s7941 + $0x2] sm:$0x1] %vm6443, %v7849
    %7945 = vst.msk [vmem:[%s7941 + $0x3] sm:$0x1] %vm6443, %v7851
    %7946 = vst.msk [vmem:[%s7941 + $0x6] sm:$0x1] %vm6443, %v7834
    %7947 = vst.msk [vmem:[%s7941 + $0x7] sm:$0x1] %vm6443, %v7848
    %7948 = vst.msk [vmem:[%s7941 + $0x8] sm:$0x1] %vm6443, %v7850
    %7949 = vst.msk [vmem:[%s7941 + $0x9] sm:$0x1] %vm6443, %v7852
    %7950 = vst.msk [vmem:[%s7941 + $0xc] sm:$0x1] %vm6443, %v7876
    %7951 = vst.msk [vmem:[%s7941 + $0xd] sm:$0x1] %vm6443, %v7890
    %7952 = vst.msk [vmem:[%s7941 + $0xe] sm:$0x1] %vm6443, %v7898
    %7953 = vst.msk [vmem:[%s7941 + $0xf] sm:$0x1] %vm6443, %v7900
    %7954 = vst.msk [vmem:[%s7941 + $0x12] sm:$0x1] %vm6443, %v7883
    %7955 = vst.msk [vmem:[%s7941 + $0x13] sm:$0x1] %vm6443, %v7897
    %7956 = vst.msk [vmem:[%s7941 + $0x14] sm:$0x1] %vm6443, %v7899
    %7957 = vst.msk [vmem:[%s7941 + $0x15] sm:$0x1] %vm6443, %v7901
    %v7958 = vld [vmem:[#allocation5] sm:$0x1]
    %v7959 = vld [vmem:[#allocation5 + $0x1] sm:$0x1]
    %v7960 = vld [vmem:[#allocation5 + $0x2] sm:$0x1]
    %v7961 = vld [vmem:[#allocation5 + $0x3] sm:$0x1]
    %v7962 = vld [vmem:[#allocation5 + $0x4] sm:$0x1]
    %v7963 = vld [vmem:[#allocation5 + $0x6] sm:$0x1]
    %v7964 = vld [vmem:[#allocation5 + $0x7] sm:$0x1]
    %v7965 = vld [vmem:[#allocation5 + $0x8] sm:$0x1]
    %v7966 = vld [vmem:[#allocation5 + $0x9] sm:$0x1]
    %v7967 = vld [vmem:[#allocation5 + $0xa] sm:$0x1]
    %v7968 = vld [vmem:[#allocation5 + $0xc] sm:$0x1]
    %v7969 = vld [vmem:[#allocation5 + $0xd] sm:$0x1]
    %v7970 = vld [vmem:[#allocation5 + $0xe] sm:$0x1]
    %v7971 = vld [vmem:[#allocation5 + $0xf] sm:$0x1]
    %v7972 = vld [vmem:[#allocation5 + $0x10] sm:$0x1]
    %v7973 = vld [vmem:[#allocation5 + $0x12] sm:$0x1]
    %v7974 = vld [vmem:[#allocation5 + $0x13] sm:$0x1]
    %v7975 = vld [vmem:[#allocation5 + $0x14] sm:$0x1]
    %v7976 = vld [vmem:[#allocation5 + $0x15] sm:$0x1]
    %v7977 = vld [vmem:[#allocation5 + $0x16] sm:$0x1]
    %v7978 = vld [vmem:[#allocation5 + $0x18] sm:$0x1]
    %v7979 = vld [vmem:[#allocation5 + $0x19] sm:$0x1]
    %v7980 = vld [vmem:[#allocation5 + $0x1a] sm:$0x1]
    %v7981 = vld [vmem:[#allocation5 + $0x1b] sm:$0x1]
    %v7982 = vld [vmem:[#allocation5 + $0x1c] sm:$0x1]
    %v7983 = vld [vmem:[#allocation14] sm:$0xf]
    %v7984 = vld [vmem:[#allocation14 + $0x4] sm:$0xf]
    %v7985 = vld [vmem:[#allocation14 + $0x8] sm:$0xf]
    %v7986 = vld [vmem:[#allocation14 + $0xc] sm:$0xf]
    %v7987 = vld [vmem:[#allocation14 + $0x10] sm:$0xf]
    %v7988 = vld [vmem:[#allocation14 + $0x14] sm:$0xf]
    %v7989 = vld [vmem:[#allocation14 + $0x18] sm:$0xf]
    %v7990 = vld [vmem:[#allocation14 + $0x1c] sm:$0xf]
    %s7991 = scalar_lea.vmem [#allocation14], 32
    %v7992 = vld [vmem:[%s7991] sm:$0xf]
    %v7993 = vld [vmem:[%s7991 + $0x4] sm:$0xf]
    %v7994 = vld [vmem:[%s7991 + $0x8] sm:$0xf]
    %v7995 = vld [vmem:[%s7991 + $0xc] sm:$0xf]
    %v7996 = vld [vmem:[%s7991 + $0x10] sm:$0xf]
    %v7997 = vld [vmem:[%s7991 + $0x14] sm:$0xf]
    %v7998 = vld [vmem:[%s7991 + $0x18] sm:$0xf]
    %v7999 = vld [vmem:[%s7991 + $0x1c] sm:$0xf]
    %v8004 = vcombine.low %v7959, %v7961
    %v8005 = vcombine.low %v7969, %v7971
    %v8007 = vunpack.c.l.s4 1966171168
    %v8008 = vunpack.c.0.s8 %v8007
    %v8009 = vlaneseq
    %v8010 = vshrl.u32 %v8009, 7
    %v8011 = vsub.s32 %v8008, %v8010
    %v8012 = vrot.slane %v8004, %v8011
    %v8014 = vunpack.c.l.s4 1966171168
    %v8015 = vunpack.c.0.s8 %v8014
    %v8016 = vlaneseq
    %v8017 = vshrl.u32 %v8016, 7
    %v8018 = vsub.s32 %v8015, %v8017
    %v8019 = vrot.slane %v8005, %v8018
    %v8020 = vcombine.low %v8012, %v8019
    %v8022 = vunpack.c.l.s4 1966171168
    %v8023 = vunpack.c.0.s8 %v8022
    %v8024 = vlaneseq
    %v8025 = vshrl.u32 %v8024, 7
    %v8026 = vsub.s32 %v8023, %v8025
    %v8027 = vrot.slane %v8020, %v8026
    %v8036 = vunpack.c.l.b16 %v7992
    %v8037 = vunpack.c.l.b16 %v7993
    %v8038 = vunpack.c.l.b16 %v7994
    %v8039 = vunpack.c.l.b16 %v7995
    %v8040 = vunpack.c.l.b16 %v7996
    %v8041 = vunpack.c.l.b16 %v7997
    %v8042 = vunpack.c.l.b16 %v7998
    %v8043 = vunpack.c.l.b16 %v7999
    %v8044 = vpack.c.b16 %v8037, %v8036
    %v8045 = vpack.c.b16 %v8039, %v8038
    %v8046 = vpack.c.b16 %v8041, %v8040
    %v8047 = vpack.c.b16 %v8043, %v8042
    %v8053 = vsel %vm6675, %v8027, 0
    %8055 = vmatprep.subr.bf16.mxu0 0
    %8056 = vmatpush1.bf16.msra.mxu0 %v8044
    %8057 = vmatprep.subr.bf16.mxu0 0
    %8058 = vmatpush1.bf16.msra.mxu0 %v8045
    %8059 = vmatprep.subr.bf16.mxu0 0
    %8060 = vmatpush1.bf16.msra.mxu0 %v8046
    %8061 = vmatprep.subr.bf16.mxu0 0
    %8062 = vmatpush1.bf16.msra.mxu0 %v8047
    %8063 = vmatprep.subr.bf16.mxu0 0
    %8064 = vmatpush1.bf16.msra.mxu0 0
    %8065 = vmatprep.subr.bf16.mxu0 0
    %8066 = vmatpush1.bf16.msra.mxu0 0
    %8067 = vmatprep.subr.bf16.mxu0 0
    %8068 = vmatpush1.bf16.msra.mxu0 0
    %8069 = vmatprep.subr.bf16.mxu0 0
    %8070 = vmatpush1.bf16.msra.mxu0 0
    %8071 = vmatprep.subr.bf16.mxu0 0
    %8072 = vmatpush1.bf16.msra.mxu0 0
    %8073 = vmatprep.subr.bf16.mxu0 0
    %8074 = vmatpush1.bf16.msra.mxu0 0
    %8075 = vmatprep.subr.bf16.mxu0 0
    %8076 = vmatpush1.bf16.msra.mxu0 0
    %8077 = vmatprep.subr.bf16.mxu0 0
    %8078 = vmatpush1.bf16.msra.mxu0 0
    %8079 = vmatprep.subr.bf16.mxu0 0
    %8080 = vmatpush1.bf16.msra.mxu0 0
    %8081 = vmatprep.subr.bf16.mxu0 0
    %8082 = vmatpush1.bf16.msra.mxu0 0
    %8083 = vmatprep.subr.bf16.mxu0 0
    %8084 = vmatpush1.bf16.msra.mxu0 0
    %8085 = vmatprep.subr.bf16.mxu0 0
    %8086 = vmatpush1.bf16.msra.mxu0 0
    %8087 = vmatprep.mubr.bf16.mxu0 0
    %8088 = vmatmul.mubr.bf16.gmra.mrb[0].mxu0 %v8053
    %v8089 = vpop.f32.mrb[0].mxu0
    %v8090 = vadd.f32 0.0, %v8089
    %v8091 = vpop.f32.mrb[0].mxu0
    %v8092 = vpop.f32.mrb[0].mxu0
    %v8093 = vpop.f32.mrb[0].mxu0
    %8094 = vdwg.mxu0
    %v8099 = vcombine.low %v7958, %v7960
    %v8100 = vcombine.low %v7968, %v7970
    %v8102 = vunpack.c.l.s4 1966171168
    %v8103 = vunpack.c.0.s8 %v8102
    %v8104 = vlaneseq
    %v8105 = vshrl.u32 %v8104, 7
    %v8106 = vsub.s32 %v8103, %v8105
    %v8107 = vrot.slane %v8099, %v8106
    %v8109 = vunpack.c.l.s4 1966171168
    %v8110 = vunpack.c.0.s8 %v8109
    %v8111 = vlaneseq
    %v8112 = vshrl.u32 %v8111, 7
    %v8113 = vsub.s32 %v8110, %v8112
    %v8114 = vrot.slane %v8100, %v8113
    %v8115 = vcombine.low %v8107, %v8114
    %v8117 = vunpack.c.l.s4 1966171168
    %v8118 = vunpack.c.0.s8 %v8117
    %v8119 = vlaneseq
    %v8120 = vshrl.u32 %v8119, 7
    %v8121 = vsub.s32 %v8118, %v8120
    %v8122 = vrot.slane %v8115, %v8121
    %v8131 = vunpack.c.l.b16 %v7983
    %v8132 = vunpack.c.l.b16 %v7984
    %v8133 = vunpack.c.l.b16 %v7985
    %v8134 = vunpack.c.l.b16 %v7986
    %v8135 = vunpack.c.l.b16 %v7987
    %v8136 = vunpack.c.l.b16 %v7988
    %v8137 = vunpack.c.l.b16 %v7989
    %v8138 = vunpack.c.l.b16 %v7990
    %v8139 = vpack.c.b16 %v8132, %v8131
    %v8140 = vpack.c.b16 %v8134, %v8133
    %v8141 = vpack.c.b16 %v8136, %v8135
    %v8142 = vpack.c.b16 %v8138, %v8137
    %v8148 = vsel %vm6675, %v8122, 0
    %8150 = vmatprep.subr.bf16.mxu0 0
    %8151 = vmatpush1.bf16.msra.mxu0 %v8139
    %8152 = vmatprep.subr.bf16.mxu0 0
    %8153 = vmatpush1.bf16.msra.mxu0 %v8140
    %8154 = vmatprep.subr.bf16.mxu0 0
    %8155 = vmatpush1.bf16.msra.mxu0 %v8141
    %8156 = vmatprep.subr.bf16.mxu0 0
    %8157 = vmatpush1.bf16.msra.mxu0 %v8142
    %8158 = vmatprep.subr.bf16.mxu0 0
    %8159 = vmatpush1.bf16.msra.mxu0 0
    %8160 = vmatprep.subr.bf16.mxu0 0
    %8161 = vmatpush1.bf16.msra.mxu0 0
    %8162 = vmatprep.subr.bf16.mxu0 0
    %8163 = vmatpush1.bf16.msra.mxu0 0
    %8164 = vmatprep.subr.bf16.mxu0 0
    %8165 = vmatpush1.bf16.msra.mxu0 0
    %8166 = vmatprep.subr.bf16.mxu0 0
    %8167 = vmatpush1.bf16.msra.mxu0 0
    %8168 = vmatprep.subr.bf16.mxu0 0
    %8169 = vmatpush1.bf16.msra.mxu0 0
    %8170 = vmatprep.subr.bf16.mxu0 0
    %8171 = vmatpush1.bf16.msra.mxu0 0
    %8172 = vmatprep.subr.bf16.mxu0 0
    %8173 = vmatpush1.bf16.msra.mxu0 0
    %8174 = vmatprep.subr.bf16.mxu0 0
    %8175 = vmatpush1.bf16.msra.mxu0 0
    %8176 = vmatprep.subr.bf16.mxu0 0
    %8177 = vmatpush1.bf16.msra.mxu0 0
    %8178 = vmatprep.subr.bf16.mxu0 0
    %8179 = vmatpush1.bf16.msra.mxu0 0
    %8180 = vmatprep.subr.bf16.mxu0 0
    %8181 = vmatpush1.bf16.msra.mxu0 0
    %8182 = vmatprep.mubr.bf16.mxu0 0
    %8183 = vmatmul.mubr.bf16.gmra.mrb[0].mxu0 %v8148
    %v8184 = vpop.f32.mrb[0].mxu0
    %v8185 = vadd.f32 %v8090, %v8184
    %v8186 = vpop.f32.mrb[0].mxu0
    %v8187 = vpop.f32.mrb[0].mxu0
    %v8188 = vpop.f32.mrb[0].mxu0
    %8189 = vdwg.mxu0
    %s8190 = scalar_lea.vmem [#allocation14], 64
    %v8191 = vld [vmem:[%s8190] sm:$0xf]
    %v8192 = vld [vmem:[%s8190 + $0x4] sm:$0xf]
    %v8193 = vld [vmem:[%s8190 + $0x8] sm:$0xf]
    %v8194 = vld [vmem:[%s8190 + $0xc] sm:$0xf]
    %v8195 = vld [vmem:[%s8190 + $0x10] sm:$0xf]
    %v8196 = vld [vmem:[%s8190 + $0x14] sm:$0xf]
    %v8197 = vld [vmem:[%s8190 + $0x18] sm:$0xf]
    %v8198 = vld [vmem:[%s8190 + $0x1c] sm:$0xf]
    %v8201 = vcombine.low %v7960, %v7962
    %v8202 = vcombine.low %v7970, %v7972
    %v8204 = vunpack.c.l.s4 1966171168
    %v8205 = vunpack.c.0.s8 %v8204
    %v8206 = vlaneseq
    %v8207 = vshrl.u32 %v8206, 7
    %v8208 = vsub.s32 %v8205, %v8207
    %v8209 = vrot.slane %v8201, %v8208
    %v8211 = vunpack.c.l.s4 1966171168
    %v8212 = vunpack.c.0.s8 %v8211
    %v8213 = vlaneseq
    %v8214 = vshrl.u32 %v8213, 7
    %v8215 = vsub.s32 %v8212, %v8214
    %v8216 = vrot.slane %v8202, %v8215
    %v8217 = vcombine.low %v8209, %v8216
    %v8219 = vunpack.c.l.s4 1966171168
    %v8220 = vunpack.c.0.s8 %v8219
    %v8221 = vlaneseq
    %v8222 = vshrl.u32 %v8221, 7
    %v8223 = vsub.s32 %v8220, %v8222
    %v8224 = vrot.slane %v8217, %v8223
    %v8233 = vunpack.c.l.b16 %v8191
    %v8234 = vunpack.c.l.b16 %v8192
    %v8235 = vunpack.c.l.b16 %v8193
    %v8236 = vunpack.c.l.b16 %v8194
    %v8237 = vunpack.c.l.b16 %v8195
    %v8238 = vunpack.c.l.b16 %v8196
    %v8239 = vunpack.c.l.b16 %v8197
    %v8240 = vunpack.c.l.b16 %v8198
    %v8241 = vpack.c.b16 %v8234, %v8233
    %v8242 = vpack.c.b16 %v8236, %v8235
    %v8243 = vpack.c.b16 %v8238, %v8237
    %v8244 = vpack.c.b16 %v8240, %v8239
    %v8250 = vsel %vm6675, %v8224, 0
    %8252 = vmatprep.subr.bf16.mxu0 0
    %8253 = vmatpush1.bf16.msra.mxu0 %v8241
    %8254 = vmatprep.subr.bf16.mxu0 0
    %8255 = vmatpush1.bf16.msra.mxu0 %v8242
    %8256 = vmatprep.subr.bf16.mxu0 0
    %8257 = vmatpush1.bf16.msra.mxu0 %v8243
    %8258 = vmatprep.subr.bf16.mxu0 0
    %8259 = vmatpush1.bf16.msra.mxu0 %v8244
    %8260 = vmatprep.subr.bf16.mxu0 0
    %8261 = vmatpush1.bf16.msra.mxu0 0
    %8262 = vmatprep.subr.bf16.mxu0 0
    %8263 = vmatpush1.bf16.msra.mxu0 0
    %8264 = vmatprep.subr.bf16.mxu0 0
    %8265 = vmatpush1.bf16.msra.mxu0 0
    %8266 = vmatprep.subr.bf16.mxu0 0
    %8267 = vmatpush1.bf16.msra.mxu0 0
    %8268 = vmatprep.subr.bf16.mxu0 0
    %8269 = vmatpush1.bf16.msra.mxu0 0
    %8270 = vmatprep.subr.bf16.mxu0 0
    %8271 = vmatpush1.bf16.msra.mxu0 0
    %8272 = vmatprep.subr.bf16.mxu0 0
    %8273 = vmatpush1.bf16.msra.mxu0 0
    %8274 = vmatprep.subr.bf16.mxu0 0
    %8275 = vmatpush1.bf16.msra.mxu0 0
    %8276 = vmatprep.subr.bf16.mxu0 0
    %8277 = vmatpush1.bf16.msra.mxu0 0
    %8278 = vmatprep.subr.bf16.mxu0 0
    %8279 = vmatpush1.bf16.msra.mxu0 0
    %8280 = vmatprep.subr.bf16.mxu0 0
    %8281 = vmatpush1.bf16.msra.mxu0 0
    %8282 = vmatprep.subr.bf16.mxu0 0
    %8283 = vmatpush1.bf16.msra.mxu0 0
    %8284 = vmatprep.mubr.bf16.mxu0 0
    %8285 = vmatmul.mubr.bf16.gmra.mrb[0].mxu0 %v8250
    %v8286 = vpop.f32.mrb[0].mxu0
    %v8287 = vadd.f32 0.0, %v8286
    %v8288 = vpop.f32.mrb[0].mxu0
    %v8289 = vpop.f32.mrb[0].mxu0
    %v8290 = vpop.f32.mrb[0].mxu0
    %8291 = vdwg.mxu0
    %v8292 = vadd.f32 %v8185, %v8287
    %s8293 = scalar_lea.vmem [#allocation14], 96
    %v8294 = vld [vmem:[%s8293] sm:$0xf]
    %v8295 = vld [vmem:[%s8293 + $0x4] sm:$0xf]
    %v8296 = vld [vmem:[%s8293 + $0x8] sm:$0xf]
    %v8297 = vld [vmem:[%s8293 + $0xc] sm:$0xf]
    %v8298 = vld [vmem:[%s8293 + $0x10] sm:$0xf]
    %v8299 = vld [vmem:[%s8293 + $0x14] sm:$0xf]
    %v8300 = vld [vmem:[%s8293 + $0x18] sm:$0xf]
    %v8301 = vld [vmem:[%s8293 + $0x1c] sm:$0xf]
    %v8306 = vcombine.low %v7963, %v7965
    %v8307 = vcombine.low %v7973, %v7975
    %v8309 = vunpack.c.l.s4 1966171168
    %v8310 = vunpack.c.0.s8 %v8309
    %v8311 = vlaneseq
    %v8312 = vshrl.u32 %v8311, 7
    %v8313 = vsub.s32 %v8310, %v8312
    %v8314 = vrot.slane %v8306, %v8313
    %v8316 = vunpack.c.l.s4 1966171168
    %v8317 = vunpack.c.0.s8 %v8316
    %v8318 = vlaneseq
    %v8319 = vshrl.u32 %v8318, 7
    %v8320 = vsub.s32 %v8317, %v8319
    %v8321 = vrot.slane %v8307, %v8320
    %v8322 = vcombine.low %v8314, %v8321
    %v8324 = vunpack.c.l.s4 1966171168
    %v8325 = vunpack.c.0.s8 %v8324
    %v8326 = vlaneseq
    %v8327 = vshrl.u32 %v8326, 7
    %v8328 = vsub.s32 %v8325, %v8327
    %v8329 = vrot.slane %v8322, %v8328
    %v8338 = vunpack.c.l.b16 %v8294
    %v8339 = vunpack.c.l.b16 %v8295
    %v8340 = vunpack.c.l.b16 %v8296
    %v8341 = vunpack.c.l.b16 %v8297
    %v8342 = vunpack.c.l.b16 %v8298
    %v8343 = vunpack.c.l.b16 %v8299
    %v8344 = vunpack.c.l.b16 %v8300
    %v8345 = vunpack.c.l.b16 %v8301
    %v8346 = vpack.c.b16 %v8339, %v8338
    %v8347 = vpack.c.b16 %v8341, %v8340
    %v8348 = vpack.c.b16 %v8343, %v8342
    %v8349 = vpack.c.b16 %v8345, %v8344
    %v8355 = vsel %vm6675, %v8329, 0
    %8357 = vmatprep.subr.bf16.mxu0 0
    %8358 = vmatpush1.bf16.msra.mxu0 %v8346
    %8359 = vmatprep.subr.bf16.mxu0 0
    %8360 = vmatpush1.bf16.msra.mxu0 %v8347
    %8361 = vmatprep.subr.bf16.mxu0 0
    %8362 = vmatpush1.bf16.msra.mxu0 %v8348
    %8363 = vmatprep.subr.bf16.mxu0 0
    %8364 = vmatpush1.bf16.msra.mxu0 %v8349
    %8365 = vmatprep.subr.bf16.mxu0 0
    %8366 = vmatpush1.bf16.msra.mxu0 0
    %8367 = vmatprep.subr.bf16.mxu0 0
    %8368 = vmatpush1.bf16.msra.mxu0 0
    %8369 = vmatprep.subr.bf16.mxu0 0
    %8370 = vmatpush1.bf16.msra.mxu0 0
    %8371 = vmatprep.subr.bf16.mxu0 0
    %8372 = vmatpush1.bf16.msra.mxu0 0
    %8373 = vmatprep.subr.bf16.mxu0 0
    %8374 = vmatpush1.bf16.msra.mxu0 0
    %8375 = vmatprep.subr.bf16.mxu0 0
    %8376 = vmatpush1.bf16.msra.mxu0 0
    %8377 = vmatprep.subr.bf16.mxu0 0
    %8378 = vmatpush1.bf16.msra.mxu0 0
    %8379 = vmatprep.subr.bf16.mxu0 0
    %8380 = vmatpush1.bf16.msra.mxu0 0
    %8381 = vmatprep.subr.bf16.mxu0 0
    %8382 = vmatpush1.bf16.msra.mxu0 0
    %8383 = vmatprep.subr.bf16.mxu0 0
    %8384 = vmatpush1.bf16.msra.mxu0 0
    %8385 = vmatprep.subr.bf16.mxu0 0
    %8386 = vmatpush1.bf16.msra.mxu0 0
    %8387 = vmatprep.subr.bf16.mxu0 0
    %8388 = vmatpush1.bf16.msra.mxu0 0
    %8389 = vmatprep.mubr.bf16.mxu0 0
    %8390 = vmatmul.mubr.bf16.gmra.mrb[0].mxu0 %v8355
    %v8391 = vpop.f32.mrb[0].mxu0
    %v8392 = vadd.f32 0.0, %v8391
    %v8393 = vpop.f32.mrb[0].mxu0
    %v8394 = vpop.f32.mrb[0].mxu0
    %v8395 = vpop.f32.mrb[0].mxu0
    %8396 = vdwg.mxu0
    %v8397 = vadd.f32 %v8292, %v8392
    %s8398 = scalar_lea.vmem [#allocation14], 128
    %v8399 = vld [vmem:[%s8398] sm:$0xf]
    %v8400 = vld [vmem:[%s8398 + $0x4] sm:$0xf]
    %v8401 = vld [vmem:[%s8398 + $0x8] sm:$0xf]
    %v8402 = vld [vmem:[%s8398 + $0xc] sm:$0xf]
    %v8403 = vld [vmem:[%s8398 + $0x10] sm:$0xf]
    %v8404 = vld [vmem:[%s8398 + $0x14] sm:$0xf]
    %v8405 = vld [vmem:[%s8398 + $0x18] sm:$0xf]
    %v8406 = vld [vmem:[%s8398 + $0x1c] sm:$0xf]
    %v8411 = vcombine.low %v7964, %v7966
    %v8412 = vcombine.low %v7974, %v7976
    %v8414 = vunpack.c.l.s4 1966171168
    %v8415 = vunpack.c.0.s8 %v8414
    %v8416 = vlaneseq
    %v8417 = vshrl.u32 %v8416, 7
    %v8418 = vsub.s32 %v8415, %v8417
    %v8419 = vrot.slane %v8411, %v8418
    %v8421 = vunpack.c.l.s4 1966171168
    %v8422 = vunpack.c.0.s8 %v8421
    %v8423 = vlaneseq
    %v8424 = vshrl.u32 %v8423, 7
    %v8425 = vsub.s32 %v8422, %v8424
    %v8426 = vrot.slane %v8412, %v8425
    %v8427 = vcombine.low %v8419, %v8426
    %v8429 = vunpack.c.l.s4 1966171168
    %v8430 = vunpack.c.0.s8 %v8429
    %v8431 = vlaneseq
    %v8432 = vshrl.u32 %v8431, 7
    %v8433 = vsub.s32 %v8430, %v8432
    %v8434 = vrot.slane %v8427, %v8433
    %v8443 = vunpack.c.l.b16 %v8399
    %v8444 = vunpack.c.l.b16 %v8400
    %v8445 = vunpack.c.l.b16 %v8401
    %v8446 = vunpack.c.l.b16 %v8402
    %v8447 = vunpack.c.l.b16 %v8403
    %v8448 = vunpack.c.l.b16 %v8404
    %v8449 = vunpack.c.l.b16 %v8405
    %v8450 = vunpack.c.l.b16 %v8406
    %v8451 = vpack.c.b16 %v8444, %v8443
    %v8452 = vpack.c.b16 %v8446, %v8445
    %v8453 = vpack.c.b16 %v8448, %v8447
    %v8454 = vpack.c.b16 %v8450, %v8449
    %v8460 = vsel %vm6675, %v8434, 0
    %8462 = vmatprep.subr.bf16.mxu0 0
    %8463 = vmatpush1.bf16.msra.mxu0 %v8451
    %8464 = vmatprep.subr.bf16.mxu0 0
    %8465 = vmatpush1.bf16.msra.mxu0 %v8452
    %8466 = vmatprep.subr.bf16.mxu0 0
    %8467 = vmatpush1.bf16.msra.mxu0 %v8453
    %8468 = vmatprep.subr.bf16.mxu0 0
    %8469 = vmatpush1.bf16.msra.mxu0 %v8454
    %8470 = vmatprep.subr.bf16.mxu0 0
    %8471 = vmatpush1.bf16.msra.mxu0 0
    %8472 = vmatprep.subr.bf16.mxu0 0
    %8473 = vmatpush1.bf16.msra.mxu0 0
    %8474 = vmatprep.subr.bf16.mxu0 0
    %8475 = vmatpush1.bf16.msra.mxu0 0
    %8476 = vmatprep.subr.bf16.mxu0 0
    %8477 = vmatpush1.bf16.msra.mxu0 0
    %8478 = vmatprep.subr.bf16.mxu0 0
    %8479 = vmatpush1.bf16.msra.mxu0 0
    %8480 = vmatprep.subr.bf16.mxu0 0
    %8481 = vmatpush1.bf16.msra.mxu0 0
    %8482 = vmatprep.subr.bf16.mxu0 0
    %8483 = vmatpush1.bf16.msra.mxu0 0
    %8484 = vmatprep.subr.bf16.mxu0 0
    %8485 = vmatpush1.bf16.msra.mxu0 0
    %8486 = vmatprep.subr.bf16.mxu0 0
    %8487 = vmatpush1.bf16.msra.mxu0 0
    %8488 = vmatprep.subr.bf16.mxu0 0
    %8489 = vmatpush1.bf16.msra.mxu0 0
    %8490 = vmatprep.subr.bf16.mxu0 0
    %8491 = vmatpush1.bf16.msra.mxu0 0
    %8492 = vmatprep.subr.bf16.mxu0 0
    %8493 = vmatpush1.bf16.msra.mxu0 0
    %8494 = vmatprep.mubr.bf16.mxu0 0
    %8495 = vmatmul.mubr.bf16.gmra.mrb[0].mxu0 %v8460
    %v8496 = vpop.f32.mrb[0].mxu0
    %v8497 = vadd.f32 0.0, %v8496
    %v8498 = vpop.f32.mrb[0].mxu0
    %v8499 = vpop.f32.mrb[0].mxu0
    %v8500 = vpop.f32.mrb[0].mxu0
    %8501 = vdwg.mxu0
    %v8502 = vadd.f32 %v8397, %v8497
    %s8503 = scalar_lea.vmem [#allocation14], 160
    %v8504 = vld [vmem:[%s8503] sm:$0xf]
    %v8505 = vld [vmem:[%s8503 + $0x4] sm:$0xf]
    %v8506 = vld [vmem:[%s8503 + $0x8] sm:$0xf]
    %v8507 = vld [vmem:[%s8503 + $0xc] sm:$0xf]
    %v8508 = vld [vmem:[%s8503 + $0x10] sm:$0xf]
    %v8509 = vld [vmem:[%s8503 + $0x14] sm:$0xf]
    %v8510 = vld [vmem:[%s8503 + $0x18] sm:$0xf]
    %v8511 = vld [vmem:[%s8503 + $0x1c] sm:$0xf]
    %v8514 = vcombine.low %v7965, %v7967
    %v8515 = vcombine.low %v7975, %v7977
    %v8517 = vunpack.c.l.s4 1966171168
    %v8518 = vunpack.c.0.s8 %v8517
    %v8519 = vlaneseq
    %v8520 = vshrl.u32 %v8519, 7
    %v8521 = vsub.s32 %v8518, %v8520
    %v8522 = vrot.slane %v8514, %v8521
    %v8524 = vunpack.c.l.s4 1966171168
    %v8525 = vunpack.c.0.s8 %v8524
    %v8526 = vlaneseq
    %v8527 = vshrl.u32 %v8526, 7
    %v8528 = vsub.s32 %v8525, %v8527
    %v8529 = vrot.slane %v8515, %v8528
    %v8530 = vcombine.low %v8522, %v8529
    %v8532 = vunpack.c.l.s4 1966171168
    %v8533 = vunpack.c.0.s8 %v8532
    %v8534 = vlaneseq
    %v8535 = vshrl.u32 %v8534, 7
    %v8536 = vsub.s32 %v8533, %v8535
    %v8537 = vrot.slane %v8530, %v8536
    %v8546 = vunpack.c.l.b16 %v8504
    %v8547 = vunpack.c.l.b16 %v8505
    %v8548 = vunpack.c.l.b16 %v8506
    %v8549 = vunpack.c.l.b16 %v8507
    %v8550 = vunpack.c.l.b16 %v8508
    %v8551 = vunpack.c.l.b16 %v8509
    %v8552 = vunpack.c.l.b16 %v8510
    %v8553 = vunpack.c.l.b16 %v8511
    %v8554 = vpack.c.b16 %v8547, %v8546
    %v8555 = vpack.c.b16 %v8549, %v8548
    %v8556 = vpack.c.b16 %v8551, %v8550
    %v8557 = vpack.c.b16 %v8553, %v8552
    %v8563 = vsel %vm6675, %v8537, 0
    %8565 = vmatprep.subr.bf16.mxu0 0
    %8566 = vmatpush1.bf16.msra.mxu0 %v8554
    %8567 = vmatprep.subr.bf16.mxu0 0
    %8568 = vmatpush1.bf16.msra.mxu0 %v8555
    %8569 = vmatprep.subr.bf16.mxu0 0
    %8570 = vmatpush1.bf16.msra.mxu0 %v8556
    %8571 = vmatprep.subr.bf16.mxu0 0
    %8572 = vmatpush1.bf16.msra.mxu0 %v8557
    %8573 = vmatprep.subr.bf16.mxu0 0
    %8574 = vmatpush1.bf16.msra.mxu0 0
    %8575 = vmatprep.subr.bf16.mxu0 0
    %8576 = vmatpush1.bf16.msra.mxu0 0
    %8577 = vmatprep.subr.bf16.mxu0 0
    %8578 = vmatpush1.bf16.msra.mxu0 0
    %8579 = vmatprep.subr.bf16.mxu0 0
    %8580 = vmatpush1.bf16.msra.mxu0 0
    %8581 = vmatprep.subr.bf16.mxu0 0
    %8582 = vmatpush1.bf16.msra.mxu0 0
    %8583 = vmatprep.subr.bf16.mxu0 0
    %8584 = vmatpush1.bf16.msra.mxu0 0
    %8585 = vmatprep.subr.bf16.mxu0 0
    %8586 = vmatpush1.bf16.msra.mxu0 0
    %8587 = vmatprep.subr.bf16.mxu0 0
    %8588 = vmatpush1.bf16.msra.mxu0 0
    %8589 = vmatprep.subr.bf16.mxu0 0
    %8590 = vmatpush1.bf16.msra.mxu0 0
    %8591 = vmatprep.subr.bf16.mxu0 0
    %8592 = vmatpush1.bf16.msra.mxu0 0
    %8593 = vmatprep.subr.bf16.mxu0 0
    %8594 = vmatpush1.bf16.msra.mxu0 0
    %8595 = vmatprep.subr.bf16.mxu0 0
    %8596 = vmatpush1.bf16.msra.mxu0 0
    %8597 = vmatprep.mubr.bf16.mxu0 0
    %8598 = vmatmul.mubr.bf16.gmra.mrb[0].mxu0 %v8563
    %v8599 = vpop.f32.mrb[0].mxu0
    %v8600 = vadd.f32 0.0, %v8599
    %v8601 = vpop.f32.mrb[0].mxu0
    %v8602 = vpop.f32.mrb[0].mxu0
    %v8603 = vpop.f32.mrb[0].mxu0
    %8604 = vdwg.mxu0
    %v8605 = vadd.f32 %v8502, %v8600
    %s8606 = scalar_lea.vmem [#allocation14], 192
    %v8607 = vld [vmem:[%s8606] sm:$0xf]
    %v8608 = vld [vmem:[%s8606 + $0x4] sm:$0xf]
    %v8609 = vld [vmem:[%s8606 + $0x8] sm:$0xf]
    %v8610 = vld [vmem:[%s8606 + $0xc] sm:$0xf]
    %v8611 = vld [vmem:[%s8606 + $0x10] sm:$0xf]
    %v8612 = vld [vmem:[%s8606 + $0x14] sm:$0xf]
    %v8613 = vld [vmem:[%s8606 + $0x18] sm:$0xf]
    %v8614 = vld [vmem:[%s8606 + $0x1c] sm:$0xf]
    %v8617 = vcombine.low %v7978, %v7980
    %v8619 = vunpack.c.l.s4 1966171168
    %v8620 = vunpack.c.0.s8 %v8619
    %v8621 = vlaneseq
    %v8622 = vshrl.u32 %v8621, 7
    %v8623 = vsub.s32 %v8620, %v8622
    %v8624 = vrot.slane %v8617, %v8623
    %v8625 = vcombine.low %v8114, %v8624
    %v8627 = vunpack.c.l.s4 1966171168
    %v8628 = vunpack.c.0.s8 %v8627
    %v8629 = vlaneseq
    %v8630 = vshrl.u32 %v8629, 7
    %v8631 = vsub.s32 %v8628, %v8630
    %v8632 = vrot.slane %v8625, %v8631
    %v8641 = vunpack.c.l.b16 %v8607
    %v8642 = vunpack.c.l.b16 %v8608
    %v8643 = vunpack.c.l.b16 %v8609
    %v8644 = vunpack.c.l.b16 %v8610
    %v8645 = vunpack.c.l.b16 %v8611
    %v8646 = vunpack.c.l.b16 %v8612
    %v8647 = vunpack.c.l.b16 %v8613
    %v8648 = vunpack.c.l.b16 %v8614
    %v8649 = vpack.c.b16 %v8642, %v8641
    %v8650 = vpack.c.b16 %v8644, %v8643
    %v8651 = vpack.c.b16 %v8646, %v8645
    %v8652 = vpack.c.b16 %v8648, %v8647
    %v8658 = vsel %vm6675, %v8632, 0
    %8660 = vmatprep.subr.bf16.mxu0 0
    %8661 = vmatpush1.bf16.msra.mxu0 %v8649
    %8662 = vmatprep.subr.bf16.mxu0 0
    %8663 = vmatpush1.bf16.msra.mxu0 %v8650
    %8664 = vmatprep.subr.bf16.mxu0 0
    %8665 = vmatpush1.bf16.msra.mxu0 %v8651
    %8666 = vmatprep.subr.bf16.mxu0 0
    %8667 = vmatpush1.bf16.msra.mxu0 %v8652
    %8668 = vmatprep.subr.bf16.mxu0 0
    %8669 = vmatpush1.bf16.msra.mxu0 0
    %8670 = vmatprep.subr.bf16.mxu0 0
    %8671 = vmatpush1.bf16.msra.mxu0 0
    %8672 = vmatprep.subr.bf16.mxu0 0
    %8673 = vmatpush1.bf16.msra.mxu0 0
    %8674 = vmatprep.subr.bf16.mxu0 0
    %8675 = vmatpush1.bf16.msra.mxu0 0
    %8676 = vmatprep.subr.bf16.mxu0 0
    %8677 = vmatpush1.bf16.msra.mxu0 0
    %8678 = vmatprep.subr.bf16.mxu0 0
    %8679 = vmatpush1.bf16.msra.mxu0 0
    %8680 = vmatprep.subr.bf16.mxu0 0
    %8681 = vmatpush1.bf16.msra.mxu0 0
    %8682 = vmatprep.subr.bf16.mxu0 0
    %8683 = vmatpush1.bf16.msra.mxu0 0
    %8684 = vmatprep.subr.bf16.mxu0 0
    %8685 = vmatpush1.bf16.msra.mxu0 0
    %8686 = vmatprep.subr.bf16.mxu0 0
    %8687 = vmatpush1.bf16.msra.mxu0 0
    %8688 = vmatprep.subr.bf16.mxu0 0
    %8689 = vmatpush1.bf16.msra.mxu0 0
    %8690 = vmatprep.subr.bf16.mxu0 0
    %8691 = vmatpush1.bf16.msra.mxu0 0
    %8692 = vmatprep.mubr.bf16.mxu0 0
    %8693 = vmatmul.mubr.bf16.gmra.mrb[0].mxu0 %v8658
    %v8694 = vpop.f32.mrb[0].mxu0
    %v8695 = vadd.f32 0.0, %v8694
    %v8696 = vpop.f32.mrb[0].mxu0
    %v8697 = vpop.f32.mrb[0].mxu0
    %v8698 = vpop.f32.mrb[0].mxu0
    %8699 = vdwg.mxu0
    %v8700 = vadd.f32 %v8605, %v8695
    %s8701 = scalar_lea.vmem [#allocation14], 224
    %v8702 = vld [vmem:[%s8701] sm:$0xf]
    %v8703 = vld [vmem:[%s8701 + $0x4] sm:$0xf]
    %v8704 = vld [vmem:[%s8701 + $0x8] sm:$0xf]
    %v8705 = vld [vmem:[%s8701 + $0xc] sm:$0xf]
    %v8706 = vld [vmem:[%s8701 + $0x10] sm:$0xf]
    %v8707 = vld [vmem:[%s8701 + $0x14] sm:$0xf]
    %v8708 = vld [vmem:[%s8701 + $0x18] sm:$0xf]
    %v8709 = vld [vmem:[%s8701 + $0x1c] sm:$0xf]
    %v8712 = vcombine.low %v7979, %v7981
    %v8714 = vunpack.c.l.s4 1966171168
    %v8715 = vunpack.c.0.s8 %v8714
    %v8716 = vlaneseq
    %v8717 = vshrl.u32 %v8716, 7
    %v8718 = vsub.s32 %v8715, %v8717
    %v8719 = vrot.slane %v8712, %v8718
    %v8720 = vcombine.low %v8019, %v8719
    %v8722 = vunpack.c.l.s4 1966171168
    %v8723 = vunpack.c.0.s8 %v8722
    %v8724 = vlaneseq
    %v8725 = vshrl.u32 %v8724, 7
    %v8726 = vsub.s32 %v8723, %v8725
    %v8727 = vrot.slane %v8720, %v8726
    %v8736 = vunpack.c.l.b16 %v8702
    %v8737 = vunpack.c.l.b16 %v8703
    %v8738 = vunpack.c.l.b16 %v8704
    %v8739 = vunpack.c.l.b16 %v8705
    %v8740 = vunpack.c.l.b16 %v8706
    %v8741 = vunpack.c.l.b16 %v8707
    %v8742 = vunpack.c.l.b16 %v8708
    %v8743 = vunpack.c.l.b16 %v8709
    %v8744 = vpack.c.b16 %v8737, %v8736
    %v8745 = vpack.c.b16 %v8739, %v8738
    %v8746 = vpack.c.b16 %v8741, %v8740
    %v8747 = vpack.c.b16 %v8743, %v8742
    %v8753 = vsel %vm6675, %v8727, 0
    %8755 = vmatprep.subr.bf16.mxu0 0
    %8756 = vmatpush1.bf16.msra.mxu0 %v8744
    %8757 = vmatprep.subr.bf16.mxu0 0
    %8758 = vmatpush1.bf16.msra.mxu0 %v8745
    %8759 = vmatprep.subr.bf16.mxu0 0
    %8760 = vmatpush1.bf16.msra.mxu0 %v8746
    %8761 = vmatprep.subr.bf16.mxu0 0
    %8762 = vmatpush1.bf16.msra.mxu0 %v8747
    %8763 = vmatprep.subr.bf16.mxu0 0
    %8764 = vmatpush1.bf16.msra.mxu0 0
    %8765 = vmatprep.subr.bf16.mxu0 0
    %8766 = vmatpush1.bf16.msra.mxu0 0
    %8767 = vmatprep.subr.bf16.mxu0 0
    %8768 = vmatpush1.bf16.msra.mxu0 0
    %8769 = vmatprep.subr.bf16.mxu0 0
    %8770 = vmatpush1.bf16.msra.mxu0 0
    %8771 = vmatprep.subr.bf16.mxu0 0
    %8772 = vmatpush1.bf16.msra.mxu0 0
    %8773 = vmatprep.subr.bf16.mxu0 0
    %8774 = vmatpush1.bf16.msra.mxu0 0
    %8775 = vmatprep.subr.bf16.mxu0 0
    %8776 = vmatpush1.bf16.msra.mxu0 0
    %8777 = vmatprep.subr.bf16.mxu0 0
    %8778 = vmatpush1.bf16.msra.mxu0 0
    %8779 = vmatprep.subr.bf16.mxu0 0
    %8780 = vmatpush1.bf16.msra.mxu0 0
    %8781 = vmatprep.subr.bf16.mxu0 0
    %8782 = vmatpush1.bf16.msra.mxu0 0
    %8783 = vmatprep.subr.bf16.mxu0 0
    %8784 = vmatpush1.bf16.msra.mxu0 0
    %8785 = vmatprep.subr.bf16.mxu0 0
    %8786 = vmatpush1.bf16.msra.mxu0 0
    %8787 = vmatprep.mubr.bf16.mxu0 0
    %8788 = vmatmul.mubr.bf16.gmra.mrb[0].mxu0 %v8753
    %v8789 = vpop.f32.mrb[0].mxu0
    %v8790 = vadd.f32 0.0, %v8789
    %v8791 = vpop.f32.mrb[0].mxu0
    %v8792 = vpop.f32.mrb[0].mxu0
    %v8793 = vpop.f32.mrb[0].mxu0
    %8794 = vdwg.mxu0
    %v8795 = vadd.f32 %v8700, %v8790
    %s8796 = scalar_lea.vmem [#allocation14], 256
    %v8797 = vld [vmem:[%s8796] sm:$0xf]
    %v8798 = vld [vmem:[%s8796 + $0x4] sm:$0xf]
    %v8799 = vld [vmem:[%s8796 + $0x8] sm:$0xf]
    %v8800 = vld [vmem:[%s8796 + $0xc] sm:$0xf]
    %v8801 = vld [vmem:[%s8796 + $0x10] sm:$0xf]
    %v8802 = vld [vmem:[%s8796 + $0x14] sm:$0xf]
    %v8803 = vld [vmem:[%s8796 + $0x18] sm:$0xf]
    %v8804 = vld [vmem:[%s8796 + $0x1c] sm:$0xf]
    %v8806 = vcombine.low %v7980, %v7982
    %v8808 = vunpack.c.l.s4 1966171168
    %v8809 = vunpack.c.0.s8 %v8808
    %v8810 = vlaneseq
    %v8811 = vshrl.u32 %v8810, 7
    %v8812 = vsub.s32 %v8809, %v8811
    %v8813 = vrot.slane %v8806, %v8812
    %v8814 = vcombine.low %v8216, %v8813
    %v8816 = vunpack.c.l.s4 1966171168
    %v8817 = vunpack.c.0.s8 %v8816
    %v8818 = vlaneseq
    %v8819 = vshrl.u32 %v8818, 7
    %v8820 = vsub.s32 %v8817, %v8819
    %v8821 = vrot.slane %v8814, %v8820
    %v8830 = vunpack.c.l.b16 %v8797
    %v8831 = vunpack.c.l.b16 %v8798
    %v8832 = vunpack.c.l.b16 %v8799
    %v8833 = vunpack.c.l.b16 %v8800
    %v8834 = vunpack.c.l.b16 %v8801
    %v8835 = vunpack.c.l.b16 %v8802
    %v8836 = vunpack.c.l.b16 %v8803
    %v8837 = vunpack.c.l.b16 %v8804
    %v8838 = vpack.c.b16 %v8831, %v8830
    %v8839 = vpack.c.b16 %v8833, %v8832
    %v8840 = vpack.c.b16 %v8835, %v8834
    %v8841 = vpack.c.b16 %v8837, %v8836
    %v8847 = vsel %vm6675, %v8821, 0
    %8849 = vmatprep.subr.bf16.mxu0 0
    %8850 = vmatpush1.bf16.msra.mxu0 %v8838
    %8851 = vmatprep.subr.bf16.mxu0 0
    %8852 = vmatpush1.bf16.msra.mxu0 %v8839
    %8853 = vmatprep.subr.bf16.mxu0 0
    %8854 = vmatpush1.bf16.msra.mxu0 %v8840
    %8855 = vmatprep.subr.bf16.mxu0 0
    %8856 = vmatpush1.bf16.msra.mxu0 %v8841
    %8857 = vmatprep.subr.bf16.mxu0 0
    %8858 = vmatpush1.bf16.msra.mxu0 0
    %8859 = vmatprep.subr.bf16.mxu0 0
    %8860 = vmatpush1.bf16.msra.mxu0 0
    %8861 = vmatprep.subr.bf16.mxu0 0
    %8862 = vmatpush1.bf16.msra.mxu0 0
    %8863 = vmatprep.subr.bf16.mxu0 0
    %8864 = vmatpush1.bf16.msra.mxu0 0
    %8865 = vmatprep.subr.bf16.mxu0 0
    %8866 = vmatpush1.bf16.msra.mxu0 0
    %8867 = vmatprep.subr.bf16.mxu0 0
    %8868 = vmatpush1.bf16.msra.mxu0 0
    %8869 = vmatprep.subr.bf16.mxu0 0
    %8870 = vmatpush1.bf16.msra.mxu0 0
    %8871 = vmatprep.subr.bf16.mxu0 0
    %8872 = vmatpush1.bf16.msra.mxu0 0
    %8873 = vmatprep.subr.bf16.mxu0 0
    %8874 = vmatpush1.bf16.msra.mxu0 0
    %8875 = vmatprep.subr.bf16.mxu0 0
    %8876 = vmatpush1.bf16.msra.mxu0 0
    %8877 = vmatprep.subr.bf16.mxu0 0
    %8878 = vmatpush1.bf16.msra.mxu0 0
    %8879 = vmatprep.subr.bf16.mxu0 0
    %8880 = vmatpush1.bf16.msra.mxu0 0
    %8881 = vmatprep.mubr.bf16.mxu0 0
    %8882 = vmatmul.mubr.bf16.gmra.mrb[0].mxu0 %v8847
    %v8883 = vpop.f32.mrb[0].mxu0
    %v8884 = vadd.f32 0.0, %v8883
    %v8885 = vpop.f32.mrb[0].mxu0
    %v8886 = vpop.f32.mrb[0].mxu0
    %v8887 = vpop.f32.mrb[0].mxu0
    %8888 = vdwg.mxu0
    %v8889 = vadd.f32 %v8795, %v8884
    %v8890 = vld [vmem:[%s10] sm:$0x1]
    %v8892 = vlaneseq
    %v8893 = vshrl.u32 %v8892, 7
    %v8894 = vsub.s32 0, %v8893
    %v8895 = vrot.slane %v8890, %v8894
    %v8897 = vmul.f32 %v8889, %v8895
    %v8898 = vld [vmem:[%s15] sm:$0x1]
    %v8900 = vlaneseq
    %v8901 = vshrl.u32 %v8900, 7
    %v8902 = vsub.s32 0, %v8901
    %v8903 = vrot.slane %v8898, %v8902
    %v8905 = vadd.f32 %v8897, %v8903
    %vm8906 = vcmp.gt.f32.partialorder %v8905, 0.0
    %v8907 = vmul.f32 %v8905, 0.2
    %v8908 = vsel %vm8906, %v8905, %v8907
    %v8910 = vcombine.high %v8908, %v8908
    %v8912 = vunpack.c.l.s4 1983009808
    %v8913 = vunpack.c.0.s8 %v8912
    %v8914 = vlaneseq
    %v8915 = vshrl.u32 %v8914, 7
    %v8916 = vsub.s32 %v8913, %v8915
    %v8917 = vrot.slane %v8908, %v8916
    %v8919 = vunpack.c.l.s4 1983009808
    %v8920 = vunpack.c.0.s8 %v8919
    %v8921 = vlaneseq
    %v8922 = vshrl.u32 %v8921, 7
    %v8923 = vsub.s32 %v8920, %v8922
    %v8924 = vrot.slane %v8910, %v8923
    %v8925 = vcombine.high %v8917, %v8917
    %v8926 = vcombine.high %v8924, %v8924
    %vm8931 = vcmask 517120
    %8932 = vst.msk [vmem:[#allocation15] sm:$0x3] %vm8931, %v8917
    %8933 = vst.msk [vmem:[#allocation15 + $0x2] sm:$0x3] %vm8931, %v8925
    %8934 = vst.msk [vmem:[#allocation15 + $0x4] sm:$0x3] %vm8931, %v8924
    %8935 = vst.msk [vmem:[#allocation15 + $0x6] sm:$0x3] %vm8931, %v8926
    // Predicated region
    $region86: #{tpu_custom_call.1} parent=1 // pred_check
      _
    $region87: #{tpu_custom_call.1} parent=1 // pred_check_branch
      %8937 = sbr.rel (0) target = $region89
    $region88: #{tpu_custom_call.1} parent=1 // pred_region
      %s8939 = ssub.s32 128, 128
      %8940 = vsyncadd [#allocation8], %s8939
      %s8941 = sshll.u32 [#allocation15], 4
      %s8942 = int_to_ptr.vmem [resolvable:$true] %s8941
      %8947 = dma.vmem_to_hbm [thread:$0]  %s8942, 128, %s16, [#allocation8], 32, 32, 2
    $region89: #{tpu_custom_call.1} parent=1 // pred_fallthru
      _
    // Predicated region
    $region90: #{tpu_custom_call.1} parent=1 // pred_check
      _
    $region91: #{tpu_custom_call.1} parent=1 // pred_check_branch
      %8949 = sbr.rel (0) target = $region93
    $region92: #{tpu_custom_call.1} parent=1 // pred_region
      %8950 = dma.done [#allocation8], 128
    $region93: #{tpu_custom_call.1} parent=1 // pred_fallthru
      _
    %8951 = vsyncpa [#allocation7], 1
    %8952 = vsyncpa [#allocation10], 1
    %8953 = vsyncpa [#allocation13], 1
    %8954 = vsyncpa [#allocation8], 1

</llo_original>
